<compile_context>
chip_gen: v6e
topology: v6e:2x2x1
jax: 0.10.0
libtpu: 0.0.40
codegen_flags: <defaults>
</compile_context>

<pallas_src>
import functools
import math

import numpy as np
import jax
import jax.numpy as jnp
from jax.experimental import pallas as pl
from jax.experimental.pallas import tpu as pltpu

CONFIG = dict(
    dim=32, nhead=4, N=2, embedding="linear", dots=192,
    snr=10.0, BS=2, mask_noise=True, K=5,
)
DFF = 2048          # torch.nn.TransformerEncoderLayer default dim_feedforward
LN_EPS = 1e-5
BN_EPS = 1e-5

D = CONFIG["dim"]
H = CONFIG["nhead"]
DH = D // H
SEQ = CONFIG["dots"] // 24
S = SEQ + 1                      # tokens per sequence (CLS + seq)
BS = CONFIG["BS"]
T = BS * S                       # total flattened tokens (18)
K = CONFIG["K"]
SNR = CONFIG["snr"]
SCALE = 1.0 / math.sqrt(DH)
NL = CONFIG["N"]
PER_LAYER = 16                   # refs per encoder layer in the stack kernel
TAIL_ARGS = 16                   # refs for final LN + proj/pred/head

# Compile-time constant: additive mask forbidding cross-batch attention on the
# flattened (T, T) score matrix.
_bb = np.zeros((T, T), np.float32)
for _i in range(T):
    for _j in range(T):
        if _i // S != _j // S:
            _bb[_i, _j] = -1e9
BATCH_BLOCK = _bb

# Compile-time constant scatter: raw token (b, t) -> flattened slot b*S + 1 + t
# (CLS rows are all-zero, so the scatter matmul leaves them at 0).
_sel = np.zeros((T, BS * SEQ), np.float32)
for _b in range(BS):
    for _t in range(SEQ):
        _sel[_b * S + 1 + _t, _b * SEQ + _t] = 1.0
SCATTER_SEL = _sel


# ----------------------------------------------------------------------------
# pallas_call plumbing: single grid step, full-array blocks (everything fits
# VMEM with huge margin on v5e/v6e/v7x, so no tiling is needed or wanted).
# ----------------------------------------------------------------------------
def _zero_index(i, n):
    return (0,) * n


def _fused_call(kernel, out_shapes, *args):
    args = [jnp.asarray(a) for a in args]
    in_specs = [pl.BlockSpec(a.shape, functools.partial(_zero_index, n=a.ndim))
                for a in args]
    multi = isinstance(out_shapes, (tuple, list))
    outs = tuple(out_shapes) if multi else (out_shapes,)
    out_specs = [pl.BlockSpec(o.shape, functools.partial(_zero_index, n=len(o.shape)))
                 for o in outs]
    return pl.pallas_call(
        kernel,
        out_shape=tuple(outs) if multi else out_shapes,
        grid=(1,),
        in_specs=in_specs,
        out_specs=tuple(out_specs) if multi else out_specs[0],
        compiler_params=pltpu.CompilerParams(dimension_semantics=("arbitrary",)),
    )(*args)


# ----------------------------------------------------------------------------
# In-kernel math helpers
# ----------------------------------------------------------------------------
def _layernorm(x, g, b):
    mu = jnp.mean(x, axis=-1, keepdims=True)
    xc = x - mu
    var = jnp.mean(xc * xc, axis=-1, keepdims=True)
    return xc * jax.lax.rsqrt(var + LN_EPS) * g + b


def _erf(x):
    # Abramowitz & Stegun 7.1.26 rational approximation (|err| <= 1.5e-7),
    # i.e. float32-exact for nn.GELU(approximate='none') semantics; uses only
    # VPU/EUP-friendly primitives (abs/mul/add/div/exp/select).
    ax = jnp.abs(x)
    t = 1.0 / (1.0 + 0.3275911 * ax)
    poly = ((((1.061405429 * t - 1.453152027) * t + 1.421413741) * t
             - 0.284496736) * t + 0.254829592) * t
    y = 1.0 - poly * jnp.exp(-ax * ax)
    return jnp.where(x < 0.0, -y, y)


def _gelu(x):
    return 0.5 * x * (1.0 + _erf(x * 0.7071067811865476))


# ----------------------------------------------------------------------------
# Kernel 1: embedding + CLS/positional scatter + noise key-mask values
# ----------------------------------------------------------------------------
def _embed_kernel(x_ref, w_ref, b_ref, sel_ref, posfull_ref, h_ref, neg_ref):
    x = x_ref[...]                                      # (BS*SEQ, 24)
    xe = jnp.dot(x, w_ref[...], preferred_element_type=jnp.float32) + b_ref[...]
    # Scatter data rows into their flattened slots; CLS rows stay zero and the
    # positional table (pre-tiled per batch) is added in the same op.
    h_ref[...] = (jnp.dot(sel_ref[...], xe, preferred_element_type=jnp.float32)
                  + posfull_ref[...])
    # key padding mask from raw (pre-embedding) dot means: mean(x_row) <= mean(x)/snr
    total = jnp.sum(jnp.sum(x, axis=-1, keepdims=True), axis=0, keepdims=True)  # (1,1)
    thr = total * (1.0 / (BS * SEQ * 24 * SNR))
    row_mean = jnp.mean(x, axis=-1, keepdims=True)      # (BS*SEQ, 1)
    neg_ref[...] = jnp.where(row_mean <= thr, -1e9, 0.0).astype(jnp.float32)


# ----------------------------------------------------------------------------
# Kernel 2: full encoder stack + tail, fully fused.
#   per-layer refs : qw qb kw kb vw vb ow ob g1 b1 fw1 fb1 fw2 fb2 g2 b2
#   tail refs      : lnf_g lnf_b w1 b1 w2 b2 w3 b3 w4 b4 w5 b5 w6 b6 wh bh
# ----------------------------------------------------------------------------
def _attention(h, bias, qw, qb, kw, kb, vw, vb):
    q = jnp.dot(h, qw, preferred_element_type=jnp.float32) + qb
    k = jnp.dot(h, kw, preferred_element_type=jnp.float32) + kb
    v = jnp.dot(h, vw, preferred_element_type=jnp.float32) + vb
    # Multi-head attention without reshape/transpose/slicing: pick each head's
    # feature lanes with an iota mask; cross-batch + padded-key pairs are
    # killed by the additive bias matrix.
    lane = jax.lax.broadcasted_iota(jnp.int32, (T, D), 1)
    attn = jnp.zeros((T, D), jnp.float32)
    for head in range(H):
        hm = (lane >= head * DH) & (lane < (head + 1) * DH)
        qh = jnp.where(hm, q, 0.0) * SCALE               # pre-scale q, not scores
        s = jax.lax.dot_general(qh, k, (((1,), (1,)), ((), ())),
                                preferred_element_type=jnp.float32)   # (T, T)
        s = s + bias
        s = s - jnp.max(s, axis=-1, keepdims=True)
        p = jnp.exp(s)
        p = p / jnp.sum(p, axis=-1, keepdims=True)
        vh = jnp.where(hm, v, 0.0)
        attn = attn + jnp.dot(p, vh, preferred_element_type=jnp.float32)
    return attn


def _encoder_layer(h, bias, prm):
    (qw, qb, kw, kb, vw, vb, ow, ob, g1, b1,
     fw1, fb1, fw2, fb2, g2, b2) = prm
    a = _attention(h, bias, qw, qb, kw, kb, vw, vb)
    o = jnp.dot(a, ow, preferred_element_type=jnp.float32) + ob
    x1 = _layernorm(h + o, g1, b1)
    # FFN: (T, 2048) intermediate stays in VMEM.
    f = jnp.maximum(jnp.dot(x1, fw1, preferred_element_type=jnp.float32) + fb1, 0.0)
    f2 = jnp.dot(f, fw2, preferred_element_type=jnp.float32) + fb2
    return _layernorm(x1 + f2, g2, b2)


def _tail(h, prm, out_ref):
    (lng, lnb, w1, b1, w2, b2, w3, b3,
     w4, b4, w5, b5, w6, b6, wh, bh) = prm
    # CLS extraction as a tiny selector matmul (rows b*S); no row slicing.
    rows = jax.lax.broadcasted_iota(jnp.int32, (BS, T), 0)
    cols = jax.lax.broadcasted_iota(jnp.int32, (BS, T), 1)
    sel = (cols == rows * S).astype(jnp.float32)              # (BS, T)
    x = jnp.dot(sel, h, preferred_element_type=jnp.float32)   # (BS, D)

    x = _layernorm(x, lng, lnb)                                # encoder final LN
    # proj: 3 x (Linear[BN folded] -> GELU)
    x = _gelu(jnp.dot(x, w1, preferred_element_type=jnp.float32) + b1)
    x = _gelu(jnp.dot(x, w2, preferred_element_type=jnp.float32) + b2)
    x = _gelu(jnp.dot(x, w3, preferred_element_type=jnp.float32) + b3)
    # pred: 2 x (Linear[BN folded] -> GELU) -> Linear
    x = _gelu(jnp.dot(x, w4, preferred_element_type=jnp.float32) + b4)
    x = _gelu(jnp.dot(x, w5, preferred_element_type=jnp.float32) + b5)
    x = jnp.dot(x, w6, preferred_element_type=jnp.float32) + b6
    # head
    out_ref[...] = jnp.dot(x, wh, preferred_element_type=jnp.float32) + bh


def _stack_tail_kernel(*refs):
    h_ref, bias_ref = refs[0], refs[1]
    out_ref = refs[-1]
    h = h_ref[...]                                       # (T, D)
    bias = bias_ref[...]                                 # (T, T)
    idx = 2
    for _ in range(NL):
        prm = [r[...] for r in refs[idx:idx + PER_LAYER]]
        idx += PER_LAYER
        prm[10] = prm[10].astype(jnp.float32)            # ff_w1: bf16 -> f32 in VMEM
        prm[12] = prm[12].astype(jnp.float32)            # ff_w2: bf16 -> f32 in VMEM
        h = _encoder_layer(h, bias, prm)
    tail = [r[...] for r in refs[idx:idx + TAIL_ARGS]]
    _tail(h, tail, out_ref)


# ----------------------------------------------------------------------------
# Deterministic parameter construction
# ----------------------------------------------------------------------------
def _lin(key, fan_in, fan_out, w_dtype=jnp.float32):
    kw, kb = jax.random.split(key)
    return dict(
        w=(jax.random.normal(kw, (fan_in, fan_out), jnp.float32) * 0.05).astype(w_dtype),
        b=jax.random.normal(kb, (fan_out,), jnp.float32) * 0.02,
    )


def _bn(key, n):
    k1, k2, k3 = jax.random.split(key, 3)
    return dict(
        g=1.0 + 0.1 * jax.random.normal(k1, (n,), jnp.float32),
        b=0.1 * jax.random.normal(k2, (n,), jnp.float32),
        mean=0.1 * jax.random.normal(k3, (n,), jnp.float32),
        var=jnp.ones((n,), jnp.float32),
    )


def make_params(key):
    keys = iter(jax.random.split(key, 64))
    params = {}
    emb = _lin(next(keys), 24, D)
    params["emb_w"], params["emb_b"] = emb["w"], emb["b"]
    params["pos"] = 0.05 * jax.random.normal(next(keys), (SEQ + 2, D), jnp.float32)

    layers = []
    for _ in range(NL):
        qkv = _lin(next(keys), D, 3 * D)
        out = _lin(next(keys), D, D)
        ff1 = _lin(next(keys), D, DFF, w_dtype=jnp.bfloat16)    # bf16 weight storage
        ff2 = _lin(next(keys), DFF, D, w_dtype=jnp.bfloat16)    # (cast to f32 in VMEM)
        layers.append(dict(
            qkv_w=qkv["w"], qkv_b=qkv["b"],
            out_w=out["w"], out_b=out["b"],
            ff_w1=ff1["w"], ff_b1=ff1["b"],
            ff_w2=ff2["w"], ff_b2=ff2["b"],
            ln1_g=jnp.ones((D,), jnp.float32), ln1_b=jnp.zeros((D,), jnp.float32),
            ln2_g=jnp.ones((D,), jnp.float32), ln2_b=jnp.zeros((D,), jnp.float32),
        ))
    params["layers"] = layers
    params["lnf_g"] = jnp.ones((D,), jnp.float32)
    params["lnf_b"] = jnp.zeros((D,), jnp.float32)

    params["norm"] = _bn(next(keys), D)                          # self.norm

    params["proj"] = [
        (_lin(next(keys), D, 2 * D), _bn(next(keys), 2 * D)),
        (_lin(next(keys), 2 * D, 4 * D), _bn(next(keys), 4 * D)),
        (_lin(next(keys), 4 * D, D), _bn(next(keys), D)),
    ]
    params["pred"] = [
        (_lin(next(keys), D, 2 * D), _bn(next(keys), 2 * D)),
        (_lin(next(keys), 2 * D, 4 * D), _bn(next(keys), 4 * D)),
        (_lin(next(keys), 4 * D, D), None),
    ]
    params["head"] = _lin(next(keys), D, K)
    return params


# ----------------------------------------------------------------------------
# Trace-time eval-BatchNorm folding into adjacent Linear weights
# ----------------------------------------------------------------------------
def _bn_scale_shift(bn):
    s = bn["g"] * jax.lax.rsqrt(bn["var"] + BN_EPS)
    t = bn["b"] - bn["mean"] * s
    return s, t


def _fold_bn_out(w, b, bn):
    # Linear -> BN   ==>   Linear with w*s, b*s + t
    s, t = _bn_scale_shift(bn)
    return w * s[None, :], b * s + t


def _fold_bn_in(w, b, bn):
    # BN -> Linear   ==>   Linear with s[:,None]*w, t@w + b
    s, t = _bn_scale_shift(bn)
    return s[:, None] * w, t @ w + b


# ----------------------------------------------------------------------------
# Forward pass (mirrors BaseModel.forward, eval mode, pred=True)
# ----------------------------------------------------------------------------
def forward(params, x_in):
    x2 = x_in.reshape(BS * SEQ, 24).astype(jnp.float32)
    pos_full = jnp.tile(params["pos"][:S], (BS, 1))              # (T, D)

    h, neg16 = _fused_call(
        _embed_kernel,
        (jax.ShapeDtypeStruct((T, D), jnp.float32),
         jax.ShapeDtypeStruct((BS * SEQ, 1), jnp.float32)),
        x2, params["emb_w"], params["emb_b"].reshape(1, D),
        jnp.asarray(SCATTER_SEL), pos_full,
    )

    if CONFIG["mask_noise"]:
        keyrow = jnp.concatenate(
            [jnp.zeros((BS, 1), jnp.float32), neg16.reshape(BS, SEQ)], axis=1
        ).reshape(1, T)
        bias = jnp.asarray(BATCH_BLOCK) + keyrow                 # (T, T)
    else:
        bias = jnp.asarray(BATCH_BLOCK)

    layer_args = []
    for lp in params["layers"]:
        qw, kw, vw = jnp.split(lp["qkv_w"], 3, axis=1)
        qb, kb, vb = jnp.split(lp["qkv_b"], 3)
        layer_args += [
            qw, qb.reshape(1, D), kw, kb.reshape(1, D), vw, vb.reshape(1, D),
            lp["out_w"], lp["out_b"].reshape(1, D),
            lp["ln1_g"].reshape(1, D), lp["ln1_b"].reshape(1, D),
            lp["ff_w1"], lp["ff_b1"].reshape(1, DFF),
            lp["ff_w2"], lp["ff_b2"].reshape(1, D),
            lp["ln2_g"].reshape(1, D), lp["ln2_b"].reshape(1, D),
        ]

    # Fold every eval-mode BatchNorm into the adjacent Linear (trace-time algebra).
    (p1, bn1), (p2, bn2), (p3, bn3) = params["proj"]
    (r1, bnr1), (r2, bnr2), (r3, _) = params["pred"]
    w1, b1 = _fold_bn_in(p1["w"], p1["b"], params["norm"])   # self.norm into proj lin1
    w1, b1 = _fold_bn_out(w1, b1, bn1)
    w2, b2 = _fold_bn_out(p2["w"], p2["b"], bn2)
    w3, b3 = _fold_bn_out(p3["w"], p3["b"], bn3)
    w4, b4 = _fold_bn_out(r1["w"], r1["b"], bnr1)
    w5, b5 = _fold_bn_out(r2["w"], r2["b"], bnr2)
    w6, b6 = r3["w"], r3["b"]
    wh, bh = params["head"]["w"], params["head"]["b"]

    tail_args = [
        params["lnf_g"].reshape(1, D), params["lnf_b"].reshape(1, D),
        w1, b1.reshape(1, 2 * D), w2, b2.reshape(1, 4 * D), w3, b3.reshape(1, D),
        w4, b4.reshape(1, 2 * D), w5, b5.reshape(1, 4 * D), w6, b6.reshape(1, D),
        wh, bh.reshape(1, K),
    ]

    out = _fused_call(
        _stack_tail_kernel,
        jax.ShapeDtypeStruct((BS, K), jnp.float32),
        h, bias, *layer_args, *tail_args,
    )
    return out
    # TODO(synk): training-mode BatchNorm statistics update and dropout (p=0.1)
    # semantics are not implemented; this is the eval-mode forward.


if __name__ == "__main__":
    params = make_params(jax.random.PRNGKey(42))
    x = jax.random.normal(jax.random.PRNGKey(0),
                          (CONFIG["BS"], CONFIG["dots"]), jnp.float32)
    out = jax.jit(forward)(params, x)
    out = jax.block_until_ready(out)
    assert out.shape == (CONFIG["BS"], CONFIG["K"]) and out.dtype == jnp.float32
    print("KERNEL_OK")
</pallas_src>

<mosaic_0001>
module attributes {stable_mosaic.version = 11 : i64} {
  func.func @_embed_kernel(%arg0: i32, %arg1: memref<16x24xf32, #tpu.memory_space<vmem>>, %arg2: memref<24x32xf32, #tpu.memory_space<vmem>>, %arg3: memref<1x32xf32, #tpu.memory_space<vmem>>, %arg4: memref<18x16xf32, #tpu.memory_space<vmem>>, %arg5: memref<18x32xf32, #tpu.memory_space<vmem>>, %arg6: memref<18x32xf32, #tpu.memory_space<vmem>>, %arg7: memref<16x1xf32, #tpu.memory_space<vmem>>) attributes {dimension_semantics = [#tpu.dimension_semantics<arbitrary>], iteration_bounds = array<i64: 1>, scalar_prefetch = 0 : i64, scratch_operands = 0 : i64, tpu.core_type = #tpu.core_type<tc>, window_params = [{pipeline_mode = #tpu.pipeline_mode<synchronous>, transform_indices = @transform_0, window_bounds = array<i64: 16, 24>}, {pipeline_mode = #tpu.pipeline_mode<synchronous>, transform_indices = @transform_1, window_bounds = array<i64: 24, 32>}, {pipeline_mode = #tpu.pipeline_mode<synchronous>, transform_indices = @transform_2, window_bounds = array<i64: 1, 32>}, {pipeline_mode = #tpu.pipeline_mode<synchronous>, transform_indices = @transform_3, window_bounds = array<i64: 18, 16>}, {pipeline_mode = #tpu.pipeline_mode<synchronous>, transform_indices = @transform_4, window_bounds = array<i64: 18, 32>}, {pipeline_mode = #tpu.pipeline_mode<synchronous>, transform_indices = @transform_5, window_bounds = array<i64: 18, 32>}, {pipeline_mode = #tpu.pipeline_mode<synchronous>, transform_indices = @transform_6, window_bounds = array<i64: 16, 1>}]} {
    %c0 = arith.constant 0 : index
    %c0_0 = arith.constant 0 : index
    %0 = vector.load %arg1[%c0, %c0_0] : memref<16x24xf32, #tpu.memory_space<vmem>>, vector<16x24xf32>
    %c0_1 = arith.constant 0 : index
    %c0_2 = arith.constant 0 : index
    %1 = vector.load %arg2[%c0_1, %c0_2] : memref<24x32xf32, #tpu.memory_space<vmem>>, vector<24x32xf32>
    %cst = arith.constant dense<0.000000e+00> : vector<16x32xf32>
    %2 = tpu.matmul %0, %1, %cst {dimension_numbers = #tpu.dot_dimension_numbers<[1], [0], [0], [1], [0, 0, 1, 1], [], []>} : vector<16x24xf32>, vector<24x32xf32>, vector<16x32xf32> -> vector<16x32xf32>
    %c0_3 = arith.constant 0 : index
    %c0_4 = arith.constant 0 : index
    %3 = vector.load %arg3[%c0_3, %c0_4] : memref<1x32xf32, #tpu.memory_space<vmem>>, vector<1x32xf32>
    %4 = vector.broadcast %3 : vector<1x32xf32> to vector<16x32xf32>
    %5 = arith.addf %2, %4 : vector<16x32xf32>
    %c0_5 = arith.constant 0 : index
    %c0_6 = arith.constant 0 : index
    %6 = vector.load %arg4[%c0_5, %c0_6] : memref<18x16xf32, #tpu.memory_space<vmem>>, vector<18x16xf32>
    %cst_7 = arith.constant dense<0.000000e+00> : vector<18x32xf32>
    %7 = tpu.matmul %6, %5, %cst_7 {dimension_numbers = #tpu.dot_dimension_numbers<[1], [0], [0], [1], [0, 0, 1, 1], [], []>} : vector<18x16xf32>, vector<16x32xf32>, vector<18x32xf32> -> vector<18x32xf32>
    %c0_8 = arith.constant 0 : index
    %c0_9 = arith.constant 0 : index
    %8 = vector.load %arg5[%c0_8, %c0_9] : memref<18x32xf32, #tpu.memory_space<vmem>>, vector<18x32xf32>
    %9 = arith.addf %7, %8 : vector<18x32xf32>
    %c0_10 = arith.constant 0 : index
    %c0_11 = arith.constant 0 : index
    %10 = vector.load %arg6[%c0_10, %c0_11] : memref<18x32xf32, #tpu.memory_space<vmem>>, vector<18x32xf32>
    tpu.vector_store %arg6[%c0_10, %c0_11], %9 {strides = array<i32>} : memref<18x32xf32, #tpu.memory_space<vmem>>, vector<18x32xf32>,
    %cst_12 = arith.constant dense<0.000000e+00> : vector<16xf32>
    %11 = vector.multi_reduction <add>, %0, %cst_12 [1] : vector<16x24xf32> to vector<16xf32>
    %12 = vector.shape_cast %11 : vector<16xf32> to vector<16x1xf32>
    %cst_13 = arith.constant dense<0.000000e+00> : vector<1xf32>
    %13 = vector.multi_reduction <add>, %12, %cst_13 [0] : vector<16x1xf32> to vector<1xf32>
    %14 = vector.shape_cast %13 : vector<1xf32> to vector<1x1xf32>
    %cst_14 = arith.constant 2.6041668E-4 : f32
    %15 = vector.broadcast %cst_14 : f32 to vector<1x1xf32>
    %16 = arith.mulf %14, %15 : vector<1x1xf32>
    %cst_15 = arith.constant dense<0.000000e+00> : vector<16xf32>
    %17 = vector.multi_reduction <add>, %0, %cst_15 [1] : vector<16x24xf32> to vector<16xf32>
    %18 = vector.shape_cast %17 : vector<16xf32> to vector<16x1xf32>
    %cst_16 = arith.constant 2.400000e+01 : f32
    %19 = vector.broadcast %cst_16 : f32 to vector<16x1xf32>
    %20 = arith.divf %18, %19 : vector<16x1xf32>
    %21 = vector.broadcast %16 : vector<1x1xf32> to vector<16x1xf32>
    %22 = arith.cmpf ole, %20, %21 : vector<16x1xf32>
    %cst_17 = arith.constant -1.000000e+09 : f32
    %cst_18 = arith.constant 0.000000e+00 : f32
    %23 = vector.broadcast %cst_17 : f32 to vector<16x1xf32>
    %24 = vector.broadcast %cst_18 : f32 to vector<16x1xf32>
    %25 = arith.select %22, %23, %24 : vector<16x1xi1>, vector<16x1xf32>
    %c0_19 = arith.constant 0 : index
    %c0_20 = arith.constant 0 : index
    %26 = vector.load %arg7[%c0_19, %c0_20] : memref<16x1xf32, #tpu.memory_space<vmem>>, vector<16x1xf32>
    tpu.vector_store %arg7[%c0_19, %c0_20], %25 {strides = array<i32>} : memref<16x1xf32, #tpu.memory_space<vmem>>, vector<16x1xf32>,
    return
  }
  func.func @transform_0(%arg0: i32) -> (i32, i32) {
    %c0_i32 = arith.constant 0 : i32
    %c0_i32_0 = arith.constant 0 : i32
    %c0_i32_1 = arith.constant 0 : i32
    return %c0_i32, %c0_i32_0 : i32, i32
  }
  func.func @transform_1(%arg0: i32) -> (i32, i32) {
    %c0_i32 = arith.constant 0 : i32
    %c0_i32_0 = arith.constant 0 : i32
    %c0_i32_1 = arith.constant 0 : i32
    return %c0_i32, %c0_i32_0 : i32, i32
  }
  func.func @transform_2(%arg0: i32) -> (i32, i32) {
    %c0_i32 = arith.constant 0 : i32
    %c0_i32_0 = arith.constant 0 : i32
    %c0_i32_1 = arith.constant 0 : i32
    return %c0_i32, %c0_i32_0 : i32, i32
  }
  func.func @transform_3(%arg0: i32) -> (i32, i32) {
    %c0_i32 = arith.constant 0 : i32
    %c0_i32_0 = arith.constant 0 : i32
    %c0_i32_1 = arith.constant 0 : i32
    return %c0_i32, %c0_i32_0 : i32, i32
  }
  func.func @transform_4(%arg0: i32) -> (i32, i32) {
    %c0_i32 = arith.constant 0 : i32
    %c0_i32_0 = arith.constant 0 : i32
    %c0_i32_1 = arith.constant 0 : i32
    return %c0_i32, %c0_i32_0 : i32, i32
  }
  func.func @transform_5(%arg0: i32) -> (i32, i32) {
    %c0_i32 = arith.constant 0 : i32
    %c0_i32_0 = arith.constant 0 : i32
    %c0_i32_1 = arith.constant 0 : i32
    return %c0_i32, %c0_i32_0 : i32, i32
  }
  func.func @transform_6(%arg0: i32) -> (i32, i32) {
    %c0_i32 = arith.constant 0 : i32
    %c0_i32_0 = arith.constant 0 : i32
    %c0_i32_1 = arith.constant 0 : i32
    return %c0_i32, %c0_i32_0 : i32, i32
  }
}

module attributes {stable_mosaic.version = 11 : i64} {
  func.func @_stack_tail_kernel(%arg0: i32, %arg1: memref<18x32xf32, #tpu.memory_space<vmem>>, %arg2: memref<18x18xf32, #tpu.memory_space<vmem>>, %arg3: memref<32x32xf32, #tpu.memory_space<vmem>>, %arg4: memref<1x32xf32, #tpu.memory_space<vmem>>, %arg5: memref<32x32xf32, #tpu.memory_space<vmem>>, %arg6: memref<1x32xf32, #tpu.memory_space<vmem>>, %arg7: memref<32x32xf32, #tpu.memory_space<vmem>>, %arg8: memref<1x32xf32, #tpu.memory_space<vmem>>, %arg9: memref<32x32xf32, #tpu.memory_space<vmem>>, %arg10: memref<1x32xf32, #tpu.memory_space<vmem>>, %arg11: memref<1x32xf32, #tpu.memory_space<vmem>>, %arg12: memref<1x32xf32, #tpu.memory_space<vmem>>, %arg13: memref<32x2048xbf16, #tpu.memory_space<vmem>>, %arg14: memref<1x2048xf32, #tpu.memory_space<vmem>>, %arg15: memref<2048x32xbf16, #tpu.memory_space<vmem>>, %arg16: memref<1x32xf32, #tpu.memory_space<vmem>>, %arg17: memref<1x32xf32, #tpu.memory_space<vmem>>, %arg18: memref<1x32xf32, #tpu.memory_space<vmem>>, %arg19: memref<32x32xf32, #tpu.memory_space<vmem>>, %arg20: memref<1x32xf32, #tpu.memory_space<vmem>>, %arg21: memref<32x32xf32, #tpu.memory_space<vmem>>, %arg22: memref<1x32xf32, #tpu.memory_space<vmem>>, %arg23: memref<32x32xf32, #tpu.memory_space<vmem>>, %arg24: memref<1x32xf32, #tpu.memory_space<vmem>>, %arg25: memref<32x32xf32, #tpu.memory_space<vmem>>, %arg26: memref<1x32xf32, #tpu.memory_space<vmem>>, %arg27: memref<1x32xf32, #tpu.memory_space<vmem>>, %arg28: memref<1x32xf32, #tpu.memory_space<vmem>>, %arg29: memref<32x2048xbf16, #tpu.memory_space<vmem>>, %arg30: memref<1x2048xf32, #tpu.memory_space<vmem>>, %arg31: memref<2048x32xbf16, #tpu.memory_space<vmem>>, %arg32: memref<1x32xf32, #tpu.memory_space<vmem>>, %arg33: memref<1x32xf32, #tpu.memory_space<vmem>>, %arg34: memref<1x32xf32, #tpu.memory_space<vmem>>, %arg35: memref<1x32xf32, #tpu.memory_space<vmem>>, %arg36: memref<1x32xf32, #tpu.memory_space<vmem>>, %arg37: memref<32x64xf32, #tpu.memory_space<vmem>>, %arg38: memref<1x64xf32, #tpu.memory_space<vmem>>, %arg39: memref<64x128xf32, #tpu.memory_space<vmem>>, %arg40: memref<1x128xf32, #tpu.memory_space<vmem>>, %arg41: memref<128x32xf32, #tpu.memory_space<vmem>>, %arg42: memref<1x32xf32, #tpu.memory_space<vmem>>, %arg43: memref<32x64xf32, #tpu.memory_space<vmem>>, %arg44: memref<1x64xf32, #tpu.memory_space<vmem>>, %arg45: memref<64x128xf32, #tpu.memory_space<vmem>>, %arg46: memref<1x128xf32, #tpu.memory_space<vmem>>, %arg47: memref<128x32xf32, #tpu.memory_space<vmem>>, %arg48: memref<1x32xf32, #tpu.memory_space<vmem>>, %arg49: memref<32x5xf32, #tpu.memory_space<vmem>>, %arg50: memref<1x5xf32, #tpu.memory_space<vmem>>, %arg51: memref<2x5xf32, #tpu.memory_space<vmem>>) attributes {dimension_semantics = [#tpu.dimension_semantics<arbitrary>], iteration_bounds = array<i64: 1>, scalar_prefetch = 0 : i64, scratch_operands = 0 : i64, tpu.core_type = #tpu.core_type<tc>, window_params = [{pipeline_mode = #tpu.pipeline_mode<synchronous>, transform_indices = @transform_0, window_bounds = array<i64: 18, 32>}, {pipeline_mode = #tpu.pipeline_mode<synchronous>, transform_indices = @transform_1, window_bounds = array<i64: 18, 18>}, {pipeline_mode = #tpu.pipeline_mode<synchronous>, transform_indices = @transform_2, window_bounds = array<i64: 32, 32>}, {pipeline_mode = #tpu.pipeline_mode<synchronous>, transform_indices = @transform_3, window_bounds = array<i64: 1, 32>}, {pipeline_mode = #tpu.pipeline_mode<synchronous>, transform_indices = @transform_4, window_bounds = array<i64: 32, 32>}, {pipeline_mode = #tpu.pipeline_mode<synchronous>, transform_indices = @transform_5, window_bounds = array<i64: 1, 32>}, {pipeline_mode = #tpu.pipeline_mode<synchronous>, transform_indices = @transform_6, window_bounds = array<i64: 32, 32>}, {pipeline_mode = #tpu.pipeline_mode<synchronous>, transform_indices = @transform_7, window_bounds = array<i64: 1, 32>}, {pipeline_mode = #tpu.pipeline_mode<synchronous>, transform_indices = @transform_8, window_bounds = array<i64: 32, 32>}, {pipeline_mode = #tpu.pipeline_mode<synchronous>, transform_indices = @transform_9, window_bounds = array<i64: 1, 32>}, {pipeline_mode = #tpu.pipeline_mode<synchronous>, transform_indices = @transform_10, window_bounds = array<i64: 1, 32>}, {pipeline_mode = #tpu.pipeline_mode<synchronous>, transform_indices = @transform_11, window_bounds = array<i64: 1, 32>}, {pipeline_mode = #tpu.pipeline_mode<synchronous>, transform_indices = @transform_12, window_bounds = array<i64: 32, 2048>}, {pipeline_mode = #tpu.pipeline_mode<synchronous>, transform_indices = @transform_13, window_bounds = array<i64: 1, 2048>}, {pipeline_mode = #tpu.pipeline_mode<synchronous>, transform_indices = @transform_14, window_bounds = array<i64: 2048, 32>}, {pipeline_mode = #tpu.pipeline_mode<synchronous>, transform_indices = @transform_15, window_bounds = array<i64: 1, 32>}, {pipeline_mode = #tpu.pipeline_mode<synchronous>, transform_indices = @transform_16, window_bounds = array<i64: 1, 32>}, {pipeline_mode = #tpu.pipeline_mode<synchronous>, transform_indices = @transform_17, window_bounds = array<i64: 1, 32>}, {pipeline_mode = #tpu.pipeline_mode<synchronous>, transform_indices = @transform_18, window_bounds = array<i64: 32, 32>}, {pipeline_mode = #tpu.pipeline_mode<synchronous>, transform_indices = @transform_19, window_bounds = array<i64: 1, 32>}, {pipeline_mode = #tpu.pipeline_mode<synchronous>, transform_indices = @transform_20, window_bounds = array<i64: 32, 32>}, {pipeline_mode = #tpu.pipeline_mode<synchronous>, transform_indices = @transform_21, window_bounds = array<i64: 1, 32>}, {pipeline_mode = #tpu.pipeline_mode<synchronous>, transform_indices = @transform_22, window_bounds = array<i64: 32, 32>}, {pipeline_mode = #tpu.pipeline_mode<synchronous>, transform_indices = @transform_23, window_bounds = array<i64: 1, 32>}, {pipeline_mode = #tpu.pipeline_mode<synchronous>, transform_indices = @transform_24, window_bounds = array<i64: 32, 32>}, {pipeline_mode = #tpu.pipeline_mode<synchronous>, transform_indices = @transform_25, window_bounds = array<i64: 1, 32>}, {pipeline_mode = #tpu.pipeline_mode<synchronous>, transform_indices = @transform_26, window_bounds = array<i64: 1, 32>}, {pipeline_mode = #tpu.pipeline_mode<synchronous>, transform_indices = @transform_27, window_bounds = array<i64: 1, 32>}, {pipeline_mode = #tpu.pipeline_mode<synchronous>, transform_indices = @transform_28, window_bounds = array<i64: 32, 2048>}, {pipeline_mode = #tpu.pipeline_mode<synchronous>, transform_indices = @transform_29, window_bounds = array<i64: 1, 2048>}, {pipeline_mode = #tpu.pipeline_mode<synchronous>, transform_indices = @transform_30, window_bounds = array<i64: 2048, 32>}, {pipeline_mode = #tpu.pipeline_mode<synchronous>, transform_indices = @transform_31, window_bounds = array<i64: 1, 32>}, {pipeline_mode = #tpu.pipeline_mode<synchronous>, transform_indices = @transform_32, window_bounds = array<i64: 1, 32>}, {pipeline_mode = #tpu.pipeline_mode<synchronous>, transform_indices = @transform_33, window_bounds = array<i64: 1, 32>}, {pipeline_mode = #tpu.pipeline_mode<synchronous>, transform_indices = @transform_34, window_bounds = array<i64: 1, 32>}, {pipeline_mode = #tpu.pipeline_mode<synchronous>, transform_indices = @transform_35, window_bounds = array<i64: 1, 32>}, {pipeline_mode = #tpu.pipeline_mode<synchronous>, transform_indices = @transform_36, window_bounds = array<i64: 32, 64>}, {pipeline_mode = #tpu.pipeline_mode<synchronous>, transform_indices = @transform_37, window_bounds = array<i64: 1, 64>}, {pipeline_mode = #tpu.pipeline_mode<synchronous>, transform_indices = @transform_38, window_bounds = array<i64: 64, 128>}, {pipeline_mode = #tpu.pipeline_mode<synchronous>, transform_indices = @transform_39, window_bounds = array<i64: 1, 128>}, {pipeline_mode = #tpu.pipeline_mode<synchronous>, transform_indices = @transform_40, window_bounds = array<i64: 128, 32>}, {pipeline_mode = #tpu.pipeline_mode<synchronous>, transform_indices = @transform_41, window_bounds = array<i64: 1, 32>}, {pipeline_mode = #tpu.pipeline_mode<synchronous>, transform_indices = @transform_42, window_bounds = array<i64: 32, 64>}, {pipeline_mode = #tpu.pipeline_mode<synchronous>, transform_indices = @transform_43, window_bounds = array<i64: 1, 64>}, {pipeline_mode = #tpu.pipeline_mode<synchronous>, transform_indices = @transform_44, window_bounds = array<i64: 64, 128>}, {pipeline_mode = #tpu.pipeline_mode<synchronous>, transform_indices = @transform_45, window_bounds = array<i64: 1, 128>}, {pipeline_mode = #tpu.pipeline_mode<synchronous>, transform_indices = @transform_46, window_bounds = array<i64: 128, 32>}, {pipeline_mode = #tpu.pipeline_mode<synchronous>, transform_indices = @transform_47, window_bounds = array<i64: 1, 32>}, {pipeline_mode = #tpu.pipeline_mode<synchronous>, transform_indices = @transform_48, window_bounds = array<i64: 32, 5>}, {pipeline_mode = #tpu.pipeline_mode<synchronous>, transform_indices = @transform_49, window_bounds = array<i64: 1, 5>}, {pipeline_mode = #tpu.pipeline_mode<synchronous>, transform_indices = @transform_50, window_bounds = array<i64: 2, 5>}]} {
    %c0 = arith.constant 0 : index
    %c0_0 = arith.constant 0 : index
    %0 = vector.load %arg1[%c0, %c0_0] : memref<18x32xf32, #tpu.memory_space<vmem>>, vector<18x32xf32>
    %c0_1 = arith.constant 0 : index
    %c0_2 = arith.constant 0 : index
    %1 = vector.load %arg2[%c0_1, %c0_2] : memref<18x18xf32, #tpu.memory_space<vmem>>, vector<18x18xf32>
    %c0_3 = arith.constant 0 : index
    %c0_4 = arith.constant 0 : index
    %2 = vector.load %arg3[%c0_3, %c0_4] : memref<32x32xf32, #tpu.memory_space<vmem>>, vector<32x32xf32>
    %c0_5 = arith.constant 0 : index
    %c0_6 = arith.constant 0 : index
    %3 = vector.load %arg4[%c0_5, %c0_6] : memref<1x32xf32, #tpu.memory_space<vmem>>, vector<1x32xf32>
    %c0_7 = arith.constant 0 : index
    %c0_8 = arith.constant 0 : index
    %4 = vector.load %arg5[%c0_7, %c0_8] : memref<32x32xf32, #tpu.memory_space<vmem>>, vector<32x32xf32>
    %c0_9 = arith.constant 0 : index
    %c0_10 = arith.constant 0 : index
    %5 = vector.load %arg6[%c0_9, %c0_10] : memref<1x32xf32, #tpu.memory_space<vmem>>, vector<1x32xf32>
    %c0_11 = arith.constant 0 : index
    %c0_12 = arith.constant 0 : index
    %6 = vector.load %arg7[%c0_11, %c0_12] : memref<32x32xf32, #tpu.memory_space<vmem>>, vector<32x32xf32>
    %c0_13 = arith.constant 0 : index
    %c0_14 = arith.constant 0 : index
    %7 = vector.load %arg8[%c0_13, %c0_14] : memref<1x32xf32, #tpu.memory_space<vmem>>, vector<1x32xf32>
    %c0_15 = arith.constant 0 : index
    %c0_16 = arith.constant 0 : index
    %8 = vector.load %arg9[%c0_15, %c0_16] : memref<32x32xf32, #tpu.memory_space<vmem>>, vector<32x32xf32>
    %c0_17 = arith.constant 0 : index
    %c0_18 = arith.constant 0 : index
    %9 = vector.load %arg10[%c0_17, %c0_18] : memref<1x32xf32, #tpu.memory_space<vmem>>, vector<1x32xf32>
    %c0_19 = arith.constant 0 : index
    %c0_20 = arith.constant 0 : index
    %10 = vector.load %arg11[%c0_19, %c0_20] : memref<1x32xf32, #tpu.memory_space<vmem>>, vector<1x32xf32>
    %c0_21 = arith.constant 0 : index
    %c0_22 = arith.constant 0 : index
    %11 = vector.load %arg12[%c0_21, %c0_22] : memref<1x32xf32, #tpu.memory_space<vmem>>, vector<1x32xf32>
    %c0_23 = arith.constant 0 : index
    %c0_24 = arith.constant 0 : index
    %12 = vector.load %arg13[%c0_23, %c0_24] : memref<32x2048xbf16, #tpu.memory_space<vmem>>, vector<32x2048xbf16>
    %c0_25 = arith.constant 0 : index
    %c0_26 = arith.constant 0 : index
    %13 = vector.load %arg14[%c0_25, %c0_26] : memref<1x2048xf32, #tpu.memory_space<vmem>>, vector<1x2048xf32>
    %c0_27 = arith.constant 0 : index
    %c0_28 = arith.constant 0 : index
    %14 = vector.load %arg15[%c0_27, %c0_28] : memref<2048x32xbf16, #tpu.memory_space<vmem>>, vector<2048x32xbf16>
    %c0_29 = arith.constant 0 : index
    %c0_30 = arith.constant 0 : index
    %15 = vector.load %arg16[%c0_29, %c0_30] : memref<1x32xf32, #tpu.memory_space<vmem>>, vector<1x32xf32>
    %c0_31 = arith.constant 0 : index
    %c0_32 = arith.constant 0 : index
    %16 = vector.load %arg17[%c0_31, %c0_32] : memref<1x32xf32, #tpu.memory_space<vmem>>, vector<1x32xf32>
    %c0_33 = arith.constant 0 : index
    %c0_34 = arith.constant 0 : index
    %17 = vector.load %arg18[%c0_33, %c0_34] : memref<1x32xf32, #tpu.memory_space<vmem>>, vector<1x32xf32>
    %18 = arith.extf %12 : vector<32x2048xbf16> to vector<32x2048xf32>
    %19 = arith.extf %14 : vector<2048x32xbf16> to vector<2048x32xf32>
    %cst = arith.constant dense<0.000000e+00> : vector<18x32xf32>
    %20 = tpu.matmul %0, %2, %cst {dimension_numbers = #tpu.dot_dimension_numbers<[1], [0], [0], [1], [0, 0, 1, 1], [], []>} : vector<18x32xf32>, vector<32x32xf32>, vector<18x32xf32> -> vector<18x32xf32>
    %21 = vector.broadcast %3 : vector<1x32xf32> to vector<18x32xf32>
    %22 = arith.addf %20, %21 : vector<18x32xf32>
    %cst_35 = arith.constant dense<0.000000e+00> : vector<18x32xf32>
    %23 = tpu.matmul %0, %4, %cst_35 {dimension_numbers = #tpu.dot_dimension_numbers<[1], [0], [0], [1], [0, 0, 1, 1], [], []>} : vector<18x32xf32>, vector<32x32xf32>, vector<18x32xf32> -> vector<18x32xf32>
    %24 = vector.broadcast %5 : vector<1x32xf32> to vector<18x32xf32>
    %25 = arith.addf %23, %24 : vector<18x32xf32>
    %cst_36 = arith.constant dense<0.000000e+00> : vector<18x32xf32>
    %26 = tpu.matmul %0, %6, %cst_36 {dimension_numbers = #tpu.dot_dimension_numbers<[1], [0], [0], [1], [0, 0, 1, 1], [], []>} : vector<18x32xf32>, vector<32x32xf32>, vector<18x32xf32> -> vector<18x32xf32>
    %27 = vector.broadcast %7 : vector<1x32xf32> to vector<18x32xf32>
    %28 = arith.addf %26, %27 : vector<18x32xf32>
    %29 = tpu.iota {dimensions = array<i32: 1>} : vector<18x32xi32>
    %cst_37 = arith.constant 0.000000e+00 : f32
    %30 = vector.broadcast %cst_37 : f32 to vector<18x32xf32>
    %c0_i32 = arith.constant 0 : i32
    %31 = vector.broadcast %c0_i32 : i32 to vector<18x32xi32>
    %32 = arith.cmpi sge, %29, %31 : vector<18x32xi32>
    %c8_i32 = arith.constant 8 : i32
    %33 = vector.broadcast %c8_i32 : i32 to vector<18x32xi32>
    %34 = arith.cmpi slt, %29, %33 : vector<18x32xi32>
    %35 = arith.andi %32, %34 : vector<18x32xi1>
    %cst_38 = arith.constant 0.000000e+00 : f32
    %36 = vector.broadcast %cst_38 : f32 to vector<18x32xf32>
    %37 = arith.select %35, %22, %36 : vector<18x32xi1>, vector<18x32xf32>
    %cst_39 = arith.constant 0.353553385 : f32
    %38 = vector.broadcast %cst_39 : f32 to vector<18x32xf32>
    %39 = arith.mulf %37, %38 : vector<18x32xf32>
    %cst_40 = arith.constant dense<0.000000e+00> : vector<18x18xf32>
    %40 = tpu.matmul %39, %25, %cst_40 {dimension_numbers = #tpu.dot_dimension_numbers<[1], [1], [0], [0], [0, 0, 1, 0], [], []>} : vector<18x32xf32>, vector<18x32xf32>, vector<18x18xf32> -> vector<18x18xf32>
    %41 = arith.addf %40, %1 : vector<18x18xf32>
    %cst_41 = arith.constant dense<0xFF800000> : vector<18xf32>
    %42 = vector.multi_reduction <maximumf>, %41, %cst_41 [1] : vector<18x18xf32> to vector<18xf32>
    %43 = vector.shape_cast %42 : vector<18xf32> to vector<18x1xf32>
    %44 = vector.broadcast %43 : vector<18x1xf32> to vector<18x18xf32>
    %45 = arith.subf %41, %44 : vector<18x18xf32>
    %46 = math.exp %45 : vector<18x18xf32>
    %cst_42 = arith.constant dense<0.000000e+00> : vector<18xf32>
    %47 = vector.multi_reduction <add>, %46, %cst_42 [1] : vector<18x18xf32> to vector<18xf32>
    %48 = vector.shape_cast %47 : vector<18xf32> to vector<18x1xf32>
    %49 = vector.broadcast %48 : vector<18x1xf32> to vector<18x18xf32>
    %50 = arith.divf %46, %49 : vector<18x18xf32>
    %cst_43 = arith.constant 0.000000e+00 : f32
    %51 = vector.broadcast %cst_43 : f32 to vector<18x32xf32>
    %52 = arith.select %35, %28, %51 : vector<18x32xi1>, vector<18x32xf32>
    %cst_44 = arith.constant dense<0.000000e+00> : vector<18x32xf32>
    %53 = tpu.matmul %50, %52, %cst_44 {dimension_numbers = #tpu.dot_dimension_numbers<[1], [0], [0], [1], [0, 0, 1, 1], [], []>} : vector<18x18xf32>, vector<18x32xf32>, vector<18x32xf32> -> vector<18x32xf32>
    %54 = arith.addf %30, %53 : vector<18x32xf32>
    %c8_i32_45 = arith.constant 8 : i32
    %55 = vector.broadcast %c8_i32_45 : i32 to vector<18x32xi32>
    %56 = arith.cmpi sge, %29, %55 : vector<18x32xi32>
    %c16_i32 = arith.constant 16 : i32
    %57 = vector.broadcast %c16_i32 : i32 to vector<18x32xi32>
    %58 = arith.cmpi slt, %29, %57 : vector<18x32xi32>
    %59 = arith.andi %56, %58 : vector<18x32xi1>
    %cst_46 = arith.constant 0.000000e+00 : f32
    %60 = vector.broadcast %cst_46 : f32 to vector<18x32xf32>
    %61 = arith.select %59, %22, %60 : vector<18x32xi1>, vector<18x32xf32>
    %cst_47 = arith.constant 0.353553385 : f32
    %62 = vector.broadcast %cst_47 : f32 to vector<18x32xf32>
    %63 = arith.mulf %61, %62 : vector<18x32xf32>
    %cst_48 = arith.constant dense<0.000000e+00> : vector<18x18xf32>
    %64 = tpu.matmul %63, %25, %cst_48 {dimension_numbers = #tpu.dot_dimension_numbers<[1], [1], [0], [0], [0, 0, 1, 0], [], []>} : vector<18x32xf32>, vector<18x32xf32>, vector<18x18xf32> -> vector<18x18xf32>
    %65 = arith.addf %64, %1 : vector<18x18xf32>
    %cst_49 = arith.constant dense<0xFF800000> : vector<18xf32>
    %66 = vector.multi_reduction <maximumf>, %65, %cst_49 [1] : vector<18x18xf32> to vector<18xf32>
    %67 = vector.shape_cast %66 : vector<18xf32> to vector<18x1xf32>
    %68 = vector.broadcast %67 : vector<18x1xf32> to vector<18x18xf32>
    %69 = arith.subf %65, %68 : vector<18x18xf32>
    %70 = math.exp %69 : vector<18x18xf32>
    %cst_50 = arith.constant dense<0.000000e+00> : vector<18xf32>
    %71 = vector.multi_reduction <add>, %70, %cst_50 [1] : vector<18x18xf32> to vector<18xf32>
    %72 = vector.shape_cast %71 : vector<18xf32> to vector<18x1xf32>
    %73 = vector.broadcast %72 : vector<18x1xf32> to vector<18x18xf32>
    %74 = arith.divf %70, %73 : vector<18x18xf32>
    %cst_51 = arith.constant 0.000000e+00 : f32
    %75 = vector.broadcast %cst_51 : f32 to vector<18x32xf32>
    %76 = arith.select %59, %28, %75 : vector<18x32xi1>, vector<18x32xf32>
    %cst_52 = arith.constant dense<0.000000e+00> : vector<18x32xf32>
    %77 = tpu.matmul %74, %76, %cst_52 {dimension_numbers = #tpu.dot_dimension_numbers<[1], [0], [0], [1], [0, 0, 1, 1], [], []>} : vector<18x18xf32>, vector<18x32xf32>, vector<18x32xf32> -> vector<18x32xf32>
    %78 = arith.addf %54, %77 : vector<18x32xf32>
    %c16_i32_53 = arith.constant 16 : i32
    %79 = vector.broadcast %c16_i32_53 : i32 to vector<18x32xi32>
    %80 = arith.cmpi sge, %29, %79 : vector<18x32xi32>
    %c24_i32 = arith.constant 24 : i32
    %81 = vector.broadcast %c24_i32 : i32 to vector<18x32xi32>
    %82 = arith.cmpi slt, %29, %81 : vector<18x32xi32>
    %83 = arith.andi %80, %82 : vector<18x32xi1>
    %cst_54 = arith.constant 0.000000e+00 : f32
    %84 = vector.broadcast %cst_54 : f32 to vector<18x32xf32>
    %85 = arith.select %83, %22, %84 : vector<18x32xi1>, vector<18x32xf32>
    %cst_55 = arith.constant 0.353553385 : f32
    %86 = vector.broadcast %cst_55 : f32 to vector<18x32xf32>
    %87 = arith.mulf %85, %86 : vector<18x32xf32>
    %cst_56 = arith.constant dense<0.000000e+00> : vector<18x18xf32>
    %88 = tpu.matmul %87, %25, %cst_56 {dimension_numbers = #tpu.dot_dimension_numbers<[1], [1], [0], [0], [0, 0, 1, 0], [], []>} : vector<18x32xf32>, vector<18x32xf32>, vector<18x18xf32> -> vector<18x18xf32>
    %89 = arith.addf %88, %1 : vector<18x18xf32>
    %cst_57 = arith.constant dense<0xFF800000> : vector<18xf32>
    %90 = vector.multi_reduction <maximumf>, %89, %cst_57 [1] : vector<18x18xf32> to vector<18xf32>
    %91 = vector.shape_cast %90 : vector<18xf32> to vector<18x1xf32>
    %92 = vector.broadcast %91 : vector<18x1xf32> to vector<18x18xf32>
    %93 = arith.subf %89, %92 : vector<18x18xf32>
    %94 = math.exp %93 : vector<18x18xf32>
    %cst_58 = arith.constant dense<0.000000e+00> : vector<18xf32>
    %95 = vector.multi_reduction <add>, %94, %cst_58 [1] : vector<18x18xf32> to vector<18xf32>
    %96 = vector.shape_cast %95 : vector<18xf32> to vector<18x1xf32>
    %97 = vector.broadcast %96 : vector<18x1xf32> to vector<18x18xf32>
    %98 = arith.divf %94, %97 : vector<18x18xf32>
    %cst_59 = arith.constant 0.000000e+00 : f32
    %99 = vector.broadcast %cst_59 : f32 to vector<18x32xf32>
    %100 = arith.select %83, %28, %99 : vector<18x32xi1>, vector<18x32xf32>
    %cst_60 = arith.constant dense<0.000000e+00> : vector<18x32xf32>
    %101 = tpu.matmul %98, %100, %cst_60 {dimension_numbers = #tpu.dot_dimension_numbers<[1], [0], [0], [1], [0, 0, 1, 1], [], []>} : vector<18x18xf32>, vector<18x32xf32>, vector<18x32xf32> -> vector<18x32xf32>
    %102 = arith.addf %78, %101 : vector<18x32xf32>
    %c24_i32_61 = arith.constant 24 : i32
    %103 = vector.broadcast %c24_i32_61 : i32 to vector<18x32xi32>
    %104 = arith.cmpi sge, %29, %103 : vector<18x32xi32>
    %c32_i32 = arith.constant 32 : i32
    %105 = vector.broadcast %c32_i32 : i32 to vector<18x32xi32>
    %106 = arith.cmpi slt, %29, %105 : vector<18x32xi32>
    %107 = arith.andi %104, %106 : vector<18x32xi1>
    %cst_62 = arith.constant 0.000000e+00 : f32
    %108 = vector.broadcast %cst_62 : f32 to vector<18x32xf32>
    %109 = arith.select %107, %22, %108 : vector<18x32xi1>, vector<18x32xf32>
    %cst_63 = arith.constant 0.353553385 : f32
    %110 = vector.broadcast %cst_63 : f32 to vector<18x32xf32>
    %111 = arith.mulf %109, %110 : vector<18x32xf32>
    %cst_64 = arith.constant dense<0.000000e+00> : vector<18x18xf32>
    %112 = tpu.matmul %111, %25, %cst_64 {dimension_numbers = #tpu.dot_dimension_numbers<[1], [1], [0], [0], [0, 0, 1, 0], [], []>} : vector<18x32xf32>, vector<18x32xf32>, vector<18x18xf32> -> vector<18x18xf32>
    %113 = arith.addf %112, %1 : vector<18x18xf32>
    %cst_65 = arith.constant dense<0xFF800000> : vector<18xf32>
    %114 = vector.multi_reduction <maximumf>, %113, %cst_65 [1] : vector<18x18xf32> to vector<18xf32>
    %115 = vector.shape_cast %114 : vector<18xf32> to vector<18x1xf32>
    %116 = vector.broadcast %115 : vector<18x1xf32> to vector<18x18xf32>
    %117 = arith.subf %113, %116 : vector<18x18xf32>
    %118 = math.exp %117 : vector<18x18xf32>
    %cst_66 = arith.constant dense<0.000000e+00> : vector<18xf32>
    %119 = vector.multi_reduction <add>, %118, %cst_66 [1] : vector<18x18xf32> to vector<18xf32>
    %120 = vector.shape_cast %119 : vector<18xf32> to vector<18x1xf32>
    %121 = vector.broadcast %120 : vector<18x1xf32> to vector<18x18xf32>
    %122 = arith.divf %118, %121 : vector<18x18xf32>
    %cst_67 = arith.constant 0.000000e+00 : f32
    %123 = vector.broadcast %cst_67 : f32 to vector<18x32xf32>
    %124 = arith.select %107, %28, %123 : vector<18x32xi1>, vector<18x32xf32>
    %cst_68 = arith.constant dense<0.000000e+00> : vector<18x32xf32>
    %125 = tpu.matmul %122, %124, %cst_68 {dimension_numbers = #tpu.dot_dimension_numbers<[1], [0], [0], [1], [0, 0, 1, 1], [], []>} : vector<18x18xf32>, vector<18x32xf32>, vector<18x32xf32> -> vector<18x32xf32>
    %126 = arith.addf %102, %125 : vector<18x32xf32>
    %cst_69 = arith.constant dense<0.000000e+00> : vector<18x32xf32>
    %127 = tpu.matmul %126, %8, %cst_69 {dimension_numbers = #tpu.dot_dimension_numbers<[1], [0], [0], [1], [0, 0, 1, 1], [], []>} : vector<18x32xf32>, vector<32x32xf32>, vector<18x32xf32> -> vector<18x32xf32>
    %128 = vector.broadcast %9 : vector<1x32xf32> to vector<18x32xf32>
    %129 = arith.addf %127, %128 : vector<18x32xf32>
    %130 = arith.addf %0, %129 : vector<18x32xf32>
    %cst_70 = arith.constant dense<0.000000e+00> : vector<18xf32>
    %131 = vector.multi_reduction <add>, %130, %cst_70 [1] : vector<18x32xf32> to vector<18xf32>
    %132 = vector.shape_cast %131 : vector<18xf32> to vector<18x1xf32>
    %cst_71 = arith.constant 3.200000e+01 : f32
    %133 = vector.broadcast %cst_71 : f32 to vector<18x1xf32>
    %134 = arith.divf %132, %133 : vector<18x1xf32>
    %135 = vector.broadcast %134 : vector<18x1xf32> to vector<18x32xf32>
    %136 = arith.subf %130, %135 : vector<18x32xf32>
    %137 = arith.mulf %136, %136 : vector<18x32xf32>
    %cst_72 = arith.constant dense<0.000000e+00> : vector<18xf32>
    %138 = vector.multi_reduction <add>, %137, %cst_72 [1] : vector<18x32xf32> to vector<18xf32>
    %139 = vector.shape_cast %138 : vector<18xf32> to vector<18x1xf32>
    %cst_73 = arith.constant 3.200000e+01 : f32
    %140 = vector.broadcast %cst_73 : f32 to vector<18x1xf32>
    %141 = arith.divf %139, %140 : vector<18x1xf32>
    %cst_74 = arith.constant 9.99999974E-6 : f32
    %142 = vector.broadcast %cst_74 : f32 to vector<18x1xf32>
    %143 = arith.addf %141, %142 : vector<18x1xf32>
    %144 = math.rsqrt %143 : vector<18x1xf32>
    %145 = vector.broadcast %144 : vector<18x1xf32> to vector<18x32xf32>
    %146 = arith.mulf %136, %145 : vector<18x32xf32>
    %147 = vector.broadcast %10 : vector<1x32xf32> to vector<18x32xf32>
    %148 = arith.mulf %146, %147 : vector<18x32xf32>
    %149 = vector.broadcast %11 : vector<1x32xf32> to vector<18x32xf32>
    %150 = arith.addf %148, %149 : vector<18x32xf32>
    %cst_75 = arith.constant dense<0.000000e+00> : vector<18x2048xf32>
    %151 = tpu.matmul %150, %18, %cst_75 {dimension_numbers = #tpu.dot_dimension_numbers<[1], [0], [0], [1], [0, 0, 1, 1], [], []>} : vector<18x32xf32>, vector<32x2048xf32>, vector<18x2048xf32> -> vector<18x2048xf32>
    %152 = vector.broadcast %13 : vector<1x2048xf32> to vector<18x2048xf32>
    %153 = arith.addf %151, %152 : vector<18x2048xf32>
    %cst_76 = arith.constant 0.000000e+00 : f32
    %154 = vector.broadcast %cst_76 : f32 to vector<18x2048xf32>
    %155 = arith.maximumf %153, %154 : vector<18x2048xf32>
    %cst_77 = arith.constant dense<0.000000e+00> : vector<18x32xf32>
    %156 = tpu.matmul %155, %19, %cst_77 {dimension_numbers = #tpu.dot_dimension_numbers<[1], [0], [0], [1], [0, 0, 1, 1], [], []>} : vector<18x2048xf32>, vector<2048x32xf32>, vector<18x32xf32> -> vector<18x32xf32>
    %157 = vector.broadcast %15 : vector<1x32xf32> to vector<18x32xf32>
    %158 = arith.addf %156, %157 : vector<18x32xf32>
    %159 = arith.addf %150, %158 : vector<18x32xf32>
    %cst_78 = arith.constant dense<0.000000e+00> : vector<18xf32>
    %160 = vector.multi_reduction <add>, %159, %cst_78 [1] : vector<18x32xf32> to vector<18xf32>
    %161 = vector.shape_cast %160 : vector<18xf32> to vector<18x1xf32>
    %cst_79 = arith.constant 3.200000e+01 : f32
    %162 = vector.broadcast %cst_79 : f32 to vector<18x1xf32>
    %163 = arith.divf %161, %162 : vector<18x1xf32>
    %164 = vector.broadcast %163 : vector<18x1xf32> to vector<18x32xf32>
    %165 = arith.subf %159, %164 : vector<18x32xf32>
    %166 = arith.mulf %165, %165 : vector<18x32xf32>
    %cst_80 = arith.constant dense<0.000000e+00> : vector<18xf32>
    %167 = vector.multi_reduction <add>, %166, %cst_80 [1] : vector<18x32xf32> to vector<18xf32>
    %168 = vector.shape_cast %167 : vector<18xf32> to vector<18x1xf32>
    %cst_81 = arith.constant 3.200000e+01 : f32
    %169 = vector.broadcast %cst_81 : f32 to vector<18x1xf32>
    %170 = arith.divf %168, %169 : vector<18x1xf32>
    %cst_82 = arith.constant 9.99999974E-6 : f32
    %171 = vector.broadcast %cst_82 : f32 to vector<18x1xf32>
    %172 = arith.addf %170, %171 : vector<18x1xf32>
    %173 = math.rsqrt %172 : vector<18x1xf32>
    %174 = vector.broadcast %173 : vector<18x1xf32> to vector<18x32xf32>
    %175 = arith.mulf %165, %174 : vector<18x32xf32>
    %176 = vector.broadcast %16 : vector<1x32xf32> to vector<18x32xf32>
    %177 = arith.mulf %175, %176 : vector<18x32xf32>
    %178 = vector.broadcast %17 : vector<1x32xf32> to vector<18x32xf32>
    %179 = arith.addf %177, %178 : vector<18x32xf32>
    %c0_83 = arith.constant 0 : index
    %c0_84 = arith.constant 0 : index
    %180 = vector.load %arg19[%c0_83, %c0_84] : memref<32x32xf32, #tpu.memory_space<vmem>>, vector<32x32xf32>
    %c0_85 = arith.constant 0 : index
    %c0_86 = arith.constant 0 : index
    %181 = vector.load %arg20[%c0_85, %c0_86] : memref<1x32xf32, #tpu.memory_space<vmem>>, vector<1x32xf32>
    %c0_87 = arith.constant 0 : index
    %c0_88 = arith.constant 0 : index
    %182 = vector.load %arg21[%c0_87, %c0_88] : memref<32x32xf32, #tpu.memory_space<vmem>>, vector<32x32xf32>
    %c0_89 = arith.constant 0 : index
    %c0_90 = arith.constant 0 : index
    %183 = vector.load %arg22[%c0_89, %c0_90] : memref<1x32xf32, #tpu.memory_space<vmem>>, vector<1x32xf32>
    %c0_91 = arith.constant 0 : index
    %c0_92 = arith.constant 0 : index
    %184 = vector.load %arg23[%c0_91, %c0_92] : memref<32x32xf32, #tpu.memory_space<vmem>>, vector<32x32xf32>
    %c0_93 = arith.constant 0 : index
    %c0_94 = arith.constant 0 : index
    %185 = vector.load %arg24[%c0_93, %c0_94] : memref<1x32xf32, #tpu.memory_space<vmem>>, vector<1x32xf32>
    %c0_95 = arith.constant 0 : index
    %c0_96 = arith.constant 0 : index
    %186 = vector.load %arg25[%c0_95, %c0_96] : memref<32x32xf32, #tpu.memory_space<vmem>>, vector<32x32xf32>
    %c0_97 = arith.constant 0 : index
    %c0_98 = arith.constant 0 : index
    %187 = vector.load %arg26[%c0_97, %c0_98] : memref<1x32xf32, #tpu.memory_space<vmem>>, vector<1x32xf32>
    %c0_99 = arith.constant 0 : index
    %c0_100 = arith.constant 0 : index
    %188 = vector.load %arg27[%c0_99, %c0_100] : memref<1x32xf32, #tpu.memory_space<vmem>>, vector<1x32xf32>
    %c0_101 = arith.constant 0 : index
    %c0_102 = arith.constant 0 : index
    %189 = vector.load %arg28[%c0_101, %c0_102] : memref<1x32xf32, #tpu.memory_space<vmem>>, vector<1x32xf32>
    %c0_103 = arith.constant 0 : index
    %c0_104 = arith.constant 0 : index
    %190 = vector.load %arg29[%c0_103, %c0_104] : memref<32x2048xbf16, #tpu.memory_space<vmem>>, vector<32x2048xbf16>
    %c0_105 = arith.constant 0 : index
    %c0_106 = arith.constant 0 : index
    %191 = vector.load %arg30[%c0_105, %c0_106] : memref<1x2048xf32, #tpu.memory_space<vmem>>, vector<1x2048xf32>
    %c0_107 = arith.constant 0 : index
    %c0_108 = arith.constant 0 : index
    %192 = vector.load %arg31[%c0_107, %c0_108] : memref<2048x32xbf16, #tpu.memory_space<vmem>>, vector<2048x32xbf16>
    %c0_109 = arith.constant 0 : index
    %c0_110 = arith.constant 0 : index
    %193 = vector.load %arg32[%c0_109, %c0_110] : memref<1x32xf32, #tpu.memory_space<vmem>>, vector<1x32xf32>
    %c0_111 = arith.constant 0 : index
    %c0_112 = arith.constant 0 : index
    %194 = vector.load %arg33[%c0_111, %c0_112] : memref<1x32xf32, #tpu.memory_space<vmem>>, vector<1x32xf32>
    %c0_113 = arith.constant 0 : index
    %c0_114 = arith.constant 0 : index
    %195 = vector.load %arg34[%c0_113, %c0_114] : memref<1x32xf32, #tpu.memory_space<vmem>>, vector<1x32xf32>
    %196 = arith.extf %190 : vector<32x2048xbf16> to vector<32x2048xf32>
    %197 = arith.extf %192 : vector<2048x32xbf16> to vector<2048x32xf32>
    %cst_115 = arith.constant dense<0.000000e+00> : vector<18x32xf32>
    %198 = tpu.matmul %179, %180, %cst_115 {dimension_numbers = #tpu.dot_dimension_numbers<[1], [0], [0], [1], [0, 0, 1, 1], [], []>} : vector<18x32xf32>, vector<32x32xf32>, vector<18x32xf32> -> vector<18x32xf32>
    %199 = vector.broadcast %181 : vector<1x32xf32> to vector<18x32xf32>
    %200 = arith.addf %198, %199 : vector<18x32xf32>
    %cst_116 = arith.constant dense<0.000000e+00> : vector<18x32xf32>
    %201 = tpu.matmul %179, %182, %cst_116 {dimension_numbers = #tpu.dot_dimension_numbers<[1], [0], [0], [1], [0, 0, 1, 1], [], []>} : vector<18x32xf32>, vector<32x32xf32>, vector<18x32xf32> -> vector<18x32xf32>
    %202 = vector.broadcast %183 : vector<1x32xf32> to vector<18x32xf32>
    %203 = arith.addf %201, %202 : vector<18x32xf32>
    %cst_117 = arith.constant dense<0.000000e+00> : vector<18x32xf32>
    %204 = tpu.matmul %179, %184, %cst_117 {dimension_numbers = #tpu.dot_dimension_numbers<[1], [0], [0], [1], [0, 0, 1, 1], [], []>} : vector<18x32xf32>, vector<32x32xf32>, vector<18x32xf32> -> vector<18x32xf32>
    %205 = vector.broadcast %185 : vector<1x32xf32> to vector<18x32xf32>
    %206 = arith.addf %204, %205 : vector<18x32xf32>
    %207 = tpu.iota {dimensions = array<i32: 1>} : vector<18x32xi32>
    %cst_118 = arith.constant 0.000000e+00 : f32
    %208 = vector.broadcast %cst_118 : f32 to vector<18x32xf32>
    %c0_i32_119 = arith.constant 0 : i32
    %209 = vector.broadcast %c0_i32_119 : i32 to vector<18x32xi32>
    %210 = arith.cmpi sge, %207, %209 : vector<18x32xi32>
    %c8_i32_120 = arith.constant 8 : i32
    %211 = vector.broadcast %c8_i32_120 : i32 to vector<18x32xi32>
    %212 = arith.cmpi slt, %207, %211 : vector<18x32xi32>
    %213 = arith.andi %210, %212 : vector<18x32xi1>
    %cst_121 = arith.constant 0.000000e+00 : f32
    %214 = vector.broadcast %cst_121 : f32 to vector<18x32xf32>
    %215 = arith.select %213, %200, %214 : vector<18x32xi1>, vector<18x32xf32>
    %cst_122 = arith.constant 0.353553385 : f32
    %216 = vector.broadcast %cst_122 : f32 to vector<18x32xf32>
    %217 = arith.mulf %215, %216 : vector<18x32xf32>
    %cst_123 = arith.constant dense<0.000000e+00> : vector<18x18xf32>
    %218 = tpu.matmul %217, %203, %cst_123 {dimension_numbers = #tpu.dot_dimension_numbers<[1], [1], [0], [0], [0, 0, 1, 0], [], []>} : vector<18x32xf32>, vector<18x32xf32>, vector<18x18xf32> -> vector<18x18xf32>
    %219 = arith.addf %218, %1 : vector<18x18xf32>
    %cst_124 = arith.constant dense<0xFF800000> : vector<18xf32>
    %220 = vector.multi_reduction <maximumf>, %219, %cst_124 [1] : vector<18x18xf32> to vector<18xf32>
    %221 = vector.shape_cast %220 : vector<18xf32> to vector<18x1xf32>
    %222 = vector.broadcast %221 : vector<18x1xf32> to vector<18x18xf32>
    %223 = arith.subf %219, %222 : vector<18x18xf32>
    %224 = math.exp %223 : vector<18x18xf32>
    %cst_125 = arith.constant dense<0.000000e+00> : vector<18xf32>
    %225 = vector.multi_reduction <add>, %224, %cst_125 [1] : vector<18x18xf32> to vector<18xf32>
    %226 = vector.shape_cast %225 : vector<18xf32> to vector<18x1xf32>
    %227 = vector.broadcast %226 : vector<18x1xf32> to vector<18x18xf32>
    %228 = arith.divf %224, %227 : vector<18x18xf32>
    %cst_126 = arith.constant 0.000000e+00 : f32
    %229 = vector.broadcast %cst_126 : f32 to vector<18x32xf32>
    %230 = arith.select %213, %206, %229 : vector<18x32xi1>, vector<18x32xf32>
    %cst_127 = arith.constant dense<0.000000e+00> : vector<18x32xf32>
    %231 = tpu.matmul %228, %230, %cst_127 {dimension_numbers = #tpu.dot_dimension_numbers<[1], [0], [0], [1], [0, 0, 1, 1], [], []>} : vector<18x18xf32>, vector<18x32xf32>, vector<18x32xf32> -> vector<18x32xf32>
    %232 = arith.addf %208, %231 : vector<18x32xf32>
    %c8_i32_128 = arith.constant 8 : i32
    %233 = vector.broadcast %c8_i32_128 : i32 to vector<18x32xi32>
    %234 = arith.cmpi sge, %207, %233 : vector<18x32xi32>
    %c16_i32_129 = arith.constant 16 : i32
    %235 = vector.broadcast %c16_i32_129 : i32 to vector<18x32xi32>
    %236 = arith.cmpi slt, %207, %235 : vector<18x32xi32>
    %237 = arith.andi %234, %236 : vector<18x32xi1>
    %cst_130 = arith.constant 0.000000e+00 : f32
    %238 = vector.broadcast %cst_130 : f32 to vector<18x32xf32>
    %239 = arith.select %237, %200, %238 : vector<18x32xi1>, vector<18x32xf32>
    %cst_131 = arith.constant 0.353553385 : f32
    %240 = vector.broadcast %cst_131 : f32 to vector<18x32xf32>
    %241 = arith.mulf %239, %240 : vector<18x32xf32>
    %cst_132 = arith.constant dense<0.000000e+00> : vector<18x18xf32>
    %242 = tpu.matmul %241, %203, %cst_132 {dimension_numbers = #tpu.dot_dimension_numbers<[1], [1], [0], [0], [0, 0, 1, 0], [], []>} : vector<18x32xf32>, vector<18x32xf32>, vector<18x18xf32> -> vector<18x18xf32>
    %243 = arith.addf %242, %1 : vector<18x18xf32>
    %cst_133 = arith.constant dense<0xFF800000> : vector<18xf32>
    %244 = vector.multi_reduction <maximumf>, %243, %cst_133 [1] : vector<18x18xf32> to vector<18xf32>
    %245 = vector.shape_cast %244 : vector<18xf32> to vector<18x1xf32>
    %246 = vector.broadcast %245 : vector<18x1xf32> to vector<18x18xf32>
    %247 = arith.subf %243, %246 : vector<18x18xf32>
    %248 = math.exp %247 : vector<18x18xf32>
    %cst_134 = arith.constant dense<0.000000e+00> : vector<18xf32>
    %249 = vector.multi_reduction <add>, %248, %cst_134 [1] : vector<18x18xf32> to vector<18xf32>
    %250 = vector.shape_cast %249 : vector<18xf32> to vector<18x1xf32>
    %251 = vector.broadcast %250 : vector<18x1xf32> to vector<18x18xf32>
    %252 = arith.divf %248, %251 : vector<18x18xf32>
    %cst_135 = arith.constant 0.000000e+00 : f32
    %253 = vector.broadcast %cst_135 : f32 to vector<18x32xf32>
    %254 = arith.select %237, %206, %253 : vector<18x32xi1>, vector<18x32xf32>
    %cst_136 = arith.constant dense<0.000000e+00> : vector<18x32xf32>
    %255 = tpu.matmul %252, %254, %cst_136 {dimension_numbers = #tpu.dot_dimension_numbers<[1], [0], [0], [1], [0, 0, 1, 1], [], []>} : vector<18x18xf32>, vector<18x32xf32>, vector<18x32xf32> -> vector<18x32xf32>
    %256 = arith.addf %232, %255 : vector<18x32xf32>
    %c16_i32_137 = arith.constant 16 : i32
    %257 = vector.broadcast %c16_i32_137 : i32 to vector<18x32xi32>
    %258 = arith.cmpi sge, %207, %257 : vector<18x32xi32>
    %c24_i32_138 = arith.constant 24 : i32
    %259 = vector.broadcast %c24_i32_138 : i32 to vector<18x32xi32>
    %260 = arith.cmpi slt, %207, %259 : vector<18x32xi32>
    %261 = arith.andi %258, %260 : vector<18x32xi1>
    %cst_139 = arith.constant 0.000000e+00 : f32
    %262 = vector.broadcast %cst_139 : f32 to vector<18x32xf32>
    %263 = arith.select %261, %200, %262 : vector<18x32xi1>, vector<18x32xf32>
    %cst_140 = arith.constant 0.353553385 : f32
    %264 = vector.broadcast %cst_140 : f32 to vector<18x32xf32>
    %265 = arith.mulf %263, %264 : vector<18x32xf32>
    %cst_141 = arith.constant dense<0.000000e+00> : vector<18x18xf32>
    %266 = tpu.matmul %265, %203, %cst_141 {dimension_numbers = #tpu.dot_dimension_numbers<[1], [1], [0], [0], [0, 0, 1, 0], [], []>} : vector<18x32xf32>, vector<18x32xf32>, vector<18x18xf32> -> vector<18x18xf32>
    %267 = arith.addf %266, %1 : vector<18x18xf32>
    %cst_142 = arith.constant dense<0xFF800000> : vector<18xf32>
    %268 = vector.multi_reduction <maximumf>, %267, %cst_142 [1] : vector<18x18xf32> to vector<18xf32>
    %269 = vector.shape_cast %268 : vector<18xf32> to vector<18x1xf32>
    %270 = vector.broadcast %269 : vector<18x1xf32> to vector<18x18xf32>
    %271 = arith.subf %267, %270 : vector<18x18xf32>
    %272 = math.exp %271 : vector<18x18xf32>
    %cst_143 = arith.constant dense<0.000000e+00> : vector<18xf32>
    %273 = vector.multi_reduction <add>, %272, %cst_143 [1] : vector<18x18xf32> to vector<18xf32>
    %274 = vector.shape_cast %273 : vector<18xf32> to vector<18x1xf32>
    %275 = vector.broadcast %274 : vector<18x1xf32> to vector<18x18xf32>
    %276 = arith.divf %272, %275 : vector<18x18xf32>
    %cst_144 = arith.constant 0.000000e+00 : f32
    %277 = vector.broadcast %cst_144 : f32 to vector<18x32xf32>
    %278 = arith.select %261, %206, %277 : vector<18x32xi1>, vector<18x32xf32>
    %cst_145 = arith.constant dense<0.000000e+00> : vector<18x32xf32>
    %279 = tpu.matmul %276, %278, %cst_145 {dimension_numbers = #tpu.dot_dimension_numbers<[1], [0], [0], [1], [0, 0, 1, 1], [], []>} : vector<18x18xf32>, vector<18x32xf32>, vector<18x32xf32> -> vector<18x32xf32>
    %280 = arith.addf %256, %279 : vector<18x32xf32>
    %c24_i32_146 = arith.constant 24 : i32
    %281 = vector.broadcast %c24_i32_146 : i32 to vector<18x32xi32>
    %282 = arith.cmpi sge, %207, %281 : vector<18x32xi32>
    %c32_i32_147 = arith.constant 32 : i32
    %283 = vector.broadcast %c32_i32_147 : i32 to vector<18x32xi32>
    %284 = arith.cmpi slt, %207, %283 : vector<18x32xi32>
    %285 = arith.andi %282, %284 : vector<18x32xi1>
    %cst_148 = arith.constant 0.000000e+00 : f32
    %286 = vector.broadcast %cst_148 : f32 to vector<18x32xf32>
    %287 = arith.select %285, %200, %286 : vector<18x32xi1>, vector<18x32xf32>
    %cst_149 = arith.constant 0.353553385 : f32
    %288 = vector.broadcast %cst_149 : f32 to vector<18x32xf32>
    %289 = arith.mulf %287, %288 : vector<18x32xf32>
    %cst_150 = arith.constant dense<0.000000e+00> : vector<18x18xf32>
    %290 = tpu.matmul %289, %203, %cst_150 {dimension_numbers = #tpu.dot_dimension_numbers<[1], [1], [0], [0], [0, 0, 1, 0], [], []>} : vector<18x32xf32>, vector<18x32xf32>, vector<18x18xf32> -> vector<18x18xf32>
    %291 = arith.addf %290, %1 : vector<18x18xf32>
    %cst_151 = arith.constant dense<0xFF800000> : vector<18xf32>
    %292 = vector.multi_reduction <maximumf>, %291, %cst_151 [1] : vector<18x18xf32> to vector<18xf32>
    %293 = vector.shape_cast %292 : vector<18xf32> to vector<18x1xf32>
    %294 = vector.broadcast %293 : vector<18x1xf32> to vector<18x18xf32>
    %295 = arith.subf %291, %294 : vector<18x18xf32>
    %296 = math.exp %295 : vector<18x18xf32>
    %cst_152 = arith.constant dense<0.000000e+00> : vector<18xf32>
    %297 = vector.multi_reduction <add>, %296, %cst_152 [1] : vector<18x18xf32> to vector<18xf32>
    %298 = vector.shape_cast %297 : vector<18xf32> to vector<18x1xf32>
    %299 = vector.broadcast %298 : vector<18x1xf32> to vector<18x18xf32>
    %300 = arith.divf %296, %299 : vector<18x18xf32>
    %cst_153 = arith.constant 0.000000e+00 : f32
    %301 = vector.broadcast %cst_153 : f32 to vector<18x32xf32>
    %302 = arith.select %285, %206, %301 : vector<18x32xi1>, vector<18x32xf32>
    %cst_154 = arith.constant dense<0.000000e+00> : vector<18x32xf32>
    %303 = tpu.matmul %300, %302, %cst_154 {dimension_numbers = #tpu.dot_dimension_numbers<[1], [0], [0], [1], [0, 0, 1, 1], [], []>} : vector<18x18xf32>, vector<18x32xf32>, vector<18x32xf32> -> vector<18x32xf32>
    %304 = arith.addf %280, %303 : vector<18x32xf32>
    %cst_155 = arith.constant dense<0.000000e+00> : vector<18x32xf32>
    %305 = tpu.matmul %304, %186, %cst_155 {dimension_numbers = #tpu.dot_dimension_numbers<[1], [0], [0], [1], [0, 0, 1, 1], [], []>} : vector<18x32xf32>, vector<32x32xf32>, vector<18x32xf32> -> vector<18x32xf32>
    %306 = vector.broadcast %187 : vector<1x32xf32> to vector<18x32xf32>
    %307 = arith.addf %305, %306 : vector<18x32xf32>
    %308 = arith.addf %179, %307 : vector<18x32xf32>
    %cst_156 = arith.constant dense<0.000000e+00> : vector<18xf32>
    %309 = vector.multi_reduction <add>, %308, %cst_156 [1] : vector<18x32xf32> to vector<18xf32>
    %310 = vector.shape_cast %309 : vector<18xf32> to vector<18x1xf32>
    %cst_157 = arith.constant 3.200000e+01 : f32
    %311 = vector.broadcast %cst_157 : f32 to vector<18x1xf32>
    %312 = arith.divf %310, %311 : vector<18x1xf32>
    %313 = vector.broadcast %312 : vector<18x1xf32> to vector<18x32xf32>
    %314 = arith.subf %308, %313 : vector<18x32xf32>
    %315 = arith.mulf %314, %314 : vector<18x32xf32>
    %cst_158 = arith.constant dense<0.000000e+00> : vector<18xf32>
    %316 = vector.multi_reduction <add>, %315, %cst_158 [1] : vector<18x32xf32> to vector<18xf32>
    %317 = vector.shape_cast %316 : vector<18xf32> to vector<18x1xf32>
    %cst_159 = arith.constant 3.200000e+01 : f32
    %318 = vector.broadcast %cst_159 : f32 to vector<18x1xf32>
    %319 = arith.divf %317, %318 : vector<18x1xf32>
    %cst_160 = arith.constant 9.99999974E-6 : f32
    %320 = vector.broadcast %cst_160 : f32 to vector<18x1xf32>
    %321 = arith.addf %319, %320 : vector<18x1xf32>
    %322 = math.rsqrt %321 : vector<18x1xf32>
    %323 = vector.broadcast %322 : vector<18x1xf32> to vector<18x32xf32>
    %324 = arith.mulf %314, %323 : vector<18x32xf32>
    %325 = vector.broadcast %188 : vector<1x32xf32> to vector<18x32xf32>
    %326 = arith.mulf %324, %325 : vector<18x32xf32>
    %327 = vector.broadcast %189 : vector<1x32xf32> to vector<18x32xf32>
    %328 = arith.addf %326, %327 : vector<18x32xf32>
    %cst_161 = arith.constant dense<0.000000e+00> : vector<18x2048xf32>
    %329 = tpu.matmul %328, %196, %cst_161 {dimension_numbers = #tpu.dot_dimension_numbers<[1], [0], [0], [1], [0, 0, 1, 1], [], []>} : vector<18x32xf32>, vector<32x2048xf32>, vector<18x2048xf32> -> vector<18x2048xf32>
    %330 = vector.broadcast %191 : vector<1x2048xf32> to vector<18x2048xf32>
    %331 = arith.addf %329, %330 : vector<18x2048xf32>
    %cst_162 = arith.constant 0.000000e+00 : f32
    %332 = vector.broadcast %cst_162 : f32 to vector<18x2048xf32>
    %333 = arith.maximumf %331, %332 : vector<18x2048xf32>
    %cst_163 = arith.constant dense<0.000000e+00> : vector<18x32xf32>
    %334 = tpu.matmul %333, %197, %cst_163 {dimension_numbers = #tpu.dot_dimension_numbers<[1], [0], [0], [1], [0, 0, 1, 1], [], []>} : vector<18x2048xf32>, vector<2048x32xf32>, vector<18x32xf32> -> vector<18x32xf32>
    %335 = vector.broadcast %193 : vector<1x32xf32> to vector<18x32xf32>
    %336 = arith.addf %334, %335 : vector<18x32xf32>
    %337 = arith.addf %328, %336 : vector<18x32xf32>
    %cst_164 = arith.constant dense<0.000000e+00> : vector<18xf32>
    %338 = vector.multi_reduction <add>, %337, %cst_164 [1] : vector<18x32xf32> to vector<18xf32>
    %339 = vector.shape_cast %338 : vector<18xf32> to vector<18x1xf32>
    %cst_165 = arith.constant 3.200000e+01 : f32
    %340 = vector.broadcast %cst_165 : f32 to vector<18x1xf32>
    %341 = arith.divf %339, %340 : vector<18x1xf32>
    %342 = vector.broadcast %341 : vector<18x1xf32> to vector<18x32xf32>
    %343 = arith.subf %337, %342 : vector<18x32xf32>
    %344 = arith.mulf %343, %343 : vector<18x32xf32>
    %cst_166 = arith.constant dense<0.000000e+00> : vector<18xf32>
    %345 = vector.multi_reduction <add>, %344, %cst_166 [1] : vector<18x32xf32> to vector<18xf32>
    %346 = vector.shape_cast %345 : vector<18xf32> to vector<18x1xf32>
    %cst_167 = arith.constant 3.200000e+01 : f32
    %347 = vector.broadcast %cst_167 : f32 to vector<18x1xf32>
    %348 = arith.divf %346, %347 : vector<18x1xf32>
    %cst_168 = arith.constant 9.99999974E-6 : f32
    %349 = vector.broadcast %cst_168 : f32 to vector<18x1xf32>
    %350 = arith.addf %348, %349 : vector<18x1xf32>
    %351 = math.rsqrt %350 : vector<18x1xf32>
    %352 = vector.broadcast %351 : vector<18x1xf32> to vector<18x32xf32>
    %353 = arith.mulf %343, %352 : vector<18x32xf32>
    %354 = vector.broadcast %194 : vector<1x32xf32> to vector<18x32xf32>
    %355 = arith.mulf %353, %354 : vector<18x32xf32>
    %356 = vector.broadcast %195 : vector<1x32xf32> to vector<18x32xf32>
    %357 = arith.addf %355, %356 : vector<18x32xf32>
    %c0_169 = arith.constant 0 : index
    %c0_170 = arith.constant 0 : index
    %358 = vector.load %arg35[%c0_169, %c0_170] : memref<1x32xf32, #tpu.memory_space<vmem>>, vector<1x32xf32>
    %c0_171 = arith.constant 0 : index
    %c0_172 = arith.constant 0 : index
    %359 = vector.load %arg36[%c0_171, %c0_172] : memref<1x32xf32, #tpu.memory_space<vmem>>, vector<1x32xf32>
    %c0_173 = arith.constant 0 : index
    %c0_174 = arith.constant 0 : index
    %360 = vector.load %arg37[%c0_173, %c0_174] : memref<32x64xf32, #tpu.memory_space<vmem>>, vector<32x64xf32>
    %c0_175 = arith.constant 0 : index
    %c0_176 = arith.constant 0 : index
    %361 = vector.load %arg38[%c0_175, %c0_176] : memref<1x64xf32, #tpu.memory_space<vmem>>, vector<1x64xf32>
    %c0_177 = arith.constant 0 : index
    %c0_178 = arith.constant 0 : index
    %362 = vector.load %arg39[%c0_177, %c0_178] : memref<64x128xf32, #tpu.memory_space<vmem>>, vector<64x128xf32>
    %c0_179 = arith.constant 0 : index
    %c0_180 = arith.constant 0 : index
    %363 = vector.load %arg40[%c0_179, %c0_180] : memref<1x128xf32, #tpu.memory_space<vmem>>, vector<1x128xf32>
    %c0_181 = arith.constant 0 : index
    %c0_182 = arith.constant 0 : index
    %364 = vector.load %arg41[%c0_181, %c0_182] : memref<128x32xf32, #tpu.memory_space<vmem>>, vector<128x32xf32>
    %c0_183 = arith.constant 0 : index
    %c0_184 = arith.constant 0 : index
    %365 = vector.load %arg42[%c0_183, %c0_184] : memref<1x32xf32, #tpu.memory_space<vmem>>, vector<1x32xf32>
    %c0_185 = arith.constant 0 : index
    %c0_186 = arith.constant 0 : index
    %366 = vector.load %arg43[%c0_185, %c0_186] : memref<32x64xf32, #tpu.memory_space<vmem>>, vector<32x64xf32>
    %c0_187 = arith.constant 0 : index
    %c0_188 = arith.constant 0 : index
    %367 = vector.load %arg44[%c0_187, %c0_188] : memref<1x64xf32, #tpu.memory_space<vmem>>, vector<1x64xf32>
    %c0_189 = arith.constant 0 : index
    %c0_190 = arith.constant 0 : index
    %368 = vector.load %arg45[%c0_189, %c0_190] : memref<64x128xf32, #tpu.memory_space<vmem>>, vector<64x128xf32>
    %c0_191 = arith.constant 0 : index
    %c0_192 = arith.constant 0 : index
    %369 = vector.load %arg46[%c0_191, %c0_192] : memref<1x128xf32, #tpu.memory_space<vmem>>, vector<1x128xf32>
    %c0_193 = arith.constant 0 : index
    %c0_194 = arith.constant 0 : index
    %370 = vector.load %arg47[%c0_193, %c0_194] : memref<128x32xf32, #tpu.memory_space<vmem>>, vector<128x32xf32>
    %c0_195 = arith.constant 0 : index
    %c0_196 = arith.constant 0 : index
    %371 = vector.load %arg48[%c0_195, %c0_196] : memref<1x32xf32, #tpu.memory_space<vmem>>, vector<1x32xf32>
    %c0_197 = arith.constant 0 : index
    %c0_198 = arith.constant 0 : index
    %372 = vector.load %arg49[%c0_197, %c0_198] : memref<32x5xf32, #tpu.memory_space<vmem>>, vector<32x5xf32>
    %c0_199 = arith.constant 0 : index
    %c0_200 = arith.constant 0 : index
    %373 = vector.load %arg50[%c0_199, %c0_200] : memref<1x5xf32, #tpu.memory_space<vmem>>, vector<1x5xf32>
    %374 = tpu.iota {dimensions = array<i32: 0>} : vector<2x18xi32>
    %375 = tpu.iota {dimensions = array<i32: 1>} : vector<2x18xi32>
    %c9_i32 = arith.constant 9 : i32
    %376 = vector.broadcast %c9_i32 : i32 to vector<2x18xi32>
    %377 = arith.muli %374, %376 : vector<2x18xi32>
    %378 = arith.cmpi eq, %375, %377 : vector<2x18xi32>
    %379 = arith.extui %378 : vector<2x18xi1> to vector<2x18xi32>
    %380 = arith.sitofp %379 : vector<2x18xi32> to vector<2x18xf32>
    %cst_201 = arith.constant dense<0.000000e+00> : vector<2x32xf32>
    %381 = tpu.matmul %380, %357, %cst_201 {dimension_numbers = #tpu.dot_dimension_numbers<[1], [0], [0], [1], [0, 0, 1, 1], [], []>} : vector<2x18xf32>, vector<18x32xf32>, vector<2x32xf32> -> vector<2x32xf32>
    %cst_202 = arith.constant dense<0.000000e+00> : vector<2xf32>
    %382 = vector.multi_reduction <add>, %381, %cst_202 [1] : vector<2x32xf32> to vector<2xf32>
    %383 = vector.shape_cast %382 : vector<2xf32> to vector<2x1xf32>
    %cst_203 = arith.constant 3.200000e+01 : f32
    %384 = vector.broadcast %cst_203 : f32 to vector<2x1xf32>
    %385 = arith.divf %383, %384 : vector<2x1xf32>
    %386 = vector.broadcast %385 : vector<2x1xf32> to vector<2x32xf32>
    %387 = arith.subf %381, %386 : vector<2x32xf32>
    %388 = arith.mulf %387, %387 : vector<2x32xf32>
    %cst_204 = arith.constant dense<0.000000e+00> : vector<2xf32>
    %389 = vector.multi_reduction <add>, %388, %cst_204 [1] : vector<2x32xf32> to vector<2xf32>
    %390 = vector.shape_cast %389 : vector<2xf32> to vector<2x1xf32>
    %cst_205 = arith.constant 3.200000e+01 : f32
    %391 = vector.broadcast %cst_205 : f32 to vector<2x1xf32>
    %392 = arith.divf %390, %391 : vector<2x1xf32>
    %cst_206 = arith.constant 9.99999974E-6 : f32
    %393 = vector.broadcast %cst_206 : f32 to vector<2x1xf32>
    %394 = arith.addf %392, %393 : vector<2x1xf32>
    %395 = math.rsqrt %394 : vector<2x1xf32>
    %396 = vector.broadcast %395 : vector<2x1xf32> to vector<2x32xf32>
    %397 = arith.mulf %387, %396 : vector<2x32xf32>
    %398 = vector.broadcast %358 : vector<1x32xf32> to vector<2x32xf32>
    %399 = arith.mulf %397, %398 : vector<2x32xf32>
    %400 = vector.broadcast %359 : vector<1x32xf32> to vector<2x32xf32>
    %401 = arith.addf %399, %400 : vector<2x32xf32>
    %cst_207 = arith.constant dense<0.000000e+00> : vector<2x64xf32>
    %402 = tpu.matmul %401, %360, %cst_207 {dimension_numbers = #tpu.dot_dimension_numbers<[1], [0], [0], [1], [0, 0, 1, 1], [], []>} : vector<2x32xf32>, vector<32x64xf32>, vector<2x64xf32> -> vector<2x64xf32>
    %403 = vector.broadcast %361 : vector<1x64xf32> to vector<2x64xf32>
    %404 = arith.addf %402, %403 : vector<2x64xf32>
    %cst_208 = arith.constant 5.000000e-01 : f32
    %405 = vector.broadcast %cst_208 : f32 to vector<2x64xf32>
    %406 = arith.mulf %405, %404 : vector<2x64xf32>
    %cst_209 = arith.constant 0.707106769 : f32
    %407 = vector.broadcast %cst_209 : f32 to vector<2x64xf32>
    %408 = arith.mulf %404, %407 : vector<2x64xf32>
    %409 = math.absf %408 : vector<2x64xf32>
    %cst_210 = arith.constant 0.327591091 : f32
    %410 = vector.broadcast %cst_210 : f32 to vector<2x64xf32>
    %411 = arith.mulf %410, %409 : vector<2x64xf32>
    %cst_211 = arith.constant 1.000000e+00 : f32
    %412 = vector.broadcast %cst_211 : f32 to vector<2x64xf32>
    %413 = arith.addf %412, %411 : vector<2x64xf32>
    %cst_212 = arith.constant 1.000000e+00 : f32
    %414 = vector.broadcast %cst_212 : f32 to vector<2x64xf32>
    %415 = arith.divf %414, %413 : vector<2x64xf32>
    %cst_213 = arith.constant 1.06140542 : f32
    %416 = vector.broadcast %cst_213 : f32 to vector<2x64xf32>
    %417 = arith.mulf %416, %415 : vector<2x64xf32>
    %cst_214 = arith.constant 1.45315206 : f32
    %418 = vector.broadcast %cst_214 : f32 to vector<2x64xf32>
    %419 = arith.subf %417, %418 : vector<2x64xf32>
    %420 = arith.mulf %419, %415 : vector<2x64xf32>
    %cst_215 = arith.constant 1.42141378 : f32
    %421 = vector.broadcast %cst_215 : f32 to vector<2x64xf32>
    %422 = arith.addf %420, %421 : vector<2x64xf32>
    %423 = arith.mulf %422, %415 : vector<2x64xf32>
    %cst_216 = arith.constant 0.284496725 : f32
    %424 = vector.broadcast %cst_216 : f32 to vector<2x64xf32>
    %425 = arith.subf %423, %424 : vector<2x64xf32>
    %426 = arith.mulf %425, %415 : vector<2x64xf32>
    %cst_217 = arith.constant 0.254829586 : f32
    %427 = vector.broadcast %cst_217 : f32 to vector<2x64xf32>
    %428 = arith.addf %426, %427 : vector<2x64xf32>
    %429 = arith.mulf %428, %415 : vector<2x64xf32>
    %cst_218 = arith.constant 0.000000e+00 : f32
    %430 = vector.broadcast %cst_218 : f32 to vector<2x64xf32>
    %431 = arith.subf %430, %409 : vector<2x64xf32>
    %432 = arith.mulf %431, %409 : vector<2x64xf32>
    %433 = math.exp %432 : vector<2x64xf32>
    %434 = arith.mulf %429, %433 : vector<2x64xf32>
    %cst_219 = arith.constant 1.000000e+00 : f32
    %435 = vector.broadcast %cst_219 : f32 to vector<2x64xf32>
    %436 = arith.subf %435, %434 : vector<2x64xf32>
    %cst_220 = arith.constant 0.000000e+00 : f32
    %437 = vector.broadcast %cst_220 : f32 to vector<2x64xf32>
    %438 = arith.cmpf olt, %408, %437 : vector<2x64xf32>
    %cst_221 = arith.constant 0.000000e+00 : f32
    %439 = vector.broadcast %cst_221 : f32 to vector<2x64xf32>
    %440 = arith.subf %439, %436 : vector<2x64xf32>
    %441 = arith.select %438, %440, %436 : vector<2x64xi1>, vector<2x64xf32>
    %cst_222 = arith.constant 1.000000e+00 : f32
    %442 = vector.broadcast %cst_222 : f32 to vector<2x64xf32>
    %443 = arith.addf %442, %441 : vector<2x64xf32>
    %444 = arith.mulf %406, %443 : vector<2x64xf32>
    %cst_223 = arith.constant dense<0.000000e+00> : vector<2x128xf32>
    %445 = tpu.matmul %444, %362, %cst_223 {dimension_numbers = #tpu.dot_dimension_numbers<[1], [0], [0], [1], [0, 0, 1, 1], [], []>} : vector<2x64xf32>, vector<64x128xf32>, vector<2x128xf32> -> vector<2x128xf32>
    %446 = vector.broadcast %363 : vector<1x128xf32> to vector<2x128xf32>
    %447 = arith.addf %445, %446 : vector<2x128xf32>
    %cst_224 = arith.constant 5.000000e-01 : f32
    %448 = vector.broadcast %cst_224 : f32 to vector<2x128xf32>
    %449 = arith.mulf %448, %447 : vector<2x128xf32>
    %cst_225 = arith.constant 0.707106769 : f32
    %450 = vector.broadcast %cst_225 : f32 to vector<2x128xf32>
    %451 = arith.mulf %447, %450 : vector<2x128xf32>
    %452 = math.absf %451 : vector<2x128xf32>
    %cst_226 = arith.constant 0.327591091 : f32
    %453 = vector.broadcast %cst_226 : f32 to vector<2x128xf32>
    %454 = arith.mulf %453, %452 : vector<2x128xf32>
    %cst_227 = arith.constant 1.000000e+00 : f32
    %455 = vector.broadcast %cst_227 : f32 to vector<2x128xf32>
    %456 = arith.addf %455, %454 : vector<2x128xf32>
    %cst_228 = arith.constant 1.000000e+00 : f32
    %457 = vector.broadcast %cst_228 : f32 to vector<2x128xf32>
    %458 = arith.divf %457, %456 : vector<2x128xf32>
    %cst_229 = arith.constant 1.06140542 : f32
    %459 = vector.broadcast %cst_229 : f32 to vector<2x128xf32>
    %460 = arith.mulf %459, %458 : vector<2x128xf32>
    %cst_230 = arith.constant 1.45315206 : f32
    %461 = vector.broadcast %cst_230 : f32 to vector<2x128xf32>
    %462 = arith.subf %460, %461 : vector<2x128xf32>
    %463 = arith.mulf %462, %458 : vector<2x128xf32>
    %cst_231 = arith.constant 1.42141378 : f32
    %464 = vector.broadcast %cst_231 : f32 to vector<2x128xf32>
    %465 = arith.addf %463, %464 : vector<2x128xf32>
    %466 = arith.mulf %465, %458 : vector<2x128xf32>
    %cst_232 = arith.constant 0.284496725 : f32
    %467 = vector.broadcast %cst_232 : f32 to vector<2x128xf32>
    %468 = arith.subf %466, %467 : vector<2x128xf32>
    %469 = arith.mulf %468, %458 : vector<2x128xf32>
    %cst_233 = arith.constant 0.254829586 : f32
    %470 = vector.broadcast %cst_233 : f32 to vector<2x128xf32>
    %471 = arith.addf %469, %470 : vector<2x128xf32>
    %472 = arith.mulf %471, %458 : vector<2x128xf32>
    %cst_234 = arith.constant 0.000000e+00 : f32
    %473 = vector.broadcast %cst_234 : f32 to vector<2x128xf32>
    %474 = arith.subf %473, %452 : vector<2x128xf32>
    %475 = arith.mulf %474, %452 : vector<2x128xf32>
    %476 = math.exp %475 : vector<2x128xf32>
    %477 = arith.mulf %472, %476 : vector<2x128xf32>
    %cst_235 = arith.constant 1.000000e+00 : f32
    %478 = vector.broadcast %cst_235 : f32 to vector<2x128xf32>
    %479 = arith.subf %478, %477 : vector<2x128xf32>
    %cst_236 = arith.constant 0.000000e+00 : f32
    %480 = vector.broadcast %cst_236 : f32 to vector<2x128xf32>
    %481 = arith.cmpf olt, %451, %480 : vector<2x128xf32>
    %cst_237 = arith.constant 0.000000e+00 : f32
    %482 = vector.broadcast %cst_237 : f32 to vector<2x128xf32>
    %483 = arith.subf %482, %479 : vector<2x128xf32>
    %484 = arith.select %481, %483, %479 : vector<2x128xi1>, vector<2x128xf32>
    %cst_238 = arith.constant 1.000000e+00 : f32
    %485 = vector.broadcast %cst_238 : f32 to vector<2x128xf32>
    %486 = arith.addf %485, %484 : vector<2x128xf32>
    %487 = arith.mulf %449, %486 : vector<2x128xf32>
    %cst_239 = arith.constant dense<0.000000e+00> : vector<2x32xf32>
    %488 = tpu.matmul %487, %364, %cst_239 {dimension_numbers = #tpu.dot_dimension_numbers<[1], [0], [0], [1], [0, 0, 1, 1], [], []>} : vector<2x128xf32>, vector<128x32xf32>, vector<2x32xf32> -> vector<2x32xf32>
    %489 = vector.broadcast %365 : vector<1x32xf32> to vector<2x32xf32>
    %490 = arith.addf %488, %489 : vector<2x32xf32>
    %cst_240 = arith.constant 5.000000e-01 : f32
    %491 = vector.broadcast %cst_240 : f32 to vector<2x32xf32>
    %492 = arith.mulf %491, %490 : vector<2x32xf32>
    %cst_241 = arith.constant 0.707106769 : f32
    %493 = vector.broadcast %cst_241 : f32 to vector<2x32xf32>
    %494 = arith.mulf %490, %493 : vector<2x32xf32>
    %495 = math.absf %494 : vector<2x32xf32>
    %cst_242 = arith.constant 0.327591091 : f32
    %496 = vector.broadcast %cst_242 : f32 to vector<2x32xf32>
    %497 = arith.mulf %496, %495 : vector<2x32xf32>
    %cst_243 = arith.constant 1.000000e+00 : f32
    %498 = vector.broadcast %cst_243 : f32 to vector<2x32xf32>
    %499 = arith.addf %498, %497 : vector<2x32xf32>
    %cst_244 = arith.constant 1.000000e+00 : f32
    %500 = vector.broadcast %cst_244 : f32 to vector<2x32xf32>
    %501 = arith.divf %500, %499 : vector<2x32xf32>
    %cst_245 = arith.constant 1.06140542 : f32
    %502 = vector.broadcast %cst_245 : f32 to vector<2x32xf32>
    %503 = arith.mulf %502, %501 : vector<2x32xf32>
    %cst_246 = arith.constant 1.45315206 : f32
    %504 = vector.broadcast %cst_246 : f32 to vector<2x32xf32>
    %505 = arith.subf %503, %504 : vector<2x32xf32>
    %506 = arith.mulf %505, %501 : vector<2x32xf32>
    %cst_247 = arith.constant 1.42141378 : f32
    %507 = vector.broadcast %cst_247 : f32 to vector<2x32xf32>
    %508 = arith.addf %506, %507 : vector<2x32xf32>
    %509 = arith.mulf %508, %501 : vector<2x32xf32>
    %cst_248 = arith.constant 0.284496725 : f32
    %510 = vector.broadcast %cst_248 : f32 to vector<2x32xf32>
    %511 = arith.subf %509, %510 : vector<2x32xf32>
    %512 = arith.mulf %511, %501 : vector<2x32xf32>
    %cst_249 = arith.constant 0.254829586 : f32
    %513 = vector.broadcast %cst_249 : f32 to vector<2x32xf32>
    %514 = arith.addf %512, %513 : vector<2x32xf32>
    %515 = arith.mulf %514, %501 : vector<2x32xf32>
    %cst_250 = arith.constant 0.000000e+00 : f32
    %516 = vector.broadcast %cst_250 : f32 to vector<2x32xf32>
    %517 = arith.subf %516, %495 : vector<2x32xf32>
    %518 = arith.mulf %517, %495 : vector<2x32xf32>
    %519 = math.exp %518 : vector<2x32xf32>
    %520 = arith.mulf %515, %519 : vector<2x32xf32>
    %cst_251 = arith.constant 1.000000e+00 : f32
    %521 = vector.broadcast %cst_251 : f32 to vector<2x32xf32>
    %522 = arith.subf %521, %520 : vector<2x32xf32>
    %cst_252 = arith.constant 0.000000e+00 : f32
    %523 = vector.broadcast %cst_252 : f32 to vector<2x32xf32>
    %524 = arith.cmpf olt, %494, %523 : vector<2x32xf32>
    %cst_253 = arith.constant 0.000000e+00 : f32
    %525 = vector.broadcast %cst_253 : f32 to vector<2x32xf32>
    %526 = arith.subf %525, %522 : vector<2x32xf32>
    %527 = arith.select %524, %526, %522 : vector<2x32xi1>, vector<2x32xf32>
    %cst_254 = arith.constant 1.000000e+00 : f32
    %528 = vector.broadcast %cst_254 : f32 to vector<2x32xf32>
    %529 = arith.addf %528, %527 : vector<2x32xf32>
    %530 = arith.mulf %492, %529 : vector<2x32xf32>
    %cst_255 = arith.constant dense<0.000000e+00> : vector<2x64xf32>
    %531 = tpu.matmul %530, %366, %cst_255 {dimension_numbers = #tpu.dot_dimension_numbers<[1], [0], [0], [1], [0, 0, 1, 1], [], []>} : vector<2x32xf32>, vector<32x64xf32>, vector<2x64xf32> -> vector<2x64xf32>
    %532 = vector.broadcast %367 : vector<1x64xf32> to vector<2x64xf32>
    %533 = arith.addf %531, %532 : vector<2x64xf32>
    %cst_256 = arith.constant 5.000000e-01 : f32
    %534 = vector.broadcast %cst_256 : f32 to vector<2x64xf32>
    %535 = arith.mulf %534, %533 : vector<2x64xf32>
    %cst_257 = arith.constant 0.707106769 : f32
    %536 = vector.broadcast %cst_257 : f32 to vector<2x64xf32>
    %537 = arith.mulf %533, %536 : vector<2x64xf32>
    %538 = math.absf %537 : vector<2x64xf32>
    %cst_258 = arith.constant 0.327591091 : f32
    %539 = vector.broadcast %cst_258 : f32 to vector<2x64xf32>
    %540 = arith.mulf %539, %538 : vector<2x64xf32>
    %cst_259 = arith.constant 1.000000e+00 : f32
    %541 = vector.broadcast %cst_259 : f32 to vector<2x64xf32>
    %542 = arith.addf %541, %540 : vector<2x64xf32>
    %cst_260 = arith.constant 1.000000e+00 : f32
    %543 = vector.broadcast %cst_260 : f32 to vector<2x64xf32>
    %544 = arith.divf %543, %542 : vector<2x64xf32>
    %cst_261 = arith.constant 1.06140542 : f32
    %545 = vector.broadcast %cst_261 : f32 to vector<2x64xf32>
    %546 = arith.mulf %545, %544 : vector<2x64xf32>
    %cst_262 = arith.constant 1.45315206 : f32
    %547 = vector.broadcast %cst_262 : f32 to vector<2x64xf32>
    %548 = arith.subf %546, %547 : vector<2x64xf32>
    %549 = arith.mulf %548, %544 : vector<2x64xf32>
    %cst_263 = arith.constant 1.42141378 : f32
    %550 = vector.broadcast %cst_263 : f32 to vector<2x64xf32>
    %551 = arith.addf %549, %550 : vector<2x64xf32>
    %552 = arith.mulf %551, %544 : vector<2x64xf32>
    %cst_264 = arith.constant 0.284496725 : f32
    %553 = vector.broadcast %cst_264 : f32 to vector<2x64xf32>
    %554 = arith.subf %552, %553 : vector<2x64xf32>
    %555 = arith.mulf %554, %544 : vector<2x64xf32>
    %cst_265 = arith.constant 0.254829586 : f32
    %556 = vector.broadcast %cst_265 : f32 to vector<2x64xf32>
    %557 = arith.addf %555, %556 : vector<2x64xf32>
    %558 = arith.mulf %557, %544 : vector<2x64xf32>
    %cst_266 = arith.constant 0.000000e+00 : f32
    %559 = vector.broadcast %cst_266 : f32 to vector<2x64xf32>
    %560 = arith.subf %559, %538 : vector<2x64xf32>
    %561 = arith.mulf %560, %538 : vector<2x64xf32>
    %562 = math.exp %561 : vector<2x64xf32>
    %563 = arith.mulf %558, %562 : vector<2x64xf32>
    %cst_267 = arith.constant 1.000000e+00 : f32
    %564 = vector.broadcast %cst_267 : f32 to vector<2x64xf32>
    %565 = arith.subf %564, %563 : vector<2x64xf32>
    %cst_268 = arith.constant 0.000000e+00 : f32
    %566 = vector.broadcast %cst_268 : f32 to vector<2x64xf32>
    %567 = arith.cmpf olt, %537, %566 : vector<2x64xf32>
    %cst_269 = arith.constant 0.000000e+00 : f32
    %568 = vector.broadcast %cst_269 : f32 to vector<2x64xf32>
    %569 = arith.subf %568, %565 : vector<2x64xf32>
    %570 = arith.select %567, %569, %565 : vector<2x64xi1>, vector<2x64xf32>
    %cst_270 = arith.constant 1.000000e+00 : f32
    %571 = vector.broadcast %cst_270 : f32 to vector<2x64xf32>
    %572 = arith.addf %571, %570 : vector<2x64xf32>
    %573 = arith.mulf %535, %572 : vector<2x64xf32>
    %cst_271 = arith.constant dense<0.000000e+00> : vector<2x128xf32>
    %574 = tpu.matmul %573, %368, %cst_271 {dimension_numbers = #tpu.dot_dimension_numbers<[1], [0], [0], [1], [0, 0, 1, 1], [], []>} : vector<2x64xf32>, vector<64x128xf32>, vector<2x128xf32> -> vector<2x128xf32>
    %575 = vector.broadcast %369 : vector<1x128xf32> to vector<2x128xf32>
    %576 = arith.addf %574, %575 : vector<2x128xf32>
    %cst_272 = arith.constant 5.000000e-01 : f32
    %577 = vector.broadcast %cst_272 : f32 to vector<2x128xf32>
    %578 = arith.mulf %577, %576 : vector<2x128xf32>
    %cst_273 = arith.constant 0.707106769 : f32
    %579 = vector.broadcast %cst_273 : f32 to vector<2x128xf32>
    %580 = arith.mulf %576, %579 : vector<2x128xf32>
    %581 = math.absf %580 : vector<2x128xf32>
    %cst_274 = arith.constant 0.327591091 : f32
    %582 = vector.broadcast %cst_274 : f32 to vector<2x128xf32>
    %583 = arith.mulf %582, %581 : vector<2x128xf32>
    %cst_275 = arith.constant 1.000000e+00 : f32
    %584 = vector.broadcast %cst_275 : f32 to vector<2x128xf32>
    %585 = arith.addf %584, %583 : vector<2x128xf32>
    %cst_276 = arith.constant 1.000000e+00 : f32
    %586 = vector.broadcast %cst_276 : f32 to vector<2x128xf32>
    %587 = arith.divf %586, %585 : vector<2x128xf32>
    %cst_277 = arith.constant 1.06140542 : f32
    %588 = vector.broadcast %cst_277 : f32 to vector<2x128xf32>
    %589 = arith.mulf %588, %587 : vector<2x128xf32>
    %cst_278 = arith.constant 1.45315206 : f32
    %590 = vector.broadcast %cst_278 : f32 to vector<2x128xf32>
    %591 = arith.subf %589, %590 : vector<2x128xf32>
    %592 = arith.mulf %591, %587 : vector<2x128xf32>
    %cst_279 = arith.constant 1.42141378 : f32
    %593 = vector.broadcast %cst_279 : f32 to vector<2x128xf32>
    %594 = arith.addf %592, %593 : vector<2x128xf32>
    %595 = arith.mulf %594, %587 : vector<2x128xf32>
    %cst_280 = arith.constant 0.284496725 : f32
    %596 = vector.broadcast %cst_280 : f32 to vector<2x128xf32>
    %597 = arith.subf %595, %596 : vector<2x128xf32>
    %598 = arith.mulf %597, %587 : vector<2x128xf32>
    %cst_281 = arith.constant 0.254829586 : f32
    %599 = vector.broadcast %cst_281 : f32 to vector<2x128xf32>
    %600 = arith.addf %598, %599 : vector<2x128xf32>
    %601 = arith.mulf %600, %587 : vector<2x128xf32>
    %cst_282 = arith.constant 0.000000e+00 : f32
    %602 = vector.broadcast %cst_282 : f32 to vector<2x128xf32>
    %603 = arith.subf %602, %581 : vector<2x128xf32>
    %604 = arith.mulf %603, %581 : vector<2x128xf32>
    %605 = math.exp %604 : vector<2x128xf32>
    %606 = arith.mulf %601, %605 : vector<2x128xf32>
    %cst_283 = arith.constant 1.000000e+00 : f32
    %607 = vector.broadcast %cst_283 : f32 to vector<2x128xf32>
    %608 = arith.subf %607, %606 : vector<2x128xf32>
    %cst_284 = arith.constant 0.000000e+00 : f32
    %609 = vector.broadcast %cst_284 : f32 to vector<2x128xf32>
    %610 = arith.cmpf olt, %580, %609 : vector<2x128xf32>
    %cst_285 = arith.constant 0.000000e+00 : f32
    %611 = vector.broadcast %cst_285 : f32 to vector<2x128xf32>
    %612 = arith.subf %611, %608 : vector<2x128xf32>
    %613 = arith.select %610, %612, %608 : vector<2x128xi1>, vector<2x128xf32>
    %cst_286 = arith.constant 1.000000e+00 : f32
    %614 = vector.broadcast %cst_286 : f32 to vector<2x128xf32>
    %615 = arith.addf %614, %613 : vector<2x128xf32>
    %616 = arith.mulf %578, %615 : vector<2x128xf32>
    %cst_287 = arith.constant dense<0.000000e+00> : vector<2x32xf32>
    %617 = tpu.matmul %616, %370, %cst_287 {dimension_numbers = #tpu.dot_dimension_numbers<[1], [0], [0], [1], [0, 0, 1, 1], [], []>} : vector<2x128xf32>, vector<128x32xf32>, vector<2x32xf32> -> vector<2x32xf32>
    %618 = vector.broadcast %371 : vector<1x32xf32> to vector<2x32xf32>
    %619 = arith.addf %617, %618 : vector<2x32xf32>
    %cst_288 = arith.constant dense<0.000000e+00> : vector<2x5xf32>
    %620 = tpu.matmul %619, %372, %cst_288 {dimension_numbers = #tpu.dot_dimension_numbers<[1], [0], [0], [1], [0, 0, 1, 1], [], []>} : vector<2x32xf32>, vector<32x5xf32>, vector<2x5xf32> -> vector<2x5xf32>
    %621 = vector.broadcast %373 : vector<1x5xf32> to vector<2x5xf32>
    %622 = arith.addf %620, %621 : vector<2x5xf32>
    %c0_289 = arith.constant 0 : index
    %c0_290 = arith.constant 0 : index
    %623 = vector.load %arg51[%c0_289, %c0_290] : memref<2x5xf32, #tpu.memory_space<vmem>>, vector<2x5xf32>
    tpu.vector_store %arg51[%c0_289, %c0_290], %622 {strides = array<i32>} : memref<2x5xf32, #tpu.memory_space<vmem>>, vector<2x5xf32>,
    return
  }
  func.func @transform_0(%arg0: i32) -> (i32, i32) {
    %c0_i32 = arith.constant 0 : i32
    %c0_i32_0 = arith.constant 0 : i32
    %c0_i32_1 = arith.constant 0 : i32
    return %c0_i32, %c0_i32_0 : i32, i32
  }
  func.func @transform_1(%arg0: i32) -> (i32, i32) {
    %c0_i32 = arith.constant 0 : i32
    %c0_i32_0 = arith.constant 0 : i32
    %c0_i32_1 = arith.constant 0 : i32
    return %c0_i32, %c0_i32_0 : i32, i32
  }
  func.func @transform_2(%arg0: i32) -> (i32, i32) {
    %c0_i32 = arith.constant 0 : i32
    %c0_i32_0 = arith.constant 0 : i32
    %c0_i32_1 = arith.constant 0 : i32
    return %c0_i32, %c0_i32_0 : i32, i32
  }
  func.func @transform_3(%arg0: i32) -> (i32, i32) {
    %c0_i32 = arith.constant 0 : i32
    %c0_i32_0 = arith.constant 0 : i32
    %c0_i32_1 = arith.constant 0 : i32
    return %c0_i32, %c0_i32_0 : i32, i32
  }
  func.func @transform_4(%arg0: i32) -> (i32, i32) {
    %c0_i32 = arith.constant 0 : i32
    %c0_i32_0 = arith.constant 0 : i32
    %c0_i32_1 = arith.constant 0 : i32
    return %c0_i32, %c0_i32_0 : i32, i32
  }
  func.func @transform_5(%arg0: i32) -> (i32, i32) {
    %c0_i32 = arith.constant 0 : i32
    %c0_i32_0 = arith.constant 0 : i32
    %c0_i32_1 = arith.constant 0 : i32
    return %c0_i32, %c0_i32_0 : i32, i32
  }
  func.func @transform_6(%arg0: i32) -> (i32, i32) {
    %c0_i32 = arith.constant 0 : i32
    %c0_i32_0 = arith.constant 0 : i32
    %c0_i32_1 = arith.constant 0 : i32
    return %c0_i32, %c0_i32_0 : i32, i32
  }
  func.func @transform_7(%arg0: i32) -> (i32, i32) {
    %c0_i32 = arith.constant 0 : i32
    %c0_i32_0 = arith.constant 0 : i32
    %c0_i32_1 = arith.constant 0 : i32
    return %c0_i32, %c0_i32_0 : i32, i32
  }
  func.func @transform_8(%arg0: i32) -> (i32, i32) {
    %c0_i32 = arith.constant 0 : i32
    %c0_i32_0 = arith.constant 0 : i32
    %c0_i32_1 = arith.constant 0 : i32
    return %c0_i32, %c0_i32_0 : i32, i32
  }
  func.func @transform_9(%arg0: i32) -> (i32, i32) {
    %c0_i32 = arith.constant 0 : i32
    %c0_i32_0 = arith.constant 0 : i32
    %c0_i32_1 = arith.constant 0 : i32
    return %c0_i32, %c0_i32_0 : i32, i32
  }
  func.func @transform_10(%arg0: i32) -> (i32, i32) {
    %c0_i32 = arith.constant 0 : i32
    %c0_i32_0 = arith.constant 0 : i32
    %c0_i32_1 = arith.constant 0 : i32
    return %c0_i32, %c0_i32_0 : i32, i32
  }
  func.func @transform_11(%arg0: i32) -> (i32, i32) {
    %c0_i32 = arith.constant 0 : i32
    %c0_i32_0 = arith.constant 0 : i32
    %c0_i32_1 = arith.constant 0 : i32
    return %c0_i32, %c0_i32_0 : i32, i32
  }
  func.func @transform_12(%arg0: i32) -> (i32, i32) {
    %c0_i32 = arith.constant 0 : i32
    %c0_i32_0 = arith.constant 0 : i32
    %c0_i32_1 = arith.constant 0 : i32
    return %c0_i32, %c0_i32_0 : i32, i32
  }
  func.func @transform_13(%arg0: i32) -> (i32, i32) {
    %c0_i32 = arith.constant 0 : i32
    %c0_i32_0 = arith.constant 0 : i32
    %c0_i32_1 = arith.constant 0 : i32
    return %c0_i32, %c0_i32_0 : i32, i32
  }
  func.func @transform_14(%arg0: i32) -> (i32, i32) {
    %c0_i32 = arith.constant 0 : i32
    %c0_i32_0 = arith.constant 0 : i32
    %c0_i32_1 = arith.constant 0 : i32
    return %c0_i32, %c0_i32_0 : i32, i32
  }
  func.func @transform_15(%arg0: i32) -> (i32, i32) {
    %c0_i32 = arith.constant 0 : i32
    %c0_i32_0 = arith.constant 0 : i32
    %c0_i32_1 = arith.constant 0 : i32
    return %c0_i32, %c0_i32_0 : i32, i32
  }
  func.func @transform_16(%arg0: i32) -> (i32, i32) {
    %c0_i32 = arith.constant 0 : i32
    %c0_i32_0 = arith.constant 0 : i32
    %c0_i32_1 = arith.constant 0 : i32
    return %c0_i32, %c0_i32_0 : i32, i32
  }
  func.func @transform_17(%arg0: i32) -> (i32, i32) {
    %c0_i32 = arith.constant 0 : i32
    %c0_i32_0 = arith.constant 0 : i32
    %c0_i32_1 = arith.constant 0 : i32
    return %c0_i32, %c0_i32_0 : i32, i32
  }
  func.func @transform_18(%arg0: i32) -> (i32, i32) {
    %c0_i32 = arith.constant 0 : i32
    %c0_i32_0 = arith.constant 0 : i32
    %c0_i32_1 = arith.constant 0 : i32
    return %c0_i32, %c0_i32_0 : i32, i32
  }
  func.func @transform_19(%arg0: i32) -> (i32, i32) {
    %c0_i32 = arith.constant 0 : i32
    %c0_i32_0 = arith.constant 0 : i32
    %c0_i32_1 = arith.constant 0 : i32
    return %c0_i32, %c0_i32_0 : i32, i32
  }
  func.func @transform_20(%arg0: i32) -> (i32, i32) {
    %c0_i32 = arith.constant 0 : i32
    %c0_i32_0 = arith.constant 0 : i32
    %c0_i32_1 = arith.constant 0 : i32
    return %c0_i32, %c0_i32_0 : i32, i32
  }
  func.func @transform_21(%arg0: i32) -> (i32, i32) {
    %c0_i32 = arith.constant 0 : i32
    %c0_i32_0 = arith.constant 0 : i32
    %c0_i32_1 = arith.constant 0 : i32
    return %c0_i32, %c0_i32_0 : i32, i32
  }
  func.func @transform_22(%arg0: i32) -> (i32, i32) {
    %c0_i32 = arith.constant 0 : i32
    %c0_i32_0 = arith.constant 0 : i32
    %c0_i32_1 = arith.constant 0 : i32
    return %c0_i32, %c0_i32_0 : i32, i32
  }
  func.func @transform_23(%arg0: i32) -> (i32, i32) {
    %c0_i32 = arith.constant 0 : i32
    %c0_i32_0 = arith.constant 0 : i32
    %c0_i32_1 = arith.constant 0 : i32
    return %c0_i32, %c0_i32_0 : i32, i32
  }
  func.func @transform_24(%arg0: i32) -> (i32, i32) {
    %c0_i32 = arith.constant 0 : i32
    %c0_i32_0 = arith.constant 0 : i32
    %c0_i32_1 = arith.constant 0 : i32
    return %c0_i32, %c0_i32_0 : i32, i32
  }
  func.func @transform_25(%arg0: i32) -> (i32, i32) {
    %c0_i32 = arith.constant 0 : i32
    %c0_i32_0 = arith.constant 0 : i32
    %c0_i32_1 = arith.constant 0 : i32
    return %c0_i32, %c0_i32_0 : i32, i32
  }
  func.func @transform_26(%arg0: i32) -> (i32, i32) {
    %c0_i32 = arith.constant 0 : i32
    %c0_i32_0 = arith.constant 0 : i32
    %c0_i32_1 = arith.constant 0 : i32
    return %c0_i32, %c0_i32_0 : i32, i32
  }
  func.func @transform_27(%arg0: i32) -> (i32, i32) {
    %c0_i32 = arith.constant 0 : i32
    %c0_i32_0 = arith.constant 0 : i32
    %c0_i32_1 = arith.constant 0 : i32
    return %c0_i32, %c0_i32_0 : i32, i32
  }
  func.func @transform_28(%arg0: i32) -> (i32, i32) {
    %c0_i32 = arith.constant 0 : i32
    %c0_i32_0 = arith.constant 0 : i32
    %c0_i32_1 = arith.constant 0 : i32
    return %c0_i32, %c0_i32_0 : i32, i32
  }
  func.func @transform_29(%arg0: i32) -> (i32, i32) {
    %c0_i32 = arith.constant 0 : i32
    %c0_i32_0 = arith.constant 0 : i32
    %c0_i32_1 = arith.constant 0 : i32
    return %c0_i32, %c0_i32_0 : i32, i32
  }
  func.func @transform_30(%arg0: i32) -> (i32, i32) {
    %c0_i32 = arith.constant 0 : i32
    %c0_i32_0 = arith.constant 0 : i32
    %c0_i32_1 = arith.constant 0 : i32
    return %c0_i32, %c0_i32_0 : i32, i32
  }
  func.func @transform_31(%arg0: i32) -> (i32, i32) {
    %c0_i32 = arith.constant 0 : i32
    %c0_i32_0 = arith.constant 0 : i32
    %c0_i32_1 = arith.constant 0 : i32
    return %c0_i32, %c0_i32_0 : i32, i32
  }
  func.func @transform_32(%arg0: i32) -> (i32, i32) {
    %c0_i32 = arith.constant 0 : i32
    %c0_i32_0 = arith.constant 0 : i32
    %c0_i32_1 = arith.constant 0 : i32
    return %c0_i32, %c0_i32_0 : i32, i32
  }
  func.func @transform_33(%arg0: i32) -> (i32, i32) {
    %c0_i32 = arith.constant 0 : i32
    %c0_i32_0 = arith.constant 0 : i32
    %c0_i32_1 = arith.constant 0 : i32
    return %c0_i32, %c0_i32_0 : i32, i32
  }
  func.func @transform_34(%arg0: i32) -> (i32, i32) {
    %c0_i32 = arith.constant 0 : i32
    %c0_i32_0 = arith.constant 0 : i32
    %c0_i32_1 = arith.constant 0 : i32
    return %c0_i32, %c0_i32_0 : i32, i32
  }
  func.func @transform_35(%arg0: i32) -> (i32, i32) {
    %c0_i32 = arith.constant 0 : i32
    %c0_i32_0 = arith.constant 0 : i32
    %c0_i32_1 = arith.constant 0 : i32
    return %c0_i32, %c0_i32_0 : i32, i32
  }
  func.func @transform_36(%arg0: i32) -> (i32, i32) {
    %c0_i32 = arith.constant 0 : i32
    %c0_i32_0 = arith.constant 0 : i32
    %c0_i32_1 = arith.constant 0 : i32
    return %c0_i32, %c0_i32_0 : i32, i32
  }
  func.func @transform_37(%arg0: i32) -> (i32, i32) {
    %c0_i32 = arith.constant 0 : i32
    %c0_i32_0 = arith.constant 0 : i32
    %c0_i32_1 = arith.constant 0 : i32
    return %c0_i32, %c0_i32_0 : i32, i32
  }
  func.func @transform_38(%arg0: i32) -> (i32, i32) {
    %c0_i32 = arith.constant 0 : i32
    %c0_i32_0 = arith.constant 0 : i32
    %c0_i32_1 = arith.constant 0 : i32
    return %c0_i32, %c0_i32_0 : i32, i32
  }
  func.func @transform_39(%arg0: i32) -> (i32, i32) {
    %c0_i32 = arith.constant 0 : i32
    %c0_i32_0 = arith.constant 0 : i32
    %c0_i32_1 = arith.constant 0 : i32
    return %c0_i32, %c0_i32_0 : i32, i32
  }
  func.func @transform_40(%arg0: i32) -> (i32, i32) {
    %c0_i32 = arith.constant 0 : i32
    %c0_i32_0 = arith.constant 0 : i32
    %c0_i32_1 = arith.constant 0 : i32
    return %c0_i32, %c0_i32_0 : i32, i32
  }
  func.func @transform_41(%arg0: i32) -> (i32, i32) {
    %c0_i32 = arith.constant 0 : i32
    %c0_i32_0 = arith.constant 0 : i32
    %c0_i32_1 = arith.constant 0 : i32
    return %c0_i32, %c0_i32_0 : i32, i32
  }
  func.func @transform_42(%arg0: i32) -> (i32, i32) {
    %c0_i32 = arith.constant 0 : i32
    %c0_i32_0 = arith.constant 0 : i32
    %c0_i32_1 = arith.constant 0 : i32
    return %c0_i32, %c0_i32_0 : i32, i32
  }
  func.func @transform_43(%arg0: i32) -> (i32, i32) {
    %c0_i32 = arith.constant 0 : i32
    %c0_i32_0 = arith.constant 0 : i32
    %c0_i32_1 = arith.constant 0 : i32
    return %c0_i32, %c0_i32_0 : i32, i32
  }
  func.func @transform_44(%arg0: i32) -> (i32, i32) {
    %c0_i32 = arith.constant 0 : i32
    %c0_i32_0 = arith.constant 0 : i32
    %c0_i32_1 = arith.constant 0 : i32
    return %c0_i32, %c0_i32_0 : i32, i32
  }
  func.func @transform_45(%arg0: i32) -> (i32, i32) {
    %c0_i32 = arith.constant 0 : i32
    %c0_i32_0 = arith.constant 0 : i32
    %c0_i32_1 = arith.constant 0 : i32
    return %c0_i32, %c0_i32_0 : i32, i32
  }
  func.func @transform_46(%arg0: i32) -> (i32, i32) {
    %c0_i32 = arith.constant 0 : i32
    %c0_i32_0 = arith.constant 0 : i32
    %c0_i32_1 = arith.constant 0 : i32
    return %c0_i32, %c0_i32_0 : i32, i32
  }
  func.func @transform_47(%arg0: i32) -> (i32, i32) {
    %c0_i32 = arith.constant 0 : i32
    %c0_i32_0 = arith.constant 0 : i32
    %c0_i32_1 = arith.constant 0 : i32
    return %c0_i32, %c0_i32_0 : i32, i32
  }
  func.func @transform_48(%arg0: i32) -> (i32, i32) {
    %c0_i32 = arith.constant 0 : i32
    %c0_i32_0 = arith.constant 0 : i32
    %c0_i32_1 = arith.constant 0 : i32
    return %c0_i32, %c0_i32_0 : i32, i32
  }
  func.func @transform_49(%arg0: i32) -> (i32, i32) {
    %c0_i32 = arith.constant 0 : i32
    %c0_i32_0 = arith.constant 0 : i32
    %c0_i32_1 = arith.constant 0 : i32
    return %c0_i32, %c0_i32_0 : i32, i32
  }
  func.func @transform_50(%arg0: i32) -> (i32, i32) {
    %c0_i32 = arith.constant 0 : i32
    %c0_i32_0 = arith.constant 0 : i32
    %c0_i32_1 = arith.constant 0 : i32
    return %c0_i32, %c0_i32_0 : i32, i32
  }
}

</mosaic_0001>

<llo_original>
// kernel: tile.9
$region0: #{tile.9}
  %s0 = inlined_call_operand.vmem [shape: f32[2,9,32], index: 0, kind: input, shape index: {}]
  %s1 = inlined_call_operand.vmem [shape: f32[18,32], index: 1, kind: output, shape index: {}]
  %v2 = vld [vmem:[%s0] sm:$0xff]
  %vm3 = vcmask 261120
  %4 = vst.msk [vmem:[%s1] sm:$0xff] %vm3, %v2
  %s5 = scalar_lea.vmem %s0, 8
  %s6 = smov 3
  %v7 = vld [vmem:[%s5] ss:$8 sm:%s6]
  %vm8 = vcmask 261120
  %s9 = scalar_lea.vmem %s1, 8
  %10 = vst.msk [vmem:[%s9] sm:$0x3] %vm8, %v7
  %s11 = scalar_lea.vmem %s0, 17
  %v12 = vld [vmem:[%s11] sm:$0xff]
  %vm13 = vcmask 261120
  %s14 = scalar_lea.vmem %s1, 10
  %15 = vst.msk [vmem:[%s14] sm:$0xff] %vm13, %v12

// kernel: forward.2
$region0: #{forward.2}
  #allocation0 [shape = 'u32[]', space=smem, size = 0x4, offset = 0x4, fixed_abs, tag = 'smem constant byte address 0x4 - core index']
  #allocation1 [shape = 'u32[144,128]{1,0:T(1,128)}', space=vmem, size = 0x12000, scoped, tag = 'internal scratch']
  %s0 = inlined_call_operand.vmem [shape: f32[16,24], index: 0, kind: input, shape index: {}]
  %s1 = inlined_call_operand.vmem [shape: f32[24,32], index: 1, kind: input, shape index: {}]
  %s2 = inlined_call_operand.vmem [shape: f32[1,32], index: 2, kind: input, shape index: {}]
  %s3 = inlined_call_operand.vmem [shape: f32[18,16], index: 3, kind: input, shape index: {}]
  %s4 = inlined_call_operand.vmem [shape: f32[18,32], index: 4, kind: input, shape index: {}]
  %s5 = inlined_call_operand.vmem [shape: f32[18,32], index: 5, kind: output, shape index: {0}]
  %s6 = inlined_call_operand.vmem [shape: f32[16,1], index: 6, kind: output, shape index: {1}]
  %7 = xla_tuple %s5, %s6
  %s8 = sld [smem:[#allocation0]]
  $region38: #{forward.2} parent=0
    _
  %s10 = ssub.s32 1, %s8
  %s11 = scalar_select 0, %s10, %s8
  // Predicated region
  $region2: #{forward.2} parent=0 // pred_check
    _
  $region3: #{forward.2} parent=0 // pred_check_branch
    %13 = sbr.rel (0) target = $region5
  $region4: #{forward.2} parent=0 // pred_region
    _
  $region5: #{forward.2} parent=0 // pred_fallthru
    _
  // Predicated region
  $region6: #{forward.2} parent=0 // pred_check
    _
  $region7: #{forward.2} parent=0 // pred_check_branch
    %15 = sbr.rel (0) target = $region9
  $region8: #{forward.2} parent=0 // pred_region
    _
  $region9: #{forward.2} parent=0 // pred_fallthru
    _
  // Predicated region
  $region10: #{forward.2} parent=0 // pred_check
    _
  $region11: #{forward.2} parent=0 // pred_check_branch
    %17 = sbr.rel (0) target = $region13
  $region12: #{forward.2} parent=0 // pred_region
    _
  $region13: #{forward.2} parent=0 // pred_fallthru
    _
  // Predicated region
  $region14: #{forward.2} parent=0 // pred_check
    _
  $region15: #{forward.2} parent=0 // pred_check_branch
    %19 = sbr.rel (0) target = $region17
  $region16: #{forward.2} parent=0 // pred_region
    _
  $region17: #{forward.2} parent=0 // pred_fallthru
    _
  // Predicated region
  $region18: #{forward.2} parent=0 // pred_check
    _
  $region19: #{forward.2} parent=0 // pred_check_branch
    %21 = sbr.rel (0) target = $region21
  $region20: #{forward.2} parent=0 // pred_region
    _
  $region21: #{forward.2} parent=0 // pred_fallthru
    _
  %v22 = vld [vmem:[%s0] sm:$0xff]
  %v23 = vld [vmem:[%s0 + $0x8] sm:$0xff]
  %v24 = vld [vmem:[%s1] sm:$0xff]
  %v25 = vld [vmem:[%s1 + $0x8] sm:$0xff]
  %v26 = vld [vmem:[%s1 + $0x10] sm:$0xff]
  %v27 = vld [vmem:[%s2] sm:$0x1]
  %v29 = vlaneseq
  %v30 = vshrl.u32 %v29, 7
  %v31 = vsub.s32 0, %v30
  %v32 = vrot.slane %v27, %v31
  %vm34 = vcmask 195584
  %v36 = vsel %vm34, %v22, 0
  %v39 = vsel %vm34, %v23, 0
  %41 = vmatprep.subr.mxu0 0.0
  %42 = vmatpush1.msra.mxu0 0.0
  %43 = vmatprep.subr.mxu0 0.0
  %44 = vmatpush1.msra.mxu0 0.0
  %45 = vmatprep.subr.mxu0 0.0
  %46 = vmatpush1.msra.mxu0 0.0
  %47 = vmatprep.subr.mxu0 0.0
  %48 = vmatpush1.msra.mxu0 0.0
  %49 = vmatprep.subr.mxu0 0.0
  %50 = vmatpush1.msra.mxu0 0.0
  %51 = vmatprep.subr.mxu0 0.0
  %52 = vmatpush1.msra.mxu0 0.0
  %53 = vmatprep.subr.mxu0 0.0
  %54 = vmatpush1.msra.mxu0 0.0
  %55 = vmatprep.subr.mxu0 0.0
  %56 = vmatpush1.msra.mxu0 0.0
  %57 = vmatprep.subr.mxu0 0.0
  %58 = vmatpush1.msra.mxu0 0.0
  %59 = vmatprep.subr.mxu0 0.0
  %60 = vmatpush1.msra.mxu0 0.0
  %61 = vmatprep.subr.mxu0 0.0
  %62 = vmatpush1.msra.mxu0 0.0
  %63 = vmatprep.subr.mxu0 0.0
  %64 = vmatpush1.msra.mxu0 0.0
  %65 = vmatprep.subr.mxu0 0.0
  %66 = vmatpush1.msra.mxu0 0.0
  %67 = vmatprep.subr.mxu0 0.0
  %68 = vmatpush1.msra.mxu0 %v26
  %69 = vmatprep.subr.mxu0 0.0
  %70 = vmatpush1.msra.mxu0 %v25
  %71 = vmatprep.subr.mxu0 0.0
  %72 = vmatpush1.msra.mxu0 %v24
  %73 = vmatprep.subr.mxu0 0.0
  %74 = vmatpush2.msra.mxu0 0.0
  %75 = vmatprep.subr.mxu0 0.0
  %76 = vmatpush2.msra.mxu0 0.0
  %77 = vmatprep.subr.mxu0 0.0
  %78 = vmatpush2.msra.mxu0 0.0
  %79 = vmatprep.subr.mxu0 0.0
  %80 = vmatpush2.msra.mxu0 0.0
  %81 = vmatprep.subr.mxu0 0.0
  %82 = vmatpush2.msra.mxu0 0.0
  %83 = vmatprep.subr.mxu0 0.0
  %84 = vmatpush2.msra.mxu0 0.0
  %85 = vmatprep.subr.mxu0 0.0
  %86 = vmatpush2.msra.mxu0 0.0
  %87 = vmatprep.subr.mxu0 0.0
  %88 = vmatpush2.msra.mxu0 0.0
  %89 = vmatprep.subr.mxu0 0.0
  %90 = vmatpush2.msra.mxu0 0.0
  %91 = vmatprep.subr.mxu0 0.0
  %92 = vmatpush2.msra.mxu0 0.0
  %93 = vmatprep.subr.mxu0 0.0
  %94 = vmatpush2.msra.mxu0 0.0
  %95 = vmatprep.subr.mxu0 0.0
  %96 = vmatpush2.msra.mxu0 0.0
  %97 = vmatprep.subr.mxu0 0.0
  %98 = vmatpush2.msra.mxu0 0.0
  %99 = vmatprep.subr.mxu0 0.0
  %100 = vmatpush2.msra.mxu0 0.0
  %101 = vmatprep.subr.mxu0 0.0
  %102 = vmatpush2.msra.mxu0 0.0
  %103 = vmatprep.subr.mxu0 0.0
  %104 = vmatpush2.msra.mxu0 0.0
  %105 = vmatprep.mubr.f32.mxu0 0.0
  %106 = vmatmul.mubr.f32.gmra.mxu0 %v36
  %v107 = vpop.f32.mrf.mxu0
  %v108 = vadd.f32 %v32, %v107
  %v109 = vpop.f32.mrf.mxu0
  %110 = vmatprep.mubr.f32.mxu0 0.0
  %111 = vmatmul.mubr.f32.gmra.mxu0 %v39
  %v112 = vpop.f32.mrf.mxu0
  %v113 = vadd.f32 %v32, %v112
  %v114 = vpop.f32.mrf.mxu0
  %115 = vdwg.mxu0
  %v116 = vld [vmem:[%s3] sm:$0xff]
  %v117 = vld [vmem:[%s3 + $0x8] sm:$0xff]
  %v118 = vld [vmem:[%s3 + $0x10] sm:$0x3]
  %v119 = vld [vmem:[%s4] sm:$0xff]
  %v120 = vld [vmem:[%s4 + $0x8] sm:$0xff]
  %v121 = vld [vmem:[%s4 + $0x10] sm:$0x3]
  %vm122 = vcmask 130048
  %v124 = vsel %vm122, %v116, 0
  %v127 = vsel %vm122, %v117, 0
  %v130 = vsel %vm122, %v118, 0
  %132 = vmatprep.subr.mxu0 0.0
  %133 = vmatpush1.msra.mxu0 0.0
  %134 = vmatprep.subr.mxu0 0.0
  %135 = vmatpush1.msra.mxu0 0.0
  %136 = vmatprep.subr.mxu0 0.0
  %137 = vmatpush1.msra.mxu0 0.0
  %138 = vmatprep.subr.mxu0 0.0
  %139 = vmatpush1.msra.mxu0 0.0
  %140 = vmatprep.subr.mxu0 0.0
  %141 = vmatpush1.msra.mxu0 0.0
  %142 = vmatprep.subr.mxu0 0.0
  %143 = vmatpush1.msra.mxu0 0.0
  %144 = vmatprep.subr.mxu0 0.0
  %145 = vmatpush1.msra.mxu0 0.0
  %146 = vmatprep.subr.mxu0 0.0
  %147 = vmatpush1.msra.mxu0 0.0
  %148 = vmatprep.subr.mxu0 0.0
  %149 = vmatpush1.msra.mxu0 0.0
  %150 = vmatprep.subr.mxu0 0.0
  %151 = vmatpush1.msra.mxu0 0.0
  %152 = vmatprep.subr.mxu0 0.0
  %153 = vmatpush1.msra.mxu0 0.0
  %154 = vmatprep.subr.mxu0 0.0
  %155 = vmatpush1.msra.mxu0 0.0
  %156 = vmatprep.subr.mxu0 0.0
  %157 = vmatpush1.msra.mxu0 0.0
  %158 = vmatprep.subr.mxu0 0.0
  %159 = vmatpush1.msra.mxu0 0.0
  %160 = vmatprep.subr.mxu0 0.0
  %161 = vmatpush1.msra.mxu0 %v113
  %162 = vmatprep.subr.mxu0 0.0
  %163 = vmatpush1.msra.mxu0 %v108
  %164 = vmatprep.subr.mxu0 0.0
  %165 = vmatpush2.msra.mxu0 0.0
  %166 = vmatprep.subr.mxu0 0.0
  %167 = vmatpush2.msra.mxu0 0.0
  %168 = vmatprep.subr.mxu0 0.0
  %169 = vmatpush2.msra.mxu0 0.0
  %170 = vmatprep.subr.mxu0 0.0
  %171 = vmatpush2.msra.mxu0 0.0
  %172 = vmatprep.subr.mxu0 0.0
  %173 = vmatpush2.msra.mxu0 0.0
  %174 = vmatprep.subr.mxu0 0.0
  %175 = vmatpush2.msra.mxu0 0.0
  %176 = vmatprep.subr.mxu0 0.0
  %177 = vmatpush2.msra.mxu0 0.0
  %178 = vmatprep.subr.mxu0 0.0
  %179 = vmatpush2.msra.mxu0 0.0
  %180 = vmatprep.subr.mxu0 0.0
  %181 = vmatpush2.msra.mxu0 0.0
  %182 = vmatprep.subr.mxu0 0.0
  %183 = vmatpush2.msra.mxu0 0.0
  %184 = vmatprep.subr.mxu0 0.0
  %185 = vmatpush2.msra.mxu0 0.0
  %186 = vmatprep.subr.mxu0 0.0
  %187 = vmatpush2.msra.mxu0 0.0
  %188 = vmatprep.subr.mxu0 0.0
  %189 = vmatpush2.msra.mxu0 0.0
  %190 = vmatprep.subr.mxu0 0.0
  %191 = vmatpush2.msra.mxu0 0.0
  %192 = vmatprep.subr.mxu0 0.0
  %193 = vmatpush2.msra.mxu0 0.0
  %194 = vmatprep.subr.mxu0 0.0
  %195 = vmatpush2.msra.mxu0 0.0
  %196 = vmatprep.mubr.f32.mxu0 0.0
  %197 = vmatmul.mubr.f32.gmra.mxu0 %v124
  %v198 = vpop.f32.mrf.mxu0
  %v199 = vadd.f32 %v119, %v198
  %v200 = vpop.f32.mrf.mxu0
  %201 = vmatprep.mubr.f32.mxu0 0.0
  %202 = vmatmul.mubr.f32.gmra.mxu0 %v127
  %v203 = vpop.f32.mrf.mxu0
  %v204 = vadd.f32 %v120, %v203
  %v205 = vpop.f32.mrf.mxu0
  %206 = vmatprep.mubr.f32.mxu0 0.0
  %207 = vmatmul.mubr.f32.gmra.mxu0 %v130
  %v208 = vpop.f32.mrf.mxu0
  %v209 = vadd.f32 %v121, %v208
  %v210 = vpop.f32.mrf.mxu0
  %211 = vdwg.mxu0
  %vm212 = vcmask 261120
  %213 = vst.msk [vmem:[%s5] sm:$0xff] %vm212, %v199
  %214 = vst.msk [vmem:[%s5 + $0x8] sm:$0xff] %vm212, %v204
  %vm215 = vcmask 254976
  %216 = vst.msk [vmem:[%s5 + $0x10] sm:$0x3] %vm215, %v209
  %v217 = vsel %vm34, %v22, 0.0
  %218 = vadd.xlane.f32.xlu0 %v217
  %v219 = vpop.xlane.xlu0 %218
  %v220 = vsel %vm34, %v23, 0.0
  %221 = vadd.xlane.f32.xlu0 %v220
  %v222 = vpop.xlane.xlu0 %221
  %v223 = vadd.f32 %v219, %v222
  %v224 = vrot.slane %v223, 4
  %v225 = vadd.f32 %v223, %v224
  %v226 = vrot.slane %v225, 2
  %v227 = vadd.f32 %v225, %v226
  %v228 = vrot.slane %v227, 1
  %v229 = vadd.f32 %v227, %v228
  %v230 = vmul.f32 %v229, 0.00026041668
  %v231 = vrcp.pop 24.0
  %v232 = vmul.f32 %v219, %v231
  %v233 = vmul.f32 %v222, %v231
  %vm234 = vcmp.le.f32.partialorder %v232, %v230
  %vm235 = vcmp.le.f32.partialorder %v233, %v230
  %v236 = vsel %vm234, -1e+09, 0.0
  %v237 = vsel %vm235, -1e+09, 0.0
  %vm238 = vcmask 7168
  %239 = vst.msk [vmem:[%s6] sm:$0xff] %vm238, %v236
  %240 = vst.msk [vmem:[%s6 + $0x8] sm:$0xff] %vm238, %v237
  // Predicated region
  $region22: #{forward.2} parent=0 // pred_check
    _
  $region23: #{forward.2} parent=0 // pred_check_branch
    %242 = sbr.rel (0) target = $region25
  $region24: #{forward.2} parent=0 // pred_region
    _
  $region25: #{forward.2} parent=0 // pred_fallthru
    _
  // Predicated region
  $region26: #{forward.2} parent=0 // pred_check
    _
  $region27: #{forward.2} parent=0 // pred_check_branch
    %244 = sbr.rel (0) target = $region29
  $region28: #{forward.2} parent=0 // pred_region
    _
  $region29: #{forward.2} parent=0 // pred_fallthru
    _
  // Predicated region
  $region30: #{forward.2} parent=0 // pred_check
    _
  $region31: #{forward.2} parent=0 // pred_check_branch
    %246 = sbr.rel (0) target = $region33
  $region32: #{forward.2} parent=0 // pred_region
    _
  $region33: #{forward.2} parent=0 // pred_fallthru
    _
  // Predicated region
  $region34: #{forward.2} parent=0 // pred_check
    _
  $region35: #{forward.2} parent=0 // pred_check_branch
    %248 = sbr.rel (0) target = $region37
  $region36: #{forward.2} parent=0 // pred_region
    _
  $region37: #{forward.2} parent=0 // pred_fallthru
    _

// kernel: forward.3
$region0: #{forward.3}
  #allocation0 [shape = 'u32[]', space=smem, size = 0x4, offset = 0x4, fixed_abs, tag = 'smem constant byte address 0x4 - core index']
  #allocation1 [shape = 'u32[144,128]{1,0:T(1,128)}', space=vmem, size = 0x12000, scoped, tag = 'internal scratch']
  %s0 = inlined_call_operand.smem [shape: u32[51], index: -1, kind: input, shape index: {}]
  %s1 = sld [smem:[%s0]]
  %s2 = scalar_lea.smem %s0, 1
  %s3 = sld [smem:[%s2]]
  %s4 = scalar_lea.smem %s0, 2
  %s5 = sld [smem:[%s4]]
  %s6 = scalar_lea.smem %s0, 3
  %s7 = sld [smem:[%s6]]
  %s8 = scalar_lea.smem %s0, 4
  %s9 = sld [smem:[%s8]]
  %s10 = scalar_lea.smem %s0, 5
  %s11 = sld [smem:[%s10]]
  %s12 = scalar_lea.smem %s0, 6
  %s13 = sld [smem:[%s12]]
  %s14 = scalar_lea.smem %s0, 7
  %s15 = sld [smem:[%s14]]
  %s16 = scalar_lea.smem %s0, 8
  %s17 = sld [smem:[%s16]]
  %s18 = scalar_lea.smem %s0, 9
  %s19 = sld [smem:[%s18]]
  %s20 = scalar_lea.smem %s0, 10
  %s21 = sld [smem:[%s20]]
  %s22 = scalar_lea.smem %s0, 11
  %s23 = sld [smem:[%s22]]
  %s24 = scalar_lea.smem %s0, 12
  %s25 = sld [smem:[%s24]]
  %s26 = scalar_lea.smem %s0, 13
  %s27 = sld [smem:[%s26]]
  %s28 = scalar_lea.smem %s0, 14
  %s29 = sld [smem:[%s28]]
  %s30 = scalar_lea.smem %s0, 15
  %s31 = sld [smem:[%s30]]
  %s32 = scalar_lea.smem %s0, 16
  %s33 = sld [smem:[%s32]]
  %s34 = scalar_lea.smem %s0, 17
  %s35 = sld [smem:[%s34]]
  %s36 = scalar_lea.smem %s0, 18
  %s37 = sld [smem:[%s36]]
  %s38 = scalar_lea.smem %s0, 19
  %s39 = sld [smem:[%s38]]
  %s40 = scalar_lea.smem %s0, 20
  %s41 = sld [smem:[%s40]]
  %s42 = scalar_lea.smem %s0, 21
  %s43 = sld [smem:[%s42]]
  %s44 = scalar_lea.smem %s0, 22
  %s45 = sld [smem:[%s44]]
  %s46 = scalar_lea.smem %s0, 23
  %s47 = sld [smem:[%s46]]
  %s48 = scalar_lea.smem %s0, 24
  %s49 = sld [smem:[%s48]]
  %s50 = scalar_lea.smem %s0, 25
  %s51 = sld [smem:[%s50]]
  %s52 = scalar_lea.smem %s0, 26
  %s53 = sld [smem:[%s52]]
  %s54 = scalar_lea.smem %s0, 27
  %s55 = sld [smem:[%s54]]
  %s56 = scalar_lea.smem %s0, 28
  %s57 = sld [smem:[%s56]]
  %s58 = scalar_lea.smem %s0, 29
  %s59 = sld [smem:[%s58]]
  %s60 = scalar_lea.smem %s0, 30
  %s61 = sld [smem:[%s60]]
  %s62 = scalar_lea.smem %s0, 31
  %s63 = sld [smem:[%s62]]
  %s64 = scalar_lea.smem %s0, 32
  %s65 = sld [smem:[%s64]]
  %s66 = scalar_lea.smem %s0, 33
  %s67 = sld [smem:[%s66]]
  %s68 = scalar_lea.smem %s0, 34
  %s69 = sld [smem:[%s68]]
  %s70 = scalar_lea.smem %s0, 35
  %s71 = sld [smem:[%s70]]
  %s72 = scalar_lea.smem %s0, 36
  %s73 = sld [smem:[%s72]]
  %s74 = scalar_lea.smem %s0, 37
  %s75 = sld [smem:[%s74]]
  %s76 = scalar_lea.smem %s0, 38
  %s77 = sld [smem:[%s76]]
  %s78 = scalar_lea.smem %s0, 39
  %s79 = sld [smem:[%s78]]
  %s80 = scalar_lea.smem %s0, 40
  %s81 = sld [smem:[%s80]]
  %s82 = scalar_lea.smem %s0, 41
  %s83 = sld [smem:[%s82]]
  %s84 = scalar_lea.smem %s0, 42
  %s85 = sld [smem:[%s84]]
  %s86 = scalar_lea.smem %s0, 43
  %s87 = sld [smem:[%s86]]
  %s88 = scalar_lea.smem %s0, 44
  %s89 = sld [smem:[%s88]]
  %s90 = scalar_lea.smem %s0, 45
  %s91 = sld [smem:[%s90]]
  %s92 = scalar_lea.smem %s0, 46
  %s93 = sld [smem:[%s92]]
  %s94 = scalar_lea.smem %s0, 47
  %s95 = sld [smem:[%s94]]
  %s96 = scalar_lea.smem %s0, 48
  %s97 = sld [smem:[%s96]]
  %s98 = scalar_lea.smem %s0, 49
  %s99 = sld [smem:[%s98]]
  %s100 = scalar_lea.smem %s0, 50
  %s101 = sld [smem:[%s100]]
  %s102 = sld [smem:[#allocation0]]
  $region210: #{forward.3} parent=0
    _
  %s104 = ssub.s32 1, %s102
  %s105 = scalar_select 0, %s104, %s102
  $region1: #{forward.3} parent=0
    #allocation2 [shape = 'u8[1024]{0}', space=vmem, size = 0x400, scoped, tag = 'output window, operand 0, single buffered']
    #allocation3 [shape = 's32[1]{0}', space=sflag, size = 0x4, scoped, tag = 'scoped memory for forward.3']
    %106 = vsyncpa [#allocation3], 0
    // Predicated region
    $region2: #{forward.3} parent=1 // pred_check
      _
    $region3: #{forward.3} parent=1 // pred_check_branch
      %108 = sbr.rel (0) target = $region5
    $region4: #{forward.3} parent=1 // pred_region
      _
    $region5: #{forward.3} parent=1 // pred_fallthru
      _
    // Predicated region
    $region6: #{forward.3} parent=1 // pred_check
      _
    $region7: #{forward.3} parent=1 // pred_check_branch
      %110 = sbr.rel (0) target = $region9
    $region8: #{forward.3} parent=1 // pred_region
      _
    $region9: #{forward.3} parent=1 // pred_fallthru
      _
    // Predicated region
    $region10: #{forward.3} parent=1 // pred_check
      _
    $region11: #{forward.3} parent=1 // pred_check_branch
      %112 = sbr.rel (0) target = $region13
    $region12: #{forward.3} parent=1 // pred_region
      _
    $region13: #{forward.3} parent=1 // pred_fallthru
      _
    // Predicated region
    $region14: #{forward.3} parent=1 // pred_check
      _
    $region15: #{forward.3} parent=1 // pred_check_branch
      %114 = sbr.rel (0) target = $region17
    $region16: #{forward.3} parent=1 // pred_region
      _
    $region17: #{forward.3} parent=1 // pred_fallthru
      _
    // Predicated region
    $region18: #{forward.3} parent=1 // pred_check
      _
    $region19: #{forward.3} parent=1 // pred_check_branch
      %116 = sbr.rel (0) target = $region21
    $region20: #{forward.3} parent=1 // pred_region
      _
    $region21: #{forward.3} parent=1 // pred_fallthru
      _
    // Predicated region
    $region22: #{forward.3} parent=1 // pred_check
      _
    $region23: #{forward.3} parent=1 // pred_check_branch
      %118 = sbr.rel (0) target = $region25
    $region24: #{forward.3} parent=1 // pred_region
      _
    $region25: #{forward.3} parent=1 // pred_fallthru
      _
    // Predicated region
    $region26: #{forward.3} parent=1 // pred_check
      _
    $region27: #{forward.3} parent=1 // pred_check_branch
      %120 = sbr.rel (0) target = $region29
    $region28: #{forward.3} parent=1 // pred_region
      _
    $region29: #{forward.3} parent=1 // pred_fallthru
      _
    // Predicated region
    $region30: #{forward.3} parent=1 // pred_check
      _
    $region31: #{forward.3} parent=1 // pred_check_branch
      %122 = sbr.rel (0) target = $region33
    $region32: #{forward.3} parent=1 // pred_region
      _
    $region33: #{forward.3} parent=1 // pred_fallthru
      _
    // Predicated region
    $region34: #{forward.3} parent=1 // pred_check
      _
    $region35: #{forward.3} parent=1 // pred_check_branch
      %124 = sbr.rel (0) target = $region37
    $region36: #{forward.3} parent=1 // pred_region
      _
    $region37: #{forward.3} parent=1 // pred_fallthru
      _
    // Predicated region
    $region38: #{forward.3} parent=1 // pred_check
      _
    $region39: #{forward.3} parent=1 // pred_check_branch
      %126 = sbr.rel (0) target = $region41
    $region40: #{forward.3} parent=1 // pred_region
      _
    $region41: #{forward.3} parent=1 // pred_fallthru
      _
    // Predicated region
    $region42: #{forward.3} parent=1 // pred_check
      _
    $region43: #{forward.3} parent=1 // pred_check_branch
      %128 = sbr.rel (0) target = $region45
    $region44: #{forward.3} parent=1 // pred_region
      _
    $region45: #{forward.3} parent=1 // pred_fallthru
      _
    // Predicated region
    $region46: #{forward.3} parent=1 // pred_check
      _
    $region47: #{forward.3} parent=1 // pred_check_branch
      %130 = sbr.rel (0) target = $region49
    $region48: #{forward.3} parent=1 // pred_region
      _
    $region49: #{forward.3} parent=1 // pred_fallthru
      _
    // Predicated region
    $region50: #{forward.3} parent=1 // pred_check
      _
    $region51: #{forward.3} parent=1 // pred_check_branch
      %132 = sbr.rel (0) target = $region53
    $region52: #{forward.3} parent=1 // pred_region
      _
    $region53: #{forward.3} parent=1 // pred_fallthru
      _
    // Predicated region
    $region54: #{forward.3} parent=1 // pred_check
      _
    $region55: #{forward.3} parent=1 // pred_check_branch
      %134 = sbr.rel (0) target = $region57
    $region56: #{forward.3} parent=1 // pred_region
      _
    $region57: #{forward.3} parent=1 // pred_fallthru
      _
    // Predicated region
    $region58: #{forward.3} parent=1 // pred_check
      _
    $region59: #{forward.3} parent=1 // pred_check_branch
      %136 = sbr.rel (0) target = $region61
    $region60: #{forward.3} parent=1 // pred_region
      _
    $region61: #{forward.3} parent=1 // pred_fallthru
      _
    // Predicated region
    $region62: #{forward.3} parent=1 // pred_check
      _
    $region63: #{forward.3} parent=1 // pred_check_branch
      %138 = sbr.rel (0) target = $region65
    $region64: #{forward.3} parent=1 // pred_region
      _
    $region65: #{forward.3} parent=1 // pred_fallthru
      _
    // Predicated region
    $region66: #{forward.3} parent=1 // pred_check
      _
    $region67: #{forward.3} parent=1 // pred_check_branch
      %140 = sbr.rel (0) target = $region69
    $region68: #{forward.3} parent=1 // pred_region
      _
    $region69: #{forward.3} parent=1 // pred_fallthru
      _
    // Predicated region
    $region70: #{forward.3} parent=1 // pred_check
      _
    $region71: #{forward.3} parent=1 // pred_check_branch
      %142 = sbr.rel (0) target = $region73
    $region72: #{forward.3} parent=1 // pred_region
      _
    $region73: #{forward.3} parent=1 // pred_fallthru
      _
    // Predicated region
    $region74: #{forward.3} parent=1 // pred_check
      _
    $region75: #{forward.3} parent=1 // pred_check_branch
      %144 = sbr.rel (0) target = $region77
    $region76: #{forward.3} parent=1 // pred_region
      _
    $region77: #{forward.3} parent=1 // pred_fallthru
      _
    // Predicated region
    $region78: #{forward.3} parent=1 // pred_check
      _
    $region79: #{forward.3} parent=1 // pred_check_branch
      %146 = sbr.rel (0) target = $region81
    $region80: #{forward.3} parent=1 // pred_region
      _
    $region81: #{forward.3} parent=1 // pred_fallthru
      _
    // Predicated region
    $region82: #{forward.3} parent=1 // pred_check
      _
    $region83: #{forward.3} parent=1 // pred_check_branch
      %148 = sbr.rel (0) target = $region85
    $region84: #{forward.3} parent=1 // pred_region
      _
    $region85: #{forward.3} parent=1 // pred_fallthru
      _
    // Predicated region
    $region86: #{forward.3} parent=1 // pred_check
      _
    $region87: #{forward.3} parent=1 // pred_check_branch
      %150 = sbr.rel (0) target = $region89
    $region88: #{forward.3} parent=1 // pred_region
      _
    $region89: #{forward.3} parent=1 // pred_fallthru
      _
    // Predicated region
    $region90: #{forward.3} parent=1 // pred_check
      _
    $region91: #{forward.3} parent=1 // pred_check_branch
      %152 = sbr.rel (0) target = $region93
    $region92: #{forward.3} parent=1 // pred_region
      _
    $region93: #{forward.3} parent=1 // pred_fallthru
      _
    // Predicated region
    $region94: #{forward.3} parent=1 // pred_check
      _
    $region95: #{forward.3} parent=1 // pred_check_branch
      %154 = sbr.rel (0) target = $region97
    $region96: #{forward.3} parent=1 // pred_region
      _
    $region97: #{forward.3} parent=1 // pred_fallthru
      _
    // Predicated region
    $region98: #{forward.3} parent=1 // pred_check
      _
    $region99: #{forward.3} parent=1 // pred_check_branch
      %156 = sbr.rel (0) target = $region101
    $region100: #{forward.3} parent=1 // pred_region
      _
    $region101: #{forward.3} parent=1 // pred_fallthru
      _
    // Predicated region
    $region102: #{forward.3} parent=1 // pred_check
      _
    $region103: #{forward.3} parent=1 // pred_check_branch
      %158 = sbr.rel (0) target = $region105
    $region104: #{forward.3} parent=1 // pred_region
      _
    $region105: #{forward.3} parent=1 // pred_fallthru
      _
    // Predicated region
    $region106: #{forward.3} parent=1 // pred_check
      _
    $region107: #{forward.3} parent=1 // pred_check_branch
      %160 = sbr.rel (0) target = $region109
    $region108: #{forward.3} parent=1 // pred_region
      _
    $region109: #{forward.3} parent=1 // pred_fallthru
      _
    // Predicated region
    $region110: #{forward.3} parent=1 // pred_check
      _
    $region111: #{forward.3} parent=1 // pred_check_branch
      %162 = sbr.rel (0) target = $region113
    $region112: #{forward.3} parent=1 // pred_region
      _
    $region113: #{forward.3} parent=1 // pred_fallthru
      _
    // Predicated region
    $region114: #{forward.3} parent=1 // pred_check
      _
    $region115: #{forward.3} parent=1 // pred_check_branch
      %164 = sbr.rel (0) target = $region117
    $region116: #{forward.3} parent=1 // pred_region
      _
    $region117: #{forward.3} parent=1 // pred_fallthru
      _
    // Predicated region
    $region118: #{forward.3} parent=1 // pred_check
      _
    $region119: #{forward.3} parent=1 // pred_check_branch
      %166 = sbr.rel (0) target = $region121
    $region120: #{forward.3} parent=1 // pred_region
      _
    $region121: #{forward.3} parent=1 // pred_fallthru
      _
    // Predicated region
    $region122: #{forward.3} parent=1 // pred_check
      _
    $region123: #{forward.3} parent=1 // pred_check_branch
      %168 = sbr.rel (0) target = $region125
    $region124: #{forward.3} parent=1 // pred_region
      _
    $region125: #{forward.3} parent=1 // pred_fallthru
      _
    // Predicated region
    $region126: #{forward.3} parent=1 // pred_check
      _
    $region127: #{forward.3} parent=1 // pred_check_branch
      %170 = sbr.rel (0) target = $region129
    $region128: #{forward.3} parent=1 // pred_region
      _
    $region129: #{forward.3} parent=1 // pred_fallthru
      _
    // Predicated region
    $region130: #{forward.3} parent=1 // pred_check
      _
    $region131: #{forward.3} parent=1 // pred_check_branch
      %172 = sbr.rel (0) target = $region133
    $region132: #{forward.3} parent=1 // pred_region
      _
    $region133: #{forward.3} parent=1 // pred_fallthru
      _
    // Predicated region
    $region134: #{forward.3} parent=1 // pred_check
      _
    $region135: #{forward.3} parent=1 // pred_check_branch
      %174 = sbr.rel (0) target = $region137
    $region136: #{forward.3} parent=1 // pred_region
      _
    $region137: #{forward.3} parent=1 // pred_fallthru
      _
    // Predicated region
    $region138: #{forward.3} parent=1 // pred_check
      _
    $region139: #{forward.3} parent=1 // pred_check_branch
      %176 = sbr.rel (0) target = $region141
    $region140: #{forward.3} parent=1 // pred_region
      _
    $region141: #{forward.3} parent=1 // pred_fallthru
      _
    // Predicated region
    $region142: #{forward.3} parent=1 // pred_check
      _
    $region143: #{forward.3} parent=1 // pred_check_branch
      %178 = sbr.rel (0) target = $region145
    $region144: #{forward.3} parent=1 // pred_region
      _
    $region145: #{forward.3} parent=1 // pred_fallthru
      _
    // Predicated region
    $region146: #{forward.3} parent=1 // pred_check
      _
    $region147: #{forward.3} parent=1 // pred_check_branch
      %180 = sbr.rel (0) target = $region149
    $region148: #{forward.3} parent=1 // pred_region
      _
    $region149: #{forward.3} parent=1 // pred_fallthru
      _
    // Predicated region
    $region150: #{forward.3} parent=1 // pred_check
      _
    $region151: #{forward.3} parent=1 // pred_check_branch
      %182 = sbr.rel (0) target = $region153
    $region152: #{forward.3} parent=1 // pred_region
      _
    $region153: #{forward.3} parent=1 // pred_fallthru
      _
    // Predicated region
    $region154: #{forward.3} parent=1 // pred_check
      _
    $region155: #{forward.3} parent=1 // pred_check_branch
      %184 = sbr.rel (0) target = $region157
    $region156: #{forward.3} parent=1 // pred_region
      _
    $region157: #{forward.3} parent=1 // pred_fallthru
      _
    // Predicated region
    $region158: #{forward.3} parent=1 // pred_check
      _
    $region159: #{forward.3} parent=1 // pred_check_branch
      %186 = sbr.rel (0) target = $region161
    $region160: #{forward.3} parent=1 // pred_region
      _
    $region161: #{forward.3} parent=1 // pred_fallthru
      _
    // Predicated region
    $region162: #{forward.3} parent=1 // pred_check
      _
    $region163: #{forward.3} parent=1 // pred_check_branch
      %188 = sbr.rel (0) target = $region165
    $region164: #{forward.3} parent=1 // pred_region
      _
    $region165: #{forward.3} parent=1 // pred_fallthru
      _
    // Predicated region
    $region166: #{forward.3} parent=1 // pred_check
      _
    $region167: #{forward.3} parent=1 // pred_check_branch
      %190 = sbr.rel (0) target = $region169
    $region168: #{forward.3} parent=1 // pred_region
      _
    $region169: #{forward.3} parent=1 // pred_fallthru
      _
    // Predicated region
    $region170: #{forward.3} parent=1 // pred_check
      _
    $region171: #{forward.3} parent=1 // pred_check_branch
      %192 = sbr.rel (0) target = $region173
    $region172: #{forward.3} parent=1 // pred_region
      _
    $region173: #{forward.3} parent=1 // pred_fallthru
      _
    // Predicated region
    $region174: #{forward.3} parent=1 // pred_check
      _
    $region175: #{forward.3} parent=1 // pred_check_branch
      %194 = sbr.rel (0) target = $region177
    $region176: #{forward.3} parent=1 // pred_region
      _
    $region177: #{forward.3} parent=1 // pred_fallthru
      _
    // Predicated region
    $region178: #{forward.3} parent=1 // pred_check
      _
    $region179: #{forward.3} parent=1 // pred_check_branch
      %196 = sbr.rel (0) target = $region181
    $region180: #{forward.3} parent=1 // pred_region
      _
    $region181: #{forward.3} parent=1 // pred_fallthru
      _
    // Predicated region
    $region182: #{forward.3} parent=1 // pred_check
      _
    $region183: #{forward.3} parent=1 // pred_check_branch
      %198 = sbr.rel (0) target = $region185
    $region184: #{forward.3} parent=1 // pred_region
      _
    $region185: #{forward.3} parent=1 // pred_fallthru
      _
    // Predicated region
    $region186: #{forward.3} parent=1 // pred_check
      _
    $region187: #{forward.3} parent=1 // pred_check_branch
      %200 = sbr.rel (0) target = $region189
    $region188: #{forward.3} parent=1 // pred_region
      _
    $region189: #{forward.3} parent=1 // pred_fallthru
      _
    // Predicated region
    $region190: #{forward.3} parent=1 // pred_check
      _
    $region191: #{forward.3} parent=1 // pred_check_branch
      %202 = sbr.rel (0) target = $region193
    $region192: #{forward.3} parent=1 // pred_region
      _
    $region193: #{forward.3} parent=1 // pred_fallthru
      _
    // Predicated region
    $region194: #{forward.3} parent=1 // pred_check
      _
    $region195: #{forward.3} parent=1 // pred_check_branch
      %204 = sbr.rel (0) target = $region197
    $region196: #{forward.3} parent=1 // pred_region
      _
    $region197: #{forward.3} parent=1 // pred_fallthru
      _
    // Predicated region
    $region198: #{forward.3} parent=1 // pred_check
      _
    $region199: #{forward.3} parent=1 // pred_check_branch
      %206 = sbr.rel (0) target = $region201
    $region200: #{forward.3} parent=1 // pred_region
      _
    $region201: #{forward.3} parent=1 // pred_fallthru
      _
    %v207 = vld [vmem:[%s1] sm:$0xff]
    %v208 = vld [vmem:[%s1 + $0x8] sm:$0xff]
    %v209 = vld [vmem:[%s1 + $0x10] sm:$0x3]
    %v210 = vld [vmem:[%s3] sm:$0xff]
    %v211 = vld [vmem:[%s3 + $0x8] sm:$0xff]
    %v212 = vld [vmem:[%s3 + $0x10] sm:$0x3]
    %v213 = vld [vmem:[%s5] sm:$0xff]
    %v214 = vld [vmem:[%s5 + $0x8] sm:$0xff]
    %v215 = vld [vmem:[%s5 + $0x10] sm:$0xff]
    %v216 = vld [vmem:[%s5 + $0x18] sm:$0xff]
    %v217 = vld [vmem:[%s7] sm:$0x1]
    %v218 = vld [vmem:[%s9] sm:$0xff]
    %v219 = vld [vmem:[%s9 + $0x8] sm:$0xff]
    %v220 = vld [vmem:[%s9 + $0x10] sm:$0xff]
    %v221 = vld [vmem:[%s9 + $0x18] sm:$0xff]
    %v222 = vld [vmem:[%s11] sm:$0x1]
    %v223 = vld [vmem:[%s13] sm:$0xff]
    %v224 = vld [vmem:[%s13 + $0x8] sm:$0xff]
    %v225 = vld [vmem:[%s13 + $0x10] sm:$0xff]
    %v226 = vld [vmem:[%s13 + $0x18] sm:$0xff]
    %v227 = vld [vmem:[%s15] sm:$0x1]
    %v228 = vld [vmem:[%s17] sm:$0xff]
    %v229 = vld [vmem:[%s17 + $0x8] sm:$0xff]
    %v230 = vld [vmem:[%s17 + $0x10] sm:$0xff]
    %v231 = vld [vmem:[%s17 + $0x18] sm:$0xff]
    %v232 = vld [vmem:[%s19] sm:$0x1]
    %v233 = vld [vmem:[%s21] sm:$0x1]
    %v234 = vld [vmem:[%s23] sm:$0x1]
    %v235 = vld [vmem:[%s25] sm:$0xff]
    %v236 = vld [vmem:[%s25 + $0x8] sm:$0xff]
    %v237 = vld [vmem:[%s25 + $0x10] sm:$0xff]
    %v238 = vld [vmem:[%s25 + $0x18] sm:$0xff]
    %v239 = vld [vmem:[%s25 + $0x20] sm:$0xff]
    %v240 = vld [vmem:[%s25 + $0x28] sm:$0xff]
    %v241 = vld [vmem:[%s25 + $0x30] sm:$0xff]
    %v242 = vld [vmem:[%s25 + $0x38] sm:$0xff]
    %v243 = vld [vmem:[%s25 + $0x40] sm:$0xff]
    %v244 = vld [vmem:[%s25 + $0x48] sm:$0xff]
    %v245 = vld [vmem:[%s25 + $0x50] sm:$0xff]
    %v246 = vld [vmem:[%s25 + $0x58] sm:$0xff]
    %v247 = vld [vmem:[%s25 + $0x60] sm:$0xff]
    %v248 = vld [vmem:[%s25 + $0x68] sm:$0xff]
    %v249 = vld [vmem:[%s25 + $0x70] sm:$0xff]
    %v250 = vld [vmem:[%s25 + $0x78] sm:$0xff]
    %v251 = vld [vmem:[%s25 + $0x80] sm:$0xff]
    %v252 = vld [vmem:[%s25 + $0x88] sm:$0xff]
    %v253 = vld [vmem:[%s25 + $0x90] sm:$0xff]
    %v254 = vld [vmem:[%s25 + $0x98] sm:$0xff]
    %v255 = vld [vmem:[%s25 + $0xa0] sm:$0xff]
    %v256 = vld [vmem:[%s25 + $0xa8] sm:$0xff]
    %v257 = vld [vmem:[%s25 + $0xb0] sm:$0xff]
    %v258 = vld [vmem:[%s25 + $0xb8] sm:$0xff]
    %v259 = vld [vmem:[%s25 + $0xc0] sm:$0xff]
    %v260 = vld [vmem:[%s25 + $0xc8] sm:$0xff]
    %v261 = vld [vmem:[%s25 + $0xd0] sm:$0xff]
    %v262 = vld [vmem:[%s25 + $0xd8] sm:$0xff]
    %v263 = vld [vmem:[%s25 + $0xe0] sm:$0xff]
    %v264 = vld [vmem:[%s25 + $0xe8] sm:$0xff]
    %v265 = vld [vmem:[%s25 + $0xf0] sm:$0xff]
    %v266 = vld [vmem:[%s25 + $0xf8] sm:$0xff]
    %v267 = vld [vmem:[%s27] sm:$0xff]
    %v268 = vld [vmem:[%s27 + $0x8] sm:$0xff]
    %v269 = vld [vmem:[%s29] sm:$0xf]
    %v270 = vld [vmem:[%s29 + $0x4] sm:$0xf]
    %v271 = vld [vmem:[%s29 + $0x8] sm:$0xf]
    %v272 = vld [vmem:[%s29 + $0xc] sm:$0xf]
    %v273 = vld [vmem:[%s29 + $0x10] sm:$0xf]
    %v274 = vld [vmem:[%s29 + $0x14] sm:$0xf]
    %v275 = vld [vmem:[%s29 + $0x18] sm:$0xf]
    %v276 = vld [vmem:[%s29 + $0x1c] sm:$0xf]
    %v277 = vld [vmem:[%s29 + $0x20] sm:$0xf]
    %v278 = vld [vmem:[%s29 + $0x24] sm:$0xf]
    %v279 = vld [vmem:[%s29 + $0x28] sm:$0xf]
    %v280 = vld [vmem:[%s29 + $0x2c] sm:$0xf]
    %v281 = vld [vmem:[%s29 + $0x30] sm:$0xf]
    %v282 = vld [vmem:[%s29 + $0x34] sm:$0xf]
    %v283 = vld [vmem:[%s29 + $0x38] sm:$0xf]
    %v284 = vld [vmem:[%s29 + $0x3c] sm:$0xf]
    %v285 = vld [vmem:[%s29 + $0x40] sm:$0xf]
    %v286 = vld [vmem:[%s29 + $0x44] sm:$0xf]
    %v287 = vld [vmem:[%s29 + $0x48] sm:$0xf]
    %v288 = vld [vmem:[%s29 + $0x4c] sm:$0xf]
    %v289 = vld [vmem:[%s29 + $0x50] sm:$0xf]
    %v290 = vld [vmem:[%s29 + $0x54] sm:$0xf]
    %v291 = vld [vmem:[%s29 + $0x58] sm:$0xf]
    %v292 = vld [vmem:[%s29 + $0x5c] sm:$0xf]
    %v293 = vld [vmem:[%s29 + $0x60] sm:$0xf]
    %v294 = vld [vmem:[%s29 + $0x64] sm:$0xf]
    %v295 = vld [vmem:[%s29 + $0x68] sm:$0xf]
    %v296 = vld [vmem:[%s29 + $0x6c] sm:$0xf]
    %v297 = vld [vmem:[%s29 + $0x70] sm:$0xf]
    %v298 = vld [vmem:[%s29 + $0x74] sm:$0xf]
    %v299 = vld [vmem:[%s29 + $0x78] sm:$0xf]
    %v300 = vld [vmem:[%s29 + $0x7c] sm:$0xf]
    %v301 = vld [vmem:[%s29 + $0x80] sm:$0xf]
    %v302 = vld [vmem:[%s29 + $0x84] sm:$0xf]
    %v303 = vld [vmem:[%s29 + $0x88] sm:$0xf]
    %v304 = vld [vmem:[%s29 + $0x8c] sm:$0xf]
    %v305 = vld [vmem:[%s29 + $0x90] sm:$0xf]
    %v306 = vld [vmem:[%s29 + $0x94] sm:$0xf]
    %v307 = vld [vmem:[%s29 + $0x98] sm:$0xf]
    %v308 = vld [vmem:[%s29 + $0x9c] sm:$0xf]
    %v309 = vld [vmem:[%s29 + $0xa0] sm:$0xf]
    %v310 = vld [vmem:[%s29 + $0xa4] sm:$0xf]
    %v311 = vld [vmem:[%s29 + $0xa8] sm:$0xf]
    %v312 = vld [vmem:[%s29 + $0xac] sm:$0xf]
    %v313 = vld [vmem:[%s29 + $0xb0] sm:$0xf]
    %v314 = vld [vmem:[%s29 + $0xb4] sm:$0xf]
    %v315 = vld [vmem:[%s29 + $0xb8] sm:$0xf]
    %v316 = vld [vmem:[%s29 + $0xbc] sm:$0xf]
    %v317 = vld [vmem:[%s29 + $0xc0] sm:$0xf]
    %v318 = vld [vmem:[%s29 + $0xc4] sm:$0xf]
    %v319 = vld [vmem:[%s29 + $0xc8] sm:$0xf]
    %v320 = vld [vmem:[%s29 + $0xcc] sm:$0xf]
    %v321 = vld [vmem:[%s29 + $0xd0] sm:$0xf]
    %v322 = vld [vmem:[%s29 + $0xd4] sm:$0xf]
    %v323 = vld [vmem:[%s29 + $0xd8] sm:$0xf]
    %v324 = vld [vmem:[%s29 + $0xdc] sm:$0xf]
    %v325 = vld [vmem:[%s29 + $0xe0] sm:$0xf]
    %v326 = vld [vmem:[%s29 + $0xe4] sm:$0xf]
    %v327 = vld [vmem:[%s29 + $0xe8] sm:$0xf]
    %v328 = vld [vmem:[%s29 + $0xec] sm:$0xf]
    %v329 = vld [vmem:[%s29 + $0xf0] sm:$0xf]
    %v330 = vld [vmem:[%s29 + $0xf4] sm:$0xf]
    %v331 = vld [vmem:[%s29 + $0xf8] sm:$0xf]
    %v332 = vld [vmem:[%s29 + $0xfc] sm:$0xf]
    %v333 = vld [vmem:[%s29 + $0x100] sm:$0xf]
    %v334 = vld [vmem:[%s29 + $0x104] sm:$0xf]
    %v335 = vld [vmem:[%s29 + $0x108] sm:$0xf]
    %v336 = vld [vmem:[%s29 + $0x10c] sm:$0xf]
    %v337 = vld [vmem:[%s29 + $0x110] sm:$0xf]
    %v338 = vld [vmem:[%s29 + $0x114] sm:$0xf]
    %v339 = vld [vmem:[%s29 + $0x118] sm:$0xf]
    %v340 = vld [vmem:[%s29 + $0x11c] sm:$0xf]
    %v341 = vld [vmem:[%s29 + $0x120] sm:$0xf]
    %v342 = vld [vmem:[%s29 + $0x124] sm:$0xf]
    %v343 = vld [vmem:[%s29 + $0x128] sm:$0xf]
    %v344 = vld [vmem:[%s29 + $0x12c] sm:$0xf]
    %v345 = vld [vmem:[%s29 + $0x130] sm:$0xf]
    %v346 = vld [vmem:[%s29 + $0x134] sm:$0xf]
    %v347 = vld [vmem:[%s29 + $0x138] sm:$0xf]
    %v348 = vld [vmem:[%s29 + $0x13c] sm:$0xf]
    %v349 = vld [vmem:[%s29 + $0x140] sm:$0xf]
    %v350 = vld [vmem:[%s29 + $0x144] sm:$0xf]
    %v351 = vld [vmem:[%s29 + $0x148] sm:$0xf]
    %v352 = vld [vmem:[%s29 + $0x14c] sm:$0xf]
    %v353 = vld [vmem:[%s29 + $0x150] sm:$0xf]
    %v354 = vld [vmem:[%s29 + $0x154] sm:$0xf]
    %v355 = vld [vmem:[%s29 + $0x158] sm:$0xf]
    %v356 = vld [vmem:[%s29 + $0x15c] sm:$0xf]
    %v357 = vld [vmem:[%s29 + $0x160] sm:$0xf]
    %v358 = vld [vmem:[%s29 + $0x164] sm:$0xf]
    %v359 = vld [vmem:[%s29 + $0x168] sm:$0xf]
    %v360 = vld [vmem:[%s29 + $0x16c] sm:$0xf]
    %v361 = vld [vmem:[%s29 + $0x170] sm:$0xf]
    %v362 = vld [vmem:[%s29 + $0x174] sm:$0xf]
    %v363 = vld [vmem:[%s29 + $0x178] sm:$0xf]
    %v364 = vld [vmem:[%s29 + $0x17c] sm:$0xf]
    %v365 = vld [vmem:[%s29 + $0x180] sm:$0xf]
    %v366 = vld [vmem:[%s29 + $0x184] sm:$0xf]
    %v367 = vld [vmem:[%s29 + $0x188] sm:$0xf]
    %v368 = vld [vmem:[%s29 + $0x18c] sm:$0xf]
    %v369 = vld [vmem:[%s29 + $0x190] sm:$0xf]
    %v370 = vld [vmem:[%s29 + $0x194] sm:$0xf]
    %v371 = vld [vmem:[%s29 + $0x198] sm:$0xf]
    %v372 = vld [vmem:[%s29 + $0x19c] sm:$0xf]
    %v373 = vld [vmem:[%s29 + $0x1a0] sm:$0xf]
    %v374 = vld [vmem:[%s29 + $0x1a4] sm:$0xf]
    %v375 = vld [vmem:[%s29 + $0x1a8] sm:$0xf]
    %v376 = vld [vmem:[%s29 + $0x1ac] sm:$0xf]
    %v377 = vld [vmem:[%s29 + $0x1b0] sm:$0xf]
    %v378 = vld [vmem:[%s29 + $0x1b4] sm:$0xf]
    %v379 = vld [vmem:[%s29 + $0x1b8] sm:$0xf]
    %v380 = vld [vmem:[%s29 + $0x1bc] sm:$0xf]
    %v381 = vld [vmem:[%s29 + $0x1c0] sm:$0xf]
    %v382 = vld [vmem:[%s29 + $0x1c4] sm:$0xf]
    %v383 = vld [vmem:[%s29 + $0x1c8] sm:$0xf]
    %v384 = vld [vmem:[%s29 + $0x1cc] sm:$0xf]
    %v385 = vld [vmem:[%s29 + $0x1d0] sm:$0xf]
    %v386 = vld [vmem:[%s29 + $0x1d4] sm:$0xf]
    %v387 = vld [vmem:[%s29 + $0x1d8] sm:$0xf]
    %v388 = vld [vmem:[%s29 + $0x1dc] sm:$0xf]
    %v389 = vld [vmem:[%s29 + $0x1e0] sm:$0xf]
    %v390 = vld [vmem:[%s29 + $0x1e4] sm:$0xf]
    %v391 = vld [vmem:[%s29 + $0x1e8] sm:$0xf]
    %v392 = vld [vmem:[%s29 + $0x1ec] sm:$0xf]
    %v393 = vld [vmem:[%s29 + $0x1f0] sm:$0xf]
    %v394 = vld [vmem:[%s29 + $0x1f4] sm:$0xf]
    %v395 = vld [vmem:[%s29 + $0x1f8] sm:$0xf]
    %v396 = vld [vmem:[%s29 + $0x1fc] sm:$0xf]
    %v397 = vld [vmem:[%s29 + $0x200] sm:$0xf]
    %v398 = vld [vmem:[%s29 + $0x204] sm:$0xf]
    %v399 = vld [vmem:[%s29 + $0x208] sm:$0xf]
    %v400 = vld [vmem:[%s29 + $0x20c] sm:$0xf]
    %v401 = vld [vmem:[%s29 + $0x210] sm:$0xf]
    %v402 = vld [vmem:[%s29 + $0x214] sm:$0xf]
    %v403 = vld [vmem:[%s29 + $0x218] sm:$0xf]
    %v404 = vld [vmem:[%s29 + $0x21c] sm:$0xf]
    %v405 = vld [vmem:[%s29 + $0x220] sm:$0xf]
    %v406 = vld [vmem:[%s29 + $0x224] sm:$0xf]
    %v407 = vld [vmem:[%s29 + $0x228] sm:$0xf]
    %v408 = vld [vmem:[%s29 + $0x22c] sm:$0xf]
    %v409 = vld [vmem:[%s29 + $0x230] sm:$0xf]
    %v410 = vld [vmem:[%s29 + $0x234] sm:$0xf]
    %v411 = vld [vmem:[%s29 + $0x238] sm:$0xf]
    %v412 = vld [vmem:[%s29 + $0x23c] sm:$0xf]
    %v413 = vld [vmem:[%s29 + $0x240] sm:$0xf]
    %v414 = vld [vmem:[%s29 + $0x244] sm:$0xf]
    %v415 = vld [vmem:[%s29 + $0x248] sm:$0xf]
    %v416 = vld [vmem:[%s29 + $0x24c] sm:$0xf]
    %v417 = vld [vmem:[%s29 + $0x250] sm:$0xf]
    %v418 = vld [vmem:[%s29 + $0x254] sm:$0xf]
    %v419 = vld [vmem:[%s29 + $0x258] sm:$0xf]
    %v420 = vld [vmem:[%s29 + $0x25c] sm:$0xf]
    %v421 = vld [vmem:[%s29 + $0x260] sm:$0xf]
    %v422 = vld [vmem:[%s29 + $0x264] sm:$0xf]
    %v423 = vld [vmem:[%s29 + $0x268] sm:$0xf]
    %v424 = vld [vmem:[%s29 + $0x26c] sm:$0xf]
    %v425 = vld [vmem:[%s29 + $0x270] sm:$0xf]
    %v426 = vld [vmem:[%s29 + $0x274] sm:$0xf]
    %v427 = vld [vmem:[%s29 + $0x278] sm:$0xf]
    %v428 = vld [vmem:[%s29 + $0x27c] sm:$0xf]
    %v429 = vld [vmem:[%s29 + $0x280] sm:$0xf]
    %v430 = vld [vmem:[%s29 + $0x284] sm:$0xf]
    %v431 = vld [vmem:[%s29 + $0x288] sm:$0xf]
    %v432 = vld [vmem:[%s29 + $0x28c] sm:$0xf]
    %v433 = vld [vmem:[%s29 + $0x290] sm:$0xf]
    %v434 = vld [vmem:[%s29 + $0x294] sm:$0xf]
    %v435 = vld [vmem:[%s29 + $0x298] sm:$0xf]
    %v436 = vld [vmem:[%s29 + $0x29c] sm:$0xf]
    %v437 = vld [vmem:[%s29 + $0x2a0] sm:$0xf]
    %v438 = vld [vmem:[%s29 + $0x2a4] sm:$0xf]
    %v439 = vld [vmem:[%s29 + $0x2a8] sm:$0xf]
    %v440 = vld [vmem:[%s29 + $0x2ac] sm:$0xf]
    %v441 = vld [vmem:[%s29 + $0x2b0] sm:$0xf]
    %v442 = vld [vmem:[%s29 + $0x2b4] sm:$0xf]
    %v443 = vld [vmem:[%s29 + $0x2b8] sm:$0xf]
    %v444 = vld [vmem:[%s29 + $0x2bc] sm:$0xf]
    %v445 = vld [vmem:[%s29 + $0x2c0] sm:$0xf]
    %v446 = vld [vmem:[%s29 + $0x2c4] sm:$0xf]
    %v447 = vld [vmem:[%s29 + $0x2c8] sm:$0xf]
    %v448 = vld [vmem:[%s29 + $0x2cc] sm:$0xf]
    %v449 = vld [vmem:[%s29 + $0x2d0] sm:$0xf]
    %v450 = vld [vmem:[%s29 + $0x2d4] sm:$0xf]
    %v451 = vld [vmem:[%s29 + $0x2d8] sm:$0xf]
    %v452 = vld [vmem:[%s29 + $0x2dc] sm:$0xf]
    %v453 = vld [vmem:[%s29 + $0x2e0] sm:$0xf]
    %v454 = vld [vmem:[%s29 + $0x2e4] sm:$0xf]
    %v455 = vld [vmem:[%s29 + $0x2e8] sm:$0xf]
    %v456 = vld [vmem:[%s29 + $0x2ec] sm:$0xf]
    %v457 = vld [vmem:[%s29 + $0x2f0] sm:$0xf]
    %v458 = vld [vmem:[%s29 + $0x2f4] sm:$0xf]
    %v459 = vld [vmem:[%s29 + $0x2f8] sm:$0xf]
    %v460 = vld [vmem:[%s29 + $0x2fc] sm:$0xf]
    %v461 = vld [vmem:[%s29 + $0x300] sm:$0xf]
    %v462 = vld [vmem:[%s29 + $0x304] sm:$0xf]
    %v463 = vld [vmem:[%s29 + $0x308] sm:$0xf]
    %v464 = vld [vmem:[%s29 + $0x30c] sm:$0xf]
    %v465 = vld [vmem:[%s29 + $0x310] sm:$0xf]
    %v466 = vld [vmem:[%s29 + $0x314] sm:$0xf]
    %v467 = vld [vmem:[%s29 + $0x318] sm:$0xf]
    %v468 = vld [vmem:[%s29 + $0x31c] sm:$0xf]
    %v469 = vld [vmem:[%s29 + $0x320] sm:$0xf]
    %v470 = vld [vmem:[%s29 + $0x324] sm:$0xf]
    %v471 = vld [vmem:[%s29 + $0x328] sm:$0xf]
    %v472 = vld [vmem:[%s29 + $0x32c] sm:$0xf]
    %v473 = vld [vmem:[%s29 + $0x330] sm:$0xf]
    %v474 = vld [vmem:[%s29 + $0x334] sm:$0xf]
    %v475 = vld [vmem:[%s29 + $0x338] sm:$0xf]
    %v476 = vld [vmem:[%s29 + $0x33c] sm:$0xf]
    %v477 = vld [vmem:[%s29 + $0x340] sm:$0xf]
    %v478 = vld [vmem:[%s29 + $0x344] sm:$0xf]
    %v479 = vld [vmem:[%s29 + $0x348] sm:$0xf]
    %v480 = vld [vmem:[%s29 + $0x34c] sm:$0xf]
    %v481 = vld [vmem:[%s29 + $0x350] sm:$0xf]
    %v482 = vld [vmem:[%s29 + $0x354] sm:$0xf]
    %v483 = vld [vmem:[%s29 + $0x358] sm:$0xf]
    %v484 = vld [vmem:[%s29 + $0x35c] sm:$0xf]
    %v485 = vld [vmem:[%s29 + $0x360] sm:$0xf]
    %v486 = vld [vmem:[%s29 + $0x364] sm:$0xf]
    %v487 = vld [vmem:[%s29 + $0x368] sm:$0xf]
    %v488 = vld [vmem:[%s29 + $0x36c] sm:$0xf]
    %v489 = vld [vmem:[%s29 + $0x370] sm:$0xf]
    %v490 = vld [vmem:[%s29 + $0x374] sm:$0xf]
    %v491 = vld [vmem:[%s29 + $0x378] sm:$0xf]
    %v492 = vld [vmem:[%s29 + $0x37c] sm:$0xf]
    %v493 = vld [vmem:[%s29 + $0x380] sm:$0xf]
    %v494 = vld [vmem:[%s29 + $0x384] sm:$0xf]
    %v495 = vld [vmem:[%s29 + $0x388] sm:$0xf]
    %v496 = vld [vmem:[%s29 + $0x38c] sm:$0xf]
    %v497 = vld [vmem:[%s29 + $0x390] sm:$0xf]
    %v498 = vld [vmem:[%s29 + $0x394] sm:$0xf]
    %v499 = vld [vmem:[%s29 + $0x398] sm:$0xf]
    %v500 = vld [vmem:[%s29 + $0x39c] sm:$0xf]
    %v501 = vld [vmem:[%s29 + $0x3a0] sm:$0xf]
    %v502 = vld [vmem:[%s29 + $0x3a4] sm:$0xf]
    %v503 = vld [vmem:[%s29 + $0x3a8] sm:$0xf]
    %v504 = vld [vmem:[%s29 + $0x3ac] sm:$0xf]
    %v505 = vld [vmem:[%s29 + $0x3b0] sm:$0xf]
    %v506 = vld [vmem:[%s29 + $0x3b4] sm:$0xf]
    %v507 = vld [vmem:[%s29 + $0x3b8] sm:$0xf]
    %v508 = vld [vmem:[%s29 + $0x3bc] sm:$0xf]
    %v509 = vld [vmem:[%s29 + $0x3c0] sm:$0xf]
    %v510 = vld [vmem:[%s29 + $0x3c4] sm:$0xf]
    %v511 = vld [vmem:[%s29 + $0x3c8] sm:$0xf]
    %v512 = vld [vmem:[%s29 + $0x3cc] sm:$0xf]
    %v513 = vld [vmem:[%s29 + $0x3d0] sm:$0xf]
    %v514 = vld [vmem:[%s29 + $0x3d4] sm:$0xf]
    %v515 = vld [vmem:[%s29 + $0x3d8] sm:$0xf]
    %v516 = vld [vmem:[%s29 + $0x3dc] sm:$0xf]
    %v517 = vld [vmem:[%s29 + $0x3e0] sm:$0xf]
    %v518 = vld [vmem:[%s29 + $0x3e4] sm:$0xf]
    %v519 = vld [vmem:[%s29 + $0x3e8] sm:$0xf]
    %v520 = vld [vmem:[%s29 + $0x3ec] sm:$0xf]
    %v521 = vld [vmem:[%s29 + $0x3f0] sm:$0xf]
    %v522 = vld [vmem:[%s29 + $0x3f4] sm:$0xf]
    %v523 = vld [vmem:[%s29 + $0x3f8] sm:$0xf]
    %v524 = vld [vmem:[%s29 + $0x3fc] sm:$0xf]
    %v525 = vld [vmem:[%s31] sm:$0x1]
    %v526 = vld [vmem:[%s33] sm:$0x1]
    %v527 = vld [vmem:[%s35] sm:$0x1]
    %v528 = vunpack.c.l.bf16 %v235
    %v529 = vunpack.c.h.bf16 %v235
    %v530 = vunpack.c.l.bf16 %v236
    %v531 = vunpack.c.h.bf16 %v236
    %v532 = vunpack.c.l.bf16 %v237
    %v533 = vunpack.c.h.bf16 %v237
    %v534 = vunpack.c.l.bf16 %v238
    %v535 = vunpack.c.h.bf16 %v238
    %v536 = vunpack.c.l.bf16 %v239
    %v537 = vunpack.c.h.bf16 %v239
    %v538 = vunpack.c.l.bf16 %v240
    %v539 = vunpack.c.h.bf16 %v240
    %v540 = vunpack.c.l.bf16 %v241
    %v541 = vunpack.c.h.bf16 %v241
    %v542 = vunpack.c.l.bf16 %v242
    %v543 = vunpack.c.h.bf16 %v242
    %v544 = vunpack.c.l.bf16 %v243
    %v545 = vunpack.c.h.bf16 %v243
    %v546 = vunpack.c.l.bf16 %v244
    %v547 = vunpack.c.h.bf16 %v244
    %v548 = vunpack.c.l.bf16 %v245
    %v549 = vunpack.c.h.bf16 %v245
    %v550 = vunpack.c.l.bf16 %v246
    %v551 = vunpack.c.h.bf16 %v246
    %v552 = vunpack.c.l.bf16 %v247
    %v553 = vunpack.c.h.bf16 %v247
    %v554 = vunpack.c.l.bf16 %v248
    %v555 = vunpack.c.h.bf16 %v248
    %v556 = vunpack.c.l.bf16 %v249
    %v557 = vunpack.c.h.bf16 %v249
    %v558 = vunpack.c.l.bf16 %v250
    %v559 = vunpack.c.h.bf16 %v250
    %v560 = vunpack.c.l.bf16 %v251
    %v561 = vunpack.c.h.bf16 %v251
    %v562 = vunpack.c.l.bf16 %v252
    %v563 = vunpack.c.h.bf16 %v252
    %v564 = vunpack.c.l.bf16 %v253
    %v565 = vunpack.c.h.bf16 %v253
    %v566 = vunpack.c.l.bf16 %v254
    %v567 = vunpack.c.h.bf16 %v254
    %v568 = vunpack.c.l.bf16 %v255
    %v569 = vunpack.c.h.bf16 %v255
    %v570 = vunpack.c.l.bf16 %v256
    %v571 = vunpack.c.h.bf16 %v256
    %v572 = vunpack.c.l.bf16 %v257
    %v573 = vunpack.c.h.bf16 %v257
    %v574 = vunpack.c.l.bf16 %v258
    %v575 = vunpack.c.h.bf16 %v258
    %v576 = vunpack.c.l.bf16 %v259
    %v577 = vunpack.c.h.bf16 %v259
    %v578 = vunpack.c.l.bf16 %v260
    %v579 = vunpack.c.h.bf16 %v260
    %v580 = vunpack.c.l.bf16 %v261
    %v581 = vunpack.c.h.bf16 %v261
    %v582 = vunpack.c.l.bf16 %v262
    %v583 = vunpack.c.h.bf16 %v262
    %v584 = vunpack.c.l.bf16 %v263
    %v585 = vunpack.c.h.bf16 %v263
    %v586 = vunpack.c.l.bf16 %v264
    %v587 = vunpack.c.h.bf16 %v264
    %v588 = vunpack.c.l.bf16 %v265
    %v589 = vunpack.c.h.bf16 %v265
    %v590 = vunpack.c.l.bf16 %v266
    %v591 = vunpack.c.h.bf16 %v266
    %v592 = vunpack.c.l.bf16 %v269
    %v593 = vunpack.c.l.bf16 %v270
    %v594 = vunpack.c.l.bf16 %v271
    %v595 = vunpack.c.l.bf16 %v272
    %v596 = vunpack.c.l.bf16 %v273
    %v597 = vunpack.c.l.bf16 %v274
    %v598 = vunpack.c.l.bf16 %v275
    %v599 = vunpack.c.l.bf16 %v276
    %v600 = vunpack.c.l.bf16 %v277
    %v601 = vunpack.c.l.bf16 %v278
    %v602 = vunpack.c.l.bf16 %v279
    %v603 = vunpack.c.l.bf16 %v280
    %v604 = vunpack.c.l.bf16 %v281
    %v605 = vunpack.c.l.bf16 %v282
    %v606 = vunpack.c.l.bf16 %v283
    %v607 = vunpack.c.l.bf16 %v284
    %v608 = vunpack.c.l.bf16 %v285
    %v609 = vunpack.c.l.bf16 %v286
    %v610 = vunpack.c.l.bf16 %v287
    %v611 = vunpack.c.l.bf16 %v288
    %v612 = vunpack.c.l.bf16 %v289
    %v613 = vunpack.c.l.bf16 %v290
    %v614 = vunpack.c.l.bf16 %v291
    %v615 = vunpack.c.l.bf16 %v292
    %v616 = vunpack.c.l.bf16 %v293
    %v617 = vunpack.c.l.bf16 %v294
    %v618 = vunpack.c.l.bf16 %v295
    %v619 = vunpack.c.l.bf16 %v296
    %v620 = vunpack.c.l.bf16 %v297
    %v621 = vunpack.c.l.bf16 %v298
    %v622 = vunpack.c.l.bf16 %v299
    %v623 = vunpack.c.l.bf16 %v300
    %v624 = vunpack.c.l.bf16 %v301
    %v625 = vunpack.c.l.bf16 %v302
    %v626 = vunpack.c.l.bf16 %v303
    %v627 = vunpack.c.l.bf16 %v304
    %v628 = vunpack.c.l.bf16 %v305
    %v629 = vunpack.c.l.bf16 %v306
    %v630 = vunpack.c.l.bf16 %v307
    %v631 = vunpack.c.l.bf16 %v308
    %v632 = vunpack.c.l.bf16 %v309
    %v633 = vunpack.c.l.bf16 %v310
    %v634 = vunpack.c.l.bf16 %v311
    %v635 = vunpack.c.l.bf16 %v312
    %v636 = vunpack.c.l.bf16 %v313
    %v637 = vunpack.c.l.bf16 %v314
    %v638 = vunpack.c.l.bf16 %v315
    %v639 = vunpack.c.l.bf16 %v316
    %v640 = vunpack.c.l.bf16 %v317
    %v641 = vunpack.c.l.bf16 %v318
    %v642 = vunpack.c.l.bf16 %v319
    %v643 = vunpack.c.l.bf16 %v320
    %v644 = vunpack.c.l.bf16 %v321
    %v645 = vunpack.c.l.bf16 %v322
    %v646 = vunpack.c.l.bf16 %v323
    %v647 = vunpack.c.l.bf16 %v324
    %v648 = vunpack.c.l.bf16 %v325
    %v649 = vunpack.c.l.bf16 %v326
    %v650 = vunpack.c.l.bf16 %v327
    %v651 = vunpack.c.l.bf16 %v328
    %v652 = vunpack.c.l.bf16 %v329
    %v653 = vunpack.c.l.bf16 %v330
    %v654 = vunpack.c.l.bf16 %v331
    %v655 = vunpack.c.l.bf16 %v332
    %v656 = vunpack.c.l.bf16 %v333
    %v657 = vunpack.c.l.bf16 %v334
    %v658 = vunpack.c.l.bf16 %v335
    %v659 = vunpack.c.l.bf16 %v336
    %v660 = vunpack.c.l.bf16 %v337
    %v661 = vunpack.c.l.bf16 %v338
    %v662 = vunpack.c.l.bf16 %v339
    %v663 = vunpack.c.l.bf16 %v340
    %v664 = vunpack.c.l.bf16 %v341
    %v665 = vunpack.c.l.bf16 %v342
    %v666 = vunpack.c.l.bf16 %v343
    %v667 = vunpack.c.l.bf16 %v344
    %v668 = vunpack.c.l.bf16 %v345
    %v669 = vunpack.c.l.bf16 %v346
    %v670 = vunpack.c.l.bf16 %v347
    %v671 = vunpack.c.l.bf16 %v348
    %v672 = vunpack.c.l.bf16 %v349
    %v673 = vunpack.c.l.bf16 %v350
    %v674 = vunpack.c.l.bf16 %v351
    %v675 = vunpack.c.l.bf16 %v352
    %v676 = vunpack.c.l.bf16 %v353
    %v677 = vunpack.c.l.bf16 %v354
    %v678 = vunpack.c.l.bf16 %v355
    %v679 = vunpack.c.l.bf16 %v356
    %v680 = vunpack.c.l.bf16 %v357
    %v681 = vunpack.c.l.bf16 %v358
    %v682 = vunpack.c.l.bf16 %v359
    %v683 = vunpack.c.l.bf16 %v360
    %v684 = vunpack.c.l.bf16 %v361
    %v685 = vunpack.c.l.bf16 %v362
    %v686 = vunpack.c.l.bf16 %v363
    %v687 = vunpack.c.l.bf16 %v364
    %v688 = vunpack.c.l.bf16 %v365
    %v689 = vunpack.c.l.bf16 %v366
    %v690 = vunpack.c.l.bf16 %v367
    %v691 = vunpack.c.l.bf16 %v368
    %v692 = vunpack.c.l.bf16 %v369
    %v693 = vunpack.c.l.bf16 %v370
    %v694 = vunpack.c.l.bf16 %v371
    %v695 = vunpack.c.l.bf16 %v372
    %v696 = vunpack.c.l.bf16 %v373
    %v697 = vunpack.c.l.bf16 %v374
    %v698 = vunpack.c.l.bf16 %v375
    %v699 = vunpack.c.l.bf16 %v376
    %v700 = vunpack.c.l.bf16 %v377
    %v701 = vunpack.c.l.bf16 %v378
    %v702 = vunpack.c.l.bf16 %v379
    %v703 = vunpack.c.l.bf16 %v380
    %v704 = vunpack.c.l.bf16 %v381
    %v705 = vunpack.c.l.bf16 %v382
    %v706 = vunpack.c.l.bf16 %v383
    %v707 = vunpack.c.l.bf16 %v384
    %v708 = vunpack.c.l.bf16 %v385
    %v709 = vunpack.c.l.bf16 %v386
    %v710 = vunpack.c.l.bf16 %v387
    %v711 = vunpack.c.l.bf16 %v388
    %v712 = vunpack.c.l.bf16 %v389
    %v713 = vunpack.c.l.bf16 %v390
    %v714 = vunpack.c.l.bf16 %v391
    %v715 = vunpack.c.l.bf16 %v392
    %v716 = vunpack.c.l.bf16 %v393
    %v717 = vunpack.c.l.bf16 %v394
    %v718 = vunpack.c.l.bf16 %v395
    %v719 = vunpack.c.l.bf16 %v396
    %v720 = vunpack.c.l.bf16 %v397
    %v721 = vunpack.c.l.bf16 %v398
    %v722 = vunpack.c.l.bf16 %v399
    %v723 = vunpack.c.l.bf16 %v400
    %v724 = vunpack.c.l.bf16 %v401
    %v725 = vunpack.c.l.bf16 %v402
    %v726 = vunpack.c.l.bf16 %v403
    %v727 = vunpack.c.l.bf16 %v404
    %v728 = vunpack.c.l.bf16 %v405
    %v729 = vunpack.c.l.bf16 %v406
    %v730 = vunpack.c.l.bf16 %v407
    %v731 = vunpack.c.l.bf16 %v408
    %v732 = vunpack.c.l.bf16 %v409
    %v733 = vunpack.c.l.bf16 %v410
    %v734 = vunpack.c.l.bf16 %v411
    %v735 = vunpack.c.l.bf16 %v412
    %v736 = vunpack.c.l.bf16 %v413
    %v737 = vunpack.c.l.bf16 %v414
    %v738 = vunpack.c.l.bf16 %v415
    %v739 = vunpack.c.l.bf16 %v416
    %v740 = vunpack.c.l.bf16 %v417
    %v741 = vunpack.c.l.bf16 %v418
    %v742 = vunpack.c.l.bf16 %v419
    %v743 = vunpack.c.l.bf16 %v420
    %v744 = vunpack.c.l.bf16 %v421
    %v745 = vunpack.c.l.bf16 %v422
    %v746 = vunpack.c.l.bf16 %v423
    %v747 = vunpack.c.l.bf16 %v424
    %v748 = vunpack.c.l.bf16 %v425
    %v749 = vunpack.c.l.bf16 %v426
    %v750 = vunpack.c.l.bf16 %v427
    %v751 = vunpack.c.l.bf16 %v428
    %v752 = vunpack.c.l.bf16 %v429
    %v753 = vunpack.c.l.bf16 %v430
    %v754 = vunpack.c.l.bf16 %v431
    %v755 = vunpack.c.l.bf16 %v432
    %v756 = vunpack.c.l.bf16 %v433
    %v757 = vunpack.c.l.bf16 %v434
    %v758 = vunpack.c.l.bf16 %v435
    %v759 = vunpack.c.l.bf16 %v436
    %v760 = vunpack.c.l.bf16 %v437
    %v761 = vunpack.c.l.bf16 %v438
    %v762 = vunpack.c.l.bf16 %v439
    %v763 = vunpack.c.l.bf16 %v440
    %v764 = vunpack.c.l.bf16 %v441
    %v765 = vunpack.c.l.bf16 %v442
    %v766 = vunpack.c.l.bf16 %v443
    %v767 = vunpack.c.l.bf16 %v444
    %v768 = vunpack.c.l.bf16 %v445
    %v769 = vunpack.c.l.bf16 %v446
    %v770 = vunpack.c.l.bf16 %v447
    %v771 = vunpack.c.l.bf16 %v448
    %v772 = vunpack.c.l.bf16 %v449
    %v773 = vunpack.c.l.bf16 %v450
    %v774 = vunpack.c.l.bf16 %v451
    %v775 = vunpack.c.l.bf16 %v452
    %v776 = vunpack.c.l.bf16 %v453
    %v777 = vunpack.c.l.bf16 %v454
    %v778 = vunpack.c.l.bf16 %v455
    %v779 = vunpack.c.l.bf16 %v456
    %v780 = vunpack.c.l.bf16 %v457
    %v781 = vunpack.c.l.bf16 %v458
    %v782 = vunpack.c.l.bf16 %v459
    %v783 = vunpack.c.l.bf16 %v460
    %v784 = vunpack.c.l.bf16 %v461
    %v785 = vunpack.c.l.bf16 %v462
    %v786 = vunpack.c.l.bf16 %v463
    %v787 = vunpack.c.l.bf16 %v464
    %v788 = vunpack.c.l.bf16 %v465
    %v789 = vunpack.c.l.bf16 %v466
    %v790 = vunpack.c.l.bf16 %v467
    %v791 = vunpack.c.l.bf16 %v468
    %v792 = vunpack.c.l.bf16 %v469
    %v793 = vunpack.c.l.bf16 %v470
    %v794 = vunpack.c.l.bf16 %v471
    %v795 = vunpack.c.l.bf16 %v472
    %v796 = vunpack.c.l.bf16 %v473
    %v797 = vunpack.c.l.bf16 %v474
    %v798 = vunpack.c.l.bf16 %v475
    %v799 = vunpack.c.l.bf16 %v476
    %v800 = vunpack.c.l.bf16 %v477
    %v801 = vunpack.c.l.bf16 %v478
    %v802 = vunpack.c.l.bf16 %v479
    %v803 = vunpack.c.l.bf16 %v480
    %v804 = vunpack.c.l.bf16 %v481
    %v805 = vunpack.c.l.bf16 %v482
    %v806 = vunpack.c.l.bf16 %v483
    %v807 = vunpack.c.l.bf16 %v484
    %v808 = vunpack.c.l.bf16 %v485
    %v809 = vunpack.c.l.bf16 %v486
    %v810 = vunpack.c.l.bf16 %v487
    %v811 = vunpack.c.l.bf16 %v488
    %v812 = vunpack.c.l.bf16 %v489
    %v813 = vunpack.c.l.bf16 %v490
    %v814 = vunpack.c.l.bf16 %v491
    %v815 = vunpack.c.l.bf16 %v492
    %v816 = vunpack.c.l.bf16 %v493
    %v817 = vunpack.c.l.bf16 %v494
    %v818 = vunpack.c.l.bf16 %v495
    %v819 = vunpack.c.l.bf16 %v496
    %v820 = vunpack.c.l.bf16 %v497
    %v821 = vunpack.c.l.bf16 %v498
    %v822 = vunpack.c.l.bf16 %v499
    %v823 = vunpack.c.l.bf16 %v500
    %v824 = vunpack.c.l.bf16 %v501
    %v825 = vunpack.c.l.bf16 %v502
    %v826 = vunpack.c.l.bf16 %v503
    %v827 = vunpack.c.l.bf16 %v504
    %v828 = vunpack.c.l.bf16 %v505
    %v829 = vunpack.c.l.bf16 %v506
    %v830 = vunpack.c.l.bf16 %v507
    %v831 = vunpack.c.l.bf16 %v508
    %v832 = vunpack.c.l.bf16 %v509
    %v833 = vunpack.c.l.bf16 %v510
    %v834 = vunpack.c.l.bf16 %v511
    %v835 = vunpack.c.l.bf16 %v512
    %v836 = vunpack.c.l.bf16 %v513
    %v837 = vunpack.c.l.bf16 %v514
    %v838 = vunpack.c.l.bf16 %v515
    %v839 = vunpack.c.l.bf16 %v516
    %v840 = vunpack.c.l.bf16 %v517
    %v841 = vunpack.c.l.bf16 %v518
    %v842 = vunpack.c.l.bf16 %v519
    %v843 = vunpack.c.l.bf16 %v520
    %v844 = vunpack.c.l.bf16 %v521
    %v845 = vunpack.c.l.bf16 %v522
    %v846 = vunpack.c.l.bf16 %v523
    %v847 = vunpack.c.l.bf16 %v524
    %v849 = vlaneseq
    %v850 = vshrl.u32 %v849, 7
    %v851 = vsub.s32 0, %v850
    %v852 = vrot.slane %v217, %v851
    %vm854 = vcmask 261120
    %v856 = vsel %vm854, %v207, 0
    %v859 = vsel %vm854, %v208, 0
    %v862 = vsel %vm854, %v209, 0
    %864 = vmatprep.subr.mxu0 0.0
    %865 = vmatpush1.msra.mxu0 0.0
    %866 = vmatprep.subr.mxu0 0.0
    %867 = vmatpush1.msra.mxu0 0.0
    %868 = vmatprep.subr.mxu0 0.0
    %869 = vmatpush1.msra.mxu0 0.0
    %870 = vmatprep.subr.mxu0 0.0
    %871 = vmatpush1.msra.mxu0 0.0
    %872 = vmatprep.subr.mxu0 0.0
    %873 = vmatpush1.msra.mxu0 0.0
    %874 = vmatprep.subr.mxu0 0.0
    %875 = vmatpush1.msra.mxu0 0.0
    %876 = vmatprep.subr.mxu0 0.0
    %877 = vmatpush1.msra.mxu0 0.0
    %878 = vmatprep.subr.mxu0 0.0
    %879 = vmatpush1.msra.mxu0 0.0
    %880 = vmatprep.subr.mxu0 0.0
    %881 = vmatpush1.msra.mxu0 0.0
    %882 = vmatprep.subr.mxu0 0.0
    %883 = vmatpush1.msra.mxu0 0.0
    %884 = vmatprep.subr.mxu0 0.0
    %885 = vmatpush1.msra.mxu0 0.0
    %886 = vmatprep.subr.mxu0 0.0
    %887 = vmatpush1.msra.mxu0 0.0
    %888 = vmatprep.subr.mxu0 0.0
    %889 = vmatpush1.msra.mxu0 %v216
    %890 = vmatprep.subr.mxu0 0.0
    %891 = vmatpush1.msra.mxu0 %v215
    %892 = vmatprep.subr.mxu0 0.0
    %893 = vmatpush1.msra.mxu0 %v214
    %894 = vmatprep.subr.mxu0 0.0
    %895 = vmatpush1.msra.mxu0 %v213
    %896 = vmatprep.subr.mxu0 0.0
    %897 = vmatpush2.msra.mxu0 0.0
    %898 = vmatprep.subr.mxu0 0.0
    %899 = vmatpush2.msra.mxu0 0.0
    %900 = vmatprep.subr.mxu0 0.0
    %901 = vmatpush2.msra.mxu0 0.0
    %902 = vmatprep.subr.mxu0 0.0
    %903 = vmatpush2.msra.mxu0 0.0
    %904 = vmatprep.subr.mxu0 0.0
    %905 = vmatpush2.msra.mxu0 0.0
    %906 = vmatprep.subr.mxu0 0.0
    %907 = vmatpush2.msra.mxu0 0.0
    %908 = vmatprep.subr.mxu0 0.0
    %909 = vmatpush2.msra.mxu0 0.0
    %910 = vmatprep.subr.mxu0 0.0
    %911 = vmatpush2.msra.mxu0 0.0
    %912 = vmatprep.subr.mxu0 0.0
    %913 = vmatpush2.msra.mxu0 0.0
    %914 = vmatprep.subr.mxu0 0.0
    %915 = vmatpush2.msra.mxu0 0.0
    %916 = vmatprep.subr.mxu0 0.0
    %917 = vmatpush2.msra.mxu0 0.0
    %918 = vmatprep.subr.mxu0 0.0
    %919 = vmatpush2.msra.mxu0 0.0
    %920 = vmatprep.subr.mxu0 0.0
    %921 = vmatpush2.msra.mxu0 0.0
    %922 = vmatprep.subr.mxu0 0.0
    %923 = vmatpush2.msra.mxu0 0.0
    %924 = vmatprep.subr.mxu0 0.0
    %925 = vmatpush2.msra.mxu0 0.0
    %926 = vmatprep.subr.mxu0 0.0
    %927 = vmatpush2.msra.mxu0 0.0
    %928 = vmatprep.mubr.f32.mxu0 0.0
    %929 = vmatmul.mubr.f32.gmra.mxu0 %v856
    %v930 = vpop.f32.mrf.mxu0
    %v931 = vadd.f32 %v852, %v930
    %v932 = vpop.f32.mrf.mxu0
    %933 = vmatprep.mubr.f32.mxu0 0.0
    %934 = vmatmul.mubr.f32.gmra.mxu0 %v859
    %v935 = vpop.f32.mrf.mxu0
    %v936 = vadd.f32 %v852, %v935
    %v937 = vpop.f32.mrf.mxu0
    %938 = vmatprep.mubr.f32.mxu0 0.0
    %939 = vmatmul.mubr.f32.gmra.mxu0 %v862
    %v940 = vpop.f32.mrf.mxu0
    %v941 = vadd.f32 %v852, %v940
    %v942 = vpop.f32.mrf.mxu0
    %943 = vdwg.mxu0
    %v945 = vlaneseq
    %v946 = vshrl.u32 %v945, 7
    %v947 = vsub.s32 0, %v946
    %v948 = vrot.slane %v222, %v947
    %950 = vmatprep.subr.mxu0 0.0
    %951 = vmatpush1.msra.mxu0 0.0
    %952 = vmatprep.subr.mxu0 0.0
    %953 = vmatpush1.msra.mxu0 0.0
    %954 = vmatprep.subr.mxu0 0.0
    %955 = vmatpush1.msra.mxu0 0.0
    %956 = vmatprep.subr.mxu0 0.0
    %957 = vmatpush1.msra.mxu0 0.0
    %958 = vmatprep.subr.mxu0 0.0
    %959 = vmatpush1.msra.mxu0 0.0
    %960 = vmatprep.subr.mxu0 0.0
    %961 = vmatpush1.msra.mxu0 0.0
    %962 = vmatprep.subr.mxu0 0.0
    %963 = vmatpush1.msra.mxu0 0.0
    %964 = vmatprep.subr.mxu0 0.0
    %965 = vmatpush1.msra.mxu0 0.0
    %966 = vmatprep.subr.mxu0 0.0
    %967 = vmatpush1.msra.mxu0 0.0
    %968 = vmatprep.subr.mxu0 0.0
    %969 = vmatpush1.msra.mxu0 0.0
    %970 = vmatprep.subr.mxu0 0.0
    %971 = vmatpush1.msra.mxu0 0.0
    %972 = vmatprep.subr.mxu0 0.0
    %973 = vmatpush1.msra.mxu0 0.0
    %974 = vmatprep.subr.mxu0 0.0
    %975 = vmatpush1.msra.mxu0 %v221
    %976 = vmatprep.subr.mxu0 0.0
    %977 = vmatpush1.msra.mxu0 %v220
    %978 = vmatprep.subr.mxu0 0.0
    %979 = vmatpush1.msra.mxu0 %v219
    %980 = vmatprep.subr.mxu0 0.0
    %981 = vmatpush1.msra.mxu0 %v218
    %982 = vmatprep.subr.mxu0 0.0
    %983 = vmatpush2.msra.mxu0 0.0
    %984 = vmatprep.subr.mxu0 0.0
    %985 = vmatpush2.msra.mxu0 0.0
    %986 = vmatprep.subr.mxu0 0.0
    %987 = vmatpush2.msra.mxu0 0.0
    %988 = vmatprep.subr.mxu0 0.0
    %989 = vmatpush2.msra.mxu0 0.0
    %990 = vmatprep.subr.mxu0 0.0
    %991 = vmatpush2.msra.mxu0 0.0
    %992 = vmatprep.subr.mxu0 0.0
    %993 = vmatpush2.msra.mxu0 0.0
    %994 = vmatprep.subr.mxu0 0.0
    %995 = vmatpush2.msra.mxu0 0.0
    %996 = vmatprep.subr.mxu0 0.0
    %997 = vmatpush2.msra.mxu0 0.0
    %998 = vmatprep.subr.mxu0 0.0
    %999 = vmatpush2.msra.mxu0 0.0
    %1000 = vmatprep.subr.mxu0 0.0
    %1001 = vmatpush2.msra.mxu0 0.0
    %1002 = vmatprep.subr.mxu0 0.0
    %1003 = vmatpush2.msra.mxu0 0.0
    %1004 = vmatprep.subr.mxu0 0.0
    %1005 = vmatpush2.msra.mxu0 0.0
    %1006 = vmatprep.subr.mxu0 0.0
    %1007 = vmatpush2.msra.mxu0 0.0
    %1008 = vmatprep.subr.mxu0 0.0
    %1009 = vmatpush2.msra.mxu0 0.0
    %1010 = vmatprep.subr.mxu0 0.0
    %1011 = vmatpush2.msra.mxu0 0.0
    %1012 = vmatprep.subr.mxu0 0.0
    %1013 = vmatpush2.msra.mxu0 0.0
    %1014 = vmatprep.mubr.f32.mxu0 0.0
    %1015 = vmatmul.mubr.f32.gmra.mxu0 %v856
    %v1016 = vpop.f32.mrf.mxu0
    %v1017 = vadd.f32 %v948, %v1016
    %v1018 = vpop.f32.mrf.mxu0
    %1019 = vmatprep.mubr.f32.mxu0 0.0
    %1020 = vmatmul.mubr.f32.gmra.mxu0 %v859
    %v1021 = vpop.f32.mrf.mxu0
    %v1022 = vadd.f32 %v948, %v1021
    %v1023 = vpop.f32.mrf.mxu0
    %1024 = vmatprep.mubr.f32.mxu0 0.0
    %1025 = vmatmul.mubr.f32.gmra.mxu0 %v862
    %v1026 = vpop.f32.mrf.mxu0
    %v1027 = vadd.f32 %v948, %v1026
    %v1028 = vpop.f32.mrf.mxu0
    %1029 = vdwg.mxu0
    %v1031 = vlaneseq
    %v1032 = vshrl.u32 %v1031, 7
    %v1033 = vsub.s32 0, %v1032
    %v1034 = vrot.slane %v227, %v1033
    %1036 = vmatprep.subr.mxu0 0.0
    %1037 = vmatpush1.msra.mxu0 0.0
    %1038 = vmatprep.subr.mxu0 0.0
    %1039 = vmatpush1.msra.mxu0 0.0
    %1040 = vmatprep.subr.mxu0 0.0
    %1041 = vmatpush1.msra.mxu0 0.0
    %1042 = vmatprep.subr.mxu0 0.0
    %1043 = vmatpush1.msra.mxu0 0.0
    %1044 = vmatprep.subr.mxu0 0.0
    %1045 = vmatpush1.msra.mxu0 0.0
    %1046 = vmatprep.subr.mxu0 0.0
    %1047 = vmatpush1.msra.mxu0 0.0
    %1048 = vmatprep.subr.mxu0 0.0
    %1049 = vmatpush1.msra.mxu0 0.0
    %1050 = vmatprep.subr.mxu0 0.0
    %1051 = vmatpush1.msra.mxu0 0.0
    %1052 = vmatprep.subr.mxu0 0.0
    %1053 = vmatpush1.msra.mxu0 0.0
    %1054 = vmatprep.subr.mxu0 0.0
    %1055 = vmatpush1.msra.mxu0 0.0
    %1056 = vmatprep.subr.mxu0 0.0
    %1057 = vmatpush1.msra.mxu0 0.0
    %1058 = vmatprep.subr.mxu0 0.0
    %1059 = vmatpush1.msra.mxu0 0.0
    %1060 = vmatprep.subr.mxu0 0.0
    %1061 = vmatpush1.msra.mxu0 %v226
    %1062 = vmatprep.subr.mxu0 0.0
    %1063 = vmatpush1.msra.mxu0 %v225
    %1064 = vmatprep.subr.mxu0 0.0
    %1065 = vmatpush1.msra.mxu0 %v224
    %1066 = vmatprep.subr.mxu0 0.0
    %1067 = vmatpush1.msra.mxu0 %v223
    %1068 = vmatprep.subr.mxu0 0.0
    %1069 = vmatpush2.msra.mxu0 0.0
    %1070 = vmatprep.subr.mxu0 0.0
    %1071 = vmatpush2.msra.mxu0 0.0
    %1072 = vmatprep.subr.mxu0 0.0
    %1073 = vmatpush2.msra.mxu0 0.0
    %1074 = vmatprep.subr.mxu0 0.0
    %1075 = vmatpush2.msra.mxu0 0.0
    %1076 = vmatprep.subr.mxu0 0.0
    %1077 = vmatpush2.msra.mxu0 0.0
    %1078 = vmatprep.subr.mxu0 0.0
    %1079 = vmatpush2.msra.mxu0 0.0
    %1080 = vmatprep.subr.mxu0 0.0
    %1081 = vmatpush2.msra.mxu0 0.0
    %1082 = vmatprep.subr.mxu0 0.0
    %1083 = vmatpush2.msra.mxu0 0.0
    %1084 = vmatprep.subr.mxu0 0.0
    %1085 = vmatpush2.msra.mxu0 0.0
    %1086 = vmatprep.subr.mxu0 0.0
    %1087 = vmatpush2.msra.mxu0 0.0
    %1088 = vmatprep.subr.mxu0 0.0
    %1089 = vmatpush2.msra.mxu0 0.0
    %1090 = vmatprep.subr.mxu0 0.0
    %1091 = vmatpush2.msra.mxu0 0.0
    %1092 = vmatprep.subr.mxu0 0.0
    %1093 = vmatpush2.msra.mxu0 0.0
    %1094 = vmatprep.subr.mxu0 0.0
    %1095 = vmatpush2.msra.mxu0 0.0
    %1096 = vmatprep.subr.mxu0 0.0
    %1097 = vmatpush2.msra.mxu0 0.0
    %1098 = vmatprep.subr.mxu0 0.0
    %1099 = vmatpush2.msra.mxu0 0.0
    %1100 = vmatprep.mubr.f32.mxu0 0.0
    %1101 = vmatmul.mubr.f32.gmra.mxu0 %v856
    %v1102 = vpop.f32.mrf.mxu0
    %v1103 = vadd.f32 %v1034, %v1102
    %v1104 = vpop.f32.mrf.mxu0
    %1105 = vmatprep.mubr.f32.mxu0 0.0
    %1106 = vmatmul.mubr.f32.gmra.mxu0 %v859
    %v1107 = vpop.f32.mrf.mxu0
    %v1108 = vadd.f32 %v1034, %v1107
    %v1109 = vpop.f32.mrf.mxu0
    %1110 = vmatprep.mubr.f32.mxu0 0.0
    %1111 = vmatmul.mubr.f32.gmra.mxu0 %v862
    %v1112 = vpop.f32.mrf.mxu0
    %v1113 = vadd.f32 %v1034, %v1112
    %v1114 = vpop.f32.mrf.mxu0
    %1115 = vdwg.mxu0
    %v1116 = vlaneseq
    %v1117 = vand.u32 %v1116, 127
    %vm1118 = vcmp.ge.s32.totalorder %v1117, 0
    %vm1119 = vcmp.lt.s32.totalorder %v1117, 8
    %vm1120 = vmand %vm1118, %vm1119
    %v1121 = vsel %vm1120, %v931, 0.0
    %v1122 = vsel %vm1120, %v936, 0.0
    %v1123 = vsel %vm1120, %v941, 0.0
    %v1124 = vmul.f32 %v1121, 0.35355338
    %v1125 = vmul.f32 %v1122, 0.35355338
    %v1126 = vmul.f32 %v1123, 0.35355338
    %v1128 = vsel %vm854, %v1124, 0
    %v1131 = vsel %vm854, %v1125, 0
    %v1134 = vsel %vm854, %v1126, 0
    %v1137 = vsel %vm854, %v1017, 0
    %v1140 = vsel %vm854, %v1022, 0
    %v1143 = vsel %vm854, %v1027, 0
    %1145 = vmatprep.subr.mxu0 0.0
    %1146 = vmatpush1.xpose.msra.mxu0 0.0
    %1147 = vmatprep.subr.mxu0 0.0
    %1148 = vmatpush1.xpose.msra.mxu0 0.0
    %1149 = vmatprep.subr.mxu0 0.0
    %1150 = vmatpush1.xpose.msra.mxu0 0.0
    %1151 = vmatprep.subr.mxu0 0.0
    %1152 = vmatpush1.xpose.msra.mxu0 0.0
    %1153 = vmatprep.subr.mxu0 0.0
    %1154 = vmatpush1.xpose.msra.mxu0 0.0
    %1155 = vmatprep.subr.mxu0 0.0
    %1156 = vmatpush1.xpose.msra.mxu0 0.0
    %1157 = vmatprep.subr.mxu0 0.0
    %1158 = vmatpush1.xpose.msra.mxu0 0.0
    %1159 = vmatprep.subr.mxu0 0.0
    %1160 = vmatpush1.xpose.msra.mxu0 0.0
    %1161 = vmatprep.subr.mxu0 0.0
    %1162 = vmatpush1.xpose.msra.mxu0 0.0
    %1163 = vmatprep.subr.mxu0 0.0
    %1164 = vmatpush1.xpose.msra.mxu0 0.0
    %1165 = vmatprep.subr.mxu0 0.0
    %1166 = vmatpush1.xpose.msra.mxu0 0.0
    %1167 = vmatprep.subr.mxu0 0.0
    %1168 = vmatpush1.xpose.msra.mxu0 0.0
    %1169 = vmatprep.subr.mxu0 0.0
    %1170 = vmatpush1.xpose.msra.mxu0 0.0
    %1171 = vmatprep.subr.mxu0 0.0
    %1172 = vmatpush1.xpose.msra.mxu0 %v1143
    %1173 = vmatprep.subr.mxu0 0.0
    %1174 = vmatpush1.xpose.msra.mxu0 %v1140
    %1175 = vmatprep.subr.mxu0 0.0
    %1176 = vmatpush1.xpose.msra.mxu0 %v1137
    %1177 = vmatprep.subr.mxu0 0.0
    %1178 = vmatpush2.xpose.msra.mxu0 0.0
    %1179 = vmatprep.subr.mxu0 0.0
    %1180 = vmatpush2.xpose.msra.mxu0 0.0
    %1181 = vmatprep.subr.mxu0 0.0
    %1182 = vmatpush2.xpose.msra.mxu0 0.0
    %1183 = vmatprep.subr.mxu0 0.0
    %1184 = vmatpush2.xpose.msra.mxu0 0.0
    %1185 = vmatprep.subr.mxu0 0.0
    %1186 = vmatpush2.xpose.msra.mxu0 0.0
    %1187 = vmatprep.subr.mxu0 0.0
    %1188 = vmatpush2.xpose.msra.mxu0 0.0
    %1189 = vmatprep.subr.mxu0 0.0
    %1190 = vmatpush2.xpose.msra.mxu0 0.0
    %1191 = vmatprep.subr.mxu0 0.0
    %1192 = vmatpush2.xpose.msra.mxu0 0.0
    %1193 = vmatprep.subr.mxu0 0.0
    %1194 = vmatpush2.xpose.msra.mxu0 0.0
    %1195 = vmatprep.subr.mxu0 0.0
    %1196 = vmatpush2.xpose.msra.mxu0 0.0
    %1197 = vmatprep.subr.mxu0 0.0
    %1198 = vmatpush2.xpose.msra.mxu0 0.0
    %1199 = vmatprep.subr.mxu0 0.0
    %1200 = vmatpush2.xpose.msra.mxu0 0.0
    %1201 = vmatprep.subr.mxu0 0.0
    %1202 = vmatpush2.xpose.msra.mxu0 0.0
    %1203 = vmatprep.subr.mxu0 0.0
    %1204 = vmatpush2.xpose.msra.mxu0 0.0
    %1205 = vmatprep.subr.mxu0 0.0
    %1206 = vmatpush2.xpose.msra.mxu0 0.0
    %1207 = vmatprep.subr.mxu0 0.0
    %1208 = vmatpush2.xpose.msra.mxu0 0.0
    %1209 = vmatprep.mubr.f32.mxu0 0.0
    %1210 = vmatmul.mubr.f32.gmra.mxu0 %v1128
    %v1211 = vpop.f32.mrf.mxu0
    %v1212 = vadd.f32 %v210, %v1211
    %v1213 = vpop.f32.mrf.mxu0
    %1214 = vmatprep.mubr.f32.mxu0 0.0
    %1215 = vmatmul.mubr.f32.gmra.mxu0 %v1131
    %v1216 = vpop.f32.mrf.mxu0
    %v1217 = vadd.f32 %v211, %v1216
    %v1218 = vpop.f32.mrf.mxu0
    %1219 = vmatprep.mubr.f32.mxu0 0.0
    %1220 = vmatmul.mubr.f32.gmra.mxu0 %v1134
    %v1221 = vpop.f32.mrf.mxu0
    %v1222 = vadd.f32 %v212, %v1221
    %v1223 = vpop.f32.mrf.mxu0
    %1224 = vdwg.mxu0
    %vm1225 = vcmask 146432
    %v1226 = vsel %vm1225, %v1212, -inf
    %1227 = vmax.xlane.f32.xlu0 %v1226
    %v1228 = vpop.xlane.xlu0 %1227
    %v1229 = vsel %vm1225, %v1217, -inf
    %1230 = vmax.xlane.f32.xlu0 %v1229
    %v1231 = vpop.xlane.xlu0 %1230
    %vm1232 = vcmask 140288
    %v1233 = vsel %vm1232, %v1222, -inf
    %1234 = vmax.xlane.f32.xlu0 %v1233
    %v1235 = vpop.xlane.xlu0 %1234
    %v1236 = vsub.f32 %v1212, %v1228
    %v1237 = vsub.f32 %v1217, %v1231
    %v1238 = vsub.f32 %v1222, %v1235
    %v1239 = vmul.f32 %v1236, 1.442695
    %v1240 = vpow.pop %v1239
    %v1241 = vmul.f32 %v1237, 1.442695
    %v1242 = vpow.pop %v1241
    %v1243 = vmul.f32 %v1238, 1.442695
    %v1244 = vpow.pop %v1243
    %v1245 = vsel %vm1225, %v1240, 0.0
    %1246 = vadd.xlane.f32.xlu0 %v1245
    %v1247 = vpop.xlane.xlu0 %1246
    %v1248 = vsel %vm1225, %v1242, 0.0
    %1249 = vadd.xlane.f32.xlu0 %v1248
    %v1250 = vpop.xlane.xlu0 %1249
    %v1251 = vsel %vm1232, %v1244, 0.0
    %1252 = vadd.xlane.f32.xlu0 %v1251
    %v1253 = vpop.xlane.xlu0 %1252
    %v1254 = vrcp.pop %v1247
    %v1255 = vmul.f32 %v1240, %v1254
    %v1256 = vrcp.pop %v1250
    %v1257 = vmul.f32 %v1242, %v1256
    %v1258 = vrcp.pop %v1253
    %v1259 = vmul.f32 %v1244, %v1258
    %v1260 = vsel %vm1120, %v1103, 0.0
    %v1261 = vsel %vm1120, %v1108, 0.0
    %v1262 = vsel %vm1120, %v1113, 0.0
    %vm1263 = vcmp.ge.s32.totalorder %v1117, 8
    %vm1264 = vcmp.lt.s32.totalorder %v1117, 16
    %vm1265 = vmand %vm1263, %vm1264
    %v1266 = vsel %vm1265, %v931, 0.0
    %v1267 = vsel %vm1265, %v936, 0.0
    %v1268 = vsel %vm1265, %v941, 0.0
    %v1269 = vmul.f32 %v1266, 0.35355338
    %v1270 = vmul.f32 %v1267, 0.35355338
    %v1271 = vmul.f32 %v1268, 0.35355338
    %v1273 = vsel %vm854, %v1269, 0
    %v1276 = vsel %vm854, %v1270, 0
    %v1279 = vsel %vm854, %v1271, 0
    %1281 = vmatprep.subr.mxu0 0.0
    %1282 = vmatpush1.xpose.msra.mxu0 0.0
    %1283 = vmatprep.subr.mxu0 0.0
    %1284 = vmatpush1.xpose.msra.mxu0 0.0
    %1285 = vmatprep.subr.mxu0 0.0
    %1286 = vmatpush1.xpose.msra.mxu0 0.0
    %1287 = vmatprep.subr.mxu0 0.0
    %1288 = vmatpush1.xpose.msra.mxu0 0.0
    %1289 = vmatprep.subr.mxu0 0.0
    %1290 = vmatpush1.xpose.msra.mxu0 0.0
    %1291 = vmatprep.subr.mxu0 0.0
    %1292 = vmatpush1.xpose.msra.mxu0 0.0
    %1293 = vmatprep.subr.mxu0 0.0
    %1294 = vmatpush1.xpose.msra.mxu0 0.0
    %1295 = vmatprep.subr.mxu0 0.0
    %1296 = vmatpush1.xpose.msra.mxu0 0.0
    %1297 = vmatprep.subr.mxu0 0.0
    %1298 = vmatpush1.xpose.msra.mxu0 0.0
    %1299 = vmatprep.subr.mxu0 0.0
    %1300 = vmatpush1.xpose.msra.mxu0 0.0
    %1301 = vmatprep.subr.mxu0 0.0
    %1302 = vmatpush1.xpose.msra.mxu0 0.0
    %1303 = vmatprep.subr.mxu0 0.0
    %1304 = vmatpush1.xpose.msra.mxu0 0.0
    %1305 = vmatprep.subr.mxu0 0.0
    %1306 = vmatpush1.xpose.msra.mxu0 0.0
    %1307 = vmatprep.subr.mxu0 0.0
    %1308 = vmatpush1.xpose.msra.mxu0 %v1143
    %1309 = vmatprep.subr.mxu0 0.0
    %1310 = vmatpush1.xpose.msra.mxu0 %v1140
    %1311 = vmatprep.subr.mxu0 0.0
    %1312 = vmatpush1.xpose.msra.mxu0 %v1137
    %1313 = vmatprep.subr.mxu0 0.0
    %1314 = vmatpush2.xpose.msra.mxu0 0.0
    %1315 = vmatprep.subr.mxu0 0.0
    %1316 = vmatpush2.xpose.msra.mxu0 0.0
    %1317 = vmatprep.subr.mxu0 0.0
    %1318 = vmatpush2.xpose.msra.mxu0 0.0
    %1319 = vmatprep.subr.mxu0 0.0
    %1320 = vmatpush2.xpose.msra.mxu0 0.0
    %1321 = vmatprep.subr.mxu0 0.0
    %1322 = vmatpush2.xpose.msra.mxu0 0.0
    %1323 = vmatprep.subr.mxu0 0.0
    %1324 = vmatpush2.xpose.msra.mxu0 0.0
    %1325 = vmatprep.subr.mxu0 0.0
    %1326 = vmatpush2.xpose.msra.mxu0 0.0
    %1327 = vmatprep.subr.mxu0 0.0
    %1328 = vmatpush2.xpose.msra.mxu0 0.0
    %1329 = vmatprep.subr.mxu0 0.0
    %1330 = vmatpush2.xpose.msra.mxu0 0.0
    %1331 = vmatprep.subr.mxu0 0.0
    %1332 = vmatpush2.xpose.msra.mxu0 0.0
    %1333 = vmatprep.subr.mxu0 0.0
    %1334 = vmatpush2.xpose.msra.mxu0 0.0
    %1335 = vmatprep.subr.mxu0 0.0
    %1336 = vmatpush2.xpose.msra.mxu0 0.0
    %1337 = vmatprep.subr.mxu0 0.0
    %1338 = vmatpush2.xpose.msra.mxu0 0.0
    %1339 = vmatprep.subr.mxu0 0.0
    %1340 = vmatpush2.xpose.msra.mxu0 0.0
    %1341 = vmatprep.subr.mxu0 0.0
    %1342 = vmatpush2.xpose.msra.mxu0 0.0
    %1343 = vmatprep.subr.mxu0 0.0
    %1344 = vmatpush2.xpose.msra.mxu0 0.0
    %1345 = vmatprep.mubr.f32.mxu0 0.0
    %1346 = vmatmul.mubr.f32.gmra.mxu0 %v1273
    %v1347 = vpop.f32.mrf.mxu0
    %v1348 = vadd.f32 %v210, %v1347
    %v1349 = vpop.f32.mrf.mxu0
    %1350 = vmatprep.mubr.f32.mxu0 0.0
    %1351 = vmatmul.mubr.f32.gmra.mxu0 %v1276
    %v1352 = vpop.f32.mrf.mxu0
    %v1353 = vadd.f32 %v211, %v1352
    %v1354 = vpop.f32.mrf.mxu0
    %1355 = vmatprep.mubr.f32.mxu0 0.0
    %1356 = vmatmul.mubr.f32.gmra.mxu0 %v1279
    %v1357 = vpop.f32.mrf.mxu0
    %v1358 = vadd.f32 %v212, %v1357
    %v1359 = vpop.f32.mrf.mxu0
    %1360 = vdwg.mxu0
    %v1361 = vsel %vm1225, %v1348, -inf
    %1362 = vmax.xlane.f32.xlu0 %v1361
    %v1363 = vpop.xlane.xlu0 %1362
    %v1364 = vsel %vm1225, %v1353, -inf
    %1365 = vmax.xlane.f32.xlu0 %v1364
    %v1366 = vpop.xlane.xlu0 %1365
    %v1367 = vsel %vm1232, %v1358, -inf
    %1368 = vmax.xlane.f32.xlu0 %v1367
    %v1369 = vpop.xlane.xlu0 %1368
    %v1370 = vsub.f32 %v1348, %v1363
    %v1371 = vsub.f32 %v1353, %v1366
    %v1372 = vsub.f32 %v1358, %v1369
    %v1373 = vmul.f32 %v1370, 1.442695
    %v1374 = vpow.pop %v1373
    %v1375 = vmul.f32 %v1371, 1.442695
    %v1376 = vpow.pop %v1375
    %v1377 = vmul.f32 %v1372, 1.442695
    %v1378 = vpow.pop %v1377
    %v1379 = vsel %vm1225, %v1374, 0.0
    %1380 = vadd.xlane.f32.xlu0 %v1379
    %v1381 = vpop.xlane.xlu0 %1380
    %v1382 = vsel %vm1225, %v1376, 0.0
    %1383 = vadd.xlane.f32.xlu0 %v1382
    %v1384 = vpop.xlane.xlu0 %1383
    %v1385 = vsel %vm1232, %v1378, 0.0
    %1386 = vadd.xlane.f32.xlu0 %v1385
    %v1387 = vpop.xlane.xlu0 %1386
    %v1388 = vrcp.pop %v1381
    %v1389 = vmul.f32 %v1374, %v1388
    %v1390 = vrcp.pop %v1384
    %v1391 = vmul.f32 %v1376, %v1390
    %v1392 = vrcp.pop %v1387
    %v1393 = vmul.f32 %v1378, %v1392
    %v1394 = vsel %vm1265, %v1103, 0.0
    %v1395 = vsel %vm1265, %v1108, 0.0
    %v1396 = vsel %vm1265, %v1113, 0.0
    %v1398 = vsel %vm1225, %v1389, 0
    %v1401 = vsel %vm1225, %v1391, 0
    %v1404 = vsel %vm1225, %v1393, 0
    %vm1406 = vcmask 1041408
    %v1408 = vsel %vm1406, %v1396, 0
    %1410 = vmatprep.subr.mxu0 0.0
    %1411 = vmatpush1.msra.mxu0 0.0
    %1412 = vmatprep.subr.mxu0 0.0
    %1413 = vmatpush1.msra.mxu0 0.0
    %1414 = vmatprep.subr.mxu0 0.0
    %1415 = vmatpush1.msra.mxu0 0.0
    %1416 = vmatprep.subr.mxu0 0.0
    %1417 = vmatpush1.msra.mxu0 0.0
    %1418 = vmatprep.subr.mxu0 0.0
    %1419 = vmatpush1.msra.mxu0 0.0
    %1420 = vmatprep.subr.mxu0 0.0
    %1421 = vmatpush1.msra.mxu0 0.0
    %1422 = vmatprep.subr.mxu0 0.0
    %1423 = vmatpush1.msra.mxu0 0.0
    %1424 = vmatprep.subr.mxu0 0.0
    %1425 = vmatpush1.msra.mxu0 0.0
    %1426 = vmatprep.subr.mxu0 0.0
    %1427 = vmatpush1.msra.mxu0 0.0
    %1428 = vmatprep.subr.mxu0 0.0
    %1429 = vmatpush1.msra.mxu0 0.0
    %1430 = vmatprep.subr.mxu0 0.0
    %1431 = vmatpush1.msra.mxu0 0.0
    %1432 = vmatprep.subr.mxu0 0.0
    %1433 = vmatpush1.msra.mxu0 0.0
    %1434 = vmatprep.subr.mxu0 0.0
    %1435 = vmatpush1.msra.mxu0 0.0
    %1436 = vmatprep.subr.mxu0 0.0
    %1437 = vmatpush1.msra.mxu0 %v1408
    %1438 = vmatprep.subr.mxu0 0.0
    %1439 = vmatpush1.msra.mxu0 %v1395
    %1440 = vmatprep.subr.mxu0 0.0
    %1441 = vmatpush1.msra.mxu0 %v1394
    %1442 = vmatprep.subr.mxu0 0.0
    %1443 = vmatpush2.msra.mxu0 0.0
    %1444 = vmatprep.subr.mxu0 0.0
    %1445 = vmatpush2.msra.mxu0 0.0
    %1446 = vmatprep.subr.mxu0 0.0
    %1447 = vmatpush2.msra.mxu0 0.0
    %1448 = vmatprep.subr.mxu0 0.0
    %1449 = vmatpush2.msra.mxu0 0.0
    %1450 = vmatprep.subr.mxu0 0.0
    %1451 = vmatpush2.msra.mxu0 0.0
    %1452 = vmatprep.subr.mxu0 0.0
    %1453 = vmatpush2.msra.mxu0 0.0
    %1454 = vmatprep.subr.mxu0 0.0
    %1455 = vmatpush2.msra.mxu0 0.0
    %1456 = vmatprep.subr.mxu0 0.0
    %1457 = vmatpush2.msra.mxu0 0.0
    %1458 = vmatprep.subr.mxu0 0.0
    %1459 = vmatpush2.msra.mxu0 0.0
    %1460 = vmatprep.subr.mxu0 0.0
    %1461 = vmatpush2.msra.mxu0 0.0
    %1462 = vmatprep.subr.mxu0 0.0
    %1463 = vmatpush2.msra.mxu0 0.0
    %1464 = vmatprep.subr.mxu0 0.0
    %1465 = vmatpush2.msra.mxu0 0.0
    %1466 = vmatprep.subr.mxu0 0.0
    %1467 = vmatpush2.msra.mxu0 0.0
    %1468 = vmatprep.subr.mxu0 0.0
    %1469 = vmatpush2.msra.mxu0 0.0
    %1470 = vmatprep.subr.mxu0 0.0
    %1471 = vmatpush2.msra.mxu0 0.0
    %1472 = vmatprep.subr.mxu0 0.0
    %1473 = vmatpush2.msra.mxu0 0.0
    %1474 = vmatprep.mubr.f32.mxu0 0.0
    %1475 = vmatmul.mubr.f32.gmra.mxu0 %v1398
    %v1476 = vpop.f32.mrf.mxu0
    %v1477 = vadd.f32 0.0, %v1476
    %v1478 = vpop.f32.mrf.mxu0
    %1479 = vmatprep.mubr.f32.mxu0 0.0
    %1480 = vmatmul.mubr.f32.gmra.mxu0 %v1401
    %v1481 = vpop.f32.mrf.mxu0
    %v1482 = vadd.f32 0.0, %v1481
    %v1483 = vpop.f32.mrf.mxu0
    %1484 = vmatprep.mubr.f32.mxu0 0.0
    %1485 = vmatmul.mubr.f32.gmra.mxu0 %v1404
    %v1486 = vpop.f32.mrf.mxu0
    %v1487 = vadd.f32 0.0, %v1486
    %v1488 = vpop.f32.mrf.mxu0
    %1489 = vdwg.mxu0
    %v1491 = vsel %vm1225, %v1255, 0
    %v1494 = vsel %vm1225, %v1257, 0
    %v1497 = vsel %vm1225, %v1259, 0
    %v1500 = vsel %vm1406, %v1262, 0
    %1502 = vmatprep.subr.mxu0 0.0
    %1503 = vmatpush1.msra.mxu0 0.0
    %1504 = vmatprep.subr.mxu0 0.0
    %1505 = vmatpush1.msra.mxu0 0.0
    %1506 = vmatprep.subr.mxu0 0.0
    %1507 = vmatpush1.msra.mxu0 0.0
    %1508 = vmatprep.subr.mxu0 0.0
    %1509 = vmatpush1.msra.mxu0 0.0
    %1510 = vmatprep.subr.mxu0 0.0
    %1511 = vmatpush1.msra.mxu0 0.0
    %1512 = vmatprep.subr.mxu0 0.0
    %1513 = vmatpush1.msra.mxu0 0.0
    %1514 = vmatprep.subr.mxu0 0.0
    %1515 = vmatpush1.msra.mxu0 0.0
    %1516 = vmatprep.subr.mxu0 0.0
    %1517 = vmatpush1.msra.mxu0 0.0
    %1518 = vmatprep.subr.mxu0 0.0
    %1519 = vmatpush1.msra.mxu0 0.0
    %1520 = vmatprep.subr.mxu0 0.0
    %1521 = vmatpush1.msra.mxu0 0.0
    %1522 = vmatprep.subr.mxu0 0.0
    %1523 = vmatpush1.msra.mxu0 0.0
    %1524 = vmatprep.subr.mxu0 0.0
    %1525 = vmatpush1.msra.mxu0 0.0
    %1526 = vmatprep.subr.mxu0 0.0
    %1527 = vmatpush1.msra.mxu0 0.0
    %1528 = vmatprep.subr.mxu0 0.0
    %1529 = vmatpush1.msra.mxu0 %v1500
    %1530 = vmatprep.subr.mxu0 0.0
    %1531 = vmatpush1.msra.mxu0 %v1261
    %1532 = vmatprep.subr.mxu0 0.0
    %1533 = vmatpush1.msra.mxu0 %v1260
    %1534 = vmatprep.subr.mxu0 0.0
    %1535 = vmatpush2.msra.mxu0 0.0
    %1536 = vmatprep.subr.mxu0 0.0
    %1537 = vmatpush2.msra.mxu0 0.0
    %1538 = vmatprep.subr.mxu0 0.0
    %1539 = vmatpush2.msra.mxu0 0.0
    %1540 = vmatprep.subr.mxu0 0.0
    %1541 = vmatpush2.msra.mxu0 0.0
    %1542 = vmatprep.subr.mxu0 0.0
    %1543 = vmatpush2.msra.mxu0 0.0
    %1544 = vmatprep.subr.mxu0 0.0
    %1545 = vmatpush2.msra.mxu0 0.0
    %1546 = vmatprep.subr.mxu0 0.0
    %1547 = vmatpush2.msra.mxu0 0.0
    %1548 = vmatprep.subr.mxu0 0.0
    %1549 = vmatpush2.msra.mxu0 0.0
    %1550 = vmatprep.subr.mxu0 0.0
    %1551 = vmatpush2.msra.mxu0 0.0
    %1552 = vmatprep.subr.mxu0 0.0
    %1553 = vmatpush2.msra.mxu0 0.0
    %1554 = vmatprep.subr.mxu0 0.0
    %1555 = vmatpush2.msra.mxu0 0.0
    %1556 = vmatprep.subr.mxu0 0.0
    %1557 = vmatpush2.msra.mxu0 0.0
    %1558 = vmatprep.subr.mxu0 0.0
    %1559 = vmatpush2.msra.mxu0 0.0
    %1560 = vmatprep.subr.mxu0 0.0
    %1561 = vmatpush2.msra.mxu0 0.0
    %1562 = vmatprep.subr.mxu0 0.0
    %1563 = vmatpush2.msra.mxu0 0.0
    %1564 = vmatprep.subr.mxu0 0.0
    %1565 = vmatpush2.msra.mxu0 0.0
    %1566 = vmatprep.mubr.f32.mxu0 0.0
    %1567 = vmatmul.mubr.f32.gmra.mxu0 %v1491
    %v1568 = vpop.f32.mrf.mxu0
    %v1569 = vadd.f32 %v1477, %v1568
    %v1570 = vpop.f32.mrf.mxu0
    %1571 = vmatprep.mubr.f32.mxu0 0.0
    %1572 = vmatmul.mubr.f32.gmra.mxu0 %v1494
    %v1573 = vpop.f32.mrf.mxu0
    %v1574 = vadd.f32 %v1482, %v1573
    %v1575 = vpop.f32.mrf.mxu0
    %1576 = vmatprep.mubr.f32.mxu0 0.0
    %1577 = vmatmul.mubr.f32.gmra.mxu0 %v1497
    %v1578 = vpop.f32.mrf.mxu0
    %v1579 = vadd.f32 %v1487, %v1578
    %v1580 = vpop.f32.mrf.mxu0
    %1581 = vdwg.mxu0
    %vm1582 = vcmp.ge.s32.totalorder %v1117, 16
    %vm1583 = vcmp.lt.s32.totalorder %v1117, 24
    %vm1584 = vmand %vm1582, %vm1583
    %v1585 = vsel %vm1584, %v931, 0.0
    %v1586 = vsel %vm1584, %v936, 0.0
    %v1587 = vsel %vm1584, %v941, 0.0
    %v1588 = vmul.f32 %v1585, 0.35355338
    %v1589 = vmul.f32 %v1586, 0.35355338
    %v1590 = vmul.f32 %v1587, 0.35355338
    %v1592 = vsel %vm854, %v1588, 0
    %v1595 = vsel %vm854, %v1589, 0
    %v1598 = vsel %vm854, %v1590, 0
    %1600 = vmatprep.subr.mxu0 0.0
    %1601 = vmatpush1.xpose.msra.mxu0 0.0
    %1602 = vmatprep.subr.mxu0 0.0
    %1603 = vmatpush1.xpose.msra.mxu0 0.0
    %1604 = vmatprep.subr.mxu0 0.0
    %1605 = vmatpush1.xpose.msra.mxu0 0.0
    %1606 = vmatprep.subr.mxu0 0.0
    %1607 = vmatpush1.xpose.msra.mxu0 0.0
    %1608 = vmatprep.subr.mxu0 0.0
    %1609 = vmatpush1.xpose.msra.mxu0 0.0
    %1610 = vmatprep.subr.mxu0 0.0
    %1611 = vmatpush1.xpose.msra.mxu0 0.0
    %1612 = vmatprep.subr.mxu0 0.0
    %1613 = vmatpush1.xpose.msra.mxu0 0.0
    %1614 = vmatprep.subr.mxu0 0.0
    %1615 = vmatpush1.xpose.msra.mxu0 0.0
    %1616 = vmatprep.subr.mxu0 0.0
    %1617 = vmatpush1.xpose.msra.mxu0 0.0
    %1618 = vmatprep.subr.mxu0 0.0
    %1619 = vmatpush1.xpose.msra.mxu0 0.0
    %1620 = vmatprep.subr.mxu0 0.0
    %1621 = vmatpush1.xpose.msra.mxu0 0.0
    %1622 = vmatprep.subr.mxu0 0.0
    %1623 = vmatpush1.xpose.msra.mxu0 0.0
    %1624 = vmatprep.subr.mxu0 0.0
    %1625 = vmatpush1.xpose.msra.mxu0 0.0
    %1626 = vmatprep.subr.mxu0 0.0
    %1627 = vmatpush1.xpose.msra.mxu0 %v1143
    %1628 = vmatprep.subr.mxu0 0.0
    %1629 = vmatpush1.xpose.msra.mxu0 %v1140
    %1630 = vmatprep.subr.mxu0 0.0
    %1631 = vmatpush1.xpose.msra.mxu0 %v1137
    %1632 = vmatprep.subr.mxu0 0.0
    %1633 = vmatpush2.xpose.msra.mxu0 0.0
    %1634 = vmatprep.subr.mxu0 0.0
    %1635 = vmatpush2.xpose.msra.mxu0 0.0
    %1636 = vmatprep.subr.mxu0 0.0
    %1637 = vmatpush2.xpose.msra.mxu0 0.0
    %1638 = vmatprep.subr.mxu0 0.0
    %1639 = vmatpush2.xpose.msra.mxu0 0.0
    %1640 = vmatprep.subr.mxu0 0.0
    %1641 = vmatpush2.xpose.msra.mxu0 0.0
    %1642 = vmatprep.subr.mxu0 0.0
    %1643 = vmatpush2.xpose.msra.mxu0 0.0
    %1644 = vmatprep.subr.mxu0 0.0
    %1645 = vmatpush2.xpose.msra.mxu0 0.0
    %1646 = vmatprep.subr.mxu0 0.0
    %1647 = vmatpush2.xpose.msra.mxu0 0.0
    %1648 = vmatprep.subr.mxu0 0.0
    %1649 = vmatpush2.xpose.msra.mxu0 0.0
    %1650 = vmatprep.subr.mxu0 0.0
    %1651 = vmatpush2.xpose.msra.mxu0 0.0
    %1652 = vmatprep.subr.mxu0 0.0
    %1653 = vmatpush2.xpose.msra.mxu0 0.0
    %1654 = vmatprep.subr.mxu0 0.0
    %1655 = vmatpush2.xpose.msra.mxu0 0.0
    %1656 = vmatprep.subr.mxu0 0.0
    %1657 = vmatpush2.xpose.msra.mxu0 0.0
    %1658 = vmatprep.subr.mxu0 0.0
    %1659 = vmatpush2.xpose.msra.mxu0 0.0
    %1660 = vmatprep.subr.mxu0 0.0
    %1661 = vmatpush2.xpose.msra.mxu0 0.0
    %1662 = vmatprep.subr.mxu0 0.0
    %1663 = vmatpush2.xpose.msra.mxu0 0.0
    %1664 = vmatprep.mubr.f32.mxu0 0.0
    %1665 = vmatmul.mubr.f32.gmra.mxu0 %v1592
    %v1666 = vpop.f32.mrf.mxu0
    %v1667 = vadd.f32 %v210, %v1666
    %v1668 = vpop.f32.mrf.mxu0
    %1669 = vmatprep.mubr.f32.mxu0 0.0
    %1670 = vmatmul.mubr.f32.gmra.mxu0 %v1595
    %v1671 = vpop.f32.mrf.mxu0
    %v1672 = vadd.f32 %v211, %v1671
    %v1673 = vpop.f32.mrf.mxu0
    %1674 = vmatprep.mubr.f32.mxu0 0.0
    %1675 = vmatmul.mubr.f32.gmra.mxu0 %v1598
    %v1676 = vpop.f32.mrf.mxu0
    %v1677 = vadd.f32 %v212, %v1676
    %v1678 = vpop.f32.mrf.mxu0
    %1679 = vdwg.mxu0
    %v1680 = vsel %vm1225, %v1667, -inf
    %1681 = vmax.xlane.f32.xlu0 %v1680
    %v1682 = vpop.xlane.xlu0 %1681
    %v1683 = vsel %vm1225, %v1672, -inf
    %1684 = vmax.xlane.f32.xlu0 %v1683
    %v1685 = vpop.xlane.xlu0 %1684
    %v1686 = vsel %vm1232, %v1677, -inf
    %1687 = vmax.xlane.f32.xlu0 %v1686
    %v1688 = vpop.xlane.xlu0 %1687
    %v1689 = vsub.f32 %v1667, %v1682
    %v1690 = vsub.f32 %v1672, %v1685
    %v1691 = vsub.f32 %v1677, %v1688
    %v1692 = vmul.f32 %v1689, 1.442695
    %v1693 = vpow.pop %v1692
    %v1694 = vmul.f32 %v1690, 1.442695
    %v1695 = vpow.pop %v1694
    %v1696 = vmul.f32 %v1691, 1.442695
    %v1697 = vpow.pop %v1696
    %v1698 = vsel %vm1225, %v1693, 0.0
    %1699 = vadd.xlane.f32.xlu0 %v1698
    %v1700 = vpop.xlane.xlu0 %1699
    %v1701 = vsel %vm1225, %v1695, 0.0
    %1702 = vadd.xlane.f32.xlu0 %v1701
    %v1703 = vpop.xlane.xlu0 %1702
    %v1704 = vsel %vm1232, %v1697, 0.0
    %1705 = vadd.xlane.f32.xlu0 %v1704
    %v1706 = vpop.xlane.xlu0 %1705
    %v1707 = vrcp.pop %v1700
    %v1708 = vmul.f32 %v1693, %v1707
    %v1709 = vrcp.pop %v1703
    %v1710 = vmul.f32 %v1695, %v1709
    %v1711 = vrcp.pop %v1706
    %v1712 = vmul.f32 %v1697, %v1711
    %v1713 = vsel %vm1584, %v1103, 0.0
    %v1714 = vsel %vm1584, %v1108, 0.0
    %v1715 = vsel %vm1584, %v1113, 0.0
    %v1717 = vsel %vm1225, %v1708, 0
    %v1720 = vsel %vm1225, %v1710, 0
    %v1723 = vsel %vm1225, %v1712, 0
    %v1726 = vsel %vm1406, %v1715, 0
    %1728 = vmatprep.subr.mxu0 0.0
    %1729 = vmatpush1.msra.mxu0 0.0
    %1730 = vmatprep.subr.mxu0 0.0
    %1731 = vmatpush1.msra.mxu0 0.0
    %1732 = vmatprep.subr.mxu0 0.0
    %1733 = vmatpush1.msra.mxu0 0.0
    %1734 = vmatprep.subr.mxu0 0.0
    %1735 = vmatpush1.msra.mxu0 0.0
    %1736 = vmatprep.subr.mxu0 0.0
    %1737 = vmatpush1.msra.mxu0 0.0
    %1738 = vmatprep.subr.mxu0 0.0
    %1739 = vmatpush1.msra.mxu0 0.0
    %1740 = vmatprep.subr.mxu0 0.0
    %1741 = vmatpush1.msra.mxu0 0.0
    %1742 = vmatprep.subr.mxu0 0.0
    %1743 = vmatpush1.msra.mxu0 0.0
    %1744 = vmatprep.subr.mxu0 0.0
    %1745 = vmatpush1.msra.mxu0 0.0
    %1746 = vmatprep.subr.mxu0 0.0
    %1747 = vmatpush1.msra.mxu0 0.0
    %1748 = vmatprep.subr.mxu0 0.0
    %1749 = vmatpush1.msra.mxu0 0.0
    %1750 = vmatprep.subr.mxu0 0.0
    %1751 = vmatpush1.msra.mxu0 0.0
    %1752 = vmatprep.subr.mxu0 0.0
    %1753 = vmatpush1.msra.mxu0 0.0
    %1754 = vmatprep.subr.mxu0 0.0
    %1755 = vmatpush1.msra.mxu0 %v1726
    %1756 = vmatprep.subr.mxu0 0.0
    %1757 = vmatpush1.msra.mxu0 %v1714
    %1758 = vmatprep.subr.mxu0 0.0
    %1759 = vmatpush1.msra.mxu0 %v1713
    %1760 = vmatprep.subr.mxu0 0.0
    %1761 = vmatpush2.msra.mxu0 0.0
    %1762 = vmatprep.subr.mxu0 0.0
    %1763 = vmatpush2.msra.mxu0 0.0
    %1764 = vmatprep.subr.mxu0 0.0
    %1765 = vmatpush2.msra.mxu0 0.0
    %1766 = vmatprep.subr.mxu0 0.0
    %1767 = vmatpush2.msra.mxu0 0.0
    %1768 = vmatprep.subr.mxu0 0.0
    %1769 = vmatpush2.msra.mxu0 0.0
    %1770 = vmatprep.subr.mxu0 0.0
    %1771 = vmatpush2.msra.mxu0 0.0
    %1772 = vmatprep.subr.mxu0 0.0
    %1773 = vmatpush2.msra.mxu0 0.0
    %1774 = vmatprep.subr.mxu0 0.0
    %1775 = vmatpush2.msra.mxu0 0.0
    %1776 = vmatprep.subr.mxu0 0.0
    %1777 = vmatpush2.msra.mxu0 0.0
    %1778 = vmatprep.subr.mxu0 0.0
    %1779 = vmatpush2.msra.mxu0 0.0
    %1780 = vmatprep.subr.mxu0 0.0
    %1781 = vmatpush2.msra.mxu0 0.0
    %1782 = vmatprep.subr.mxu0 0.0
    %1783 = vmatpush2.msra.mxu0 0.0
    %1784 = vmatprep.subr.mxu0 0.0
    %1785 = vmatpush2.msra.mxu0 0.0
    %1786 = vmatprep.subr.mxu0 0.0
    %1787 = vmatpush2.msra.mxu0 0.0
    %1788 = vmatprep.subr.mxu0 0.0
    %1789 = vmatpush2.msra.mxu0 0.0
    %1790 = vmatprep.subr.mxu0 0.0
    %1791 = vmatpush2.msra.mxu0 0.0
    %1792 = vmatprep.mubr.f32.mxu0 0.0
    %1793 = vmatmul.mubr.f32.gmra.mxu0 %v1717
    %v1794 = vpop.f32.mrf.mxu0
    %v1795 = vadd.f32 0.0, %v1794
    %v1796 = vpop.f32.mrf.mxu0
    %1797 = vmatprep.mubr.f32.mxu0 0.0
    %1798 = vmatmul.mubr.f32.gmra.mxu0 %v1720
    %v1799 = vpop.f32.mrf.mxu0
    %v1800 = vadd.f32 0.0, %v1799
    %v1801 = vpop.f32.mrf.mxu0
    %1802 = vmatprep.mubr.f32.mxu0 0.0
    %1803 = vmatmul.mubr.f32.gmra.mxu0 %v1723
    %v1804 = vpop.f32.mrf.mxu0
    %v1805 = vadd.f32 0.0, %v1804
    %v1806 = vpop.f32.mrf.mxu0
    %1807 = vdwg.mxu0
    %v1808 = vadd.f32 %v1569, %v1795
    %v1809 = vadd.f32 %v1574, %v1800
    %v1810 = vadd.f32 %v1579, %v1805
    %vm1811 = vcmp.ge.s32.totalorder %v1117, 24
    %vm1812 = vcmp.lt.s32.totalorder %v1117, 32
    %vm1813 = vmand %vm1811, %vm1812
    %v1814 = vsel %vm1813, %v931, 0.0
    %v1815 = vsel %vm1813, %v936, 0.0
    %v1816 = vsel %vm1813, %v941, 0.0
    %v1817 = vmul.f32 %v1814, 0.35355338
    %v1818 = vmul.f32 %v1815, 0.35355338
    %v1819 = vmul.f32 %v1816, 0.35355338
    %v1821 = vsel %vm854, %v1817, 0
    %v1824 = vsel %vm854, %v1818, 0
    %v1827 = vsel %vm854, %v1819, 0
    %1829 = vmatprep.subr.mxu0 0.0
    %1830 = vmatpush1.xpose.msra.mxu0 0.0
    %1831 = vmatprep.subr.mxu0 0.0
    %1832 = vmatpush1.xpose.msra.mxu0 0.0
    %1833 = vmatprep.subr.mxu0 0.0
    %1834 = vmatpush1.xpose.msra.mxu0 0.0
    %1835 = vmatprep.subr.mxu0 0.0
    %1836 = vmatpush1.xpose.msra.mxu0 0.0
    %1837 = vmatprep.subr.mxu0 0.0
    %1838 = vmatpush1.xpose.msra.mxu0 0.0
    %1839 = vmatprep.subr.mxu0 0.0
    %1840 = vmatpush1.xpose.msra.mxu0 0.0
    %1841 = vmatprep.subr.mxu0 0.0
    %1842 = vmatpush1.xpose.msra.mxu0 0.0
    %1843 = vmatprep.subr.mxu0 0.0
    %1844 = vmatpush1.xpose.msra.mxu0 0.0
    %1845 = vmatprep.subr.mxu0 0.0
    %1846 = vmatpush1.xpose.msra.mxu0 0.0
    %1847 = vmatprep.subr.mxu0 0.0
    %1848 = vmatpush1.xpose.msra.mxu0 0.0
    %1849 = vmatprep.subr.mxu0 0.0
    %1850 = vmatpush1.xpose.msra.mxu0 0.0
    %1851 = vmatprep.subr.mxu0 0.0
    %1852 = vmatpush1.xpose.msra.mxu0 0.0
    %1853 = vmatprep.subr.mxu0 0.0
    %1854 = vmatpush1.xpose.msra.mxu0 0.0
    %1855 = vmatprep.subr.mxu0 0.0
    %1856 = vmatpush1.xpose.msra.mxu0 %v1143
    %1857 = vmatprep.subr.mxu0 0.0
    %1858 = vmatpush1.xpose.msra.mxu0 %v1140
    %1859 = vmatprep.subr.mxu0 0.0
    %1860 = vmatpush1.xpose.msra.mxu0 %v1137
    %1861 = vmatprep.subr.mxu0 0.0
    %1862 = vmatpush2.xpose.msra.mxu0 0.0
    %1863 = vmatprep.subr.mxu0 0.0
    %1864 = vmatpush2.xpose.msra.mxu0 0.0
    %1865 = vmatprep.subr.mxu0 0.0
    %1866 = vmatpush2.xpose.msra.mxu0 0.0
    %1867 = vmatprep.subr.mxu0 0.0
    %1868 = vmatpush2.xpose.msra.mxu0 0.0
    %1869 = vmatprep.subr.mxu0 0.0
    %1870 = vmatpush2.xpose.msra.mxu0 0.0
    %1871 = vmatprep.subr.mxu0 0.0
    %1872 = vmatpush2.xpose.msra.mxu0 0.0
    %1873 = vmatprep.subr.mxu0 0.0
    %1874 = vmatpush2.xpose.msra.mxu0 0.0
    %1875 = vmatprep.subr.mxu0 0.0
    %1876 = vmatpush2.xpose.msra.mxu0 0.0
    %1877 = vmatprep.subr.mxu0 0.0
    %1878 = vmatpush2.xpose.msra.mxu0 0.0
    %1879 = vmatprep.subr.mxu0 0.0
    %1880 = vmatpush2.xpose.msra.mxu0 0.0
    %1881 = vmatprep.subr.mxu0 0.0
    %1882 = vmatpush2.xpose.msra.mxu0 0.0
    %1883 = vmatprep.subr.mxu0 0.0
    %1884 = vmatpush2.xpose.msra.mxu0 0.0
    %1885 = vmatprep.subr.mxu0 0.0
    %1886 = vmatpush2.xpose.msra.mxu0 0.0
    %1887 = vmatprep.subr.mxu0 0.0
    %1888 = vmatpush2.xpose.msra.mxu0 0.0
    %1889 = vmatprep.subr.mxu0 0.0
    %1890 = vmatpush2.xpose.msra.mxu0 0.0
    %1891 = vmatprep.subr.mxu0 0.0
    %1892 = vmatpush2.xpose.msra.mxu0 0.0
    %1893 = vmatprep.mubr.f32.mxu0 0.0
    %1894 = vmatmul.mubr.f32.gmra.mxu0 %v1821
    %v1895 = vpop.f32.mrf.mxu0
    %v1896 = vadd.f32 %v210, %v1895
    %v1897 = vpop.f32.mrf.mxu0
    %1898 = vmatprep.mubr.f32.mxu0 0.0
    %1899 = vmatmul.mubr.f32.gmra.mxu0 %v1824
    %v1900 = vpop.f32.mrf.mxu0
    %v1901 = vadd.f32 %v211, %v1900
    %v1902 = vpop.f32.mrf.mxu0
    %1903 = vmatprep.mubr.f32.mxu0 0.0
    %1904 = vmatmul.mubr.f32.gmra.mxu0 %v1827
    %v1905 = vpop.f32.mrf.mxu0
    %v1906 = vadd.f32 %v212, %v1905
    %v1907 = vpop.f32.mrf.mxu0
    %1908 = vdwg.mxu0
    %v1909 = vsel %vm1225, %v1896, -inf
    %1910 = vmax.xlane.f32.xlu0 %v1909
    %v1911 = vpop.xlane.xlu0 %1910
    %v1912 = vsel %vm1225, %v1901, -inf
    %1913 = vmax.xlane.f32.xlu0 %v1912
    %v1914 = vpop.xlane.xlu0 %1913
    %v1915 = vsel %vm1232, %v1906, -inf
    %1916 = vmax.xlane.f32.xlu0 %v1915
    %v1917 = vpop.xlane.xlu0 %1916
    %v1918 = vsub.f32 %v1896, %v1911
    %v1919 = vsub.f32 %v1901, %v1914
    %v1920 = vsub.f32 %v1906, %v1917
    %v1921 = vmul.f32 %v1918, 1.442695
    %v1922 = vpow.pop %v1921
    %v1923 = vmul.f32 %v1919, 1.442695
    %v1924 = vpow.pop %v1923
    %v1925 = vmul.f32 %v1920, 1.442695
    %v1926 = vpow.pop %v1925
    %v1927 = vsel %vm1225, %v1922, 0.0
    %1928 = vadd.xlane.f32.xlu0 %v1927
    %v1929 = vpop.xlane.xlu0 %1928
    %v1930 = vsel %vm1225, %v1924, 0.0
    %1931 = vadd.xlane.f32.xlu0 %v1930
    %v1932 = vpop.xlane.xlu0 %1931
    %v1933 = vsel %vm1232, %v1926, 0.0
    %1934 = vadd.xlane.f32.xlu0 %v1933
    %v1935 = vpop.xlane.xlu0 %1934
    %v1936 = vrcp.pop %v1929
    %v1937 = vmul.f32 %v1922, %v1936
    %v1938 = vrcp.pop %v1932
    %v1939 = vmul.f32 %v1924, %v1938
    %v1940 = vrcp.pop %v1935
    %v1941 = vmul.f32 %v1926, %v1940
    %v1942 = vsel %vm1813, %v1103, 0.0
    %v1943 = vsel %vm1813, %v1108, 0.0
    %v1944 = vsel %vm1813, %v1113, 0.0
    %v1946 = vsel %vm1225, %v1937, 0
    %v1949 = vsel %vm1225, %v1939, 0
    %v1952 = vsel %vm1225, %v1941, 0
    %v1955 = vsel %vm1406, %v1944, 0
    %1957 = vmatprep.subr.mxu0 0.0
    %1958 = vmatpush1.msra.mxu0 0.0
    %1959 = vmatprep.subr.mxu0 0.0
    %1960 = vmatpush1.msra.mxu0 0.0
    %1961 = vmatprep.subr.mxu0 0.0
    %1962 = vmatpush1.msra.mxu0 0.0
    %1963 = vmatprep.subr.mxu0 0.0
    %1964 = vmatpush1.msra.mxu0 0.0
    %1965 = vmatprep.subr.mxu0 0.0
    %1966 = vmatpush1.msra.mxu0 0.0
    %1967 = vmatprep.subr.mxu0 0.0
    %1968 = vmatpush1.msra.mxu0 0.0
    %1969 = vmatprep.subr.mxu0 0.0
    %1970 = vmatpush1.msra.mxu0 0.0
    %1971 = vmatprep.subr.mxu0 0.0
    %1972 = vmatpush1.msra.mxu0 0.0
    %1973 = vmatprep.subr.mxu0 0.0
    %1974 = vmatpush1.msra.mxu0 0.0
    %1975 = vmatprep.subr.mxu0 0.0
    %1976 = vmatpush1.msra.mxu0 0.0
    %1977 = vmatprep.subr.mxu0 0.0
    %1978 = vmatpush1.msra.mxu0 0.0
    %1979 = vmatprep.subr.mxu0 0.0
    %1980 = vmatpush1.msra.mxu0 0.0
    %1981 = vmatprep.subr.mxu0 0.0
    %1982 = vmatpush1.msra.mxu0 0.0
    %1983 = vmatprep.subr.mxu0 0.0
    %1984 = vmatpush1.msra.mxu0 %v1955
    %1985 = vmatprep.subr.mxu0 0.0
    %1986 = vmatpush1.msra.mxu0 %v1943
    %1987 = vmatprep.subr.mxu0 0.0
    %1988 = vmatpush1.msra.mxu0 %v1942
    %1989 = vmatprep.subr.mxu0 0.0
    %1990 = vmatpush2.msra.mxu0 0.0
    %1991 = vmatprep.subr.mxu0 0.0
    %1992 = vmatpush2.msra.mxu0 0.0
    %1993 = vmatprep.subr.mxu0 0.0
    %1994 = vmatpush2.msra.mxu0 0.0
    %1995 = vmatprep.subr.mxu0 0.0
    %1996 = vmatpush2.msra.mxu0 0.0
    %1997 = vmatprep.subr.mxu0 0.0
    %1998 = vmatpush2.msra.mxu0 0.0
    %1999 = vmatprep.subr.mxu0 0.0
    %2000 = vmatpush2.msra.mxu0 0.0
    %2001 = vmatprep.subr.mxu0 0.0
    %2002 = vmatpush2.msra.mxu0 0.0
    %2003 = vmatprep.subr.mxu0 0.0
    %2004 = vmatpush2.msra.mxu0 0.0
    %2005 = vmatprep.subr.mxu0 0.0
    %2006 = vmatpush2.msra.mxu0 0.0
    %2007 = vmatprep.subr.mxu0 0.0
    %2008 = vmatpush2.msra.mxu0 0.0
    %2009 = vmatprep.subr.mxu0 0.0
    %2010 = vmatpush2.msra.mxu0 0.0
    %2011 = vmatprep.subr.mxu0 0.0
    %2012 = vmatpush2.msra.mxu0 0.0
    %2013 = vmatprep.subr.mxu0 0.0
    %2014 = vmatpush2.msra.mxu0 0.0
    %2015 = vmatprep.subr.mxu0 0.0
    %2016 = vmatpush2.msra.mxu0 0.0
    %2017 = vmatprep.subr.mxu0 0.0
    %2018 = vmatpush2.msra.mxu0 0.0
    %2019 = vmatprep.subr.mxu0 0.0
    %2020 = vmatpush2.msra.mxu0 0.0
    %2021 = vmatprep.mubr.f32.mxu0 0.0
    %2022 = vmatmul.mubr.f32.gmra.mxu0 %v1946
    %v2023 = vpop.f32.mrf.mxu0
    %v2024 = vadd.f32 0.0, %v2023
    %v2025 = vpop.f32.mrf.mxu0
    %2026 = vmatprep.mubr.f32.mxu0 0.0
    %2027 = vmatmul.mubr.f32.gmra.mxu0 %v1949
    %v2028 = vpop.f32.mrf.mxu0
    %v2029 = vadd.f32 0.0, %v2028
    %v2030 = vpop.f32.mrf.mxu0
    %2031 = vmatprep.mubr.f32.mxu0 0.0
    %2032 = vmatmul.mubr.f32.gmra.mxu0 %v1952
    %v2033 = vpop.f32.mrf.mxu0
    %v2034 = vadd.f32 0.0, %v2033
    %v2035 = vpop.f32.mrf.mxu0
    %2036 = vdwg.mxu0
    %v2037 = vadd.f32 %v1808, %v2024
    %v2038 = vadd.f32 %v1809, %v2029
    %v2039 = vadd.f32 %v1810, %v2034
    %v2041 = vlaneseq
    %v2042 = vshrl.u32 %v2041, 7
    %v2043 = vsub.s32 0, %v2042
    %v2044 = vrot.slane %v232, %v2043
    %v2047 = vsel %vm854, %v2037, 0
    %v2050 = vsel %vm854, %v2038, 0
    %v2053 = vsel %vm854, %v2039, 0
    %2055 = vmatprep.subr.mxu0 0.0
    %2056 = vmatpush1.msra.mxu0 0.0
    %2057 = vmatprep.subr.mxu0 0.0
    %2058 = vmatpush1.msra.mxu0 0.0
    %2059 = vmatprep.subr.mxu0 0.0
    %2060 = vmatpush1.msra.mxu0 0.0
    %2061 = vmatprep.subr.mxu0 0.0
    %2062 = vmatpush1.msra.mxu0 0.0
    %2063 = vmatprep.subr.mxu0 0.0
    %2064 = vmatpush1.msra.mxu0 0.0
    %2065 = vmatprep.subr.mxu0 0.0
    %2066 = vmatpush1.msra.mxu0 0.0
    %2067 = vmatprep.subr.mxu0 0.0
    %2068 = vmatpush1.msra.mxu0 0.0
    %2069 = vmatprep.subr.mxu0 0.0
    %2070 = vmatpush1.msra.mxu0 0.0
    %2071 = vmatprep.subr.mxu0 0.0
    %2072 = vmatpush1.msra.mxu0 0.0
    %2073 = vmatprep.subr.mxu0 0.0
    %2074 = vmatpush1.msra.mxu0 0.0
    %2075 = vmatprep.subr.mxu0 0.0
    %2076 = vmatpush1.msra.mxu0 0.0
    %2077 = vmatprep.subr.mxu0 0.0
    %2078 = vmatpush1.msra.mxu0 0.0
    %2079 = vmatprep.subr.mxu0 0.0
    %2080 = vmatpush1.msra.mxu0 %v231
    %2081 = vmatprep.subr.mxu0 0.0
    %2082 = vmatpush1.msra.mxu0 %v230
    %2083 = vmatprep.subr.mxu0 0.0
    %2084 = vmatpush1.msra.mxu0 %v229
    %2085 = vmatprep.subr.mxu0 0.0
    %2086 = vmatpush1.msra.mxu0 %v228
    %2087 = vmatprep.subr.mxu0 0.0
    %2088 = vmatpush2.msra.mxu0 0.0
    %2089 = vmatprep.subr.mxu0 0.0
    %2090 = vmatpush2.msra.mxu0 0.0
    %2091 = vmatprep.subr.mxu0 0.0
    %2092 = vmatpush2.msra.mxu0 0.0
    %2093 = vmatprep.subr.mxu0 0.0
    %2094 = vmatpush2.msra.mxu0 0.0
    %2095 = vmatprep.subr.mxu0 0.0
    %2096 = vmatpush2.msra.mxu0 0.0
    %2097 = vmatprep.subr.mxu0 0.0
    %2098 = vmatpush2.msra.mxu0 0.0
    %2099 = vmatprep.subr.mxu0 0.0
    %2100 = vmatpush2.msra.mxu0 0.0
    %2101 = vmatprep.subr.mxu0 0.0
    %2102 = vmatpush2.msra.mxu0 0.0
    %2103 = vmatprep.subr.mxu0 0.0
    %2104 = vmatpush2.msra.mxu0 0.0
    %2105 = vmatprep.subr.mxu0 0.0
    %2106 = vmatpush2.msra.mxu0 0.0
    %2107 = vmatprep.subr.mxu0 0.0
    %2108 = vmatpush2.msra.mxu0 0.0
    %2109 = vmatprep.subr.mxu0 0.0
    %2110 = vmatpush2.msra.mxu0 0.0
    %2111 = vmatprep.subr.mxu0 0.0
    %2112 = vmatpush2.msra.mxu0 0.0
    %2113 = vmatprep.subr.mxu0 0.0
    %2114 = vmatpush2.msra.mxu0 0.0
    %2115 = vmatprep.subr.mxu0 0.0
    %2116 = vmatpush2.msra.mxu0 0.0
    %2117 = vmatprep.subr.mxu0 0.0
    %2118 = vmatpush2.msra.mxu0 0.0
    %2119 = vmatprep.mubr.f32.mxu0 0.0
    %2120 = vmatmul.mubr.f32.gmra.mxu0 %v2047
    %v2121 = vpop.f32.mrf.mxu0
    %v2122 = vadd.f32 %v2044, %v2121
    %v2123 = vpop.f32.mrf.mxu0
    %2124 = vmatprep.mubr.f32.mxu0 0.0
    %2125 = vmatmul.mubr.f32.gmra.mxu0 %v2050
    %v2126 = vpop.f32.mrf.mxu0
    %v2127 = vadd.f32 %v2044, %v2126
    %v2128 = vpop.f32.mrf.mxu0
    %2129 = vmatprep.mubr.f32.mxu0 0.0
    %2130 = vmatmul.mubr.f32.gmra.mxu0 %v2053
    %v2131 = vpop.f32.mrf.mxu0
    %v2132 = vadd.f32 %v2044, %v2131
    %v2133 = vpop.f32.mrf.mxu0
    %2134 = vdwg.mxu0
    %v2135 = vadd.f32 %v207, %v2122
    %v2136 = vadd.f32 %v208, %v2127
    %v2137 = vadd.f32 %v209, %v2132
    %v2138 = vsel %vm854, %v2135, 0.0
    %2139 = vadd.xlane.f32.xlu0 %v2138
    %v2140 = vpop.xlane.xlu0 %2139
    %v2141 = vsel %vm854, %v2136, 0.0
    %2142 = vadd.xlane.f32.xlu0 %v2141
    %v2143 = vpop.xlane.xlu0 %2142
    %vm2144 = vcmask 254976
    %v2145 = vsel %vm2144, %v2137, 0.0
    %2146 = vadd.xlane.f32.xlu0 %v2145
    %v2147 = vpop.xlane.xlu0 %2146
    %v2148 = vrcp.pop 32.0
    %v2149 = vmul.f32 %v2140, %v2148
    %v2150 = vmul.f32 %v2143, %v2148
    %v2151 = vmul.f32 %v2147, %v2148
    %v2152 = vsub.f32 %v2135, %v2149
    %v2153 = vsub.f32 %v2136, %v2150
    %v2154 = vsub.f32 %v2137, %v2151
    %v2155 = vmul.f32 %v2152, %v2152
    %v2156 = vmul.f32 %v2153, %v2153
    %v2157 = vmul.f32 %v2154, %v2154
    %v2158 = vsel %vm854, %v2155, 0.0
    %2159 = vadd.xlane.f32.xlu0 %v2158
    %v2160 = vpop.xlane.xlu0 %2159
    %v2161 = vsel %vm854, %v2156, 0.0
    %2162 = vadd.xlane.f32.xlu0 %v2161
    %v2163 = vpop.xlane.xlu0 %2162
    %v2164 = vsel %vm2144, %v2157, 0.0
    %2165 = vadd.xlane.f32.xlu0 %v2164
    %v2166 = vpop.xlane.xlu0 %2165
    %v2167 = vmul.f32 %v2160, %v2148
    %v2168 = vmul.f32 %v2163, %v2148
    %v2169 = vmul.f32 %v2166, %v2148
    %v2170 = vadd.f32 %v2167, 1e-05
    %v2171 = vadd.f32 %v2168, 1e-05
    %v2172 = vadd.f32 %v2169, 1e-05
    %v2173 = vrsqrt.pop %v2170
    %v2174 = vrsqrt.pop %v2171
    %v2175 = vrsqrt.pop %v2172
    %v2176 = vmul.f32 %v2152, %v2173
    %v2177 = vmul.f32 %v2153, %v2174
    %v2178 = vmul.f32 %v2154, %v2175
    %v2180 = vlaneseq
    %v2181 = vshrl.u32 %v2180, 7
    %v2182 = vsub.s32 0, %v2181
    %v2183 = vrot.slane %v233, %v2182
    %v2185 = vmul.f32 %v2176, %v2183
    %v2186 = vmul.f32 %v2177, %v2183
    %v2187 = vmul.f32 %v2178, %v2183
    %v2189 = vlaneseq
    %v2190 = vshrl.u32 %v2189, 7
    %v2191 = vsub.s32 0, %v2190
    %v2192 = vrot.slane %v234, %v2191
    %v2194 = vadd.f32 %v2185, %v2192
    %v2195 = vadd.f32 %v2186, %v2192
    %v2196 = vadd.f32 %v2187, %v2192
    %v2199 = vlaneseq
    %v2200 = vshrl.u32 %v2199, 7
    %v2201 = vsub.s32 0, %v2200
    %v2202 = vrot.slane %v267, %v2201
    %v2203 = vlaneseq
    %v2204 = vshrl.u32 %v2203, 7
    %v2205 = vsub.s32 1, %v2204
    %v2206 = vrot.slane %v267, %v2205
    %v2207 = vlaneseq
    %v2208 = vshrl.u32 %v2207, 7
    %v2209 = vsub.s32 2, %v2208
    %v2210 = vrot.slane %v267, %v2209
    %v2211 = vlaneseq
    %v2212 = vshrl.u32 %v2211, 7
    %v2213 = vsub.s32 3, %v2212
    %v2214 = vrot.slane %v267, %v2213
    %v2215 = vlaneseq
    %v2216 = vshrl.u32 %v2215, 7
    %v2217 = vsub.s32 4, %v2216
    %v2218 = vrot.slane %v267, %v2217
    %v2219 = vlaneseq
    %v2220 = vshrl.u32 %v2219, 7
    %v2221 = vsub.s32 5, %v2220
    %v2222 = vrot.slane %v267, %v2221
    %v2223 = vlaneseq
    %v2224 = vshrl.u32 %v2223, 7
    %v2225 = vsub.s32 6, %v2224
    %v2226 = vrot.slane %v267, %v2225
    %v2227 = vlaneseq
    %v2228 = vshrl.u32 %v2227, 7
    %v2229 = vsub.s32 7, %v2228
    %v2230 = vrot.slane %v267, %v2229
    %v2231 = vlaneseq
    %v2232 = vshrl.u32 %v2231, 7
    %v2233 = vsub.s32 0, %v2232
    %v2234 = vrot.slane %v268, %v2233
    %v2235 = vlaneseq
    %v2236 = vshrl.u32 %v2235, 7
    %v2237 = vsub.s32 1, %v2236
    %v2238 = vrot.slane %v268, %v2237
    %v2239 = vlaneseq
    %v2240 = vshrl.u32 %v2239, 7
    %v2241 = vsub.s32 2, %v2240
    %v2242 = vrot.slane %v268, %v2241
    %v2243 = vlaneseq
    %v2244 = vshrl.u32 %v2243, 7
    %v2245 = vsub.s32 3, %v2244
    %v2246 = vrot.slane %v268, %v2245
    %v2247 = vlaneseq
    %v2248 = vshrl.u32 %v2247, 7
    %v2249 = vsub.s32 4, %v2248
    %v2250 = vrot.slane %v268, %v2249
    %v2251 = vlaneseq
    %v2252 = vshrl.u32 %v2251, 7
    %v2253 = vsub.s32 5, %v2252
    %v2254 = vrot.slane %v268, %v2253
    %v2255 = vlaneseq
    %v2256 = vshrl.u32 %v2255, 7
    %v2257 = vsub.s32 6, %v2256
    %v2258 = vrot.slane %v268, %v2257
    %v2259 = vlaneseq
    %v2260 = vshrl.u32 %v2259, 7
    %v2261 = vsub.s32 7, %v2260
    %v2262 = vrot.slane %v268, %v2261
    %v2280 = vsel %vm854, %v2194, 0
    %v2283 = vsel %vm854, %v2195, 0
    %v2286 = vsel %vm854, %v2196, 0
    %2288 = vmatprep.subr.mxu0 0.0
    %2289 = vmatpush1.msra.mxu0 0.0
    %2290 = vmatprep.subr.mxu0 0.0
    %2291 = vmatpush1.msra.mxu0 0.0
    %2292 = vmatprep.subr.mxu0 0.0
    %2293 = vmatpush1.msra.mxu0 0.0
    %2294 = vmatprep.subr.mxu0 0.0
    %2295 = vmatpush1.msra.mxu0 0.0
    %2296 = vmatprep.subr.mxu0 0.0
    %2297 = vmatpush1.msra.mxu0 0.0
    %2298 = vmatprep.subr.mxu0 0.0
    %2299 = vmatpush1.msra.mxu0 0.0
    %2300 = vmatprep.subr.mxu0 0.0
    %2301 = vmatpush1.msra.mxu0 0.0
    %2302 = vmatprep.subr.mxu0 0.0
    %2303 = vmatpush1.msra.mxu0 0.0
    %2304 = vmatprep.subr.mxu0 0.0
    %2305 = vmatpush1.msra.mxu0 0.0
    %2306 = vmatprep.subr.mxu0 0.0
    %2307 = vmatpush1.msra.mxu0 0.0
    %2308 = vmatprep.subr.mxu0 0.0
    %2309 = vmatpush1.msra.mxu0 0.0
    %2310 = vmatprep.subr.mxu0 0.0
    %2311 = vmatpush1.msra.mxu0 0.0
    %2312 = vmatprep.subr.mxu0 %v577
    %2313 = vmatpush1.msra.mxu0 %v576
    %2314 = vmatprep.subr.mxu0 %v561
    %2315 = vmatpush1.msra.mxu0 %v560
    %2316 = vmatprep.subr.mxu0 %v545
    %2317 = vmatpush1.msra.mxu0 %v544
    %2318 = vmatprep.subr.mxu0 %v529
    %2319 = vmatpush1.msra.mxu0 %v528
    %2320 = vmatprep.subr.mxu0 0.0
    %2321 = vmatpush2.msra.mxu0 0.0
    %2322 = vmatprep.subr.mxu0 0.0
    %2323 = vmatpush2.msra.mxu0 0.0
    %2324 = vmatprep.subr.mxu0 0.0
    %2325 = vmatpush2.msra.mxu0 0.0
    %2326 = vmatprep.subr.mxu0 0.0
    %2327 = vmatpush2.msra.mxu0 0.0
    %2328 = vmatprep.subr.mxu0 0.0
    %2329 = vmatpush2.msra.mxu0 0.0
    %2330 = vmatprep.subr.mxu0 0.0
    %2331 = vmatpush2.msra.mxu0 0.0
    %2332 = vmatprep.subr.mxu0 0.0
    %2333 = vmatpush2.msra.mxu0 0.0
    %2334 = vmatprep.subr.mxu0 0.0
    %2335 = vmatpush2.msra.mxu0 0.0
    %2336 = vmatprep.subr.mxu0 0.0
    %2337 = vmatpush2.msra.mxu0 0.0
    %2338 = vmatprep.subr.mxu0 0.0
    %2339 = vmatpush2.msra.mxu0 0.0
    %2340 = vmatprep.subr.mxu0 0.0
    %2341 = vmatpush2.msra.mxu0 0.0
    %2342 = vmatprep.subr.mxu0 0.0
    %2343 = vmatpush2.msra.mxu0 0.0
    %2344 = vmatprep.subr.mxu0 0.0
    %2345 = vmatpush2.msra.mxu0 0.0
    %2346 = vmatprep.subr.mxu0 0.0
    %2347 = vmatpush2.msra.mxu0 0.0
    %2348 = vmatprep.subr.mxu0 0.0
    %2349 = vmatpush2.msra.mxu0 0.0
    %2350 = vmatprep.subr.mxu0 0.0
    %2351 = vmatpush2.msra.mxu0 0.0
    %2352 = vmatprep.mubr.f32.mxu0 0.0
    %2353 = vmatmul.mubr.f32.gmra.mxu0 %v2280
    %v2354 = vpop.f32.mrf.mxu0
    %v2355 = vadd.f32 %v2202, %v2354
    %v2356 = vpop.f32.mrf.mxu0
    %v2357 = vadd.f32 %v2206, %v2356
    %2358 = vmatprep.mubr.f32.mxu0 0.0
    %2359 = vmatmul.mubr.f32.gmra.mxu0 %v2283
    %v2360 = vpop.f32.mrf.mxu0
    %v2361 = vadd.f32 %v2202, %v2360
    %v2362 = vpop.f32.mrf.mxu0
    %v2363 = vadd.f32 %v2206, %v2362
    %2364 = vmatprep.mubr.f32.mxu0 0.0
    %2365 = vmatmul.mubr.f32.gmra.mxu0 %v2286
    %v2366 = vpop.f32.mrf.mxu0
    %v2367 = vadd.f32 %v2202, %v2366
    %v2368 = vpop.f32.mrf.mxu0
    %v2369 = vadd.f32 %v2206, %v2368
    %2370 = vdwg.mxu0
    %2371 = vmatprep.subr.mxu0 0.0
    %2372 = vmatpush1.msra.mxu0 0.0
    %2373 = vmatprep.subr.mxu0 0.0
    %2374 = vmatpush1.msra.mxu0 0.0
    %2375 = vmatprep.subr.mxu0 0.0
    %2376 = vmatpush1.msra.mxu0 0.0
    %2377 = vmatprep.subr.mxu0 0.0
    %2378 = vmatpush1.msra.mxu0 0.0
    %2379 = vmatprep.subr.mxu0 0.0
    %2380 = vmatpush1.msra.mxu0 0.0
    %2381 = vmatprep.subr.mxu0 0.0
    %2382 = vmatpush1.msra.mxu0 0.0
    %2383 = vmatprep.subr.mxu0 0.0
    %2384 = vmatpush1.msra.mxu0 0.0
    %2385 = vmatprep.subr.mxu0 0.0
    %2386 = vmatpush1.msra.mxu0 0.0
    %2387 = vmatprep.subr.mxu0 0.0
    %2388 = vmatpush1.msra.mxu0 0.0
    %2389 = vmatprep.subr.mxu0 0.0
    %2390 = vmatpush1.msra.mxu0 0.0
    %2391 = vmatprep.subr.mxu0 0.0
    %2392 = vmatpush1.msra.mxu0 0.0
    %2393 = vmatprep.subr.mxu0 0.0
    %2394 = vmatpush1.msra.mxu0 0.0
    %2395 = vmatprep.subr.mxu0 %v579
    %2396 = vmatpush1.msra.mxu0 %v578
    %2397 = vmatprep.subr.mxu0 %v563
    %2398 = vmatpush1.msra.mxu0 %v562
    %2399 = vmatprep.subr.mxu0 %v547
    %2400 = vmatpush1.msra.mxu0 %v546
    %2401 = vmatprep.subr.mxu0 %v531
    %2402 = vmatpush1.msra.mxu0 %v530
    %2403 = vmatprep.subr.mxu0 0.0
    %2404 = vmatpush2.msra.mxu0 0.0
    %2405 = vmatprep.subr.mxu0 0.0
    %2406 = vmatpush2.msra.mxu0 0.0
    %2407 = vmatprep.subr.mxu0 0.0
    %2408 = vmatpush2.msra.mxu0 0.0
    %2409 = vmatprep.subr.mxu0 0.0
    %2410 = vmatpush2.msra.mxu0 0.0
    %2411 = vmatprep.subr.mxu0 0.0
    %2412 = vmatpush2.msra.mxu0 0.0
    %2413 = vmatprep.subr.mxu0 0.0
    %2414 = vmatpush2.msra.mxu0 0.0
    %2415 = vmatprep.subr.mxu0 0.0
    %2416 = vmatpush2.msra.mxu0 0.0
    %2417 = vmatprep.subr.mxu0 0.0
    %2418 = vmatpush2.msra.mxu0 0.0
    %2419 = vmatprep.subr.mxu0 0.0
    %2420 = vmatpush2.msra.mxu0 0.0
    %2421 = vmatprep.subr.mxu0 0.0
    %2422 = vmatpush2.msra.mxu0 0.0
    %2423 = vmatprep.subr.mxu0 0.0
    %2424 = vmatpush2.msra.mxu0 0.0
    %2425 = vmatprep.subr.mxu0 0.0
    %2426 = vmatpush2.msra.mxu0 0.0
    %2427 = vmatprep.subr.mxu0 0.0
    %2428 = vmatpush2.msra.mxu0 0.0
    %2429 = vmatprep.subr.mxu0 0.0
    %2430 = vmatpush2.msra.mxu0 0.0
    %2431 = vmatprep.subr.mxu0 0.0
    %2432 = vmatpush2.msra.mxu0 0.0
    %2433 = vmatprep.subr.mxu0 0.0
    %2434 = vmatpush2.msra.mxu0 0.0
    %2435 = vmatprep.mubr.f32.mxu0 0.0
    %2436 = vmatmul.mubr.f32.gmra.mxu0 %v2280
    %v2437 = vpop.f32.mrf.mxu0
    %v2438 = vadd.f32 %v2210, %v2437
    %v2439 = vpop.f32.mrf.mxu0
    %v2440 = vadd.f32 %v2214, %v2439
    %2441 = vmatprep.mubr.f32.mxu0 0.0
    %2442 = vmatmul.mubr.f32.gmra.mxu0 %v2283
    %v2443 = vpop.f32.mrf.mxu0
    %v2444 = vadd.f32 %v2210, %v2443
    %v2445 = vpop.f32.mrf.mxu0
    %v2446 = vadd.f32 %v2214, %v2445
    %2447 = vmatprep.mubr.f32.mxu0 0.0
    %2448 = vmatmul.mubr.f32.gmra.mxu0 %v2286
    %v2449 = vpop.f32.mrf.mxu0
    %v2450 = vadd.f32 %v2210, %v2449
    %v2451 = vpop.f32.mrf.mxu0
    %v2452 = vadd.f32 %v2214, %v2451
    %2453 = vdwg.mxu0
    %2454 = vmatprep.subr.mxu0 0.0
    %2455 = vmatpush1.msra.mxu0 0.0
    %2456 = vmatprep.subr.mxu0 0.0
    %2457 = vmatpush1.msra.mxu0 0.0
    %2458 = vmatprep.subr.mxu0 0.0
    %2459 = vmatpush1.msra.mxu0 0.0
    %2460 = vmatprep.subr.mxu0 0.0
    %2461 = vmatpush1.msra.mxu0 0.0
    %2462 = vmatprep.subr.mxu0 0.0
    %2463 = vmatpush1.msra.mxu0 0.0
    %2464 = vmatprep.subr.mxu0 0.0
    %2465 = vmatpush1.msra.mxu0 0.0
    %2466 = vmatprep.subr.mxu0 0.0
    %2467 = vmatpush1.msra.mxu0 0.0
    %2468 = vmatprep.subr.mxu0 0.0
    %2469 = vmatpush1.msra.mxu0 0.0
    %2470 = vmatprep.subr.mxu0 0.0
    %2471 = vmatpush1.msra.mxu0 0.0
    %2472 = vmatprep.subr.mxu0 0.0
    %2473 = vmatpush1.msra.mxu0 0.0
    %2474 = vmatprep.subr.mxu0 0.0
    %2475 = vmatpush1.msra.mxu0 0.0
    %2476 = vmatprep.subr.mxu0 0.0
    %2477 = vmatpush1.msra.mxu0 0.0
    %2478 = vmatprep.subr.mxu0 %v581
    %2479 = vmatpush1.msra.mxu0 %v580
    %2480 = vmatprep.subr.mxu0 %v565
    %2481 = vmatpush1.msra.mxu0 %v564
    %2482 = vmatprep.subr.mxu0 %v549
    %2483 = vmatpush1.msra.mxu0 %v548
    %2484 = vmatprep.subr.mxu0 %v533
    %2485 = vmatpush1.msra.mxu0 %v532
    %2486 = vmatprep.subr.mxu0 0.0
    %2487 = vmatpush2.msra.mxu0 0.0
    %2488 = vmatprep.subr.mxu0 0.0
    %2489 = vmatpush2.msra.mxu0 0.0
    %2490 = vmatprep.subr.mxu0 0.0
    %2491 = vmatpush2.msra.mxu0 0.0
    %2492 = vmatprep.subr.mxu0 0.0
    %2493 = vmatpush2.msra.mxu0 0.0
    %2494 = vmatprep.subr.mxu0 0.0
    %2495 = vmatpush2.msra.mxu0 0.0
    %2496 = vmatprep.subr.mxu0 0.0
    %2497 = vmatpush2.msra.mxu0 0.0
    %2498 = vmatprep.subr.mxu0 0.0
    %2499 = vmatpush2.msra.mxu0 0.0
    %2500 = vmatprep.subr.mxu0 0.0
    %2501 = vmatpush2.msra.mxu0 0.0
    %2502 = vmatprep.subr.mxu0 0.0
    %2503 = vmatpush2.msra.mxu0 0.0
    %2504 = vmatprep.subr.mxu0 0.0
    %2505 = vmatpush2.msra.mxu0 0.0
    %2506 = vmatprep.subr.mxu0 0.0
    %2507 = vmatpush2.msra.mxu0 0.0
    %2508 = vmatprep.subr.mxu0 0.0
    %2509 = vmatpush2.msra.mxu0 0.0
    %2510 = vmatprep.subr.mxu0 0.0
    %2511 = vmatpush2.msra.mxu0 0.0
    %2512 = vmatprep.subr.mxu0 0.0
    %2513 = vmatpush2.msra.mxu0 0.0
    %2514 = vmatprep.subr.mxu0 0.0
    %2515 = vmatpush2.msra.mxu0 0.0
    %2516 = vmatprep.subr.mxu0 0.0
    %2517 = vmatpush2.msra.mxu0 0.0
    %2518 = vmatprep.mubr.f32.mxu0 0.0
    %2519 = vmatmul.mubr.f32.gmra.mxu0 %v2280
    %v2520 = vpop.f32.mrf.mxu0
    %v2521 = vadd.f32 %v2218, %v2520
    %v2522 = vpop.f32.mrf.mxu0
    %v2523 = vadd.f32 %v2222, %v2522
    %2524 = vmatprep.mubr.f32.mxu0 0.0
    %2525 = vmatmul.mubr.f32.gmra.mxu0 %v2283
    %v2526 = vpop.f32.mrf.mxu0
    %v2527 = vadd.f32 %v2218, %v2526
    %v2528 = vpop.f32.mrf.mxu0
    %v2529 = vadd.f32 %v2222, %v2528
    %2530 = vmatprep.mubr.f32.mxu0 0.0
    %2531 = vmatmul.mubr.f32.gmra.mxu0 %v2286
    %v2532 = vpop.f32.mrf.mxu0
    %v2533 = vadd.f32 %v2218, %v2532
    %v2534 = vpop.f32.mrf.mxu0
    %v2535 = vadd.f32 %v2222, %v2534
    %2536 = vdwg.mxu0
    %2537 = vmatprep.subr.mxu0 0.0
    %2538 = vmatpush1.msra.mxu0 0.0
    %2539 = vmatprep.subr.mxu0 0.0
    %2540 = vmatpush1.msra.mxu0 0.0
    %2541 = vmatprep.subr.mxu0 0.0
    %2542 = vmatpush1.msra.mxu0 0.0
    %2543 = vmatprep.subr.mxu0 0.0
    %2544 = vmatpush1.msra.mxu0 0.0
    %2545 = vmatprep.subr.mxu0 0.0
    %2546 = vmatpush1.msra.mxu0 0.0
    %2547 = vmatprep.subr.mxu0 0.0
    %2548 = vmatpush1.msra.mxu0 0.0
    %2549 = vmatprep.subr.mxu0 0.0
    %2550 = vmatpush1.msra.mxu0 0.0
    %2551 = vmatprep.subr.mxu0 0.0
    %2552 = vmatpush1.msra.mxu0 0.0
    %2553 = vmatprep.subr.mxu0 0.0
    %2554 = vmatpush1.msra.mxu0 0.0
    %2555 = vmatprep.subr.mxu0 0.0
    %2556 = vmatpush1.msra.mxu0 0.0
    %2557 = vmatprep.subr.mxu0 0.0
    %2558 = vmatpush1.msra.mxu0 0.0
    %2559 = vmatprep.subr.mxu0 0.0
    %2560 = vmatpush1.msra.mxu0 0.0
    %2561 = vmatprep.subr.mxu0 %v583
    %2562 = vmatpush1.msra.mxu0 %v582
    %2563 = vmatprep.subr.mxu0 %v567
    %2564 = vmatpush1.msra.mxu0 %v566
    %2565 = vmatprep.subr.mxu0 %v551
    %2566 = vmatpush1.msra.mxu0 %v550
    %2567 = vmatprep.subr.mxu0 %v535
    %2568 = vmatpush1.msra.mxu0 %v534
    %2569 = vmatprep.subr.mxu0 0.0
    %2570 = vmatpush2.msra.mxu0 0.0
    %2571 = vmatprep.subr.mxu0 0.0
    %2572 = vmatpush2.msra.mxu0 0.0
    %2573 = vmatprep.subr.mxu0 0.0
    %2574 = vmatpush2.msra.mxu0 0.0
    %2575 = vmatprep.subr.mxu0 0.0
    %2576 = vmatpush2.msra.mxu0 0.0
    %2577 = vmatprep.subr.mxu0 0.0
    %2578 = vmatpush2.msra.mxu0 0.0
    %2579 = vmatprep.subr.mxu0 0.0
    %2580 = vmatpush2.msra.mxu0 0.0
    %2581 = vmatprep.subr.mxu0 0.0
    %2582 = vmatpush2.msra.mxu0 0.0
    %2583 = vmatprep.subr.mxu0 0.0
    %2584 = vmatpush2.msra.mxu0 0.0
    %2585 = vmatprep.subr.mxu0 0.0
    %2586 = vmatpush2.msra.mxu0 0.0
    %2587 = vmatprep.subr.mxu0 0.0
    %2588 = vmatpush2.msra.mxu0 0.0
    %2589 = vmatprep.subr.mxu0 0.0
    %2590 = vmatpush2.msra.mxu0 0.0
    %2591 = vmatprep.subr.mxu0 0.0
    %2592 = vmatpush2.msra.mxu0 0.0
    %2593 = vmatprep.subr.mxu0 0.0
    %2594 = vmatpush2.msra.mxu0 0.0
    %2595 = vmatprep.subr.mxu0 0.0
    %2596 = vmatpush2.msra.mxu0 0.0
    %2597 = vmatprep.subr.mxu0 0.0
    %2598 = vmatpush2.msra.mxu0 0.0
    %2599 = vmatprep.subr.mxu0 0.0
    %2600 = vmatpush2.msra.mxu0 0.0
    %2601 = vmatprep.mubr.f32.mxu0 0.0
    %2602 = vmatmul.mubr.f32.gmra.mxu0 %v2280
    %v2603 = vpop.f32.mrf.mxu0
    %v2604 = vadd.f32 %v2226, %v2603
    %v2605 = vpop.f32.mrf.mxu0
    %v2606 = vadd.f32 %v2230, %v2605
    %2607 = vmatprep.mubr.f32.mxu0 0.0
    %2608 = vmatmul.mubr.f32.gmra.mxu0 %v2283
    %v2609 = vpop.f32.mrf.mxu0
    %v2610 = vadd.f32 %v2226, %v2609
    %v2611 = vpop.f32.mrf.mxu0
    %v2612 = vadd.f32 %v2230, %v2611
    %2613 = vmatprep.mubr.f32.mxu0 0.0
    %2614 = vmatmul.mubr.f32.gmra.mxu0 %v2286
    %v2615 = vpop.f32.mrf.mxu0
    %v2616 = vadd.f32 %v2226, %v2615
    %v2617 = vpop.f32.mrf.mxu0
    %v2618 = vadd.f32 %v2230, %v2617
    %2619 = vdwg.mxu0
    %2620 = vmatprep.subr.mxu0 0.0
    %2621 = vmatpush1.msra.mxu0 0.0
    %2622 = vmatprep.subr.mxu0 0.0
    %2623 = vmatpush1.msra.mxu0 0.0
    %2624 = vmatprep.subr.mxu0 0.0
    %2625 = vmatpush1.msra.mxu0 0.0
    %2626 = vmatprep.subr.mxu0 0.0
    %2627 = vmatpush1.msra.mxu0 0.0
    %2628 = vmatprep.subr.mxu0 0.0
    %2629 = vmatpush1.msra.mxu0 0.0
    %2630 = vmatprep.subr.mxu0 0.0
    %2631 = vmatpush1.msra.mxu0 0.0
    %2632 = vmatprep.subr.mxu0 0.0
    %2633 = vmatpush1.msra.mxu0 0.0
    %2634 = vmatprep.subr.mxu0 0.0
    %2635 = vmatpush1.msra.mxu0 0.0
    %2636 = vmatprep.subr.mxu0 0.0
    %2637 = vmatpush1.msra.mxu0 0.0
    %2638 = vmatprep.subr.mxu0 0.0
    %2639 = vmatpush1.msra.mxu0 0.0
    %2640 = vmatprep.subr.mxu0 0.0
    %2641 = vmatpush1.msra.mxu0 0.0
    %2642 = vmatprep.subr.mxu0 0.0
    %2643 = vmatpush1.msra.mxu0 0.0
    %2644 = vmatprep.subr.mxu0 %v585
    %2645 = vmatpush1.msra.mxu0 %v584
    %2646 = vmatprep.subr.mxu0 %v569
    %2647 = vmatpush1.msra.mxu0 %v568
    %2648 = vmatprep.subr.mxu0 %v553
    %2649 = vmatpush1.msra.mxu0 %v552
    %2650 = vmatprep.subr.mxu0 %v537
    %2651 = vmatpush1.msra.mxu0 %v536
    %2652 = vmatprep.subr.mxu0 0.0
    %2653 = vmatpush2.msra.mxu0 0.0
    %2654 = vmatprep.subr.mxu0 0.0
    %2655 = vmatpush2.msra.mxu0 0.0
    %2656 = vmatprep.subr.mxu0 0.0
    %2657 = vmatpush2.msra.mxu0 0.0
    %2658 = vmatprep.subr.mxu0 0.0
    %2659 = vmatpush2.msra.mxu0 0.0
    %2660 = vmatprep.subr.mxu0 0.0
    %2661 = vmatpush2.msra.mxu0 0.0
    %2662 = vmatprep.subr.mxu0 0.0
    %2663 = vmatpush2.msra.mxu0 0.0
    %2664 = vmatprep.subr.mxu0 0.0
    %2665 = vmatpush2.msra.mxu0 0.0
    %2666 = vmatprep.subr.mxu0 0.0
    %2667 = vmatpush2.msra.mxu0 0.0
    %2668 = vmatprep.subr.mxu0 0.0
    %2669 = vmatpush2.msra.mxu0 0.0
    %2670 = vmatprep.subr.mxu0 0.0
    %2671 = vmatpush2.msra.mxu0 0.0
    %2672 = vmatprep.subr.mxu0 0.0
    %2673 = vmatpush2.msra.mxu0 0.0
    %2674 = vmatprep.subr.mxu0 0.0
    %2675 = vmatpush2.msra.mxu0 0.0
    %2676 = vmatprep.subr.mxu0 0.0
    %2677 = vmatpush2.msra.mxu0 0.0
    %2678 = vmatprep.subr.mxu0 0.0
    %2679 = vmatpush2.msra.mxu0 0.0
    %2680 = vmatprep.subr.mxu0 0.0
    %2681 = vmatpush2.msra.mxu0 0.0
    %2682 = vmatprep.subr.mxu0 0.0
    %2683 = vmatpush2.msra.mxu0 0.0
    %2684 = vmatprep.mubr.f32.mxu0 0.0
    %2685 = vmatmul.mubr.f32.gmra.mxu0 %v2280
    %v2686 = vpop.f32.mrf.mxu0
    %v2687 = vadd.f32 %v2234, %v2686
    %v2688 = vpop.f32.mrf.mxu0
    %v2689 = vadd.f32 %v2238, %v2688
    %2690 = vmatprep.mubr.f32.mxu0 0.0
    %2691 = vmatmul.mubr.f32.gmra.mxu0 %v2283
    %v2692 = vpop.f32.mrf.mxu0
    %v2693 = vadd.f32 %v2234, %v2692
    %v2694 = vpop.f32.mrf.mxu0
    %v2695 = vadd.f32 %v2238, %v2694
    %2696 = vmatprep.mubr.f32.mxu0 0.0
    %2697 = vmatmul.mubr.f32.gmra.mxu0 %v2286
    %v2698 = vpop.f32.mrf.mxu0
    %v2699 = vadd.f32 %v2234, %v2698
    %v2700 = vpop.f32.mrf.mxu0
    %v2701 = vadd.f32 %v2238, %v2700
    %2702 = vdwg.mxu0
    %2703 = vmatprep.subr.mxu0 0.0
    %2704 = vmatpush1.msra.mxu0 0.0
    %2705 = vmatprep.subr.mxu0 0.0
    %2706 = vmatpush1.msra.mxu0 0.0
    %2707 = vmatprep.subr.mxu0 0.0
    %2708 = vmatpush1.msra.mxu0 0.0
    %2709 = vmatprep.subr.mxu0 0.0
    %2710 = vmatpush1.msra.mxu0 0.0
    %2711 = vmatprep.subr.mxu0 0.0
    %2712 = vmatpush1.msra.mxu0 0.0
    %2713 = vmatprep.subr.mxu0 0.0
    %2714 = vmatpush1.msra.mxu0 0.0
    %2715 = vmatprep.subr.mxu0 0.0
    %2716 = vmatpush1.msra.mxu0 0.0
    %2717 = vmatprep.subr.mxu0 0.0
    %2718 = vmatpush1.msra.mxu0 0.0
    %2719 = vmatprep.subr.mxu0 0.0
    %2720 = vmatpush1.msra.mxu0 0.0
    %2721 = vmatprep.subr.mxu0 0.0
    %2722 = vmatpush1.msra.mxu0 0.0
    %2723 = vmatprep.subr.mxu0 0.0
    %2724 = vmatpush1.msra.mxu0 0.0
    %2725 = vmatprep.subr.mxu0 0.0
    %2726 = vmatpush1.msra.mxu0 0.0
    %2727 = vmatprep.subr.mxu0 %v587
    %2728 = vmatpush1.msra.mxu0 %v586
    %2729 = vmatprep.subr.mxu0 %v571
    %2730 = vmatpush1.msra.mxu0 %v570
    %2731 = vmatprep.subr.mxu0 %v555
    %2732 = vmatpush1.msra.mxu0 %v554
    %2733 = vmatprep.subr.mxu0 %v539
    %2734 = vmatpush1.msra.mxu0 %v538
    %2735 = vmatprep.subr.mxu0 0.0
    %2736 = vmatpush2.msra.mxu0 0.0
    %2737 = vmatprep.subr.mxu0 0.0
    %2738 = vmatpush2.msra.mxu0 0.0
    %2739 = vmatprep.subr.mxu0 0.0
    %2740 = vmatpush2.msra.mxu0 0.0
    %2741 = vmatprep.subr.mxu0 0.0
    %2742 = vmatpush2.msra.mxu0 0.0
    %2743 = vmatprep.subr.mxu0 0.0
    %2744 = vmatpush2.msra.mxu0 0.0
    %2745 = vmatprep.subr.mxu0 0.0
    %2746 = vmatpush2.msra.mxu0 0.0
    %2747 = vmatprep.subr.mxu0 0.0
    %2748 = vmatpush2.msra.mxu0 0.0
    %2749 = vmatprep.subr.mxu0 0.0
    %2750 = vmatpush2.msra.mxu0 0.0
    %2751 = vmatprep.subr.mxu0 0.0
    %2752 = vmatpush2.msra.mxu0 0.0
    %2753 = vmatprep.subr.mxu0 0.0
    %2754 = vmatpush2.msra.mxu0 0.0
    %2755 = vmatprep.subr.mxu0 0.0
    %2756 = vmatpush2.msra.mxu0 0.0
    %2757 = vmatprep.subr.mxu0 0.0
    %2758 = vmatpush2.msra.mxu0 0.0
    %2759 = vmatprep.subr.mxu0 0.0
    %2760 = vmatpush2.msra.mxu0 0.0
    %2761 = vmatprep.subr.mxu0 0.0
    %2762 = vmatpush2.msra.mxu0 0.0
    %2763 = vmatprep.subr.mxu0 0.0
    %2764 = vmatpush2.msra.mxu0 0.0
    %2765 = vmatprep.subr.mxu0 0.0
    %2766 = vmatpush2.msra.mxu0 0.0
    %2767 = vmatprep.mubr.f32.mxu0 0.0
    %2768 = vmatmul.mubr.f32.gmra.mxu0 %v2280
    %v2769 = vpop.f32.mrf.mxu0
    %v2770 = vadd.f32 %v2242, %v2769
    %v2771 = vpop.f32.mrf.mxu0
    %v2772 = vadd.f32 %v2246, %v2771
    %2773 = vmatprep.mubr.f32.mxu0 0.0
    %2774 = vmatmul.mubr.f32.gmra.mxu0 %v2283
    %v2775 = vpop.f32.mrf.mxu0
    %v2776 = vadd.f32 %v2242, %v2775
    %v2777 = vpop.f32.mrf.mxu0
    %v2778 = vadd.f32 %v2246, %v2777
    %2779 = vmatprep.mubr.f32.mxu0 0.0
    %2780 = vmatmul.mubr.f32.gmra.mxu0 %v2286
    %v2781 = vpop.f32.mrf.mxu0
    %v2782 = vadd.f32 %v2242, %v2781
    %v2783 = vpop.f32.mrf.mxu0
    %v2784 = vadd.f32 %v2246, %v2783
    %2785 = vdwg.mxu0
    %2786 = vmatprep.subr.mxu0 0.0
    %2787 = vmatpush1.msra.mxu0 0.0
    %2788 = vmatprep.subr.mxu0 0.0
    %2789 = vmatpush1.msra.mxu0 0.0
    %2790 = vmatprep.subr.mxu0 0.0
    %2791 = vmatpush1.msra.mxu0 0.0
    %2792 = vmatprep.subr.mxu0 0.0
    %2793 = vmatpush1.msra.mxu0 0.0
    %2794 = vmatprep.subr.mxu0 0.0
    %2795 = vmatpush1.msra.mxu0 0.0
    %2796 = vmatprep.subr.mxu0 0.0
    %2797 = vmatpush1.msra.mxu0 0.0
    %2798 = vmatprep.subr.mxu0 0.0
    %2799 = vmatpush1.msra.mxu0 0.0
    %2800 = vmatprep.subr.mxu0 0.0
    %2801 = vmatpush1.msra.mxu0 0.0
    %2802 = vmatprep.subr.mxu0 0.0
    %2803 = vmatpush1.msra.mxu0 0.0
    %2804 = vmatprep.subr.mxu0 0.0
    %2805 = vmatpush1.msra.mxu0 0.0
    %2806 = vmatprep.subr.mxu0 0.0
    %2807 = vmatpush1.msra.mxu0 0.0
    %2808 = vmatprep.subr.mxu0 0.0
    %2809 = vmatpush1.msra.mxu0 0.0
    %2810 = vmatprep.subr.mxu0 %v589
    %2811 = vmatpush1.msra.mxu0 %v588
    %2812 = vmatprep.subr.mxu0 %v573
    %2813 = vmatpush1.msra.mxu0 %v572
    %2814 = vmatprep.subr.mxu0 %v557
    %2815 = vmatpush1.msra.mxu0 %v556
    %2816 = vmatprep.subr.mxu0 %v541
    %2817 = vmatpush1.msra.mxu0 %v540
    %2818 = vmatprep.subr.mxu0 0.0
    %2819 = vmatpush2.msra.mxu0 0.0
    %2820 = vmatprep.subr.mxu0 0.0
    %2821 = vmatpush2.msra.mxu0 0.0
    %2822 = vmatprep.subr.mxu0 0.0
    %2823 = vmatpush2.msra.mxu0 0.0
    %2824 = vmatprep.subr.mxu0 0.0
    %2825 = vmatpush2.msra.mxu0 0.0
    %2826 = vmatprep.subr.mxu0 0.0
    %2827 = vmatpush2.msra.mxu0 0.0
    %2828 = vmatprep.subr.mxu0 0.0
    %2829 = vmatpush2.msra.mxu0 0.0
    %2830 = vmatprep.subr.mxu0 0.0
    %2831 = vmatpush2.msra.mxu0 0.0
    %2832 = vmatprep.subr.mxu0 0.0
    %2833 = vmatpush2.msra.mxu0 0.0
    %2834 = vmatprep.subr.mxu0 0.0
    %2835 = vmatpush2.msra.mxu0 0.0
    %2836 = vmatprep.subr.mxu0 0.0
    %2837 = vmatpush2.msra.mxu0 0.0
    %2838 = vmatprep.subr.mxu0 0.0
    %2839 = vmatpush2.msra.mxu0 0.0
    %2840 = vmatprep.subr.mxu0 0.0
    %2841 = vmatpush2.msra.mxu0 0.0
    %2842 = vmatprep.subr.mxu0 0.0
    %2843 = vmatpush2.msra.mxu0 0.0
    %2844 = vmatprep.subr.mxu0 0.0
    %2845 = vmatpush2.msra.mxu0 0.0
    %2846 = vmatprep.subr.mxu0 0.0
    %2847 = vmatpush2.msra.mxu0 0.0
    %2848 = vmatprep.subr.mxu0 0.0
    %2849 = vmatpush2.msra.mxu0 0.0
    %2850 = vmatprep.mubr.f32.mxu0 0.0
    %2851 = vmatmul.mubr.f32.gmra.mxu0 %v2280
    %v2852 = vpop.f32.mrf.mxu0
    %v2853 = vadd.f32 %v2250, %v2852
    %v2854 = vpop.f32.mrf.mxu0
    %v2855 = vadd.f32 %v2254, %v2854
    %2856 = vmatprep.mubr.f32.mxu0 0.0
    %2857 = vmatmul.mubr.f32.gmra.mxu0 %v2283
    %v2858 = vpop.f32.mrf.mxu0
    %v2859 = vadd.f32 %v2250, %v2858
    %v2860 = vpop.f32.mrf.mxu0
    %v2861 = vadd.f32 %v2254, %v2860
    %2862 = vmatprep.mubr.f32.mxu0 0.0
    %2863 = vmatmul.mubr.f32.gmra.mxu0 %v2286
    %v2864 = vpop.f32.mrf.mxu0
    %v2865 = vadd.f32 %v2250, %v2864
    %v2866 = vpop.f32.mrf.mxu0
    %v2867 = vadd.f32 %v2254, %v2866
    %2868 = vdwg.mxu0
    %2869 = vmatprep.subr.mxu0 0.0
    %2870 = vmatpush1.msra.mxu0 0.0
    %2871 = vmatprep.subr.mxu0 0.0
    %2872 = vmatpush1.msra.mxu0 0.0
    %2873 = vmatprep.subr.mxu0 0.0
    %2874 = vmatpush1.msra.mxu0 0.0
    %2875 = vmatprep.subr.mxu0 0.0
    %2876 = vmatpush1.msra.mxu0 0.0
    %2877 = vmatprep.subr.mxu0 0.0
    %2878 = vmatpush1.msra.mxu0 0.0
    %2879 = vmatprep.subr.mxu0 0.0
    %2880 = vmatpush1.msra.mxu0 0.0
    %2881 = vmatprep.subr.mxu0 0.0
    %2882 = vmatpush1.msra.mxu0 0.0
    %2883 = vmatprep.subr.mxu0 0.0
    %2884 = vmatpush1.msra.mxu0 0.0
    %2885 = vmatprep.subr.mxu0 0.0
    %2886 = vmatpush1.msra.mxu0 0.0
    %2887 = vmatprep.subr.mxu0 0.0
    %2888 = vmatpush1.msra.mxu0 0.0
    %2889 = vmatprep.subr.mxu0 0.0
    %2890 = vmatpush1.msra.mxu0 0.0
    %2891 = vmatprep.subr.mxu0 0.0
    %2892 = vmatpush1.msra.mxu0 0.0
    %2893 = vmatprep.subr.mxu0 %v591
    %2894 = vmatpush1.msra.mxu0 %v590
    %2895 = vmatprep.subr.mxu0 %v575
    %2896 = vmatpush1.msra.mxu0 %v574
    %2897 = vmatprep.subr.mxu0 %v559
    %2898 = vmatpush1.msra.mxu0 %v558
    %2899 = vmatprep.subr.mxu0 %v543
    %2900 = vmatpush1.msra.mxu0 %v542
    %2901 = vmatprep.subr.mxu0 0.0
    %2902 = vmatpush2.msra.mxu0 0.0
    %2903 = vmatprep.subr.mxu0 0.0
    %2904 = vmatpush2.msra.mxu0 0.0
    %2905 = vmatprep.subr.mxu0 0.0
    %2906 = vmatpush2.msra.mxu0 0.0
    %2907 = vmatprep.subr.mxu0 0.0
    %2908 = vmatpush2.msra.mxu0 0.0
    %2909 = vmatprep.subr.mxu0 0.0
    %2910 = vmatpush2.msra.mxu0 0.0
    %2911 = vmatprep.subr.mxu0 0.0
    %2912 = vmatpush2.msra.mxu0 0.0
    %2913 = vmatprep.subr.mxu0 0.0
    %2914 = vmatpush2.msra.mxu0 0.0
    %2915 = vmatprep.subr.mxu0 0.0
    %2916 = vmatpush2.msra.mxu0 0.0
    %2917 = vmatprep.subr.mxu0 0.0
    %2918 = vmatpush2.msra.mxu0 0.0
    %2919 = vmatprep.subr.mxu0 0.0
    %2920 = vmatpush2.msra.mxu0 0.0
    %2921 = vmatprep.subr.mxu0 0.0
    %2922 = vmatpush2.msra.mxu0 0.0
    %2923 = vmatprep.subr.mxu0 0.0
    %2924 = vmatpush2.msra.mxu0 0.0
    %2925 = vmatprep.subr.mxu0 0.0
    %2926 = vmatpush2.msra.mxu0 0.0
    %2927 = vmatprep.subr.mxu0 0.0
    %2928 = vmatpush2.msra.mxu0 0.0
    %2929 = vmatprep.subr.mxu0 0.0
    %2930 = vmatpush2.msra.mxu0 0.0
    %2931 = vmatprep.subr.mxu0 0.0
    %2932 = vmatpush2.msra.mxu0 0.0
    %2933 = vmatprep.mubr.f32.mxu0 0.0
    %2934 = vmatmul.mubr.f32.gmra.mxu0 %v2280
    %v2935 = vpop.f32.mrf.mxu0
    %v2936 = vadd.f32 %v2258, %v2935
    %v2937 = vpop.f32.mrf.mxu0
    %v2938 = vadd.f32 %v2262, %v2937
    %2939 = vmatprep.mubr.f32.mxu0 0.0
    %2940 = vmatmul.mubr.f32.gmra.mxu0 %v2283
    %v2941 = vpop.f32.mrf.mxu0
    %v2942 = vadd.f32 %v2258, %v2941
    %v2943 = vpop.f32.mrf.mxu0
    %v2944 = vadd.f32 %v2262, %v2943
    %2945 = vmatprep.mubr.f32.mxu0 0.0
    %2946 = vmatmul.mubr.f32.gmra.mxu0 %v2286
    %v2947 = vpop.f32.mrf.mxu0
    %v2948 = vadd.f32 %v2258, %v2947
    %v2949 = vpop.f32.mrf.mxu0
    %v2950 = vadd.f32 %v2262, %v2949
    %2951 = vdwg.mxu0
    %v2952 = vmax.f32 %v2355, 0.0
    %v2953 = vmax.f32 %v2357, 0.0
    %v2954 = vmax.f32 %v2438, 0.0
    %v2955 = vmax.f32 %v2440, 0.0
    %v2956 = vmax.f32 %v2521, 0.0
    %v2957 = vmax.f32 %v2523, 0.0
    %v2958 = vmax.f32 %v2604, 0.0
    %v2959 = vmax.f32 %v2606, 0.0
    %v2960 = vmax.f32 %v2687, 0.0
    %v2961 = vmax.f32 %v2689, 0.0
    %v2962 = vmax.f32 %v2770, 0.0
    %v2963 = vmax.f32 %v2772, 0.0
    %v2964 = vmax.f32 %v2853, 0.0
    %v2965 = vmax.f32 %v2855, 0.0
    %v2966 = vmax.f32 %v2936, 0.0
    %v2967 = vmax.f32 %v2938, 0.0
    %v2968 = vmax.f32 %v2361, 0.0
    %v2969 = vmax.f32 %v2363, 0.0
    %v2970 = vmax.f32 %v2444, 0.0
    %v2971 = vmax.f32 %v2446, 0.0
    %v2972 = vmax.f32 %v2527, 0.0
    %v2973 = vmax.f32 %v2529, 0.0
    %v2974 = vmax.f32 %v2610, 0.0
    %v2975 = vmax.f32 %v2612, 0.0
    %v2976 = vmax.f32 %v2693, 0.0
    %v2977 = vmax.f32 %v2695, 0.0
    %v2978 = vmax.f32 %v2776, 0.0
    %v2979 = vmax.f32 %v2778, 0.0
    %v2980 = vmax.f32 %v2859, 0.0
    %v2981 = vmax.f32 %v2861, 0.0
    %v2982 = vmax.f32 %v2942, 0.0
    %v2983 = vmax.f32 %v2944, 0.0
    %v2984 = vmax.f32 %v2367, 0.0
    %v2985 = vmax.f32 %v2369, 0.0
    %v2986 = vmax.f32 %v2450, 0.0
    %v2987 = vmax.f32 %v2452, 0.0
    %v2988 = vmax.f32 %v2533, 0.0
    %v2989 = vmax.f32 %v2535, 0.0
    %v2990 = vmax.f32 %v2616, 0.0
    %v2991 = vmax.f32 %v2618, 0.0
    %v2992 = vmax.f32 %v2699, 0.0
    %v2993 = vmax.f32 %v2701, 0.0
    %v2994 = vmax.f32 %v2782, 0.0
    %v2995 = vmax.f32 %v2784, 0.0
    %v2996 = vmax.f32 %v2865, 0.0
    %v2997 = vmax.f32 %v2867, 0.0
    %v2998 = vmax.f32 %v2948, 0.0
    %v2999 = vmax.f32 %v2950, 0.0
    %v3001 = vlaneseq
    %v3002 = vshrl.u32 %v3001, 7
    %v3003 = vsub.s32 0, %v3002
    %v3004 = vrot.slane %v525, %v3003
    %3006 = vmatprep.subr.mxu0 0.0
    %3007 = vmatpush1.msra.mxu0 %v607
    %3008 = vmatprep.subr.mxu0 0.0
    %3009 = vmatpush1.msra.mxu0 %v606
    %3010 = vmatprep.subr.mxu0 0.0
    %3011 = vmatpush1.msra.mxu0 %v605
    %3012 = vmatprep.subr.mxu0 0.0
    %3013 = vmatpush1.msra.mxu0 %v604
    %3014 = vmatprep.subr.mxu0 0.0
    %3015 = vmatpush1.msra.mxu0 %v603
    %3016 = vmatprep.subr.mxu0 0.0
    %3017 = vmatpush1.msra.mxu0 %v602
    %3018 = vmatprep.subr.mxu0 0.0
    %3019 = vmatpush1.msra.mxu0 %v601
    %3020 = vmatprep.subr.mxu0 0.0
    %3021 = vmatpush1.msra.mxu0 %v600
    %3022 = vmatprep.subr.mxu0 0.0
    %3023 = vmatpush1.msra.mxu0 %v599
    %3024 = vmatprep.subr.mxu0 0.0
    %3025 = vmatpush1.msra.mxu0 %v598
    %3026 = vmatprep.subr.mxu0 0.0
    %3027 = vmatpush1.msra.mxu0 %v597
    %3028 = vmatprep.subr.mxu0 0.0
    %3029 = vmatpush1.msra.mxu0 %v596
    %3030 = vmatprep.subr.mxu0 0.0
    %3031 = vmatpush1.msra.mxu0 %v595
    %3032 = vmatprep.subr.mxu0 0.0
    %3033 = vmatpush1.msra.mxu0 %v594
    %3034 = vmatprep.subr.mxu0 0.0
    %3035 = vmatpush1.msra.mxu0 %v593
    %3036 = vmatprep.subr.mxu0 0.0
    %3037 = vmatpush1.msra.mxu0 %v592
    %3038 = vmatprep.subr.mxu0 0.0
    %3039 = vmatpush2.msra.mxu0 %v623
    %3040 = vmatprep.subr.mxu0 0.0
    %3041 = vmatpush2.msra.mxu0 %v622
    %3042 = vmatprep.subr.mxu0 0.0
    %3043 = vmatpush2.msra.mxu0 %v621
    %3044 = vmatprep.subr.mxu0 0.0
    %3045 = vmatpush2.msra.mxu0 %v620
    %3046 = vmatprep.subr.mxu0 0.0
    %3047 = vmatpush2.msra.mxu0 %v619
    %3048 = vmatprep.subr.mxu0 0.0
    %3049 = vmatpush2.msra.mxu0 %v618
    %3050 = vmatprep.subr.mxu0 0.0
    %3051 = vmatpush2.msra.mxu0 %v617
    %3052 = vmatprep.subr.mxu0 0.0
    %3053 = vmatpush2.msra.mxu0 %v616
    %3054 = vmatprep.subr.mxu0 0.0
    %3055 = vmatpush2.msra.mxu0 %v615
    %3056 = vmatprep.subr.mxu0 0.0
    %3057 = vmatpush2.msra.mxu0 %v614
    %3058 = vmatprep.subr.mxu0 0.0
    %3059 = vmatpush2.msra.mxu0 %v613
    %3060 = vmatprep.subr.mxu0 0.0
    %3061 = vmatpush2.msra.mxu0 %v612
    %3062 = vmatprep.subr.mxu0 0.0
    %3063 = vmatpush2.msra.mxu0 %v611
    %3064 = vmatprep.subr.mxu0 0.0
    %3065 = vmatpush2.msra.mxu0 %v610
    %3066 = vmatprep.subr.mxu0 0.0
    %3067 = vmatpush2.msra.mxu0 %v609
    %3068 = vmatprep.subr.mxu0 0.0
    %3069 = vmatpush2.msra.mxu0 %v608
    %3070 = vmatprep.mubr.f32.mxu0 %v2953
    %3071 = vmatmul.mubr.f32.gmra.mxu0 %v2952
    %v3072 = vpop.f32.mrf.mxu0
    %v3073 = vadd.f32 %v3004, %v3072
    %v3074 = vpop.f32.mrf.mxu0
    %3075 = vmatprep.mubr.f32.mxu0 %v2969
    %3076 = vmatmul.mubr.f32.gmra.mxu0 %v2968
    %v3077 = vpop.f32.mrf.mxu0
    %v3078 = vadd.f32 %v3004, %v3077
    %v3079 = vpop.f32.mrf.mxu0
    %3080 = vmatprep.mubr.f32.mxu0 %v2985
    %3081 = vmatmul.mubr.f32.gmra.mxu0 %v2984
    %v3082 = vpop.f32.mrf.mxu0
    %v3083 = vadd.f32 %v3004, %v3082
    %v3084 = vpop.f32.mrf.mxu0
    %3085 = vdwg.mxu0
    %3086 = vmatprep.subr.mxu0 0.0
    %3087 = vmatpush1.msra.mxu0 %v639
    %3088 = vmatprep.subr.mxu0 0.0
    %3089 = vmatpush1.msra.mxu0 %v638
    %3090 = vmatprep.subr.mxu0 0.0
    %3091 = vmatpush1.msra.mxu0 %v637
    %3092 = vmatprep.subr.mxu0 0.0
    %3093 = vmatpush1.msra.mxu0 %v636
    %3094 = vmatprep.subr.mxu0 0.0
    %3095 = vmatpush1.msra.mxu0 %v635
    %3096 = vmatprep.subr.mxu0 0.0
    %3097 = vmatpush1.msra.mxu0 %v634
    %3098 = vmatprep.subr.mxu0 0.0
    %3099 = vmatpush1.msra.mxu0 %v633
    %3100 = vmatprep.subr.mxu0 0.0
    %3101 = vmatpush1.msra.mxu0 %v632
    %3102 = vmatprep.subr.mxu0 0.0
    %3103 = vmatpush1.msra.mxu0 %v631
    %3104 = vmatprep.subr.mxu0 0.0
    %3105 = vmatpush1.msra.mxu0 %v630
    %3106 = vmatprep.subr.mxu0 0.0
    %3107 = vmatpush1.msra.mxu0 %v629
    %3108 = vmatprep.subr.mxu0 0.0
    %3109 = vmatpush1.msra.mxu0 %v628
    %3110 = vmatprep.subr.mxu0 0.0
    %3111 = vmatpush1.msra.mxu0 %v627
    %3112 = vmatprep.subr.mxu0 0.0
    %3113 = vmatpush1.msra.mxu0 %v626
    %3114 = vmatprep.subr.mxu0 0.0
    %3115 = vmatpush1.msra.mxu0 %v625
    %3116 = vmatprep.subr.mxu0 0.0
    %3117 = vmatpush1.msra.mxu0 %v624
    %3118 = vmatprep.subr.mxu0 0.0
    %3119 = vmatpush2.msra.mxu0 %v655
    %3120 = vmatprep.subr.mxu0 0.0
    %3121 = vmatpush2.msra.mxu0 %v654
    %3122 = vmatprep.subr.mxu0 0.0
    %3123 = vmatpush2.msra.mxu0 %v653
    %3124 = vmatprep.subr.mxu0 0.0
    %3125 = vmatpush2.msra.mxu0 %v652
    %3126 = vmatprep.subr.mxu0 0.0
    %3127 = vmatpush2.msra.mxu0 %v651
    %3128 = vmatprep.subr.mxu0 0.0
    %3129 = vmatpush2.msra.mxu0 %v650
    %3130 = vmatprep.subr.mxu0 0.0
    %3131 = vmatpush2.msra.mxu0 %v649
    %3132 = vmatprep.subr.mxu0 0.0
    %3133 = vmatpush2.msra.mxu0 %v648
    %3134 = vmatprep.subr.mxu0 0.0
    %3135 = vmatpush2.msra.mxu0 %v647
    %3136 = vmatprep.subr.mxu0 0.0
    %3137 = vmatpush2.msra.mxu0 %v646
    %3138 = vmatprep.subr.mxu0 0.0
    %3139 = vmatpush2.msra.mxu0 %v645
    %3140 = vmatprep.subr.mxu0 0.0
    %3141 = vmatpush2.msra.mxu0 %v644
    %3142 = vmatprep.subr.mxu0 0.0
    %3143 = vmatpush2.msra.mxu0 %v643
    %3144 = vmatprep.subr.mxu0 0.0
    %3145 = vmatpush2.msra.mxu0 %v642
    %3146 = vmatprep.subr.mxu0 0.0
    %3147 = vmatpush2.msra.mxu0 %v641
    %3148 = vmatprep.subr.mxu0 0.0
    %3149 = vmatpush2.msra.mxu0 %v640
    %3150 = vmatprep.mubr.f32.mxu0 %v2955
    %3151 = vmatmul.mubr.f32.gmra.mxu0 %v2954
    %v3152 = vpop.f32.mrf.mxu0
    %v3153 = vadd.f32 %v3073, %v3152
    %v3154 = vpop.f32.mrf.mxu0
    %3155 = vmatprep.mubr.f32.mxu0 %v2971
    %3156 = vmatmul.mubr.f32.gmra.mxu0 %v2970
    %v3157 = vpop.f32.mrf.mxu0
    %v3158 = vadd.f32 %v3078, %v3157
    %v3159 = vpop.f32.mrf.mxu0
    %3160 = vmatprep.mubr.f32.mxu0 %v2987
    %3161 = vmatmul.mubr.f32.gmra.mxu0 %v2986
    %v3162 = vpop.f32.mrf.mxu0
    %v3163 = vadd.f32 %v3083, %v3162
    %v3164 = vpop.f32.mrf.mxu0
    %3165 = vdwg.mxu0
    %3166 = vmatprep.subr.mxu0 0.0
    %3167 = vmatpush1.msra.mxu0 %v671
    %3168 = vmatprep.subr.mxu0 0.0
    %3169 = vmatpush1.msra.mxu0 %v670
    %3170 = vmatprep.subr.mxu0 0.0
    %3171 = vmatpush1.msra.mxu0 %v669
    %3172 = vmatprep.subr.mxu0 0.0
    %3173 = vmatpush1.msra.mxu0 %v668
    %3174 = vmatprep.subr.mxu0 0.0
    %3175 = vmatpush1.msra.mxu0 %v667
    %3176 = vmatprep.subr.mxu0 0.0
    %3177 = vmatpush1.msra.mxu0 %v666
    %3178 = vmatprep.subr.mxu0 0.0
    %3179 = vmatpush1.msra.mxu0 %v665
    %3180 = vmatprep.subr.mxu0 0.0
    %3181 = vmatpush1.msra.mxu0 %v664
    %3182 = vmatprep.subr.mxu0 0.0
    %3183 = vmatpush1.msra.mxu0 %v663
    %3184 = vmatprep.subr.mxu0 0.0
    %3185 = vmatpush1.msra.mxu0 %v662
    %3186 = vmatprep.subr.mxu0 0.0
    %3187 = vmatpush1.msra.mxu0 %v661
    %3188 = vmatprep.subr.mxu0 0.0
    %3189 = vmatpush1.msra.mxu0 %v660
    %3190 = vmatprep.subr.mxu0 0.0
    %3191 = vmatpush1.msra.mxu0 %v659
    %3192 = vmatprep.subr.mxu0 0.0
    %3193 = vmatpush1.msra.mxu0 %v658
    %3194 = vmatprep.subr.mxu0 0.0
    %3195 = vmatpush1.msra.mxu0 %v657
    %3196 = vmatprep.subr.mxu0 0.0
    %3197 = vmatpush1.msra.mxu0 %v656
    %3198 = vmatprep.subr.mxu0 0.0
    %3199 = vmatpush2.msra.mxu0 %v687
    %3200 = vmatprep.subr.mxu0 0.0
    %3201 = vmatpush2.msra.mxu0 %v686
    %3202 = vmatprep.subr.mxu0 0.0
    %3203 = vmatpush2.msra.mxu0 %v685
    %3204 = vmatprep.subr.mxu0 0.0
    %3205 = vmatpush2.msra.mxu0 %v684
    %3206 = vmatprep.subr.mxu0 0.0
    %3207 = vmatpush2.msra.mxu0 %v683
    %3208 = vmatprep.subr.mxu0 0.0
    %3209 = vmatpush2.msra.mxu0 %v682
    %3210 = vmatprep.subr.mxu0 0.0
    %3211 = vmatpush2.msra.mxu0 %v681
    %3212 = vmatprep.subr.mxu0 0.0
    %3213 = vmatpush2.msra.mxu0 %v680
    %3214 = vmatprep.subr.mxu0 0.0
    %3215 = vmatpush2.msra.mxu0 %v679
    %3216 = vmatprep.subr.mxu0 0.0
    %3217 = vmatpush2.msra.mxu0 %v678
    %3218 = vmatprep.subr.mxu0 0.0
    %3219 = vmatpush2.msra.mxu0 %v677
    %3220 = vmatprep.subr.mxu0 0.0
    %3221 = vmatpush2.msra.mxu0 %v676
    %3222 = vmatprep.subr.mxu0 0.0
    %3223 = vmatpush2.msra.mxu0 %v675
    %3224 = vmatprep.subr.mxu0 0.0
    %3225 = vmatpush2.msra.mxu0 %v674
    %3226 = vmatprep.subr.mxu0 0.0
    %3227 = vmatpush2.msra.mxu0 %v673
    %3228 = vmatprep.subr.mxu0 0.0
    %3229 = vmatpush2.msra.mxu0 %v672
    %3230 = vmatprep.mubr.f32.mxu0 %v2957
    %3231 = vmatmul.mubr.f32.gmra.mxu0 %v2956
    %v3232 = vpop.f32.mrf.mxu0
    %v3233 = vadd.f32 %v3153, %v3232
    %v3234 = vpop.f32.mrf.mxu0
    %3235 = vmatprep.mubr.f32.mxu0 %v2973
    %3236 = vmatmul.mubr.f32.gmra.mxu0 %v2972
    %v3237 = vpop.f32.mrf.mxu0
    %v3238 = vadd.f32 %v3158, %v3237
    %v3239 = vpop.f32.mrf.mxu0
    %3240 = vmatprep.mubr.f32.mxu0 %v2989
    %3241 = vmatmul.mubr.f32.gmra.mxu0 %v2988
    %v3242 = vpop.f32.mrf.mxu0
    %v3243 = vadd.f32 %v3163, %v3242
    %v3244 = vpop.f32.mrf.mxu0
    %3245 = vdwg.mxu0
    %3246 = vmatprep.subr.mxu0 0.0
    %3247 = vmatpush1.msra.mxu0 %v703
    %3248 = vmatprep.subr.mxu0 0.0
    %3249 = vmatpush1.msra.mxu0 %v702
    %3250 = vmatprep.subr.mxu0 0.0
    %3251 = vmatpush1.msra.mxu0 %v701
    %3252 = vmatprep.subr.mxu0 0.0
    %3253 = vmatpush1.msra.mxu0 %v700
    %3254 = vmatprep.subr.mxu0 0.0
    %3255 = vmatpush1.msra.mxu0 %v699
    %3256 = vmatprep.subr.mxu0 0.0
    %3257 = vmatpush1.msra.mxu0 %v698
    %3258 = vmatprep.subr.mxu0 0.0
    %3259 = vmatpush1.msra.mxu0 %v697
    %3260 = vmatprep.subr.mxu0 0.0
    %3261 = vmatpush1.msra.mxu0 %v696
    %3262 = vmatprep.subr.mxu0 0.0
    %3263 = vmatpush1.msra.mxu0 %v695
    %3264 = vmatprep.subr.mxu0 0.0
    %3265 = vmatpush1.msra.mxu0 %v694
    %3266 = vmatprep.subr.mxu0 0.0
    %3267 = vmatpush1.msra.mxu0 %v693
    %3268 = vmatprep.subr.mxu0 0.0
    %3269 = vmatpush1.msra.mxu0 %v692
    %3270 = vmatprep.subr.mxu0 0.0
    %3271 = vmatpush1.msra.mxu0 %v691
    %3272 = vmatprep.subr.mxu0 0.0
    %3273 = vmatpush1.msra.mxu0 %v690
    %3274 = vmatprep.subr.mxu0 0.0
    %3275 = vmatpush1.msra.mxu0 %v689
    %3276 = vmatprep.subr.mxu0 0.0
    %3277 = vmatpush1.msra.mxu0 %v688
    %3278 = vmatprep.subr.mxu0 0.0
    %3279 = vmatpush2.msra.mxu0 %v719
    %3280 = vmatprep.subr.mxu0 0.0
    %3281 = vmatpush2.msra.mxu0 %v718
    %3282 = vmatprep.subr.mxu0 0.0
    %3283 = vmatpush2.msra.mxu0 %v717
    %3284 = vmatprep.subr.mxu0 0.0
    %3285 = vmatpush2.msra.mxu0 %v716
    %3286 = vmatprep.subr.mxu0 0.0
    %3287 = vmatpush2.msra.mxu0 %v715
    %3288 = vmatprep.subr.mxu0 0.0
    %3289 = vmatpush2.msra.mxu0 %v714
    %3290 = vmatprep.subr.mxu0 0.0
    %3291 = vmatpush2.msra.mxu0 %v713
    %3292 = vmatprep.subr.mxu0 0.0
    %3293 = vmatpush2.msra.mxu0 %v712
    %3294 = vmatprep.subr.mxu0 0.0
    %3295 = vmatpush2.msra.mxu0 %v711
    %3296 = vmatprep.subr.mxu0 0.0
    %3297 = vmatpush2.msra.mxu0 %v710
    %3298 = vmatprep.subr.mxu0 0.0
    %3299 = vmatpush2.msra.mxu0 %v709
    %3300 = vmatprep.subr.mxu0 0.0
    %3301 = vmatpush2.msra.mxu0 %v708
    %3302 = vmatprep.subr.mxu0 0.0
    %3303 = vmatpush2.msra.mxu0 %v707
    %3304 = vmatprep.subr.mxu0 0.0
    %3305 = vmatpush2.msra.mxu0 %v706
    %3306 = vmatprep.subr.mxu0 0.0
    %3307 = vmatpush2.msra.mxu0 %v705
    %3308 = vmatprep.subr.mxu0 0.0
    %3309 = vmatpush2.msra.mxu0 %v704
    %3310 = vmatprep.mubr.f32.mxu0 %v2959
    %3311 = vmatmul.mubr.f32.gmra.mxu0 %v2958
    %v3312 = vpop.f32.mrf.mxu0
    %v3313 = vadd.f32 %v3233, %v3312
    %v3314 = vpop.f32.mrf.mxu0
    %3315 = vmatprep.mubr.f32.mxu0 %v2975
    %3316 = vmatmul.mubr.f32.gmra.mxu0 %v2974
    %v3317 = vpop.f32.mrf.mxu0
    %v3318 = vadd.f32 %v3238, %v3317
    %v3319 = vpop.f32.mrf.mxu0
    %3320 = vmatprep.mubr.f32.mxu0 %v2991
    %3321 = vmatmul.mubr.f32.gmra.mxu0 %v2990
    %v3322 = vpop.f32.mrf.mxu0
    %v3323 = vadd.f32 %v3243, %v3322
    %v3324 = vpop.f32.mrf.mxu0
    %3325 = vdwg.mxu0
    %3326 = vmatprep.subr.mxu0 0.0
    %3327 = vmatpush1.msra.mxu0 %v735
    %3328 = vmatprep.subr.mxu0 0.0
    %3329 = vmatpush1.msra.mxu0 %v734
    %3330 = vmatprep.subr.mxu0 0.0
    %3331 = vmatpush1.msra.mxu0 %v733
    %3332 = vmatprep.subr.mxu0 0.0
    %3333 = vmatpush1.msra.mxu0 %v732
    %3334 = vmatprep.subr.mxu0 0.0
    %3335 = vmatpush1.msra.mxu0 %v731
    %3336 = vmatprep.subr.mxu0 0.0
    %3337 = vmatpush1.msra.mxu0 %v730
    %3338 = vmatprep.subr.mxu0 0.0
    %3339 = vmatpush1.msra.mxu0 %v729
    %3340 = vmatprep.subr.mxu0 0.0
    %3341 = vmatpush1.msra.mxu0 %v728
    %3342 = vmatprep.subr.mxu0 0.0
    %3343 = vmatpush1.msra.mxu0 %v727
    %3344 = vmatprep.subr.mxu0 0.0
    %3345 = vmatpush1.msra.mxu0 %v726
    %3346 = vmatprep.subr.mxu0 0.0
    %3347 = vmatpush1.msra.mxu0 %v725
    %3348 = vmatprep.subr.mxu0 0.0
    %3349 = vmatpush1.msra.mxu0 %v724
    %3350 = vmatprep.subr.mxu0 0.0
    %3351 = vmatpush1.msra.mxu0 %v723
    %3352 = vmatprep.subr.mxu0 0.0
    %3353 = vmatpush1.msra.mxu0 %v722
    %3354 = vmatprep.subr.mxu0 0.0
    %3355 = vmatpush1.msra.mxu0 %v721
    %3356 = vmatprep.subr.mxu0 0.0
    %3357 = vmatpush1.msra.mxu0 %v720
    %3358 = vmatprep.subr.mxu0 0.0
    %3359 = vmatpush2.msra.mxu0 %v751
    %3360 = vmatprep.subr.mxu0 0.0
    %3361 = vmatpush2.msra.mxu0 %v750
    %3362 = vmatprep.subr.mxu0 0.0
    %3363 = vmatpush2.msra.mxu0 %v749
    %3364 = vmatprep.subr.mxu0 0.0
    %3365 = vmatpush2.msra.mxu0 %v748
    %3366 = vmatprep.subr.mxu0 0.0
    %3367 = vmatpush2.msra.mxu0 %v747
    %3368 = vmatprep.subr.mxu0 0.0
    %3369 = vmatpush2.msra.mxu0 %v746
    %3370 = vmatprep.subr.mxu0 0.0
    %3371 = vmatpush2.msra.mxu0 %v745
    %3372 = vmatprep.subr.mxu0 0.0
    %3373 = vmatpush2.msra.mxu0 %v744
    %3374 = vmatprep.subr.mxu0 0.0
    %3375 = vmatpush2.msra.mxu0 %v743
    %3376 = vmatprep.subr.mxu0 0.0
    %3377 = vmatpush2.msra.mxu0 %v742
    %3378 = vmatprep.subr.mxu0 0.0
    %3379 = vmatpush2.msra.mxu0 %v741
    %3380 = vmatprep.subr.mxu0 0.0
    %3381 = vmatpush2.msra.mxu0 %v740
    %3382 = vmatprep.subr.mxu0 0.0
    %3383 = vmatpush2.msra.mxu0 %v739
    %3384 = vmatprep.subr.mxu0 0.0
    %3385 = vmatpush2.msra.mxu0 %v738
    %3386 = vmatprep.subr.mxu0 0.0
    %3387 = vmatpush2.msra.mxu0 %v737
    %3388 = vmatprep.subr.mxu0 0.0
    %3389 = vmatpush2.msra.mxu0 %v736
    %3390 = vmatprep.mubr.f32.mxu0 %v2961
    %3391 = vmatmul.mubr.f32.gmra.mxu0 %v2960
    %v3392 = vpop.f32.mrf.mxu0
    %v3393 = vadd.f32 %v3313, %v3392
    %v3394 = vpop.f32.mrf.mxu0
    %3395 = vmatprep.mubr.f32.mxu0 %v2977
    %3396 = vmatmul.mubr.f32.gmra.mxu0 %v2976
    %v3397 = vpop.f32.mrf.mxu0
    %v3398 = vadd.f32 %v3318, %v3397
    %v3399 = vpop.f32.mrf.mxu0
    %3400 = vmatprep.mubr.f32.mxu0 %v2993
    %3401 = vmatmul.mubr.f32.gmra.mxu0 %v2992
    %v3402 = vpop.f32.mrf.mxu0
    %v3403 = vadd.f32 %v3323, %v3402
    %v3404 = vpop.f32.mrf.mxu0
    %3405 = vdwg.mxu0
    %3406 = vmatprep.subr.mxu0 0.0
    %3407 = vmatpush1.msra.mxu0 %v767
    %3408 = vmatprep.subr.mxu0 0.0
    %3409 = vmatpush1.msra.mxu0 %v766
    %3410 = vmatprep.subr.mxu0 0.0
    %3411 = vmatpush1.msra.mxu0 %v765
    %3412 = vmatprep.subr.mxu0 0.0
    %3413 = vmatpush1.msra.mxu0 %v764
    %3414 = vmatprep.subr.mxu0 0.0
    %3415 = vmatpush1.msra.mxu0 %v763
    %3416 = vmatprep.subr.mxu0 0.0
    %3417 = vmatpush1.msra.mxu0 %v762
    %3418 = vmatprep.subr.mxu0 0.0
    %3419 = vmatpush1.msra.mxu0 %v761
    %3420 = vmatprep.subr.mxu0 0.0
    %3421 = vmatpush1.msra.mxu0 %v760
    %3422 = vmatprep.subr.mxu0 0.0
    %3423 = vmatpush1.msra.mxu0 %v759
    %3424 = vmatprep.subr.mxu0 0.0
    %3425 = vmatpush1.msra.mxu0 %v758
    %3426 = vmatprep.subr.mxu0 0.0
    %3427 = vmatpush1.msra.mxu0 %v757
    %3428 = vmatprep.subr.mxu0 0.0
    %3429 = vmatpush1.msra.mxu0 %v756
    %3430 = vmatprep.subr.mxu0 0.0
    %3431 = vmatpush1.msra.mxu0 %v755
    %3432 = vmatprep.subr.mxu0 0.0
    %3433 = vmatpush1.msra.mxu0 %v754
    %3434 = vmatprep.subr.mxu0 0.0
    %3435 = vmatpush1.msra.mxu0 %v753
    %3436 = vmatprep.subr.mxu0 0.0
    %3437 = vmatpush1.msra.mxu0 %v752
    %3438 = vmatprep.subr.mxu0 0.0
    %3439 = vmatpush2.msra.mxu0 %v783
    %3440 = vmatprep.subr.mxu0 0.0
    %3441 = vmatpush2.msra.mxu0 %v782
    %3442 = vmatprep.subr.mxu0 0.0
    %3443 = vmatpush2.msra.mxu0 %v781
    %3444 = vmatprep.subr.mxu0 0.0
    %3445 = vmatpush2.msra.mxu0 %v780
    %3446 = vmatprep.subr.mxu0 0.0
    %3447 = vmatpush2.msra.mxu0 %v779
    %3448 = vmatprep.subr.mxu0 0.0
    %3449 = vmatpush2.msra.mxu0 %v778
    %3450 = vmatprep.subr.mxu0 0.0
    %3451 = vmatpush2.msra.mxu0 %v777
    %3452 = vmatprep.subr.mxu0 0.0
    %3453 = vmatpush2.msra.mxu0 %v776
    %3454 = vmatprep.subr.mxu0 0.0
    %3455 = vmatpush2.msra.mxu0 %v775
    %3456 = vmatprep.subr.mxu0 0.0
    %3457 = vmatpush2.msra.mxu0 %v774
    %3458 = vmatprep.subr.mxu0 0.0
    %3459 = vmatpush2.msra.mxu0 %v773
    %3460 = vmatprep.subr.mxu0 0.0
    %3461 = vmatpush2.msra.mxu0 %v772
    %3462 = vmatprep.subr.mxu0 0.0
    %3463 = vmatpush2.msra.mxu0 %v771
    %3464 = vmatprep.subr.mxu0 0.0
    %3465 = vmatpush2.msra.mxu0 %v770
    %3466 = vmatprep.subr.mxu0 0.0
    %3467 = vmatpush2.msra.mxu0 %v769
    %3468 = vmatprep.subr.mxu0 0.0
    %3469 = vmatpush2.msra.mxu0 %v768
    %3470 = vmatprep.mubr.f32.mxu0 %v2963
    %3471 = vmatmul.mubr.f32.gmra.mxu0 %v2962
    %v3472 = vpop.f32.mrf.mxu0
    %v3473 = vadd.f32 %v3393, %v3472
    %v3474 = vpop.f32.mrf.mxu0
    %3475 = vmatprep.mubr.f32.mxu0 %v2979
    %3476 = vmatmul.mubr.f32.gmra.mxu0 %v2978
    %v3477 = vpop.f32.mrf.mxu0
    %v3478 = vadd.f32 %v3398, %v3477
    %v3479 = vpop.f32.mrf.mxu0
    %3480 = vmatprep.mubr.f32.mxu0 %v2995
    %3481 = vmatmul.mubr.f32.gmra.mxu0 %v2994
    %v3482 = vpop.f32.mrf.mxu0
    %v3483 = vadd.f32 %v3403, %v3482
    %v3484 = vpop.f32.mrf.mxu0
    %3485 = vdwg.mxu0
    %3486 = vmatprep.subr.mxu0 0.0
    %3487 = vmatpush1.msra.mxu0 %v799
    %3488 = vmatprep.subr.mxu0 0.0
    %3489 = vmatpush1.msra.mxu0 %v798
    %3490 = vmatprep.subr.mxu0 0.0
    %3491 = vmatpush1.msra.mxu0 %v797
    %3492 = vmatprep.subr.mxu0 0.0
    %3493 = vmatpush1.msra.mxu0 %v796
    %3494 = vmatprep.subr.mxu0 0.0
    %3495 = vmatpush1.msra.mxu0 %v795
    %3496 = vmatprep.subr.mxu0 0.0
    %3497 = vmatpush1.msra.mxu0 %v794
    %3498 = vmatprep.subr.mxu0 0.0
    %3499 = vmatpush1.msra.mxu0 %v793
    %3500 = vmatprep.subr.mxu0 0.0
    %3501 = vmatpush1.msra.mxu0 %v792
    %3502 = vmatprep.subr.mxu0 0.0
    %3503 = vmatpush1.msra.mxu0 %v791
    %3504 = vmatprep.subr.mxu0 0.0
    %3505 = vmatpush1.msra.mxu0 %v790
    %3506 = vmatprep.subr.mxu0 0.0
    %3507 = vmatpush1.msra.mxu0 %v789
    %3508 = vmatprep.subr.mxu0 0.0
    %3509 = vmatpush1.msra.mxu0 %v788
    %3510 = vmatprep.subr.mxu0 0.0
    %3511 = vmatpush1.msra.mxu0 %v787
    %3512 = vmatprep.subr.mxu0 0.0
    %3513 = vmatpush1.msra.mxu0 %v786
    %3514 = vmatprep.subr.mxu0 0.0
    %3515 = vmatpush1.msra.mxu0 %v785
    %3516 = vmatprep.subr.mxu0 0.0
    %3517 = vmatpush1.msra.mxu0 %v784
    %3518 = vmatprep.subr.mxu0 0.0
    %3519 = vmatpush2.msra.mxu0 %v815
    %3520 = vmatprep.subr.mxu0 0.0
    %3521 = vmatpush2.msra.mxu0 %v814
    %3522 = vmatprep.subr.mxu0 0.0
    %3523 = vmatpush2.msra.mxu0 %v813
    %3524 = vmatprep.subr.mxu0 0.0
    %3525 = vmatpush2.msra.mxu0 %v812
    %3526 = vmatprep.subr.mxu0 0.0
    %3527 = vmatpush2.msra.mxu0 %v811
    %3528 = vmatprep.subr.mxu0 0.0
    %3529 = vmatpush2.msra.mxu0 %v810
    %3530 = vmatprep.subr.mxu0 0.0
    %3531 = vmatpush2.msra.mxu0 %v809
    %3532 = vmatprep.subr.mxu0 0.0
    %3533 = vmatpush2.msra.mxu0 %v808
    %3534 = vmatprep.subr.mxu0 0.0
    %3535 = vmatpush2.msra.mxu0 %v807
    %3536 = vmatprep.subr.mxu0 0.0
    %3537 = vmatpush2.msra.mxu0 %v806
    %3538 = vmatprep.subr.mxu0 0.0
    %3539 = vmatpush2.msra.mxu0 %v805
    %3540 = vmatprep.subr.mxu0 0.0
    %3541 = vmatpush2.msra.mxu0 %v804
    %3542 = vmatprep.subr.mxu0 0.0
    %3543 = vmatpush2.msra.mxu0 %v803
    %3544 = vmatprep.subr.mxu0 0.0
    %3545 = vmatpush2.msra.mxu0 %v802
    %3546 = vmatprep.subr.mxu0 0.0
    %3547 = vmatpush2.msra.mxu0 %v801
    %3548 = vmatprep.subr.mxu0 0.0
    %3549 = vmatpush2.msra.mxu0 %v800
    %3550 = vmatprep.mubr.f32.mxu0 %v2965
    %3551 = vmatmul.mubr.f32.gmra.mxu0 %v2964
    %v3552 = vpop.f32.mrf.mxu0
    %v3553 = vadd.f32 %v3473, %v3552
    %v3554 = vpop.f32.mrf.mxu0
    %3555 = vmatprep.mubr.f32.mxu0 %v2981
    %3556 = vmatmul.mubr.f32.gmra.mxu0 %v2980
    %v3557 = vpop.f32.mrf.mxu0
    %v3558 = vadd.f32 %v3478, %v3557
    %v3559 = vpop.f32.mrf.mxu0
    %3560 = vmatprep.mubr.f32.mxu0 %v2997
    %3561 = vmatmul.mubr.f32.gmra.mxu0 %v2996
    %v3562 = vpop.f32.mrf.mxu0
    %v3563 = vadd.f32 %v3483, %v3562
    %v3564 = vpop.f32.mrf.mxu0
    %3565 = vdwg.mxu0
    %3566 = vmatprep.subr.mxu0 0.0
    %3567 = vmatpush1.msra.mxu0 %v831
    %3568 = vmatprep.subr.mxu0 0.0
    %3569 = vmatpush1.msra.mxu0 %v830
    %3570 = vmatprep.subr.mxu0 0.0
    %3571 = vmatpush1.msra.mxu0 %v829
    %3572 = vmatprep.subr.mxu0 0.0
    %3573 = vmatpush1.msra.mxu0 %v828
    %3574 = vmatprep.subr.mxu0 0.0
    %3575 = vmatpush1.msra.mxu0 %v827
    %3576 = vmatprep.subr.mxu0 0.0
    %3577 = vmatpush1.msra.mxu0 %v826
    %3578 = vmatprep.subr.mxu0 0.0
    %3579 = vmatpush1.msra.mxu0 %v825
    %3580 = vmatprep.subr.mxu0 0.0
    %3581 = vmatpush1.msra.mxu0 %v824
    %3582 = vmatprep.subr.mxu0 0.0
    %3583 = vmatpush1.msra.mxu0 %v823
    %3584 = vmatprep.subr.mxu0 0.0
    %3585 = vmatpush1.msra.mxu0 %v822
    %3586 = vmatprep.subr.mxu0 0.0
    %3587 = vmatpush1.msra.mxu0 %v821
    %3588 = vmatprep.subr.mxu0 0.0
    %3589 = vmatpush1.msra.mxu0 %v820
    %3590 = vmatprep.subr.mxu0 0.0
    %3591 = vmatpush1.msra.mxu0 %v819
    %3592 = vmatprep.subr.mxu0 0.0
    %3593 = vmatpush1.msra.mxu0 %v818
    %3594 = vmatprep.subr.mxu0 0.0
    %3595 = vmatpush1.msra.mxu0 %v817
    %3596 = vmatprep.subr.mxu0 0.0
    %3597 = vmatpush1.msra.mxu0 %v816
    %3598 = vmatprep.subr.mxu0 0.0
    %3599 = vmatpush2.msra.mxu0 %v847
    %3600 = vmatprep.subr.mxu0 0.0
    %3601 = vmatpush2.msra.mxu0 %v846
    %3602 = vmatprep.subr.mxu0 0.0
    %3603 = vmatpush2.msra.mxu0 %v845
    %3604 = vmatprep.subr.mxu0 0.0
    %3605 = vmatpush2.msra.mxu0 %v844
    %3606 = vmatprep.subr.mxu0 0.0
    %3607 = vmatpush2.msra.mxu0 %v843
    %3608 = vmatprep.subr.mxu0 0.0
    %3609 = vmatpush2.msra.mxu0 %v842
    %3610 = vmatprep.subr.mxu0 0.0
    %3611 = vmatpush2.msra.mxu0 %v841
    %3612 = vmatprep.subr.mxu0 0.0
    %3613 = vmatpush2.msra.mxu0 %v840
    %3614 = vmatprep.subr.mxu0 0.0
    %3615 = vmatpush2.msra.mxu0 %v839
    %3616 = vmatprep.subr.mxu0 0.0
    %3617 = vmatpush2.msra.mxu0 %v838
    %3618 = vmatprep.subr.mxu0 0.0
    %3619 = vmatpush2.msra.mxu0 %v837
    %3620 = vmatprep.subr.mxu0 0.0
    %3621 = vmatpush2.msra.mxu0 %v836
    %3622 = vmatprep.subr.mxu0 0.0
    %3623 = vmatpush2.msra.mxu0 %v835
    %3624 = vmatprep.subr.mxu0 0.0
    %3625 = vmatpush2.msra.mxu0 %v834
    %3626 = vmatprep.subr.mxu0 0.0
    %3627 = vmatpush2.msra.mxu0 %v833
    %3628 = vmatprep.subr.mxu0 0.0
    %3629 = vmatpush2.msra.mxu0 %v832
    %3630 = vmatprep.mubr.f32.mxu0 %v2967
    %3631 = vmatmul.mubr.f32.gmra.mxu0 %v2966
    %v3632 = vpop.f32.mrf.mxu0
    %v3633 = vadd.f32 %v3553, %v3632
    %v3634 = vpop.f32.mrf.mxu0
    %3635 = vmatprep.mubr.f32.mxu0 %v2983
    %3636 = vmatmul.mubr.f32.gmra.mxu0 %v2982
    %v3637 = vpop.f32.mrf.mxu0
    %v3638 = vadd.f32 %v3558, %v3637
    %v3639 = vpop.f32.mrf.mxu0
    %3640 = vmatprep.mubr.f32.mxu0 %v2999
    %3641 = vmatmul.mubr.f32.gmra.mxu0 %v2998
    %v3642 = vpop.f32.mrf.mxu0
    %v3643 = vadd.f32 %v3563, %v3642
    %v3644 = vpop.f32.mrf.mxu0
    %3645 = vdwg.mxu0
    %v3646 = vadd.f32 %v2194, %v3633
    %v3647 = vadd.f32 %v2195, %v3638
    %v3648 = vadd.f32 %v2196, %v3643
    %v3649 = vsel %vm854, %v3646, 0.0
    %3650 = vadd.xlane.f32.xlu0 %v3649
    %v3651 = vpop.xlane.xlu0 %3650
    %v3652 = vsel %vm854, %v3647, 0.0
    %3653 = vadd.xlane.f32.xlu0 %v3652
    %v3654 = vpop.xlane.xlu0 %3653
    %v3655 = vsel %vm2144, %v3648, 0.0
    %3656 = vadd.xlane.f32.xlu0 %v3655
    %v3657 = vpop.xlane.xlu0 %3656
    %v3658 = vmul.f32 %v3651, %v2148
    %v3659 = vmul.f32 %v3654, %v2148
    %v3660 = vmul.f32 %v3657, %v2148
    %v3661 = vsub.f32 %v3646, %v3658
    %v3662 = vsub.f32 %v3647, %v3659
    %v3663 = vsub.f32 %v3648, %v3660
    %v3664 = vmul.f32 %v3661, %v3661
    %v3665 = vmul.f32 %v3662, %v3662
    %v3666 = vmul.f32 %v3663, %v3663
    %v3667 = vsel %vm854, %v3664, 0.0
    %3668 = vadd.xlane.f32.xlu0 %v3667
    %v3669 = vpop.xlane.xlu0 %3668
    %v3670 = vsel %vm854, %v3665, 0.0
    %3671 = vadd.xlane.f32.xlu0 %v3670
    %v3672 = vpop.xlane.xlu0 %3671
    %v3673 = vsel %vm2144, %v3666, 0.0
    %3674 = vadd.xlane.f32.xlu0 %v3673
    %v3675 = vpop.xlane.xlu0 %3674
    %v3676 = vmul.f32 %v3669, %v2148
    %v3677 = vmul.f32 %v3672, %v2148
    %v3678 = vmul.f32 %v3675, %v2148
    %v3679 = vadd.f32 %v3676, 1e-05
    %v3680 = vadd.f32 %v3677, 1e-05
    %v3681 = vadd.f32 %v3678, 1e-05
    %v3682 = vrsqrt.pop %v3679
    %v3683 = vrsqrt.pop %v3680
    %v3684 = vrsqrt.pop %v3681
    %v3685 = vmul.f32 %v3661, %v3682
    %v3686 = vmul.f32 %v3662, %v3683
    %v3687 = vmul.f32 %v3663, %v3684
    %v3689 = vlaneseq
    %v3690 = vshrl.u32 %v3689, 7
    %v3691 = vsub.s32 0, %v3690
    %v3692 = vrot.slane %v526, %v3691
    %v3694 = vmul.f32 %v3685, %v3692
    %v3695 = vmul.f32 %v3686, %v3692
    %v3696 = vmul.f32 %v3687, %v3692
    %v3698 = vlaneseq
    %v3699 = vshrl.u32 %v3698, 7
    %v3700 = vsub.s32 0, %v3699
    %v3701 = vrot.slane %v527, %v3700
    %v3703 = vadd.f32 %v3694, %v3701
    %v3704 = vadd.f32 %v3695, %v3701
    %v3705 = vadd.f32 %v3696, %v3701
    %v3706 = vld [vmem:[%s37] sm:$0xff]
    %v3707 = vld [vmem:[%s37 + $0x8] sm:$0xff]
    %v3708 = vld [vmem:[%s37 + $0x10] sm:$0xff]
    %v3709 = vld [vmem:[%s37 + $0x18] sm:$0xff]
    %v3710 = vld [vmem:[%s39] sm:$0x1]
    %v3711 = vld [vmem:[%s41] sm:$0xff]
    %v3712 = vld [vmem:[%s41 + $0x8] sm:$0xff]
    %v3713 = vld [vmem:[%s41 + $0x10] sm:$0xff]
    %v3714 = vld [vmem:[%s41 + $0x18] sm:$0xff]
    %v3715 = vld [vmem:[%s43] sm:$0x1]
    %v3716 = vld [vmem:[%s45] sm:$0xff]
    %v3717 = vld [vmem:[%s45 + $0x8] sm:$0xff]
    %v3718 = vld [vmem:[%s45 + $0x10] sm:$0xff]
    %v3719 = vld [vmem:[%s45 + $0x18] sm:$0xff]
    %v3720 = vld [vmem:[%s47] sm:$0x1]
    %v3721 = vld [vmem:[%s49] sm:$0xff]
    %v3722 = vld [vmem:[%s49 + $0x8] sm:$0xff]
    %v3723 = vld [vmem:[%s49 + $0x10] sm:$0xff]
    %v3724 = vld [vmem:[%s49 + $0x18] sm:$0xff]
    %v3725 = vld [vmem:[%s51] sm:$0x1]
    %v3726 = vld [vmem:[%s53] sm:$0x1]
    %v3727 = vld [vmem:[%s55] sm:$0x1]
    %v3728 = vld [vmem:[%s57] sm:$0xff]
    %v3729 = vld [vmem:[%s57 + $0x8] sm:$0xff]
    %v3730 = vld [vmem:[%s57 + $0x10] sm:$0xff]
    %v3731 = vld [vmem:[%s57 + $0x18] sm:$0xff]
    %v3732 = vld [vmem:[%s57 + $0x20] sm:$0xff]
    %v3733 = vld [vmem:[%s57 + $0x28] sm:$0xff]
    %v3734 = vld [vmem:[%s57 + $0x30] sm:$0xff]
    %v3735 = vld [vmem:[%s57 + $0x38] sm:$0xff]
    %v3736 = vld [vmem:[%s57 + $0x40] sm:$0xff]
    %v3737 = vld [vmem:[%s57 + $0x48] sm:$0xff]
    %v3738 = vld [vmem:[%s57 + $0x50] sm:$0xff]
    %v3739 = vld [vmem:[%s57 + $0x58] sm:$0xff]
    %v3740 = vld [vmem:[%s57 + $0x60] sm:$0xff]
    %v3741 = vld [vmem:[%s57 + $0x68] sm:$0xff]
    %v3742 = vld [vmem:[%s57 + $0x70] sm:$0xff]
    %v3743 = vld [vmem:[%s57 + $0x78] sm:$0xff]
    %v3744 = vld [vmem:[%s57 + $0x80] sm:$0xff]
    %v3745 = vld [vmem:[%s57 + $0x88] sm:$0xff]
    %v3746 = vld [vmem:[%s57 + $0x90] sm:$0xff]
    %v3747 = vld [vmem:[%s57 + $0x98] sm:$0xff]
    %v3748 = vld [vmem:[%s57 + $0xa0] sm:$0xff]
    %v3749 = vld [vmem:[%s57 + $0xa8] sm:$0xff]
    %v3750 = vld [vmem:[%s57 + $0xb0] sm:$0xff]
    %v3751 = vld [vmem:[%s57 + $0xb8] sm:$0xff]
    %v3752 = vld [vmem:[%s57 + $0xc0] sm:$0xff]
    %v3753 = vld [vmem:[%s57 + $0xc8] sm:$0xff]
    %v3754 = vld [vmem:[%s57 + $0xd0] sm:$0xff]
    %v3755 = vld [vmem:[%s57 + $0xd8] sm:$0xff]
    %v3756 = vld [vmem:[%s57 + $0xe0] sm:$0xff]
    %v3757 = vld [vmem:[%s57 + $0xe8] sm:$0xff]
    %v3758 = vld [vmem:[%s57 + $0xf0] sm:$0xff]
    %v3759 = vld [vmem:[%s57 + $0xf8] sm:$0xff]
    %v3760 = vld [vmem:[%s59] sm:$0xff]
    %v3761 = vld [vmem:[%s59 + $0x8] sm:$0xff]
    %v3762 = vld [vmem:[%s61] sm:$0xf]
    %v3763 = vld [vmem:[%s61 + $0x4] sm:$0xf]
    %v3764 = vld [vmem:[%s61 + $0x8] sm:$0xf]
    %v3765 = vld [vmem:[%s61 + $0xc] sm:$0xf]
    %v3766 = vld [vmem:[%s61 + $0x10] sm:$0xf]
    %v3767 = vld [vmem:[%s61 + $0x14] sm:$0xf]
    %v3768 = vld [vmem:[%s61 + $0x18] sm:$0xf]
    %v3769 = vld [vmem:[%s61 + $0x1c] sm:$0xf]
    %v3770 = vld [vmem:[%s61 + $0x20] sm:$0xf]
    %v3771 = vld [vmem:[%s61 + $0x24] sm:$0xf]
    %v3772 = vld [vmem:[%s61 + $0x28] sm:$0xf]
    %v3773 = vld [vmem:[%s61 + $0x2c] sm:$0xf]
    %v3774 = vld [vmem:[%s61 + $0x30] sm:$0xf]
    %v3775 = vld [vmem:[%s61 + $0x34] sm:$0xf]
    %v3776 = vld [vmem:[%s61 + $0x38] sm:$0xf]
    %v3777 = vld [vmem:[%s61 + $0x3c] sm:$0xf]
    %v3778 = vld [vmem:[%s61 + $0x40] sm:$0xf]
    %v3779 = vld [vmem:[%s61 + $0x44] sm:$0xf]
    %v3780 = vld [vmem:[%s61 + $0x48] sm:$0xf]
    %v3781 = vld [vmem:[%s61 + $0x4c] sm:$0xf]
    %v3782 = vld [vmem:[%s61 + $0x50] sm:$0xf]
    %v3783 = vld [vmem:[%s61 + $0x54] sm:$0xf]
    %v3784 = vld [vmem:[%s61 + $0x58] sm:$0xf]
    %v3785 = vld [vmem:[%s61 + $0x5c] sm:$0xf]
    %v3786 = vld [vmem:[%s61 + $0x60] sm:$0xf]
    %v3787 = vld [vmem:[%s61 + $0x64] sm:$0xf]
    %v3788 = vld [vmem:[%s61 + $0x68] sm:$0xf]
    %v3789 = vld [vmem:[%s61 + $0x6c] sm:$0xf]
    %v3790 = vld [vmem:[%s61 + $0x70] sm:$0xf]
    %v3791 = vld [vmem:[%s61 + $0x74] sm:$0xf]
    %v3792 = vld [vmem:[%s61 + $0x78] sm:$0xf]
    %v3793 = vld [vmem:[%s61 + $0x7c] sm:$0xf]
    %v3794 = vld [vmem:[%s61 + $0x80] sm:$0xf]
    %v3795 = vld [vmem:[%s61 + $0x84] sm:$0xf]
    %v3796 = vld [vmem:[%s61 + $0x88] sm:$0xf]
    %v3797 = vld [vmem:[%s61 + $0x8c] sm:$0xf]
    %v3798 = vld [vmem:[%s61 + $0x90] sm:$0xf]
    %v3799 = vld [vmem:[%s61 + $0x94] sm:$0xf]
    %v3800 = vld [vmem:[%s61 + $0x98] sm:$0xf]
    %v3801 = vld [vmem:[%s61 + $0x9c] sm:$0xf]
    %v3802 = vld [vmem:[%s61 + $0xa0] sm:$0xf]
    %v3803 = vld [vmem:[%s61 + $0xa4] sm:$0xf]
    %v3804 = vld [vmem:[%s61 + $0xa8] sm:$0xf]
    %v3805 = vld [vmem:[%s61 + $0xac] sm:$0xf]
    %v3806 = vld [vmem:[%s61 + $0xb0] sm:$0xf]
    %v3807 = vld [vmem:[%s61 + $0xb4] sm:$0xf]
    %v3808 = vld [vmem:[%s61 + $0xb8] sm:$0xf]
    %v3809 = vld [vmem:[%s61 + $0xbc] sm:$0xf]
    %v3810 = vld [vmem:[%s61 + $0xc0] sm:$0xf]
    %v3811 = vld [vmem:[%s61 + $0xc4] sm:$0xf]
    %v3812 = vld [vmem:[%s61 + $0xc8] sm:$0xf]
    %v3813 = vld [vmem:[%s61 + $0xcc] sm:$0xf]
    %v3814 = vld [vmem:[%s61 + $0xd0] sm:$0xf]
    %v3815 = vld [vmem:[%s61 + $0xd4] sm:$0xf]
    %v3816 = vld [vmem:[%s61 + $0xd8] sm:$0xf]
    %v3817 = vld [vmem:[%s61 + $0xdc] sm:$0xf]
    %v3818 = vld [vmem:[%s61 + $0xe0] sm:$0xf]
    %v3819 = vld [vmem:[%s61 + $0xe4] sm:$0xf]
    %v3820 = vld [vmem:[%s61 + $0xe8] sm:$0xf]
    %v3821 = vld [vmem:[%s61 + $0xec] sm:$0xf]
    %v3822 = vld [vmem:[%s61 + $0xf0] sm:$0xf]
    %v3823 = vld [vmem:[%s61 + $0xf4] sm:$0xf]
    %v3824 = vld [vmem:[%s61 + $0xf8] sm:$0xf]
    %v3825 = vld [vmem:[%s61 + $0xfc] sm:$0xf]
    %v3826 = vld [vmem:[%s61 + $0x100] sm:$0xf]
    %v3827 = vld [vmem:[%s61 + $0x104] sm:$0xf]
    %v3828 = vld [vmem:[%s61 + $0x108] sm:$0xf]
    %v3829 = vld [vmem:[%s61 + $0x10c] sm:$0xf]
    %v3830 = vld [vmem:[%s61 + $0x110] sm:$0xf]
    %v3831 = vld [vmem:[%s61 + $0x114] sm:$0xf]
    %v3832 = vld [vmem:[%s61 + $0x118] sm:$0xf]
    %v3833 = vld [vmem:[%s61 + $0x11c] sm:$0xf]
    %v3834 = vld [vmem:[%s61 + $0x120] sm:$0xf]
    %v3835 = vld [vmem:[%s61 + $0x124] sm:$0xf]
    %v3836 = vld [vmem:[%s61 + $0x128] sm:$0xf]
    %v3837 = vld [vmem:[%s61 + $0x12c] sm:$0xf]
    %v3838 = vld [vmem:[%s61 + $0x130] sm:$0xf]
    %v3839 = vld [vmem:[%s61 + $0x134] sm:$0xf]
    %v3840 = vld [vmem:[%s61 + $0x138] sm:$0xf]
    %v3841 = vld [vmem:[%s61 + $0x13c] sm:$0xf]
    %v3842 = vld [vmem:[%s61 + $0x140] sm:$0xf]
    %v3843 = vld [vmem:[%s61 + $0x144] sm:$0xf]
    %v3844 = vld [vmem:[%s61 + $0x148] sm:$0xf]
    %v3845 = vld [vmem:[%s61 + $0x14c] sm:$0xf]
    %v3846 = vld [vmem:[%s61 + $0x150] sm:$0xf]
    %v3847 = vld [vmem:[%s61 + $0x154] sm:$0xf]
    %v3848 = vld [vmem:[%s61 + $0x158] sm:$0xf]
    %v3849 = vld [vmem:[%s61 + $0x15c] sm:$0xf]
    %v3850 = vld [vmem:[%s61 + $0x160] sm:$0xf]
    %v3851 = vld [vmem:[%s61 + $0x164] sm:$0xf]
    %v3852 = vld [vmem:[%s61 + $0x168] sm:$0xf]
    %v3853 = vld [vmem:[%s61 + $0x16c] sm:$0xf]
    %v3854 = vld [vmem:[%s61 + $0x170] sm:$0xf]
    %v3855 = vld [vmem:[%s61 + $0x174] sm:$0xf]
    %v3856 = vld [vmem:[%s61 + $0x178] sm:$0xf]
    %v3857 = vld [vmem:[%s61 + $0x17c] sm:$0xf]
    %v3858 = vld [vmem:[%s61 + $0x180] sm:$0xf]
    %v3859 = vld [vmem:[%s61 + $0x184] sm:$0xf]
    %v3860 = vld [vmem:[%s61 + $0x188] sm:$0xf]
    %v3861 = vld [vmem:[%s61 + $0x18c] sm:$0xf]
    %v3862 = vld [vmem:[%s61 + $0x190] sm:$0xf]
    %v3863 = vld [vmem:[%s61 + $0x194] sm:$0xf]
    %v3864 = vld [vmem:[%s61 + $0x198] sm:$0xf]
    %v3865 = vld [vmem:[%s61 + $0x19c] sm:$0xf]
    %v3866 = vld [vmem:[%s61 + $0x1a0] sm:$0xf]
    %v3867 = vld [vmem:[%s61 + $0x1a4] sm:$0xf]
    %v3868 = vld [vmem:[%s61 + $0x1a8] sm:$0xf]
    %v3869 = vld [vmem:[%s61 + $0x1ac] sm:$0xf]
    %v3870 = vld [vmem:[%s61 + $0x1b0] sm:$0xf]
    %v3871 = vld [vmem:[%s61 + $0x1b4] sm:$0xf]
    %v3872 = vld [vmem:[%s61 + $0x1b8] sm:$0xf]
    %v3873 = vld [vmem:[%s61 + $0x1bc] sm:$0xf]
    %v3874 = vld [vmem:[%s61 + $0x1c0] sm:$0xf]
    %v3875 = vld [vmem:[%s61 + $0x1c4] sm:$0xf]
    %v3876 = vld [vmem:[%s61 + $0x1c8] sm:$0xf]
    %v3877 = vld [vmem:[%s61 + $0x1cc] sm:$0xf]
    %v3878 = vld [vmem:[%s61 + $0x1d0] sm:$0xf]
    %v3879 = vld [vmem:[%s61 + $0x1d4] sm:$0xf]
    %v3880 = vld [vmem:[%s61 + $0x1d8] sm:$0xf]
    %v3881 = vld [vmem:[%s61 + $0x1dc] sm:$0xf]
    %v3882 = vld [vmem:[%s61 + $0x1e0] sm:$0xf]
    %v3883 = vld [vmem:[%s61 + $0x1e4] sm:$0xf]
    %v3884 = vld [vmem:[%s61 + $0x1e8] sm:$0xf]
    %v3885 = vld [vmem:[%s61 + $0x1ec] sm:$0xf]
    %v3886 = vld [vmem:[%s61 + $0x1f0] sm:$0xf]
    %v3887 = vld [vmem:[%s61 + $0x1f4] sm:$0xf]
    %v3888 = vld [vmem:[%s61 + $0x1f8] sm:$0xf]
    %v3889 = vld [vmem:[%s61 + $0x1fc] sm:$0xf]
    %v3890 = vld [vmem:[%s61 + $0x200] sm:$0xf]
    %v3891 = vld [vmem:[%s61 + $0x204] sm:$0xf]
    %v3892 = vld [vmem:[%s61 + $0x208] sm:$0xf]
    %v3893 = vld [vmem:[%s61 + $0x20c] sm:$0xf]
    %v3894 = vld [vmem:[%s61 + $0x210] sm:$0xf]
    %v3895 = vld [vmem:[%s61 + $0x214] sm:$0xf]
    %v3896 = vld [vmem:[%s61 + $0x218] sm:$0xf]
    %v3897 = vld [vmem:[%s61 + $0x21c] sm:$0xf]
    %v3898 = vld [vmem:[%s61 + $0x220] sm:$0xf]
    %v3899 = vld [vmem:[%s61 + $0x224] sm:$0xf]
    %v3900 = vld [vmem:[%s61 + $0x228] sm:$0xf]
    %v3901 = vld [vmem:[%s61 + $0x22c] sm:$0xf]
    %v3902 = vld [vmem:[%s61 + $0x230] sm:$0xf]
    %v3903 = vld [vmem:[%s61 + $0x234] sm:$0xf]
    %v3904 = vld [vmem:[%s61 + $0x238] sm:$0xf]
    %v3905 = vld [vmem:[%s61 + $0x23c] sm:$0xf]
    %v3906 = vld [vmem:[%s61 + $0x240] sm:$0xf]
    %v3907 = vld [vmem:[%s61 + $0x244] sm:$0xf]
    %v3908 = vld [vmem:[%s61 + $0x248] sm:$0xf]
    %v3909 = vld [vmem:[%s61 + $0x24c] sm:$0xf]
    %v3910 = vld [vmem:[%s61 + $0x250] sm:$0xf]
    %v3911 = vld [vmem:[%s61 + $0x254] sm:$0xf]
    %v3912 = vld [vmem:[%s61 + $0x258] sm:$0xf]
    %v3913 = vld [vmem:[%s61 + $0x25c] sm:$0xf]
    %v3914 = vld [vmem:[%s61 + $0x260] sm:$0xf]
    %v3915 = vld [vmem:[%s61 + $0x264] sm:$0xf]
    %v3916 = vld [vmem:[%s61 + $0x268] sm:$0xf]
    %v3917 = vld [vmem:[%s61 + $0x26c] sm:$0xf]
    %v3918 = vld [vmem:[%s61 + $0x270] sm:$0xf]
    %v3919 = vld [vmem:[%s61 + $0x274] sm:$0xf]
    %v3920 = vld [vmem:[%s61 + $0x278] sm:$0xf]
    %v3921 = vld [vmem:[%s61 + $0x27c] sm:$0xf]
    %v3922 = vld [vmem:[%s61 + $0x280] sm:$0xf]
    %v3923 = vld [vmem:[%s61 + $0x284] sm:$0xf]
    %v3924 = vld [vmem:[%s61 + $0x288] sm:$0xf]
    %v3925 = vld [vmem:[%s61 + $0x28c] sm:$0xf]
    %v3926 = vld [vmem:[%s61 + $0x290] sm:$0xf]
    %v3927 = vld [vmem:[%s61 + $0x294] sm:$0xf]
    %v3928 = vld [vmem:[%s61 + $0x298] sm:$0xf]
    %v3929 = vld [vmem:[%s61 + $0x29c] sm:$0xf]
    %v3930 = vld [vmem:[%s61 + $0x2a0] sm:$0xf]
    %v3931 = vld [vmem:[%s61 + $0x2a4] sm:$0xf]
    %v3932 = vld [vmem:[%s61 + $0x2a8] sm:$0xf]
    %v3933 = vld [vmem:[%s61 + $0x2ac] sm:$0xf]
    %v3934 = vld [vmem:[%s61 + $0x2b0] sm:$0xf]
    %v3935 = vld [vmem:[%s61 + $0x2b4] sm:$0xf]
    %v3936 = vld [vmem:[%s61 + $0x2b8] sm:$0xf]
    %v3937 = vld [vmem:[%s61 + $0x2bc] sm:$0xf]
    %v3938 = vld [vmem:[%s61 + $0x2c0] sm:$0xf]
    %v3939 = vld [vmem:[%s61 + $0x2c4] sm:$0xf]
    %v3940 = vld [vmem:[%s61 + $0x2c8] sm:$0xf]
    %v3941 = vld [vmem:[%s61 + $0x2cc] sm:$0xf]
    %v3942 = vld [vmem:[%s61 + $0x2d0] sm:$0xf]
    %v3943 = vld [vmem:[%s61 + $0x2d4] sm:$0xf]
    %v3944 = vld [vmem:[%s61 + $0x2d8] sm:$0xf]
    %v3945 = vld [vmem:[%s61 + $0x2dc] sm:$0xf]
    %v3946 = vld [vmem:[%s61 + $0x2e0] sm:$0xf]
    %v3947 = vld [vmem:[%s61 + $0x2e4] sm:$0xf]
    %v3948 = vld [vmem:[%s61 + $0x2e8] sm:$0xf]
    %v3949 = vld [vmem:[%s61 + $0x2ec] sm:$0xf]
    %v3950 = vld [vmem:[%s61 + $0x2f0] sm:$0xf]
    %v3951 = vld [vmem:[%s61 + $0x2f4] sm:$0xf]
    %v3952 = vld [vmem:[%s61 + $0x2f8] sm:$0xf]
    %v3953 = vld [vmem:[%s61 + $0x2fc] sm:$0xf]
    %v3954 = vld [vmem:[%s61 + $0x300] sm:$0xf]
    %v3955 = vld [vmem:[%s61 + $0x304] sm:$0xf]
    %v3956 = vld [vmem:[%s61 + $0x308] sm:$0xf]
    %v3957 = vld [vmem:[%s61 + $0x30c] sm:$0xf]
    %v3958 = vld [vmem:[%s61 + $0x310] sm:$0xf]
    %v3959 = vld [vmem:[%s61 + $0x314] sm:$0xf]
    %v3960 = vld [vmem:[%s61 + $0x318] sm:$0xf]
    %v3961 = vld [vmem:[%s61 + $0x31c] sm:$0xf]
    %v3962 = vld [vmem:[%s61 + $0x320] sm:$0xf]
    %v3963 = vld [vmem:[%s61 + $0x324] sm:$0xf]
    %v3964 = vld [vmem:[%s61 + $0x328] sm:$0xf]
    %v3965 = vld [vmem:[%s61 + $0x32c] sm:$0xf]
    %v3966 = vld [vmem:[%s61 + $0x330] sm:$0xf]
    %v3967 = vld [vmem:[%s61 + $0x334] sm:$0xf]
    %v3968 = vld [vmem:[%s61 + $0x338] sm:$0xf]
    %v3969 = vld [vmem:[%s61 + $0x33c] sm:$0xf]
    %v3970 = vld [vmem:[%s61 + $0x340] sm:$0xf]
    %v3971 = vld [vmem:[%s61 + $0x344] sm:$0xf]
    %v3972 = vld [vmem:[%s61 + $0x348] sm:$0xf]
    %v3973 = vld [vmem:[%s61 + $0x34c] sm:$0xf]
    %v3974 = vld [vmem:[%s61 + $0x350] sm:$0xf]
    %v3975 = vld [vmem:[%s61 + $0x354] sm:$0xf]
    %v3976 = vld [vmem:[%s61 + $0x358] sm:$0xf]
    %v3977 = vld [vmem:[%s61 + $0x35c] sm:$0xf]
    %v3978 = vld [vmem:[%s61 + $0x360] sm:$0xf]
    %v3979 = vld [vmem:[%s61 + $0x364] sm:$0xf]
    %v3980 = vld [vmem:[%s61 + $0x368] sm:$0xf]
    %v3981 = vld [vmem:[%s61 + $0x36c] sm:$0xf]
    %v3982 = vld [vmem:[%s61 + $0x370] sm:$0xf]
    %v3983 = vld [vmem:[%s61 + $0x374] sm:$0xf]
    %v3984 = vld [vmem:[%s61 + $0x378] sm:$0xf]
    %v3985 = vld [vmem:[%s61 + $0x37c] sm:$0xf]
    %v3986 = vld [vmem:[%s61 + $0x380] sm:$0xf]
    %v3987 = vld [vmem:[%s61 + $0x384] sm:$0xf]
    %v3988 = vld [vmem:[%s61 + $0x388] sm:$0xf]
    %v3989 = vld [vmem:[%s61 + $0x38c] sm:$0xf]
    %v3990 = vld [vmem:[%s61 + $0x390] sm:$0xf]
    %v3991 = vld [vmem:[%s61 + $0x394] sm:$0xf]
    %v3992 = vld [vmem:[%s61 + $0x398] sm:$0xf]
    %v3993 = vld [vmem:[%s61 + $0x39c] sm:$0xf]
    %v3994 = vld [vmem:[%s61 + $0x3a0] sm:$0xf]
    %v3995 = vld [vmem:[%s61 + $0x3a4] sm:$0xf]
    %v3996 = vld [vmem:[%s61 + $0x3a8] sm:$0xf]
    %v3997 = vld [vmem:[%s61 + $0x3ac] sm:$0xf]
    %v3998 = vld [vmem:[%s61 + $0x3b0] sm:$0xf]
    %v3999 = vld [vmem:[%s61 + $0x3b4] sm:$0xf]
    %v4000 = vld [vmem:[%s61 + $0x3b8] sm:$0xf]
    %v4001 = vld [vmem:[%s61 + $0x3bc] sm:$0xf]
    %v4002 = vld [vmem:[%s61 + $0x3c0] sm:$0xf]
    %v4003 = vld [vmem:[%s61 + $0x3c4] sm:$0xf]
    %v4004 = vld [vmem:[%s61 + $0x3c8] sm:$0xf]
    %v4005 = vld [vmem:[%s61 + $0x3cc] sm:$0xf]
    %v4006 = vld [vmem:[%s61 + $0x3d0] sm:$0xf]
    %v4007 = vld [vmem:[%s61 + $0x3d4] sm:$0xf]
    %v4008 = vld [vmem:[%s61 + $0x3d8] sm:$0xf]
    %v4009 = vld [vmem:[%s61 + $0x3dc] sm:$0xf]
    %v4010 = vld [vmem:[%s61 + $0x3e0] sm:$0xf]
    %v4011 = vld [vmem:[%s61 + $0x3e4] sm:$0xf]
    %v4012 = vld [vmem:[%s61 + $0x3e8] sm:$0xf]
    %v4013 = vld [vmem:[%s61 + $0x3ec] sm:$0xf]
    %v4014 = vld [vmem:[%s61 + $0x3f0] sm:$0xf]
    %v4015 = vld [vmem:[%s61 + $0x3f4] sm:$0xf]
    %v4016 = vld [vmem:[%s61 + $0x3f8] sm:$0xf]
    %v4017 = vld [vmem:[%s61 + $0x3fc] sm:$0xf]
    %v4018 = vld [vmem:[%s63] sm:$0x1]
    %v4019 = vld [vmem:[%s65] sm:$0x1]
    %v4020 = vld [vmem:[%s67] sm:$0x1]
    %v4021 = vunpack.c.l.bf16 %v3728
    %v4022 = vunpack.c.h.bf16 %v3728
    %v4023 = vunpack.c.l.bf16 %v3729
    %v4024 = vunpack.c.h.bf16 %v3729
    %v4025 = vunpack.c.l.bf16 %v3730
    %v4026 = vunpack.c.h.bf16 %v3730
    %v4027 = vunpack.c.l.bf16 %v3731
    %v4028 = vunpack.c.h.bf16 %v3731
    %v4029 = vunpack.c.l.bf16 %v3732
    %v4030 = vunpack.c.h.bf16 %v3732
    %v4031 = vunpack.c.l.bf16 %v3733
    %v4032 = vunpack.c.h.bf16 %v3733
    %v4033 = vunpack.c.l.bf16 %v3734
    %v4034 = vunpack.c.h.bf16 %v3734
    %v4035 = vunpack.c.l.bf16 %v3735
    %v4036 = vunpack.c.h.bf16 %v3735
    %v4037 = vunpack.c.l.bf16 %v3736
    %v4038 = vunpack.c.h.bf16 %v3736
    %v4039 = vunpack.c.l.bf16 %v3737
    %v4040 = vunpack.c.h.bf16 %v3737
    %v4041 = vunpack.c.l.bf16 %v3738
    %v4042 = vunpack.c.h.bf16 %v3738
    %v4043 = vunpack.c.l.bf16 %v3739
    %v4044 = vunpack.c.h.bf16 %v3739
    %v4045 = vunpack.c.l.bf16 %v3740
    %v4046 = vunpack.c.h.bf16 %v3740
    %v4047 = vunpack.c.l.bf16 %v3741
    %v4048 = vunpack.c.h.bf16 %v3741
    %v4049 = vunpack.c.l.bf16 %v3742
    %v4050 = vunpack.c.h.bf16 %v3742
    %v4051 = vunpack.c.l.bf16 %v3743
    %v4052 = vunpack.c.h.bf16 %v3743
    %v4053 = vunpack.c.l.bf16 %v3744
    %v4054 = vunpack.c.h.bf16 %v3744
    %v4055 = vunpack.c.l.bf16 %v3745
    %v4056 = vunpack.c.h.bf16 %v3745
    %v4057 = vunpack.c.l.bf16 %v3746
    %v4058 = vunpack.c.h.bf16 %v3746
    %v4059 = vunpack.c.l.bf16 %v3747
    %v4060 = vunpack.c.h.bf16 %v3747
    %v4061 = vunpack.c.l.bf16 %v3748
    %v4062 = vunpack.c.h.bf16 %v3748
    %v4063 = vunpack.c.l.bf16 %v3749
    %v4064 = vunpack.c.h.bf16 %v3749
    %v4065 = vunpack.c.l.bf16 %v3750
    %v4066 = vunpack.c.h.bf16 %v3750
    %v4067 = vunpack.c.l.bf16 %v3751
    %v4068 = vunpack.c.h.bf16 %v3751
    %v4069 = vunpack.c.l.bf16 %v3752
    %v4070 = vunpack.c.h.bf16 %v3752
    %v4071 = vunpack.c.l.bf16 %v3753
    %v4072 = vunpack.c.h.bf16 %v3753
    %v4073 = vunpack.c.l.bf16 %v3754
    %v4074 = vunpack.c.h.bf16 %v3754
    %v4075 = vunpack.c.l.bf16 %v3755
    %v4076 = vunpack.c.h.bf16 %v3755
    %v4077 = vunpack.c.l.bf16 %v3756
    %v4078 = vunpack.c.h.bf16 %v3756
    %v4079 = vunpack.c.l.bf16 %v3757
    %v4080 = vunpack.c.h.bf16 %v3757
    %v4081 = vunpack.c.l.bf16 %v3758
    %v4082 = vunpack.c.h.bf16 %v3758
    %v4083 = vunpack.c.l.bf16 %v3759
    %v4084 = vunpack.c.h.bf16 %v3759
    %v4085 = vunpack.c.l.bf16 %v3762
    %v4086 = vunpack.c.l.bf16 %v3763
    %v4087 = vunpack.c.l.bf16 %v3764
    %v4088 = vunpack.c.l.bf16 %v3765
    %v4089 = vunpack.c.l.bf16 %v3766
    %v4090 = vunpack.c.l.bf16 %v3767
    %v4091 = vunpack.c.l.bf16 %v3768
    %v4092 = vunpack.c.l.bf16 %v3769
    %v4093 = vunpack.c.l.bf16 %v3770
    %v4094 = vunpack.c.l.bf16 %v3771
    %v4095 = vunpack.c.l.bf16 %v3772
    %v4096 = vunpack.c.l.bf16 %v3773
    %v4097 = vunpack.c.l.bf16 %v3774
    %v4098 = vunpack.c.l.bf16 %v3775
    %v4099 = vunpack.c.l.bf16 %v3776
    %v4100 = vunpack.c.l.bf16 %v3777
    %v4101 = vunpack.c.l.bf16 %v3778
    %v4102 = vunpack.c.l.bf16 %v3779
    %v4103 = vunpack.c.l.bf16 %v3780
    %v4104 = vunpack.c.l.bf16 %v3781
    %v4105 = vunpack.c.l.bf16 %v3782
    %v4106 = vunpack.c.l.bf16 %v3783
    %v4107 = vunpack.c.l.bf16 %v3784
    %v4108 = vunpack.c.l.bf16 %v3785
    %v4109 = vunpack.c.l.bf16 %v3786
    %v4110 = vunpack.c.l.bf16 %v3787
    %v4111 = vunpack.c.l.bf16 %v3788
    %v4112 = vunpack.c.l.bf16 %v3789
    %v4113 = vunpack.c.l.bf16 %v3790
    %v4114 = vunpack.c.l.bf16 %v3791
    %v4115 = vunpack.c.l.bf16 %v3792
    %v4116 = vunpack.c.l.bf16 %v3793
    %v4117 = vunpack.c.l.bf16 %v3794
    %v4118 = vunpack.c.l.bf16 %v3795
    %v4119 = vunpack.c.l.bf16 %v3796
    %v4120 = vunpack.c.l.bf16 %v3797
    %v4121 = vunpack.c.l.bf16 %v3798
    %v4122 = vunpack.c.l.bf16 %v3799
    %v4123 = vunpack.c.l.bf16 %v3800
    %v4124 = vunpack.c.l.bf16 %v3801
    %v4125 = vunpack.c.l.bf16 %v3802
    %v4126 = vunpack.c.l.bf16 %v3803
    %v4127 = vunpack.c.l.bf16 %v3804
    %v4128 = vunpack.c.l.bf16 %v3805
    %v4129 = vunpack.c.l.bf16 %v3806
    %v4130 = vunpack.c.l.bf16 %v3807
    %v4131 = vunpack.c.l.bf16 %v3808
    %v4132 = vunpack.c.l.bf16 %v3809
    %v4133 = vunpack.c.l.bf16 %v3810
    %v4134 = vunpack.c.l.bf16 %v3811
    %v4135 = vunpack.c.l.bf16 %v3812
    %v4136 = vunpack.c.l.bf16 %v3813
    %v4137 = vunpack.c.l.bf16 %v3814
    %v4138 = vunpack.c.l.bf16 %v3815
    %v4139 = vunpack.c.l.bf16 %v3816
    %v4140 = vunpack.c.l.bf16 %v3817
    %v4141 = vunpack.c.l.bf16 %v3818
    %v4142 = vunpack.c.l.bf16 %v3819
    %v4143 = vunpack.c.l.bf16 %v3820
    %v4144 = vunpack.c.l.bf16 %v3821
    %v4145 = vunpack.c.l.bf16 %v3822
    %v4146 = vunpack.c.l.bf16 %v3823
    %v4147 = vunpack.c.l.bf16 %v3824
    %v4148 = vunpack.c.l.bf16 %v3825
    %v4149 = vunpack.c.l.bf16 %v3826
    %v4150 = vunpack.c.l.bf16 %v3827
    %v4151 = vunpack.c.l.bf16 %v3828
    %v4152 = vunpack.c.l.bf16 %v3829
    %v4153 = vunpack.c.l.bf16 %v3830
    %v4154 = vunpack.c.l.bf16 %v3831
    %v4155 = vunpack.c.l.bf16 %v3832
    %v4156 = vunpack.c.l.bf16 %v3833
    %v4157 = vunpack.c.l.bf16 %v3834
    %v4158 = vunpack.c.l.bf16 %v3835
    %v4159 = vunpack.c.l.bf16 %v3836
    %v4160 = vunpack.c.l.bf16 %v3837
    %v4161 = vunpack.c.l.bf16 %v3838
    %v4162 = vunpack.c.l.bf16 %v3839
    %v4163 = vunpack.c.l.bf16 %v3840
    %v4164 = vunpack.c.l.bf16 %v3841
    %v4165 = vunpack.c.l.bf16 %v3842
    %v4166 = vunpack.c.l.bf16 %v3843
    %v4167 = vunpack.c.l.bf16 %v3844
    %v4168 = vunpack.c.l.bf16 %v3845
    %v4169 = vunpack.c.l.bf16 %v3846
    %v4170 = vunpack.c.l.bf16 %v3847
    %v4171 = vunpack.c.l.bf16 %v3848
    %v4172 = vunpack.c.l.bf16 %v3849
    %v4173 = vunpack.c.l.bf16 %v3850
    %v4174 = vunpack.c.l.bf16 %v3851
    %v4175 = vunpack.c.l.bf16 %v3852
    %v4176 = vunpack.c.l.bf16 %v3853
    %v4177 = vunpack.c.l.bf16 %v3854
    %v4178 = vunpack.c.l.bf16 %v3855
    %v4179 = vunpack.c.l.bf16 %v3856
    %v4180 = vunpack.c.l.bf16 %v3857
    %v4181 = vunpack.c.l.bf16 %v3858
    %v4182 = vunpack.c.l.bf16 %v3859
    %v4183 = vunpack.c.l.bf16 %v3860
    %v4184 = vunpack.c.l.bf16 %v3861
    %v4185 = vunpack.c.l.bf16 %v3862
    %v4186 = vunpack.c.l.bf16 %v3863
    %v4187 = vunpack.c.l.bf16 %v3864
    %v4188 = vunpack.c.l.bf16 %v3865
    %v4189 = vunpack.c.l.bf16 %v3866
    %v4190 = vunpack.c.l.bf16 %v3867
    %v4191 = vunpack.c.l.bf16 %v3868
    %v4192 = vunpack.c.l.bf16 %v3869
    %v4193 = vunpack.c.l.bf16 %v3870
    %v4194 = vunpack.c.l.bf16 %v3871
    %v4195 = vunpack.c.l.bf16 %v3872
    %v4196 = vunpack.c.l.bf16 %v3873
    %v4197 = vunpack.c.l.bf16 %v3874
    %v4198 = vunpack.c.l.bf16 %v3875
    %v4199 = vunpack.c.l.bf16 %v3876
    %v4200 = vunpack.c.l.bf16 %v3877
    %v4201 = vunpack.c.l.bf16 %v3878
    %v4202 = vunpack.c.l.bf16 %v3879
    %v4203 = vunpack.c.l.bf16 %v3880
    %v4204 = vunpack.c.l.bf16 %v3881
    %v4205 = vunpack.c.l.bf16 %v3882
    %v4206 = vunpack.c.l.bf16 %v3883
    %v4207 = vunpack.c.l.bf16 %v3884
    %v4208 = vunpack.c.l.bf16 %v3885
    %v4209 = vunpack.c.l.bf16 %v3886
    %v4210 = vunpack.c.l.bf16 %v3887
    %v4211 = vunpack.c.l.bf16 %v3888
    %v4212 = vunpack.c.l.bf16 %v3889
    %v4213 = vunpack.c.l.bf16 %v3890
    %v4214 = vunpack.c.l.bf16 %v3891
    %v4215 = vunpack.c.l.bf16 %v3892
    %v4216 = vunpack.c.l.bf16 %v3893
    %v4217 = vunpack.c.l.bf16 %v3894
    %v4218 = vunpack.c.l.bf16 %v3895
    %v4219 = vunpack.c.l.bf16 %v3896
    %v4220 = vunpack.c.l.bf16 %v3897
    %v4221 = vunpack.c.l.bf16 %v3898
    %v4222 = vunpack.c.l.bf16 %v3899
    %v4223 = vunpack.c.l.bf16 %v3900
    %v4224 = vunpack.c.l.bf16 %v3901
    %v4225 = vunpack.c.l.bf16 %v3902
    %v4226 = vunpack.c.l.bf16 %v3903
    %v4227 = vunpack.c.l.bf16 %v3904
    %v4228 = vunpack.c.l.bf16 %v3905
    %v4229 = vunpack.c.l.bf16 %v3906
    %v4230 = vunpack.c.l.bf16 %v3907
    %v4231 = vunpack.c.l.bf16 %v3908
    %v4232 = vunpack.c.l.bf16 %v3909
    %v4233 = vunpack.c.l.bf16 %v3910
    %v4234 = vunpack.c.l.bf16 %v3911
    %v4235 = vunpack.c.l.bf16 %v3912
    %v4236 = vunpack.c.l.bf16 %v3913
    %v4237 = vunpack.c.l.bf16 %v3914
    %v4238 = vunpack.c.l.bf16 %v3915
    %v4239 = vunpack.c.l.bf16 %v3916
    %v4240 = vunpack.c.l.bf16 %v3917
    %v4241 = vunpack.c.l.bf16 %v3918
    %v4242 = vunpack.c.l.bf16 %v3919
    %v4243 = vunpack.c.l.bf16 %v3920
    %v4244 = vunpack.c.l.bf16 %v3921
    %v4245 = vunpack.c.l.bf16 %v3922
    %v4246 = vunpack.c.l.bf16 %v3923
    %v4247 = vunpack.c.l.bf16 %v3924
    %v4248 = vunpack.c.l.bf16 %v3925
    %v4249 = vunpack.c.l.bf16 %v3926
    %v4250 = vunpack.c.l.bf16 %v3927
    %v4251 = vunpack.c.l.bf16 %v3928
    %v4252 = vunpack.c.l.bf16 %v3929
    %v4253 = vunpack.c.l.bf16 %v3930
    %v4254 = vunpack.c.l.bf16 %v3931
    %v4255 = vunpack.c.l.bf16 %v3932
    %v4256 = vunpack.c.l.bf16 %v3933
    %v4257 = vunpack.c.l.bf16 %v3934
    %v4258 = vunpack.c.l.bf16 %v3935
    %v4259 = vunpack.c.l.bf16 %v3936
    %v4260 = vunpack.c.l.bf16 %v3937
    %v4261 = vunpack.c.l.bf16 %v3938
    %v4262 = vunpack.c.l.bf16 %v3939
    %v4263 = vunpack.c.l.bf16 %v3940
    %v4264 = vunpack.c.l.bf16 %v3941
    %v4265 = vunpack.c.l.bf16 %v3942
    %v4266 = vunpack.c.l.bf16 %v3943
    %v4267 = vunpack.c.l.bf16 %v3944
    %v4268 = vunpack.c.l.bf16 %v3945
    %v4269 = vunpack.c.l.bf16 %v3946
    %v4270 = vunpack.c.l.bf16 %v3947
    %v4271 = vunpack.c.l.bf16 %v3948
    %v4272 = vunpack.c.l.bf16 %v3949
    %v4273 = vunpack.c.l.bf16 %v3950
    %v4274 = vunpack.c.l.bf16 %v3951
    %v4275 = vunpack.c.l.bf16 %v3952
    %v4276 = vunpack.c.l.bf16 %v3953
    %v4277 = vunpack.c.l.bf16 %v3954
    %v4278 = vunpack.c.l.bf16 %v3955
    %v4279 = vunpack.c.l.bf16 %v3956
    %v4280 = vunpack.c.l.bf16 %v3957
    %v4281 = vunpack.c.l.bf16 %v3958
    %v4282 = vunpack.c.l.bf16 %v3959
    %v4283 = vunpack.c.l.bf16 %v3960
    %v4284 = vunpack.c.l.bf16 %v3961
    %v4285 = vunpack.c.l.bf16 %v3962
    %v4286 = vunpack.c.l.bf16 %v3963
    %v4287 = vunpack.c.l.bf16 %v3964
    %v4288 = vunpack.c.l.bf16 %v3965
    %v4289 = vunpack.c.l.bf16 %v3966
    %v4290 = vunpack.c.l.bf16 %v3967
    %v4291 = vunpack.c.l.bf16 %v3968
    %v4292 = vunpack.c.l.bf16 %v3969
    %v4293 = vunpack.c.l.bf16 %v3970
    %v4294 = vunpack.c.l.bf16 %v3971
    %v4295 = vunpack.c.l.bf16 %v3972
    %v4296 = vunpack.c.l.bf16 %v3973
    %v4297 = vunpack.c.l.bf16 %v3974
    %v4298 = vunpack.c.l.bf16 %v3975
    %v4299 = vunpack.c.l.bf16 %v3976
    %v4300 = vunpack.c.l.bf16 %v3977
    %v4301 = vunpack.c.l.bf16 %v3978
    %v4302 = vunpack.c.l.bf16 %v3979
    %v4303 = vunpack.c.l.bf16 %v3980
    %v4304 = vunpack.c.l.bf16 %v3981
    %v4305 = vunpack.c.l.bf16 %v3982
    %v4306 = vunpack.c.l.bf16 %v3983
    %v4307 = vunpack.c.l.bf16 %v3984
    %v4308 = vunpack.c.l.bf16 %v3985
    %v4309 = vunpack.c.l.bf16 %v3986
    %v4310 = vunpack.c.l.bf16 %v3987
    %v4311 = vunpack.c.l.bf16 %v3988
    %v4312 = vunpack.c.l.bf16 %v3989
    %v4313 = vunpack.c.l.bf16 %v3990
    %v4314 = vunpack.c.l.bf16 %v3991
    %v4315 = vunpack.c.l.bf16 %v3992
    %v4316 = vunpack.c.l.bf16 %v3993
    %v4317 = vunpack.c.l.bf16 %v3994
    %v4318 = vunpack.c.l.bf16 %v3995
    %v4319 = vunpack.c.l.bf16 %v3996
    %v4320 = vunpack.c.l.bf16 %v3997
    %v4321 = vunpack.c.l.bf16 %v3998
    %v4322 = vunpack.c.l.bf16 %v3999
    %v4323 = vunpack.c.l.bf16 %v4000
    %v4324 = vunpack.c.l.bf16 %v4001
    %v4325 = vunpack.c.l.bf16 %v4002
    %v4326 = vunpack.c.l.bf16 %v4003
    %v4327 = vunpack.c.l.bf16 %v4004
    %v4328 = vunpack.c.l.bf16 %v4005
    %v4329 = vunpack.c.l.bf16 %v4006
    %v4330 = vunpack.c.l.bf16 %v4007
    %v4331 = vunpack.c.l.bf16 %v4008
    %v4332 = vunpack.c.l.bf16 %v4009
    %v4333 = vunpack.c.l.bf16 %v4010
    %v4334 = vunpack.c.l.bf16 %v4011
    %v4335 = vunpack.c.l.bf16 %v4012
    %v4336 = vunpack.c.l.bf16 %v4013
    %v4337 = vunpack.c.l.bf16 %v4014
    %v4338 = vunpack.c.l.bf16 %v4015
    %v4339 = vunpack.c.l.bf16 %v4016
    %v4340 = vunpack.c.l.bf16 %v4017
    %v4342 = vlaneseq
    %v4343 = vshrl.u32 %v4342, 7
    %v4344 = vsub.s32 0, %v4343
    %v4345 = vrot.slane %v3710, %v4344
    %v4348 = vsel %vm854, %v3703, 0
    %v4351 = vsel %vm854, %v3704, 0
    %v4354 = vsel %vm854, %v3705, 0
    %4356 = vmatprep.subr.mxu0 0.0
    %4357 = vmatpush1.msra.mxu0 0.0
    %4358 = vmatprep.subr.mxu0 0.0
    %4359 = vmatpush1.msra.mxu0 0.0
    %4360 = vmatprep.subr.mxu0 0.0
    %4361 = vmatpush1.msra.mxu0 0.0
    %4362 = vmatprep.subr.mxu0 0.0
    %4363 = vmatpush1.msra.mxu0 0.0
    %4364 = vmatprep.subr.mxu0 0.0
    %4365 = vmatpush1.msra.mxu0 0.0
    %4366 = vmatprep.subr.mxu0 0.0
    %4367 = vmatpush1.msra.mxu0 0.0
    %4368 = vmatprep.subr.mxu0 0.0
    %4369 = vmatpush1.msra.mxu0 0.0
    %4370 = vmatprep.subr.mxu0 0.0
    %4371 = vmatpush1.msra.mxu0 0.0
    %4372 = vmatprep.subr.mxu0 0.0
    %4373 = vmatpush1.msra.mxu0 0.0
    %4374 = vmatprep.subr.mxu0 0.0
    %4375 = vmatpush1.msra.mxu0 0.0
    %4376 = vmatprep.subr.mxu0 0.0
    %4377 = vmatpush1.msra.mxu0 0.0
    %4378 = vmatprep.subr.mxu0 0.0
    %4379 = vmatpush1.msra.mxu0 0.0
    %4380 = vmatprep.subr.mxu0 0.0
    %4381 = vmatpush1.msra.mxu0 %v3709
    %4382 = vmatprep.subr.mxu0 0.0
    %4383 = vmatpush1.msra.mxu0 %v3708
    %4384 = vmatprep.subr.mxu0 0.0
    %4385 = vmatpush1.msra.mxu0 %v3707
    %4386 = vmatprep.subr.mxu0 0.0
    %4387 = vmatpush1.msra.mxu0 %v3706
    %4388 = vmatprep.subr.mxu0 0.0
    %4389 = vmatpush2.msra.mxu0 0.0
    %4390 = vmatprep.subr.mxu0 0.0
    %4391 = vmatpush2.msra.mxu0 0.0
    %4392 = vmatprep.subr.mxu0 0.0
    %4393 = vmatpush2.msra.mxu0 0.0
    %4394 = vmatprep.subr.mxu0 0.0
    %4395 = vmatpush2.msra.mxu0 0.0
    %4396 = vmatprep.subr.mxu0 0.0
    %4397 = vmatpush2.msra.mxu0 0.0
    %4398 = vmatprep.subr.mxu0 0.0
    %4399 = vmatpush2.msra.mxu0 0.0
    %4400 = vmatprep.subr.mxu0 0.0
    %4401 = vmatpush2.msra.mxu0 0.0
    %4402 = vmatprep.subr.mxu0 0.0
    %4403 = vmatpush2.msra.mxu0 0.0
    %4404 = vmatprep.subr.mxu0 0.0
    %4405 = vmatpush2.msra.mxu0 0.0
    %4406 = vmatprep.subr.mxu0 0.0
    %4407 = vmatpush2.msra.mxu0 0.0
    %4408 = vmatprep.subr.mxu0 0.0
    %4409 = vmatpush2.msra.mxu0 0.0
    %4410 = vmatprep.subr.mxu0 0.0
    %4411 = vmatpush2.msra.mxu0 0.0
    %4412 = vmatprep.subr.mxu0 0.0
    %4413 = vmatpush2.msra.mxu0 0.0
    %4414 = vmatprep.subr.mxu0 0.0
    %4415 = vmatpush2.msra.mxu0 0.0
    %4416 = vmatprep.subr.mxu0 0.0
    %4417 = vmatpush2.msra.mxu0 0.0
    %4418 = vmatprep.subr.mxu0 0.0
    %4419 = vmatpush2.msra.mxu0 0.0
    %4420 = vmatprep.mubr.f32.mxu0 0.0
    %4421 = vmatmul.mubr.f32.gmra.mxu0 %v4348
    %v4422 = vpop.f32.mrf.mxu0
    %v4423 = vadd.f32 %v4345, %v4422
    %v4424 = vpop.f32.mrf.mxu0
    %4425 = vmatprep.mubr.f32.mxu0 0.0
    %4426 = vmatmul.mubr.f32.gmra.mxu0 %v4351
    %v4427 = vpop.f32.mrf.mxu0
    %v4428 = vadd.f32 %v4345, %v4427
    %v4429 = vpop.f32.mrf.mxu0
    %4430 = vmatprep.mubr.f32.mxu0 0.0
    %4431 = vmatmul.mubr.f32.gmra.mxu0 %v4354
    %v4432 = vpop.f32.mrf.mxu0
    %v4433 = vadd.f32 %v4345, %v4432
    %v4434 = vpop.f32.mrf.mxu0
    %4435 = vdwg.mxu0
    %v4437 = vlaneseq
    %v4438 = vshrl.u32 %v4437, 7
    %v4439 = vsub.s32 0, %v4438
    %v4440 = vrot.slane %v3715, %v4439
    %4442 = vmatprep.subr.mxu0 0.0
    %4443 = vmatpush1.msra.mxu0 0.0
    %4444 = vmatprep.subr.mxu0 0.0
    %4445 = vmatpush1.msra.mxu0 0.0
    %4446 = vmatprep.subr.mxu0 0.0
    %4447 = vmatpush1.msra.mxu0 0.0
    %4448 = vmatprep.subr.mxu0 0.0
    %4449 = vmatpush1.msra.mxu0 0.0
    %4450 = vmatprep.subr.mxu0 0.0
    %4451 = vmatpush1.msra.mxu0 0.0
    %4452 = vmatprep.subr.mxu0 0.0
    %4453 = vmatpush1.msra.mxu0 0.0
    %4454 = vmatprep.subr.mxu0 0.0
    %4455 = vmatpush1.msra.mxu0 0.0
    %4456 = vmatprep.subr.mxu0 0.0
    %4457 = vmatpush1.msra.mxu0 0.0
    %4458 = vmatprep.subr.mxu0 0.0
    %4459 = vmatpush1.msra.mxu0 0.0
    %4460 = vmatprep.subr.mxu0 0.0
    %4461 = vmatpush1.msra.mxu0 0.0
    %4462 = vmatprep.subr.mxu0 0.0
    %4463 = vmatpush1.msra.mxu0 0.0
    %4464 = vmatprep.subr.mxu0 0.0
    %4465 = vmatpush1.msra.mxu0 0.0
    %4466 = vmatprep.subr.mxu0 0.0
    %4467 = vmatpush1.msra.mxu0 %v3714
    %4468 = vmatprep.subr.mxu0 0.0
    %4469 = vmatpush1.msra.mxu0 %v3713
    %4470 = vmatprep.subr.mxu0 0.0
    %4471 = vmatpush1.msra.mxu0 %v3712
    %4472 = vmatprep.subr.mxu0 0.0
    %4473 = vmatpush1.msra.mxu0 %v3711
    %4474 = vmatprep.subr.mxu0 0.0
    %4475 = vmatpush2.msra.mxu0 0.0
    %4476 = vmatprep.subr.mxu0 0.0
    %4477 = vmatpush2.msra.mxu0 0.0
    %4478 = vmatprep.subr.mxu0 0.0
    %4479 = vmatpush2.msra.mxu0 0.0
    %4480 = vmatprep.subr.mxu0 0.0
    %4481 = vmatpush2.msra.mxu0 0.0
    %4482 = vmatprep.subr.mxu0 0.0
    %4483 = vmatpush2.msra.mxu0 0.0
    %4484 = vmatprep.subr.mxu0 0.0
    %4485 = vmatpush2.msra.mxu0 0.0
    %4486 = vmatprep.subr.mxu0 0.0
    %4487 = vmatpush2.msra.mxu0 0.0
    %4488 = vmatprep.subr.mxu0 0.0
    %4489 = vmatpush2.msra.mxu0 0.0
    %4490 = vmatprep.subr.mxu0 0.0
    %4491 = vmatpush2.msra.mxu0 0.0
    %4492 = vmatprep.subr.mxu0 0.0
    %4493 = vmatpush2.msra.mxu0 0.0
    %4494 = vmatprep.subr.mxu0 0.0
    %4495 = vmatpush2.msra.mxu0 0.0
    %4496 = vmatprep.subr.mxu0 0.0
    %4497 = vmatpush2.msra.mxu0 0.0
    %4498 = vmatprep.subr.mxu0 0.0
    %4499 = vmatpush2.msra.mxu0 0.0
    %4500 = vmatprep.subr.mxu0 0.0
    %4501 = vmatpush2.msra.mxu0 0.0
    %4502 = vmatprep.subr.mxu0 0.0
    %4503 = vmatpush2.msra.mxu0 0.0
    %4504 = vmatprep.subr.mxu0 0.0
    %4505 = vmatpush2.msra.mxu0 0.0
    %4506 = vmatprep.mubr.f32.mxu0 0.0
    %4507 = vmatmul.mubr.f32.gmra.mxu0 %v4348
    %v4508 = vpop.f32.mrf.mxu0
    %v4509 = vadd.f32 %v4440, %v4508
    %v4510 = vpop.f32.mrf.mxu0
    %4511 = vmatprep.mubr.f32.mxu0 0.0
    %4512 = vmatmul.mubr.f32.gmra.mxu0 %v4351
    %v4513 = vpop.f32.mrf.mxu0
    %v4514 = vadd.f32 %v4440, %v4513
    %v4515 = vpop.f32.mrf.mxu0
    %4516 = vmatprep.mubr.f32.mxu0 0.0
    %4517 = vmatmul.mubr.f32.gmra.mxu0 %v4354
    %v4518 = vpop.f32.mrf.mxu0
    %v4519 = vadd.f32 %v4440, %v4518
    %v4520 = vpop.f32.mrf.mxu0
    %4521 = vdwg.mxu0
    %v4523 = vlaneseq
    %v4524 = vshrl.u32 %v4523, 7
    %v4525 = vsub.s32 0, %v4524
    %v4526 = vrot.slane %v3720, %v4525
    %4528 = vmatprep.subr.mxu0 0.0
    %4529 = vmatpush1.msra.mxu0 0.0
    %4530 = vmatprep.subr.mxu0 0.0
    %4531 = vmatpush1.msra.mxu0 0.0
    %4532 = vmatprep.subr.mxu0 0.0
    %4533 = vmatpush1.msra.mxu0 0.0
    %4534 = vmatprep.subr.mxu0 0.0
    %4535 = vmatpush1.msra.mxu0 0.0
    %4536 = vmatprep.subr.mxu0 0.0
    %4537 = vmatpush1.msra.mxu0 0.0
    %4538 = vmatprep.subr.mxu0 0.0
    %4539 = vmatpush1.msra.mxu0 0.0
    %4540 = vmatprep.subr.mxu0 0.0
    %4541 = vmatpush1.msra.mxu0 0.0
    %4542 = vmatprep.subr.mxu0 0.0
    %4543 = vmatpush1.msra.mxu0 0.0
    %4544 = vmatprep.subr.mxu0 0.0
    %4545 = vmatpush1.msra.mxu0 0.0
    %4546 = vmatprep.subr.mxu0 0.0
    %4547 = vmatpush1.msra.mxu0 0.0
    %4548 = vmatprep.subr.mxu0 0.0
    %4549 = vmatpush1.msra.mxu0 0.0
    %4550 = vmatprep.subr.mxu0 0.0
    %4551 = vmatpush1.msra.mxu0 0.0
    %4552 = vmatprep.subr.mxu0 0.0
    %4553 = vmatpush1.msra.mxu0 %v3719
    %4554 = vmatprep.subr.mxu0 0.0
    %4555 = vmatpush1.msra.mxu0 %v3718
    %4556 = vmatprep.subr.mxu0 0.0
    %4557 = vmatpush1.msra.mxu0 %v3717
    %4558 = vmatprep.subr.mxu0 0.0
    %4559 = vmatpush1.msra.mxu0 %v3716
    %4560 = vmatprep.subr.mxu0 0.0
    %4561 = vmatpush2.msra.mxu0 0.0
    %4562 = vmatprep.subr.mxu0 0.0
    %4563 = vmatpush2.msra.mxu0 0.0
    %4564 = vmatprep.subr.mxu0 0.0
    %4565 = vmatpush2.msra.mxu0 0.0
    %4566 = vmatprep.subr.mxu0 0.0
    %4567 = vmatpush2.msra.mxu0 0.0
    %4568 = vmatprep.subr.mxu0 0.0
    %4569 = vmatpush2.msra.mxu0 0.0
    %4570 = vmatprep.subr.mxu0 0.0
    %4571 = vmatpush2.msra.mxu0 0.0
    %4572 = vmatprep.subr.mxu0 0.0
    %4573 = vmatpush2.msra.mxu0 0.0
    %4574 = vmatprep.subr.mxu0 0.0
    %4575 = vmatpush2.msra.mxu0 0.0
    %4576 = vmatprep.subr.mxu0 0.0
    %4577 = vmatpush2.msra.mxu0 0.0
    %4578 = vmatprep.subr.mxu0 0.0
    %4579 = vmatpush2.msra.mxu0 0.0
    %4580 = vmatprep.subr.mxu0 0.0
    %4581 = vmatpush2.msra.mxu0 0.0
    %4582 = vmatprep.subr.mxu0 0.0
    %4583 = vmatpush2.msra.mxu0 0.0
    %4584 = vmatprep.subr.mxu0 0.0
    %4585 = vmatpush2.msra.mxu0 0.0
    %4586 = vmatprep.subr.mxu0 0.0
    %4587 = vmatpush2.msra.mxu0 0.0
    %4588 = vmatprep.subr.mxu0 0.0
    %4589 = vmatpush2.msra.mxu0 0.0
    %4590 = vmatprep.subr.mxu0 0.0
    %4591 = vmatpush2.msra.mxu0 0.0
    %4592 = vmatprep.mubr.f32.mxu0 0.0
    %4593 = vmatmul.mubr.f32.gmra.mxu0 %v4348
    %v4594 = vpop.f32.mrf.mxu0
    %v4595 = vadd.f32 %v4526, %v4594
    %v4596 = vpop.f32.mrf.mxu0
    %4597 = vmatprep.mubr.f32.mxu0 0.0
    %4598 = vmatmul.mubr.f32.gmra.mxu0 %v4351
    %v4599 = vpop.f32.mrf.mxu0
    %v4600 = vadd.f32 %v4526, %v4599
    %v4601 = vpop.f32.mrf.mxu0
    %4602 = vmatprep.mubr.f32.mxu0 0.0
    %4603 = vmatmul.mubr.f32.gmra.mxu0 %v4354
    %v4604 = vpop.f32.mrf.mxu0
    %v4605 = vadd.f32 %v4526, %v4604
    %v4606 = vpop.f32.mrf.mxu0
    %4607 = vdwg.mxu0
    %v4608 = vsel %vm1120, %v4423, 0.0
    %v4609 = vsel %vm1120, %v4428, 0.0
    %v4610 = vsel %vm1120, %v4433, 0.0
    %v4611 = vmul.f32 %v4608, 0.35355338
    %v4612 = vmul.f32 %v4609, 0.35355338
    %v4613 = vmul.f32 %v4610, 0.35355338
    %v4615 = vsel %vm854, %v4611, 0
    %v4618 = vsel %vm854, %v4612, 0
    %v4621 = vsel %vm854, %v4613, 0
    %v4624 = vsel %vm854, %v4509, 0
    %v4627 = vsel %vm854, %v4514, 0
    %v4630 = vsel %vm854, %v4519, 0
    %4632 = vmatprep.subr.mxu0 0.0
    %4633 = vmatpush1.xpose.msra.mxu0 0.0
    %4634 = vmatprep.subr.mxu0 0.0
    %4635 = vmatpush1.xpose.msra.mxu0 0.0
    %4636 = vmatprep.subr.mxu0 0.0
    %4637 = vmatpush1.xpose.msra.mxu0 0.0
    %4638 = vmatprep.subr.mxu0 0.0
    %4639 = vmatpush1.xpose.msra.mxu0 0.0
    %4640 = vmatprep.subr.mxu0 0.0
    %4641 = vmatpush1.xpose.msra.mxu0 0.0
    %4642 = vmatprep.subr.mxu0 0.0
    %4643 = vmatpush1.xpose.msra.mxu0 0.0
    %4644 = vmatprep.subr.mxu0 0.0
    %4645 = vmatpush1.xpose.msra.mxu0 0.0
    %4646 = vmatprep.subr.mxu0 0.0
    %4647 = vmatpush1.xpose.msra.mxu0 0.0
    %4648 = vmatprep.subr.mxu0 0.0
    %4649 = vmatpush1.xpose.msra.mxu0 0.0
    %4650 = vmatprep.subr.mxu0 0.0
    %4651 = vmatpush1.xpose.msra.mxu0 0.0
    %4652 = vmatprep.subr.mxu0 0.0
    %4653 = vmatpush1.xpose.msra.mxu0 0.0
    %4654 = vmatprep.subr.mxu0 0.0
    %4655 = vmatpush1.xpose.msra.mxu0 0.0
    %4656 = vmatprep.subr.mxu0 0.0
    %4657 = vmatpush1.xpose.msra.mxu0 0.0
    %4658 = vmatprep.subr.mxu0 0.0
    %4659 = vmatpush1.xpose.msra.mxu0 %v4630
    %4660 = vmatprep.subr.mxu0 0.0
    %4661 = vmatpush1.xpose.msra.mxu0 %v4627
    %4662 = vmatprep.subr.mxu0 0.0
    %4663 = vmatpush1.xpose.msra.mxu0 %v4624
    %4664 = vmatprep.subr.mxu0 0.0
    %4665 = vmatpush2.xpose.msra.mxu0 0.0
    %4666 = vmatprep.subr.mxu0 0.0
    %4667 = vmatpush2.xpose.msra.mxu0 0.0
    %4668 = vmatprep.subr.mxu0 0.0
    %4669 = vmatpush2.xpose.msra.mxu0 0.0
    %4670 = vmatprep.subr.mxu0 0.0
    %4671 = vmatpush2.xpose.msra.mxu0 0.0
    %4672 = vmatprep.subr.mxu0 0.0
    %4673 = vmatpush2.xpose.msra.mxu0 0.0
    %4674 = vmatprep.subr.mxu0 0.0
    %4675 = vmatpush2.xpose.msra.mxu0 0.0
    %4676 = vmatprep.subr.mxu0 0.0
    %4677 = vmatpush2.xpose.msra.mxu0 0.0
    %4678 = vmatprep.subr.mxu0 0.0
    %4679 = vmatpush2.xpose.msra.mxu0 0.0
    %4680 = vmatprep.subr.mxu0 0.0
    %4681 = vmatpush2.xpose.msra.mxu0 0.0
    %4682 = vmatprep.subr.mxu0 0.0
    %4683 = vmatpush2.xpose.msra.mxu0 0.0
    %4684 = vmatprep.subr.mxu0 0.0
    %4685 = vmatpush2.xpose.msra.mxu0 0.0
    %4686 = vmatprep.subr.mxu0 0.0
    %4687 = vmatpush2.xpose.msra.mxu0 0.0
    %4688 = vmatprep.subr.mxu0 0.0
    %4689 = vmatpush2.xpose.msra.mxu0 0.0
    %4690 = vmatprep.subr.mxu0 0.0
    %4691 = vmatpush2.xpose.msra.mxu0 0.0
    %4692 = vmatprep.subr.mxu0 0.0
    %4693 = vmatpush2.xpose.msra.mxu0 0.0
    %4694 = vmatprep.subr.mxu0 0.0
    %4695 = vmatpush2.xpose.msra.mxu0 0.0
    %4696 = vmatprep.mubr.f32.mxu0 0.0
    %4697 = vmatmul.mubr.f32.gmra.mxu0 %v4615
    %v4698 = vpop.f32.mrf.mxu0
    %v4699 = vadd.f32 %v210, %v4698
    %v4700 = vpop.f32.mrf.mxu0
    %4701 = vmatprep.mubr.f32.mxu0 0.0
    %4702 = vmatmul.mubr.f32.gmra.mxu0 %v4618
    %v4703 = vpop.f32.mrf.mxu0
    %v4704 = vadd.f32 %v211, %v4703
    %v4705 = vpop.f32.mrf.mxu0
    %4706 = vmatprep.mubr.f32.mxu0 0.0
    %4707 = vmatmul.mubr.f32.gmra.mxu0 %v4621
    %v4708 = vpop.f32.mrf.mxu0
    %v4709 = vadd.f32 %v212, %v4708
    %v4710 = vpop.f32.mrf.mxu0
    %4711 = vdwg.mxu0
    %v4712 = vsel %vm1225, %v4699, -inf
    %4713 = vmax.xlane.f32.xlu0 %v4712
    %v4714 = vpop.xlane.xlu0 %4713
    %v4715 = vsel %vm1225, %v4704, -inf
    %4716 = vmax.xlane.f32.xlu0 %v4715
    %v4717 = vpop.xlane.xlu0 %4716
    %v4718 = vsel %vm1232, %v4709, -inf
    %4719 = vmax.xlane.f32.xlu0 %v4718
    %v4720 = vpop.xlane.xlu0 %4719
    %v4721 = vsub.f32 %v4699, %v4714
    %v4722 = vsub.f32 %v4704, %v4717
    %v4723 = vsub.f32 %v4709, %v4720
    %v4724 = vmul.f32 %v4721, 1.442695
    %v4725 = vpow.pop %v4724
    %v4726 = vmul.f32 %v4722, 1.442695
    %v4727 = vpow.pop %v4726
    %v4728 = vmul.f32 %v4723, 1.442695
    %v4729 = vpow.pop %v4728
    %v4730 = vsel %vm1225, %v4725, 0.0
    %4731 = vadd.xlane.f32.xlu0 %v4730
    %v4732 = vpop.xlane.xlu0 %4731
    %v4733 = vsel %vm1225, %v4727, 0.0
    %4734 = vadd.xlane.f32.xlu0 %v4733
    %v4735 = vpop.xlane.xlu0 %4734
    %v4736 = vsel %vm1232, %v4729, 0.0
    %4737 = vadd.xlane.f32.xlu0 %v4736
    %v4738 = vpop.xlane.xlu0 %4737
    %v4739 = vrcp.pop %v4732
    %v4740 = vmul.f32 %v4725, %v4739
    %v4741 = vrcp.pop %v4735
    %v4742 = vmul.f32 %v4727, %v4741
    %v4743 = vrcp.pop %v4738
    %v4744 = vmul.f32 %v4729, %v4743
    %v4745 = vsel %vm1120, %v4595, 0.0
    %v4746 = vsel %vm1120, %v4600, 0.0
    %v4747 = vsel %vm1120, %v4605, 0.0
    %v4748 = vsel %vm1265, %v4423, 0.0
    %v4749 = vsel %vm1265, %v4428, 0.0
    %v4750 = vsel %vm1265, %v4433, 0.0
    %v4751 = vmul.f32 %v4748, 0.35355338
    %v4752 = vmul.f32 %v4749, 0.35355338
    %v4753 = vmul.f32 %v4750, 0.35355338
    %v4755 = vsel %vm854, %v4751, 0
    %v4758 = vsel %vm854, %v4752, 0
    %v4761 = vsel %vm854, %v4753, 0
    %4763 = vmatprep.subr.mxu0 0.0
    %4764 = vmatpush1.xpose.msra.mxu0 0.0
    %4765 = vmatprep.subr.mxu0 0.0
    %4766 = vmatpush1.xpose.msra.mxu0 0.0
    %4767 = vmatprep.subr.mxu0 0.0
    %4768 = vmatpush1.xpose.msra.mxu0 0.0
    %4769 = vmatprep.subr.mxu0 0.0
    %4770 = vmatpush1.xpose.msra.mxu0 0.0
    %4771 = vmatprep.subr.mxu0 0.0
    %4772 = vmatpush1.xpose.msra.mxu0 0.0
    %4773 = vmatprep.subr.mxu0 0.0
    %4774 = vmatpush1.xpose.msra.mxu0 0.0
    %4775 = vmatprep.subr.mxu0 0.0
    %4776 = vmatpush1.xpose.msra.mxu0 0.0
    %4777 = vmatprep.subr.mxu0 0.0
    %4778 = vmatpush1.xpose.msra.mxu0 0.0
    %4779 = vmatprep.subr.mxu0 0.0
    %4780 = vmatpush1.xpose.msra.mxu0 0.0
    %4781 = vmatprep.subr.mxu0 0.0
    %4782 = vmatpush1.xpose.msra.mxu0 0.0
    %4783 = vmatprep.subr.mxu0 0.0
    %4784 = vmatpush1.xpose.msra.mxu0 0.0
    %4785 = vmatprep.subr.mxu0 0.0
    %4786 = vmatpush1.xpose.msra.mxu0 0.0
    %4787 = vmatprep.subr.mxu0 0.0
    %4788 = vmatpush1.xpose.msra.mxu0 0.0
    %4789 = vmatprep.subr.mxu0 0.0
    %4790 = vmatpush1.xpose.msra.mxu0 %v4630
    %4791 = vmatprep.subr.mxu0 0.0
    %4792 = vmatpush1.xpose.msra.mxu0 %v4627
    %4793 = vmatprep.subr.mxu0 0.0
    %4794 = vmatpush1.xpose.msra.mxu0 %v4624
    %4795 = vmatprep.subr.mxu0 0.0
    %4796 = vmatpush2.xpose.msra.mxu0 0.0
    %4797 = vmatprep.subr.mxu0 0.0
    %4798 = vmatpush2.xpose.msra.mxu0 0.0
    %4799 = vmatprep.subr.mxu0 0.0
    %4800 = vmatpush2.xpose.msra.mxu0 0.0
    %4801 = vmatprep.subr.mxu0 0.0
    %4802 = vmatpush2.xpose.msra.mxu0 0.0
    %4803 = vmatprep.subr.mxu0 0.0
    %4804 = vmatpush2.xpose.msra.mxu0 0.0
    %4805 = vmatprep.subr.mxu0 0.0
    %4806 = vmatpush2.xpose.msra.mxu0 0.0
    %4807 = vmatprep.subr.mxu0 0.0
    %4808 = vmatpush2.xpose.msra.mxu0 0.0
    %4809 = vmatprep.subr.mxu0 0.0
    %4810 = vmatpush2.xpose.msra.mxu0 0.0
    %4811 = vmatprep.subr.mxu0 0.0
    %4812 = vmatpush2.xpose.msra.mxu0 0.0
    %4813 = vmatprep.subr.mxu0 0.0
    %4814 = vmatpush2.xpose.msra.mxu0 0.0
    %4815 = vmatprep.subr.mxu0 0.0
    %4816 = vmatpush2.xpose.msra.mxu0 0.0
    %4817 = vmatprep.subr.mxu0 0.0
    %4818 = vmatpush2.xpose.msra.mxu0 0.0
    %4819 = vmatprep.subr.mxu0 0.0
    %4820 = vmatpush2.xpose.msra.mxu0 0.0
    %4821 = vmatprep.subr.mxu0 0.0
    %4822 = vmatpush2.xpose.msra.mxu0 0.0
    %4823 = vmatprep.subr.mxu0 0.0
    %4824 = vmatpush2.xpose.msra.mxu0 0.0
    %4825 = vmatprep.subr.mxu0 0.0
    %4826 = vmatpush2.xpose.msra.mxu0 0.0
    %4827 = vmatprep.mubr.f32.mxu0 0.0
    %4828 = vmatmul.mubr.f32.gmra.mxu0 %v4755
    %v4829 = vpop.f32.mrf.mxu0
    %v4830 = vadd.f32 %v210, %v4829
    %v4831 = vpop.f32.mrf.mxu0
    %4832 = vmatprep.mubr.f32.mxu0 0.0
    %4833 = vmatmul.mubr.f32.gmra.mxu0 %v4758
    %v4834 = vpop.f32.mrf.mxu0
    %v4835 = vadd.f32 %v211, %v4834
    %v4836 = vpop.f32.mrf.mxu0
    %4837 = vmatprep.mubr.f32.mxu0 0.0
    %4838 = vmatmul.mubr.f32.gmra.mxu0 %v4761
    %v4839 = vpop.f32.mrf.mxu0
    %v4840 = vadd.f32 %v212, %v4839
    %v4841 = vpop.f32.mrf.mxu0
    %4842 = vdwg.mxu0
    %v4843 = vsel %vm1225, %v4830, -inf
    %4844 = vmax.xlane.f32.xlu0 %v4843
    %v4845 = vpop.xlane.xlu0 %4844
    %v4846 = vsel %vm1225, %v4835, -inf
    %4847 = vmax.xlane.f32.xlu0 %v4846
    %v4848 = vpop.xlane.xlu0 %4847
    %v4849 = vsel %vm1232, %v4840, -inf
    %4850 = vmax.xlane.f32.xlu0 %v4849
    %v4851 = vpop.xlane.xlu0 %4850
    %v4852 = vsub.f32 %v4830, %v4845
    %v4853 = vsub.f32 %v4835, %v4848
    %v4854 = vsub.f32 %v4840, %v4851
    %v4855 = vmul.f32 %v4852, 1.442695
    %v4856 = vpow.pop %v4855
    %v4857 = vmul.f32 %v4853, 1.442695
    %v4858 = vpow.pop %v4857
    %v4859 = vmul.f32 %v4854, 1.442695
    %v4860 = vpow.pop %v4859
    %v4861 = vsel %vm1225, %v4856, 0.0
    %4862 = vadd.xlane.f32.xlu0 %v4861
    %v4863 = vpop.xlane.xlu0 %4862
    %v4864 = vsel %vm1225, %v4858, 0.0
    %4865 = vadd.xlane.f32.xlu0 %v4864
    %v4866 = vpop.xlane.xlu0 %4865
    %v4867 = vsel %vm1232, %v4860, 0.0
    %4868 = vadd.xlane.f32.xlu0 %v4867
    %v4869 = vpop.xlane.xlu0 %4868
    %v4870 = vrcp.pop %v4863
    %v4871 = vmul.f32 %v4856, %v4870
    %v4872 = vrcp.pop %v4866
    %v4873 = vmul.f32 %v4858, %v4872
    %v4874 = vrcp.pop %v4869
    %v4875 = vmul.f32 %v4860, %v4874
    %v4876 = vsel %vm1265, %v4595, 0.0
    %v4877 = vsel %vm1265, %v4600, 0.0
    %v4878 = vsel %vm1265, %v4605, 0.0
    %v4880 = vsel %vm1225, %v4871, 0
    %v4883 = vsel %vm1225, %v4873, 0
    %v4886 = vsel %vm1225, %v4875, 0
    %v4889 = vsel %vm1406, %v4878, 0
    %4891 = vmatprep.subr.mxu0 0.0
    %4892 = vmatpush1.msra.mxu0 0.0
    %4893 = vmatprep.subr.mxu0 0.0
    %4894 = vmatpush1.msra.mxu0 0.0
    %4895 = vmatprep.subr.mxu0 0.0
    %4896 = vmatpush1.msra.mxu0 0.0
    %4897 = vmatprep.subr.mxu0 0.0
    %4898 = vmatpush1.msra.mxu0 0.0
    %4899 = vmatprep.subr.mxu0 0.0
    %4900 = vmatpush1.msra.mxu0 0.0
    %4901 = vmatprep.subr.mxu0 0.0
    %4902 = vmatpush1.msra.mxu0 0.0
    %4903 = vmatprep.subr.mxu0 0.0
    %4904 = vmatpush1.msra.mxu0 0.0
    %4905 = vmatprep.subr.mxu0 0.0
    %4906 = vmatpush1.msra.mxu0 0.0
    %4907 = vmatprep.subr.mxu0 0.0
    %4908 = vmatpush1.msra.mxu0 0.0
    %4909 = vmatprep.subr.mxu0 0.0
    %4910 = vmatpush1.msra.mxu0 0.0
    %4911 = vmatprep.subr.mxu0 0.0
    %4912 = vmatpush1.msra.mxu0 0.0
    %4913 = vmatprep.subr.mxu0 0.0
    %4914 = vmatpush1.msra.mxu0 0.0
    %4915 = vmatprep.subr.mxu0 0.0
    %4916 = vmatpush1.msra.mxu0 0.0
    %4917 = vmatprep.subr.mxu0 0.0
    %4918 = vmatpush1.msra.mxu0 %v4889
    %4919 = vmatprep.subr.mxu0 0.0
    %4920 = vmatpush1.msra.mxu0 %v4877
    %4921 = vmatprep.subr.mxu0 0.0
    %4922 = vmatpush1.msra.mxu0 %v4876
    %4923 = vmatprep.subr.mxu0 0.0
    %4924 = vmatpush2.msra.mxu0 0.0
    %4925 = vmatprep.subr.mxu0 0.0
    %4926 = vmatpush2.msra.mxu0 0.0
    %4927 = vmatprep.subr.mxu0 0.0
    %4928 = vmatpush2.msra.mxu0 0.0
    %4929 = vmatprep.subr.mxu0 0.0
    %4930 = vmatpush2.msra.mxu0 0.0
    %4931 = vmatprep.subr.mxu0 0.0
    %4932 = vmatpush2.msra.mxu0 0.0
    %4933 = vmatprep.subr.mxu0 0.0
    %4934 = vmatpush2.msra.mxu0 0.0
    %4935 = vmatprep.subr.mxu0 0.0
    %4936 = vmatpush2.msra.mxu0 0.0
    %4937 = vmatprep.subr.mxu0 0.0
    %4938 = vmatpush2.msra.mxu0 0.0
    %4939 = vmatprep.subr.mxu0 0.0
    %4940 = vmatpush2.msra.mxu0 0.0
    %4941 = vmatprep.subr.mxu0 0.0
    %4942 = vmatpush2.msra.mxu0 0.0
    %4943 = vmatprep.subr.mxu0 0.0
    %4944 = vmatpush2.msra.mxu0 0.0
    %4945 = vmatprep.subr.mxu0 0.0
    %4946 = vmatpush2.msra.mxu0 0.0
    %4947 = vmatprep.subr.mxu0 0.0
    %4948 = vmatpush2.msra.mxu0 0.0
    %4949 = vmatprep.subr.mxu0 0.0
    %4950 = vmatpush2.msra.mxu0 0.0
    %4951 = vmatprep.subr.mxu0 0.0
    %4952 = vmatpush2.msra.mxu0 0.0
    %4953 = vmatprep.subr.mxu0 0.0
    %4954 = vmatpush2.msra.mxu0 0.0
    %4955 = vmatprep.mubr.f32.mxu0 0.0
    %4956 = vmatmul.mubr.f32.gmra.mxu0 %v4880
    %v4957 = vpop.f32.mrf.mxu0
    %v4958 = vadd.f32 0.0, %v4957
    %v4959 = vpop.f32.mrf.mxu0
    %4960 = vmatprep.mubr.f32.mxu0 0.0
    %4961 = vmatmul.mubr.f32.gmra.mxu0 %v4883
    %v4962 = vpop.f32.mrf.mxu0
    %v4963 = vadd.f32 0.0, %v4962
    %v4964 = vpop.f32.mrf.mxu0
    %4965 = vmatprep.mubr.f32.mxu0 0.0
    %4966 = vmatmul.mubr.f32.gmra.mxu0 %v4886
    %v4967 = vpop.f32.mrf.mxu0
    %v4968 = vadd.f32 0.0, %v4967
    %v4969 = vpop.f32.mrf.mxu0
    %4970 = vdwg.mxu0
    %v4972 = vsel %vm1225, %v4740, 0
    %v4975 = vsel %vm1225, %v4742, 0
    %v4978 = vsel %vm1225, %v4744, 0
    %v4981 = vsel %vm1406, %v4747, 0
    %4983 = vmatprep.subr.mxu0 0.0
    %4984 = vmatpush1.msra.mxu0 0.0
    %4985 = vmatprep.subr.mxu0 0.0
    %4986 = vmatpush1.msra.mxu0 0.0
    %4987 = vmatprep.subr.mxu0 0.0
    %4988 = vmatpush1.msra.mxu0 0.0
    %4989 = vmatprep.subr.mxu0 0.0
    %4990 = vmatpush1.msra.mxu0 0.0
    %4991 = vmatprep.subr.mxu0 0.0
    %4992 = vmatpush1.msra.mxu0 0.0
    %4993 = vmatprep.subr.mxu0 0.0
    %4994 = vmatpush1.msra.mxu0 0.0
    %4995 = vmatprep.subr.mxu0 0.0
    %4996 = vmatpush1.msra.mxu0 0.0
    %4997 = vmatprep.subr.mxu0 0.0
    %4998 = vmatpush1.msra.mxu0 0.0
    %4999 = vmatprep.subr.mxu0 0.0
    %5000 = vmatpush1.msra.mxu0 0.0
    %5001 = vmatprep.subr.mxu0 0.0
    %5002 = vmatpush1.msra.mxu0 0.0
    %5003 = vmatprep.subr.mxu0 0.0
    %5004 = vmatpush1.msra.mxu0 0.0
    %5005 = vmatprep.subr.mxu0 0.0
    %5006 = vmatpush1.msra.mxu0 0.0
    %5007 = vmatprep.subr.mxu0 0.0
    %5008 = vmatpush1.msra.mxu0 0.0
    %5009 = vmatprep.subr.mxu0 0.0
    %5010 = vmatpush1.msra.mxu0 %v4981
    %5011 = vmatprep.subr.mxu0 0.0
    %5012 = vmatpush1.msra.mxu0 %v4746
    %5013 = vmatprep.subr.mxu0 0.0
    %5014 = vmatpush1.msra.mxu0 %v4745
    %5015 = vmatprep.subr.mxu0 0.0
    %5016 = vmatpush2.msra.mxu0 0.0
    %5017 = vmatprep.subr.mxu0 0.0
    %5018 = vmatpush2.msra.mxu0 0.0
    %5019 = vmatprep.subr.mxu0 0.0
    %5020 = vmatpush2.msra.mxu0 0.0
    %5021 = vmatprep.subr.mxu0 0.0
    %5022 = vmatpush2.msra.mxu0 0.0
    %5023 = vmatprep.subr.mxu0 0.0
    %5024 = vmatpush2.msra.mxu0 0.0
    %5025 = vmatprep.subr.mxu0 0.0
    %5026 = vmatpush2.msra.mxu0 0.0
    %5027 = vmatprep.subr.mxu0 0.0
    %5028 = vmatpush2.msra.mxu0 0.0
    %5029 = vmatprep.subr.mxu0 0.0
    %5030 = vmatpush2.msra.mxu0 0.0
    %5031 = vmatprep.subr.mxu0 0.0
    %5032 = vmatpush2.msra.mxu0 0.0
    %5033 = vmatprep.subr.mxu0 0.0
    %5034 = vmatpush2.msra.mxu0 0.0
    %5035 = vmatprep.subr.mxu0 0.0
    %5036 = vmatpush2.msra.mxu0 0.0
    %5037 = vmatprep.subr.mxu0 0.0
    %5038 = vmatpush2.msra.mxu0 0.0
    %5039 = vmatprep.subr.mxu0 0.0
    %5040 = vmatpush2.msra.mxu0 0.0
    %5041 = vmatprep.subr.mxu0 0.0
    %5042 = vmatpush2.msra.mxu0 0.0
    %5043 = vmatprep.subr.mxu0 0.0
    %5044 = vmatpush2.msra.mxu0 0.0
    %5045 = vmatprep.subr.mxu0 0.0
    %5046 = vmatpush2.msra.mxu0 0.0
    %5047 = vmatprep.mubr.f32.mxu0 0.0
    %5048 = vmatmul.mubr.f32.gmra.mxu0 %v4972
    %v5049 = vpop.f32.mrf.mxu0
    %v5050 = vadd.f32 %v4958, %v5049
    %v5051 = vpop.f32.mrf.mxu0
    %5052 = vmatprep.mubr.f32.mxu0 0.0
    %5053 = vmatmul.mubr.f32.gmra.mxu0 %v4975
    %v5054 = vpop.f32.mrf.mxu0
    %v5055 = vadd.f32 %v4963, %v5054
    %v5056 = vpop.f32.mrf.mxu0
    %5057 = vmatprep.mubr.f32.mxu0 0.0
    %5058 = vmatmul.mubr.f32.gmra.mxu0 %v4978
    %v5059 = vpop.f32.mrf.mxu0
    %v5060 = vadd.f32 %v4968, %v5059
    %v5061 = vpop.f32.mrf.mxu0
    %5062 = vdwg.mxu0
    %v5063 = vsel %vm1584, %v4423, 0.0
    %v5064 = vsel %vm1584, %v4428, 0.0
    %v5065 = vsel %vm1584, %v4433, 0.0
    %v5066 = vmul.f32 %v5063, 0.35355338
    %v5067 = vmul.f32 %v5064, 0.35355338
    %v5068 = vmul.f32 %v5065, 0.35355338
    %v5070 = vsel %vm854, %v5066, 0
    %v5073 = vsel %vm854, %v5067, 0
    %v5076 = vsel %vm854, %v5068, 0
    %5078 = vmatprep.subr.mxu0 0.0
    %5079 = vmatpush1.xpose.msra.mxu0 0.0
    %5080 = vmatprep.subr.mxu0 0.0
    %5081 = vmatpush1.xpose.msra.mxu0 0.0
    %5082 = vmatprep.subr.mxu0 0.0
    %5083 = vmatpush1.xpose.msra.mxu0 0.0
    %5084 = vmatprep.subr.mxu0 0.0
    %5085 = vmatpush1.xpose.msra.mxu0 0.0
    %5086 = vmatprep.subr.mxu0 0.0
    %5087 = vmatpush1.xpose.msra.mxu0 0.0
    %5088 = vmatprep.subr.mxu0 0.0
    %5089 = vmatpush1.xpose.msra.mxu0 0.0
    %5090 = vmatprep.subr.mxu0 0.0
    %5091 = vmatpush1.xpose.msra.mxu0 0.0
    %5092 = vmatprep.subr.mxu0 0.0
    %5093 = vmatpush1.xpose.msra.mxu0 0.0
    %5094 = vmatprep.subr.mxu0 0.0
    %5095 = vmatpush1.xpose.msra.mxu0 0.0
    %5096 = vmatprep.subr.mxu0 0.0
    %5097 = vmatpush1.xpose.msra.mxu0 0.0
    %5098 = vmatprep.subr.mxu0 0.0
    %5099 = vmatpush1.xpose.msra.mxu0 0.0
    %5100 = vmatprep.subr.mxu0 0.0
    %5101 = vmatpush1.xpose.msra.mxu0 0.0
    %5102 = vmatprep.subr.mxu0 0.0
    %5103 = vmatpush1.xpose.msra.mxu0 0.0
    %5104 = vmatprep.subr.mxu0 0.0
    %5105 = vmatpush1.xpose.msra.mxu0 %v4630
    %5106 = vmatprep.subr.mxu0 0.0
    %5107 = vmatpush1.xpose.msra.mxu0 %v4627
    %5108 = vmatprep.subr.mxu0 0.0
    %5109 = vmatpush1.xpose.msra.mxu0 %v4624
    %5110 = vmatprep.subr.mxu0 0.0
    %5111 = vmatpush2.xpose.msra.mxu0 0.0
    %5112 = vmatprep.subr.mxu0 0.0
    %5113 = vmatpush2.xpose.msra.mxu0 0.0
    %5114 = vmatprep.subr.mxu0 0.0
    %5115 = vmatpush2.xpose.msra.mxu0 0.0
    %5116 = vmatprep.subr.mxu0 0.0
    %5117 = vmatpush2.xpose.msra.mxu0 0.0
    %5118 = vmatprep.subr.mxu0 0.0
    %5119 = vmatpush2.xpose.msra.mxu0 0.0
    %5120 = vmatprep.subr.mxu0 0.0
    %5121 = vmatpush2.xpose.msra.mxu0 0.0
    %5122 = vmatprep.subr.mxu0 0.0
    %5123 = vmatpush2.xpose.msra.mxu0 0.0
    %5124 = vmatprep.subr.mxu0 0.0
    %5125 = vmatpush2.xpose.msra.mxu0 0.0
    %5126 = vmatprep.subr.mxu0 0.0
    %5127 = vmatpush2.xpose.msra.mxu0 0.0
    %5128 = vmatprep.subr.mxu0 0.0
    %5129 = vmatpush2.xpose.msra.mxu0 0.0
    %5130 = vmatprep.subr.mxu0 0.0
    %5131 = vmatpush2.xpose.msra.mxu0 0.0
    %5132 = vmatprep.subr.mxu0 0.0
    %5133 = vmatpush2.xpose.msra.mxu0 0.0
    %5134 = vmatprep.subr.mxu0 0.0
    %5135 = vmatpush2.xpose.msra.mxu0 0.0
    %5136 = vmatprep.subr.mxu0 0.0
    %5137 = vmatpush2.xpose.msra.mxu0 0.0
    %5138 = vmatprep.subr.mxu0 0.0
    %5139 = vmatpush2.xpose.msra.mxu0 0.0
    %5140 = vmatprep.subr.mxu0 0.0
    %5141 = vmatpush2.xpose.msra.mxu0 0.0
    %5142 = vmatprep.mubr.f32.mxu0 0.0
    %5143 = vmatmul.mubr.f32.gmra.mxu0 %v5070
    %v5144 = vpop.f32.mrf.mxu0
    %v5145 = vadd.f32 %v210, %v5144
    %v5146 = vpop.f32.mrf.mxu0
    %5147 = vmatprep.mubr.f32.mxu0 0.0
    %5148 = vmatmul.mubr.f32.gmra.mxu0 %v5073
    %v5149 = vpop.f32.mrf.mxu0
    %v5150 = vadd.f32 %v211, %v5149
    %v5151 = vpop.f32.mrf.mxu0
    %5152 = vmatprep.mubr.f32.mxu0 0.0
    %5153 = vmatmul.mubr.f32.gmra.mxu0 %v5076
    %v5154 = vpop.f32.mrf.mxu0
    %v5155 = vadd.f32 %v212, %v5154
    %v5156 = vpop.f32.mrf.mxu0
    %5157 = vdwg.mxu0
    %v5158 = vsel %vm1225, %v5145, -inf
    %5159 = vmax.xlane.f32.xlu0 %v5158
    %v5160 = vpop.xlane.xlu0 %5159
    %v5161 = vsel %vm1225, %v5150, -inf
    %5162 = vmax.xlane.f32.xlu0 %v5161
    %v5163 = vpop.xlane.xlu0 %5162
    %v5164 = vsel %vm1232, %v5155, -inf
    %5165 = vmax.xlane.f32.xlu0 %v5164
    %v5166 = vpop.xlane.xlu0 %5165
    %v5167 = vsub.f32 %v5145, %v5160
    %v5168 = vsub.f32 %v5150, %v5163
    %v5169 = vsub.f32 %v5155, %v5166
    %v5170 = vmul.f32 %v5167, 1.442695
    %v5171 = vpow.pop %v5170
    %v5172 = vmul.f32 %v5168, 1.442695
    %v5173 = vpow.pop %v5172
    %v5174 = vmul.f32 %v5169, 1.442695
    %v5175 = vpow.pop %v5174
    %v5176 = vsel %vm1225, %v5171, 0.0
    %5177 = vadd.xlane.f32.xlu0 %v5176
    %v5178 = vpop.xlane.xlu0 %5177
    %v5179 = vsel %vm1225, %v5173, 0.0
    %5180 = vadd.xlane.f32.xlu0 %v5179
    %v5181 = vpop.xlane.xlu0 %5180
    %v5182 = vsel %vm1232, %v5175, 0.0
    %5183 = vadd.xlane.f32.xlu0 %v5182
    %v5184 = vpop.xlane.xlu0 %5183
    %v5185 = vrcp.pop %v5178
    %v5186 = vmul.f32 %v5171, %v5185
    %v5187 = vrcp.pop %v5181
    %v5188 = vmul.f32 %v5173, %v5187
    %v5189 = vrcp.pop %v5184
    %v5190 = vmul.f32 %v5175, %v5189
    %v5191 = vsel %vm1584, %v4595, 0.0
    %v5192 = vsel %vm1584, %v4600, 0.0
    %v5193 = vsel %vm1584, %v4605, 0.0
    %v5195 = vsel %vm1225, %v5186, 0
    %v5198 = vsel %vm1225, %v5188, 0
    %v5201 = vsel %vm1225, %v5190, 0
    %v5204 = vsel %vm1406, %v5193, 0
    %5206 = vmatprep.subr.mxu0 0.0
    %5207 = vmatpush1.msra.mxu0 0.0
    %5208 = vmatprep.subr.mxu0 0.0
    %5209 = vmatpush1.msra.mxu0 0.0
    %5210 = vmatprep.subr.mxu0 0.0
    %5211 = vmatpush1.msra.mxu0 0.0
    %5212 = vmatprep.subr.mxu0 0.0
    %5213 = vmatpush1.msra.mxu0 0.0
    %5214 = vmatprep.subr.mxu0 0.0
    %5215 = vmatpush1.msra.mxu0 0.0
    %5216 = vmatprep.subr.mxu0 0.0
    %5217 = vmatpush1.msra.mxu0 0.0
    %5218 = vmatprep.subr.mxu0 0.0
    %5219 = vmatpush1.msra.mxu0 0.0
    %5220 = vmatprep.subr.mxu0 0.0
    %5221 = vmatpush1.msra.mxu0 0.0
    %5222 = vmatprep.subr.mxu0 0.0
    %5223 = vmatpush1.msra.mxu0 0.0
    %5224 = vmatprep.subr.mxu0 0.0
    %5225 = vmatpush1.msra.mxu0 0.0
    %5226 = vmatprep.subr.mxu0 0.0
    %5227 = vmatpush1.msra.mxu0 0.0
    %5228 = vmatprep.subr.mxu0 0.0
    %5229 = vmatpush1.msra.mxu0 0.0
    %5230 = vmatprep.subr.mxu0 0.0
    %5231 = vmatpush1.msra.mxu0 0.0
    %5232 = vmatprep.subr.mxu0 0.0
    %5233 = vmatpush1.msra.mxu0 %v5204
    %5234 = vmatprep.subr.mxu0 0.0
    %5235 = vmatpush1.msra.mxu0 %v5192
    %5236 = vmatprep.subr.mxu0 0.0
    %5237 = vmatpush1.msra.mxu0 %v5191
    %5238 = vmatprep.subr.mxu0 0.0
    %5239 = vmatpush2.msra.mxu0 0.0
    %5240 = vmatprep.subr.mxu0 0.0
    %5241 = vmatpush2.msra.mxu0 0.0
    %5242 = vmatprep.subr.mxu0 0.0
    %5243 = vmatpush2.msra.mxu0 0.0
    %5244 = vmatprep.subr.mxu0 0.0
    %5245 = vmatpush2.msra.mxu0 0.0
    %5246 = vmatprep.subr.mxu0 0.0
    %5247 = vmatpush2.msra.mxu0 0.0
    %5248 = vmatprep.subr.mxu0 0.0
    %5249 = vmatpush2.msra.mxu0 0.0
    %5250 = vmatprep.subr.mxu0 0.0
    %5251 = vmatpush2.msra.mxu0 0.0
    %5252 = vmatprep.subr.mxu0 0.0
    %5253 = vmatpush2.msra.mxu0 0.0
    %5254 = vmatprep.subr.mxu0 0.0
    %5255 = vmatpush2.msra.mxu0 0.0
    %5256 = vmatprep.subr.mxu0 0.0
    %5257 = vmatpush2.msra.mxu0 0.0
    %5258 = vmatprep.subr.mxu0 0.0
    %5259 = vmatpush2.msra.mxu0 0.0
    %5260 = vmatprep.subr.mxu0 0.0
    %5261 = vmatpush2.msra.mxu0 0.0
    %5262 = vmatprep.subr.mxu0 0.0
    %5263 = vmatpush2.msra.mxu0 0.0
    %5264 = vmatprep.subr.mxu0 0.0
    %5265 = vmatpush2.msra.mxu0 0.0
    %5266 = vmatprep.subr.mxu0 0.0
    %5267 = vmatpush2.msra.mxu0 0.0
    %5268 = vmatprep.subr.mxu0 0.0
    %5269 = vmatpush2.msra.mxu0 0.0
    %5270 = vmatprep.mubr.f32.mxu0 0.0
    %5271 = vmatmul.mubr.f32.gmra.mxu0 %v5195
    %v5272 = vpop.f32.mrf.mxu0
    %v5273 = vadd.f32 0.0, %v5272
    %v5274 = vpop.f32.mrf.mxu0
    %5275 = vmatprep.mubr.f32.mxu0 0.0
    %5276 = vmatmul.mubr.f32.gmra.mxu0 %v5198
    %v5277 = vpop.f32.mrf.mxu0
    %v5278 = vadd.f32 0.0, %v5277
    %v5279 = vpop.f32.mrf.mxu0
    %5280 = vmatprep.mubr.f32.mxu0 0.0
    %5281 = vmatmul.mubr.f32.gmra.mxu0 %v5201
    %v5282 = vpop.f32.mrf.mxu0
    %v5283 = vadd.f32 0.0, %v5282
    %v5284 = vpop.f32.mrf.mxu0
    %5285 = vdwg.mxu0
    %v5286 = vadd.f32 %v5050, %v5273
    %v5287 = vadd.f32 %v5055, %v5278
    %v5288 = vadd.f32 %v5060, %v5283
    %v5289 = vsel %vm1813, %v4423, 0.0
    %v5290 = vsel %vm1813, %v4428, 0.0
    %v5291 = vsel %vm1813, %v4433, 0.0
    %v5292 = vmul.f32 %v5289, 0.35355338
    %v5293 = vmul.f32 %v5290, 0.35355338
    %v5294 = vmul.f32 %v5291, 0.35355338
    %v5296 = vsel %vm854, %v5292, 0
    %v5299 = vsel %vm854, %v5293, 0
    %v5302 = vsel %vm854, %v5294, 0
    %5304 = vmatprep.subr.mxu0 0.0
    %5305 = vmatpush1.xpose.msra.mxu0 0.0
    %5306 = vmatprep.subr.mxu0 0.0
    %5307 = vmatpush1.xpose.msra.mxu0 0.0
    %5308 = vmatprep.subr.mxu0 0.0
    %5309 = vmatpush1.xpose.msra.mxu0 0.0
    %5310 = vmatprep.subr.mxu0 0.0
    %5311 = vmatpush1.xpose.msra.mxu0 0.0
    %5312 = vmatprep.subr.mxu0 0.0
    %5313 = vmatpush1.xpose.msra.mxu0 0.0
    %5314 = vmatprep.subr.mxu0 0.0
    %5315 = vmatpush1.xpose.msra.mxu0 0.0
    %5316 = vmatprep.subr.mxu0 0.0
    %5317 = vmatpush1.xpose.msra.mxu0 0.0
    %5318 = vmatprep.subr.mxu0 0.0
    %5319 = vmatpush1.xpose.msra.mxu0 0.0
    %5320 = vmatprep.subr.mxu0 0.0
    %5321 = vmatpush1.xpose.msra.mxu0 0.0
    %5322 = vmatprep.subr.mxu0 0.0
    %5323 = vmatpush1.xpose.msra.mxu0 0.0
    %5324 = vmatprep.subr.mxu0 0.0
    %5325 = vmatpush1.xpose.msra.mxu0 0.0
    %5326 = vmatprep.subr.mxu0 0.0
    %5327 = vmatpush1.xpose.msra.mxu0 0.0
    %5328 = vmatprep.subr.mxu0 0.0
    %5329 = vmatpush1.xpose.msra.mxu0 0.0
    %5330 = vmatprep.subr.mxu0 0.0
    %5331 = vmatpush1.xpose.msra.mxu0 %v4630
    %5332 = vmatprep.subr.mxu0 0.0
    %5333 = vmatpush1.xpose.msra.mxu0 %v4627
    %5334 = vmatprep.subr.mxu0 0.0
    %5335 = vmatpush1.xpose.msra.mxu0 %v4624
    %5336 = vmatprep.subr.mxu0 0.0
    %5337 = vmatpush2.xpose.msra.mxu0 0.0
    %5338 = vmatprep.subr.mxu0 0.0
    %5339 = vmatpush2.xpose.msra.mxu0 0.0
    %5340 = vmatprep.subr.mxu0 0.0
    %5341 = vmatpush2.xpose.msra.mxu0 0.0
    %5342 = vmatprep.subr.mxu0 0.0
    %5343 = vmatpush2.xpose.msra.mxu0 0.0
    %5344 = vmatprep.subr.mxu0 0.0
    %5345 = vmatpush2.xpose.msra.mxu0 0.0
    %5346 = vmatprep.subr.mxu0 0.0
    %5347 = vmatpush2.xpose.msra.mxu0 0.0
    %5348 = vmatprep.subr.mxu0 0.0
    %5349 = vmatpush2.xpose.msra.mxu0 0.0
    %5350 = vmatprep.subr.mxu0 0.0
    %5351 = vmatpush2.xpose.msra.mxu0 0.0
    %5352 = vmatprep.subr.mxu0 0.0
    %5353 = vmatpush2.xpose.msra.mxu0 0.0
    %5354 = vmatprep.subr.mxu0 0.0
    %5355 = vmatpush2.xpose.msra.mxu0 0.0
    %5356 = vmatprep.subr.mxu0 0.0
    %5357 = vmatpush2.xpose.msra.mxu0 0.0
    %5358 = vmatprep.subr.mxu0 0.0
    %5359 = vmatpush2.xpose.msra.mxu0 0.0
    %5360 = vmatprep.subr.mxu0 0.0
    %5361 = vmatpush2.xpose.msra.mxu0 0.0
    %5362 = vmatprep.subr.mxu0 0.0
    %5363 = vmatpush2.xpose.msra.mxu0 0.0
    %5364 = vmatprep.subr.mxu0 0.0
    %5365 = vmatpush2.xpose.msra.mxu0 0.0
    %5366 = vmatprep.subr.mxu0 0.0
    %5367 = vmatpush2.xpose.msra.mxu0 0.0
    %5368 = vmatprep.mubr.f32.mxu0 0.0
    %5369 = vmatmul.mubr.f32.gmra.mxu0 %v5296
    %v5370 = vpop.f32.mrf.mxu0
    %v5371 = vadd.f32 %v210, %v5370
    %v5372 = vpop.f32.mrf.mxu0
    %5373 = vmatprep.mubr.f32.mxu0 0.0
    %5374 = vmatmul.mubr.f32.gmra.mxu0 %v5299
    %v5375 = vpop.f32.mrf.mxu0
    %v5376 = vadd.f32 %v211, %v5375
    %v5377 = vpop.f32.mrf.mxu0
    %5378 = vmatprep.mubr.f32.mxu0 0.0
    %5379 = vmatmul.mubr.f32.gmra.mxu0 %v5302
    %v5380 = vpop.f32.mrf.mxu0
    %v5381 = vadd.f32 %v212, %v5380
    %v5382 = vpop.f32.mrf.mxu0
    %5383 = vdwg.mxu0
    %v5384 = vsel %vm1225, %v5371, -inf
    %5385 = vmax.xlane.f32.xlu0 %v5384
    %v5386 = vpop.xlane.xlu0 %5385
    %v5387 = vsel %vm1225, %v5376, -inf
    %5388 = vmax.xlane.f32.xlu0 %v5387
    %v5389 = vpop.xlane.xlu0 %5388
    %v5390 = vsel %vm1232, %v5381, -inf
    %5391 = vmax.xlane.f32.xlu0 %v5390
    %v5392 = vpop.xlane.xlu0 %5391
    %v5393 = vsub.f32 %v5371, %v5386
    %v5394 = vsub.f32 %v5376, %v5389
    %v5395 = vsub.f32 %v5381, %v5392
    %v5396 = vmul.f32 %v5393, 1.442695
    %v5397 = vpow.pop %v5396
    %v5398 = vmul.f32 %v5394, 1.442695
    %v5399 = vpow.pop %v5398
    %v5400 = vmul.f32 %v5395, 1.442695
    %v5401 = vpow.pop %v5400
    %v5402 = vsel %vm1225, %v5397, 0.0
    %5403 = vadd.xlane.f32.xlu0 %v5402
    %v5404 = vpop.xlane.xlu0 %5403
    %v5405 = vsel %vm1225, %v5399, 0.0
    %5406 = vadd.xlane.f32.xlu0 %v5405
    %v5407 = vpop.xlane.xlu0 %5406
    %v5408 = vsel %vm1232, %v5401, 0.0
    %5409 = vadd.xlane.f32.xlu0 %v5408
    %v5410 = vpop.xlane.xlu0 %5409
    %v5411 = vrcp.pop %v5404
    %v5412 = vmul.f32 %v5397, %v5411
    %v5413 = vrcp.pop %v5407
    %v5414 = vmul.f32 %v5399, %v5413
    %v5415 = vrcp.pop %v5410
    %v5416 = vmul.f32 %v5401, %v5415
    %v5417 = vsel %vm1813, %v4595, 0.0
    %v5418 = vsel %vm1813, %v4600, 0.0
    %v5419 = vsel %vm1813, %v4605, 0.0
    %v5421 = vsel %vm1225, %v5412, 0
    %v5424 = vsel %vm1225, %v5414, 0
    %v5427 = vsel %vm1225, %v5416, 0
    %v5430 = vsel %vm1406, %v5419, 0
    %5432 = vmatprep.subr.mxu0 0.0
    %5433 = vmatpush1.msra.mxu0 0.0
    %5434 = vmatprep.subr.mxu0 0.0
    %5435 = vmatpush1.msra.mxu0 0.0
    %5436 = vmatprep.subr.mxu0 0.0
    %5437 = vmatpush1.msra.mxu0 0.0
    %5438 = vmatprep.subr.mxu0 0.0
    %5439 = vmatpush1.msra.mxu0 0.0
    %5440 = vmatprep.subr.mxu0 0.0
    %5441 = vmatpush1.msra.mxu0 0.0
    %5442 = vmatprep.subr.mxu0 0.0
    %5443 = vmatpush1.msra.mxu0 0.0
    %5444 = vmatprep.subr.mxu0 0.0
    %5445 = vmatpush1.msra.mxu0 0.0
    %5446 = vmatprep.subr.mxu0 0.0
    %5447 = vmatpush1.msra.mxu0 0.0
    %5448 = vmatprep.subr.mxu0 0.0
    %5449 = vmatpush1.msra.mxu0 0.0
    %5450 = vmatprep.subr.mxu0 0.0
    %5451 = vmatpush1.msra.mxu0 0.0
    %5452 = vmatprep.subr.mxu0 0.0
    %5453 = vmatpush1.msra.mxu0 0.0
    %5454 = vmatprep.subr.mxu0 0.0
    %5455 = vmatpush1.msra.mxu0 0.0
    %5456 = vmatprep.subr.mxu0 0.0
    %5457 = vmatpush1.msra.mxu0 0.0
    %5458 = vmatprep.subr.mxu0 0.0
    %5459 = vmatpush1.msra.mxu0 %v5430
    %5460 = vmatprep.subr.mxu0 0.0
    %5461 = vmatpush1.msra.mxu0 %v5418
    %5462 = vmatprep.subr.mxu0 0.0
    %5463 = vmatpush1.msra.mxu0 %v5417
    %5464 = vmatprep.subr.mxu0 0.0
    %5465 = vmatpush2.msra.mxu0 0.0
    %5466 = vmatprep.subr.mxu0 0.0
    %5467 = vmatpush2.msra.mxu0 0.0
    %5468 = vmatprep.subr.mxu0 0.0
    %5469 = vmatpush2.msra.mxu0 0.0
    %5470 = vmatprep.subr.mxu0 0.0
    %5471 = vmatpush2.msra.mxu0 0.0
    %5472 = vmatprep.subr.mxu0 0.0
    %5473 = vmatpush2.msra.mxu0 0.0
    %5474 = vmatprep.subr.mxu0 0.0
    %5475 = vmatpush2.msra.mxu0 0.0
    %5476 = vmatprep.subr.mxu0 0.0
    %5477 = vmatpush2.msra.mxu0 0.0
    %5478 = vmatprep.subr.mxu0 0.0
    %5479 = vmatpush2.msra.mxu0 0.0
    %5480 = vmatprep.subr.mxu0 0.0
    %5481 = vmatpush2.msra.mxu0 0.0
    %5482 = vmatprep.subr.mxu0 0.0
    %5483 = vmatpush2.msra.mxu0 0.0
    %5484 = vmatprep.subr.mxu0 0.0
    %5485 = vmatpush2.msra.mxu0 0.0
    %5486 = vmatprep.subr.mxu0 0.0
    %5487 = vmatpush2.msra.mxu0 0.0
    %5488 = vmatprep.subr.mxu0 0.0
    %5489 = vmatpush2.msra.mxu0 0.0
    %5490 = vmatprep.subr.mxu0 0.0
    %5491 = vmatpush2.msra.mxu0 0.0
    %5492 = vmatprep.subr.mxu0 0.0
    %5493 = vmatpush2.msra.mxu0 0.0
    %5494 = vmatprep.subr.mxu0 0.0
    %5495 = vmatpush2.msra.mxu0 0.0
    %5496 = vmatprep.mubr.f32.mxu0 0.0
    %5497 = vmatmul.mubr.f32.gmra.mxu0 %v5421
    %v5498 = vpop.f32.mrf.mxu0
    %v5499 = vadd.f32 0.0, %v5498
    %v5500 = vpop.f32.mrf.mxu0
    %5501 = vmatprep.mubr.f32.mxu0 0.0
    %5502 = vmatmul.mubr.f32.gmra.mxu0 %v5424
    %v5503 = vpop.f32.mrf.mxu0
    %v5504 = vadd.f32 0.0, %v5503
    %v5505 = vpop.f32.mrf.mxu0
    %5506 = vmatprep.mubr.f32.mxu0 0.0
    %5507 = vmatmul.mubr.f32.gmra.mxu0 %v5427
    %v5508 = vpop.f32.mrf.mxu0
    %v5509 = vadd.f32 0.0, %v5508
    %v5510 = vpop.f32.mrf.mxu0
    %5511 = vdwg.mxu0
    %v5512 = vadd.f32 %v5286, %v5499
    %v5513 = vadd.f32 %v5287, %v5504
    %v5514 = vadd.f32 %v5288, %v5509
    %v5516 = vlaneseq
    %v5517 = vshrl.u32 %v5516, 7
    %v5518 = vsub.s32 0, %v5517
    %v5519 = vrot.slane %v3725, %v5518
    %v5522 = vsel %vm854, %v5512, 0
    %v5525 = vsel %vm854, %v5513, 0
    %v5528 = vsel %vm854, %v5514, 0
    %5530 = vmatprep.subr.mxu0 0.0
    %5531 = vmatpush1.msra.mxu0 0.0
    %5532 = vmatprep.subr.mxu0 0.0
    %5533 = vmatpush1.msra.mxu0 0.0
    %5534 = vmatprep.subr.mxu0 0.0
    %5535 = vmatpush1.msra.mxu0 0.0
    %5536 = vmatprep.subr.mxu0 0.0
    %5537 = vmatpush1.msra.mxu0 0.0
    %5538 = vmatprep.subr.mxu0 0.0
    %5539 = vmatpush1.msra.mxu0 0.0
    %5540 = vmatprep.subr.mxu0 0.0
    %5541 = vmatpush1.msra.mxu0 0.0
    %5542 = vmatprep.subr.mxu0 0.0
    %5543 = vmatpush1.msra.mxu0 0.0
    %5544 = vmatprep.subr.mxu0 0.0
    %5545 = vmatpush1.msra.mxu0 0.0
    %5546 = vmatprep.subr.mxu0 0.0
    %5547 = vmatpush1.msra.mxu0 0.0
    %5548 = vmatprep.subr.mxu0 0.0
    %5549 = vmatpush1.msra.mxu0 0.0
    %5550 = vmatprep.subr.mxu0 0.0
    %5551 = vmatpush1.msra.mxu0 0.0
    %5552 = vmatprep.subr.mxu0 0.0
    %5553 = vmatpush1.msra.mxu0 0.0
    %5554 = vmatprep.subr.mxu0 0.0
    %5555 = vmatpush1.msra.mxu0 %v3724
    %5556 = vmatprep.subr.mxu0 0.0
    %5557 = vmatpush1.msra.mxu0 %v3723
    %5558 = vmatprep.subr.mxu0 0.0
    %5559 = vmatpush1.msra.mxu0 %v3722
    %5560 = vmatprep.subr.mxu0 0.0
    %5561 = vmatpush1.msra.mxu0 %v3721
    %5562 = vmatprep.subr.mxu0 0.0
    %5563 = vmatpush2.msra.mxu0 0.0
    %5564 = vmatprep.subr.mxu0 0.0
    %5565 = vmatpush2.msra.mxu0 0.0
    %5566 = vmatprep.subr.mxu0 0.0
    %5567 = vmatpush2.msra.mxu0 0.0
    %5568 = vmatprep.subr.mxu0 0.0
    %5569 = vmatpush2.msra.mxu0 0.0
    %5570 = vmatprep.subr.mxu0 0.0
    %5571 = vmatpush2.msra.mxu0 0.0
    %5572 = vmatprep.subr.mxu0 0.0
    %5573 = vmatpush2.msra.mxu0 0.0
    %5574 = vmatprep.subr.mxu0 0.0
    %5575 = vmatpush2.msra.mxu0 0.0
    %5576 = vmatprep.subr.mxu0 0.0
    %5577 = vmatpush2.msra.mxu0 0.0
    %5578 = vmatprep.subr.mxu0 0.0
    %5579 = vmatpush2.msra.mxu0 0.0
    %5580 = vmatprep.subr.mxu0 0.0
    %5581 = vmatpush2.msra.mxu0 0.0
    %5582 = vmatprep.subr.mxu0 0.0
    %5583 = vmatpush2.msra.mxu0 0.0
    %5584 = vmatprep.subr.mxu0 0.0
    %5585 = vmatpush2.msra.mxu0 0.0
    %5586 = vmatprep.subr.mxu0 0.0
    %5587 = vmatpush2.msra.mxu0 0.0
    %5588 = vmatprep.subr.mxu0 0.0
    %5589 = vmatpush2.msra.mxu0 0.0
    %5590 = vmatprep.subr.mxu0 0.0
    %5591 = vmatpush2.msra.mxu0 0.0
    %5592 = vmatprep.subr.mxu0 0.0
    %5593 = vmatpush2.msra.mxu0 0.0
    %5594 = vmatprep.mubr.f32.mxu0 0.0
    %5595 = vmatmul.mubr.f32.gmra.mxu0 %v5522
    %v5596 = vpop.f32.mrf.mxu0
    %v5597 = vadd.f32 %v5519, %v5596
    %v5598 = vpop.f32.mrf.mxu0
    %5599 = vmatprep.mubr.f32.mxu0 0.0
    %5600 = vmatmul.mubr.f32.gmra.mxu0 %v5525
    %v5601 = vpop.f32.mrf.mxu0
    %v5602 = vadd.f32 %v5519, %v5601
    %v5603 = vpop.f32.mrf.mxu0
    %5604 = vmatprep.mubr.f32.mxu0 0.0
    %5605 = vmatmul.mubr.f32.gmra.mxu0 %v5528
    %v5606 = vpop.f32.mrf.mxu0
    %v5607 = vadd.f32 %v5519, %v5606
    %v5608 = vpop.f32.mrf.mxu0
    %5609 = vdwg.mxu0
    %v5610 = vadd.f32 %v3703, %v5597
    %v5611 = vadd.f32 %v3704, %v5602
    %v5612 = vadd.f32 %v3705, %v5607
    %v5613 = vsel %vm854, %v5610, 0.0
    %5614 = vadd.xlane.f32.xlu0 %v5613
    %v5615 = vpop.xlane.xlu0 %5614
    %v5616 = vsel %vm854, %v5611, 0.0
    %5617 = vadd.xlane.f32.xlu0 %v5616
    %v5618 = vpop.xlane.xlu0 %5617
    %v5619 = vsel %vm2144, %v5612, 0.0
    %5620 = vadd.xlane.f32.xlu0 %v5619
    %v5621 = vpop.xlane.xlu0 %5620
    %v5622 = vmul.f32 %v5615, %v2148
    %v5623 = vmul.f32 %v5618, %v2148
    %v5624 = vmul.f32 %v5621, %v2148
    %v5625 = vsub.f32 %v5610, %v5622
    %v5626 = vsub.f32 %v5611, %v5623
    %v5627 = vsub.f32 %v5612, %v5624
    %v5628 = vmul.f32 %v5625, %v5625
    %v5629 = vmul.f32 %v5626, %v5626
    %v5630 = vmul.f32 %v5627, %v5627
    %v5631 = vsel %vm854, %v5628, 0.0
    %5632 = vadd.xlane.f32.xlu0 %v5631
    %v5633 = vpop.xlane.xlu0 %5632
    %v5634 = vsel %vm854, %v5629, 0.0
    %5635 = vadd.xlane.f32.xlu0 %v5634
    %v5636 = vpop.xlane.xlu0 %5635
    %v5637 = vsel %vm2144, %v5630, 0.0
    %5638 = vadd.xlane.f32.xlu0 %v5637
    %v5639 = vpop.xlane.xlu0 %5638
    %v5640 = vmul.f32 %v5633, %v2148
    %v5641 = vmul.f32 %v5636, %v2148
    %v5642 = vmul.f32 %v5639, %v2148
    %v5643 = vadd.f32 %v5640, 1e-05
    %v5644 = vadd.f32 %v5641, 1e-05
    %v5645 = vadd.f32 %v5642, 1e-05
    %v5646 = vrsqrt.pop %v5643
    %v5647 = vrsqrt.pop %v5644
    %v5648 = vrsqrt.pop %v5645
    %v5649 = vmul.f32 %v5625, %v5646
    %v5650 = vmul.f32 %v5626, %v5647
    %v5651 = vmul.f32 %v5627, %v5648
    %v5653 = vlaneseq
    %v5654 = vshrl.u32 %v5653, 7
    %v5655 = vsub.s32 0, %v5654
    %v5656 = vrot.slane %v3726, %v5655
    %v5658 = vmul.f32 %v5649, %v5656
    %v5659 = vmul.f32 %v5650, %v5656
    %v5660 = vmul.f32 %v5651, %v5656
    %v5662 = vlaneseq
    %v5663 = vshrl.u32 %v5662, 7
    %v5664 = vsub.s32 0, %v5663
    %v5665 = vrot.slane %v3727, %v5664
    %v5667 = vadd.f32 %v5658, %v5665
    %v5668 = vadd.f32 %v5659, %v5665
    %v5669 = vadd.f32 %v5660, %v5665
    %v5672 = vlaneseq
    %v5673 = vshrl.u32 %v5672, 7
    %v5674 = vsub.s32 0, %v5673
    %v5675 = vrot.slane %v3760, %v5674
    %v5676 = vlaneseq
    %v5677 = vshrl.u32 %v5676, 7
    %v5678 = vsub.s32 1, %v5677
    %v5679 = vrot.slane %v3760, %v5678
    %v5680 = vlaneseq
    %v5681 = vshrl.u32 %v5680, 7
    %v5682 = vsub.s32 2, %v5681
    %v5683 = vrot.slane %v3760, %v5682
    %v5684 = vlaneseq
    %v5685 = vshrl.u32 %v5684, 7
    %v5686 = vsub.s32 3, %v5685
    %v5687 = vrot.slane %v3760, %v5686
    %v5688 = vlaneseq
    %v5689 = vshrl.u32 %v5688, 7
    %v5690 = vsub.s32 4, %v5689
    %v5691 = vrot.slane %v3760, %v5690
    %v5692 = vlaneseq
    %v5693 = vshrl.u32 %v5692, 7
    %v5694 = vsub.s32 5, %v5693
    %v5695 = vrot.slane %v3760, %v5694
    %v5696 = vlaneseq
    %v5697 = vshrl.u32 %v5696, 7
    %v5698 = vsub.s32 6, %v5697
    %v5699 = vrot.slane %v3760, %v5698
    %v5700 = vlaneseq
    %v5701 = vshrl.u32 %v5700, 7
    %v5702 = vsub.s32 7, %v5701
    %v5703 = vrot.slane %v3760, %v5702
    %v5704 = vlaneseq
    %v5705 = vshrl.u32 %v5704, 7
    %v5706 = vsub.s32 0, %v5705
    %v5707 = vrot.slane %v3761, %v5706
    %v5708 = vlaneseq
    %v5709 = vshrl.u32 %v5708, 7
    %v5710 = vsub.s32 1, %v5709
    %v5711 = vrot.slane %v3761, %v5710
    %v5712 = vlaneseq
    %v5713 = vshrl.u32 %v5712, 7
    %v5714 = vsub.s32 2, %v5713
    %v5715 = vrot.slane %v3761, %v5714
    %v5716 = vlaneseq
    %v5717 = vshrl.u32 %v5716, 7
    %v5718 = vsub.s32 3, %v5717
    %v5719 = vrot.slane %v3761, %v5718
    %v5720 = vlaneseq
    %v5721 = vshrl.u32 %v5720, 7
    %v5722 = vsub.s32 4, %v5721
    %v5723 = vrot.slane %v3761, %v5722
    %v5724 = vlaneseq
    %v5725 = vshrl.u32 %v5724, 7
    %v5726 = vsub.s32 5, %v5725
    %v5727 = vrot.slane %v3761, %v5726
    %v5728 = vlaneseq
    %v5729 = vshrl.u32 %v5728, 7
    %v5730 = vsub.s32 6, %v5729
    %v5731 = vrot.slane %v3761, %v5730
    %v5732 = vlaneseq
    %v5733 = vshrl.u32 %v5732, 7
    %v5734 = vsub.s32 7, %v5733
    %v5735 = vrot.slane %v3761, %v5734
    %v5753 = vsel %vm854, %v5667, 0
    %v5756 = vsel %vm854, %v5668, 0
    %v5759 = vsel %vm854, %v5669, 0
    %5761 = vmatprep.subr.mxu0 0.0
    %5762 = vmatpush1.msra.mxu0 0.0
    %5763 = vmatprep.subr.mxu0 0.0
    %5764 = vmatpush1.msra.mxu0 0.0
    %5765 = vmatprep.subr.mxu0 0.0
    %5766 = vmatpush1.msra.mxu0 0.0
    %5767 = vmatprep.subr.mxu0 0.0
    %5768 = vmatpush1.msra.mxu0 0.0
    %5769 = vmatprep.subr.mxu0 0.0
    %5770 = vmatpush1.msra.mxu0 0.0
    %5771 = vmatprep.subr.mxu0 0.0
    %5772 = vmatpush1.msra.mxu0 0.0
    %5773 = vmatprep.subr.mxu0 0.0
    %5774 = vmatpush1.msra.mxu0 0.0
    %5775 = vmatprep.subr.mxu0 0.0
    %5776 = vmatpush1.msra.mxu0 0.0
    %5777 = vmatprep.subr.mxu0 0.0
    %5778 = vmatpush1.msra.mxu0 0.0
    %5779 = vmatprep.subr.mxu0 0.0
    %5780 = vmatpush1.msra.mxu0 0.0
    %5781 = vmatprep.subr.mxu0 0.0
    %5782 = vmatpush1.msra.mxu0 0.0
    %5783 = vmatprep.subr.mxu0 0.0
    %5784 = vmatpush1.msra.mxu0 0.0
    %5785 = vmatprep.subr.mxu0 %v4070
    %5786 = vmatpush1.msra.mxu0 %v4069
    %5787 = vmatprep.subr.mxu0 %v4054
    %5788 = vmatpush1.msra.mxu0 %v4053
    %5789 = vmatprep.subr.mxu0 %v4038
    %5790 = vmatpush1.msra.mxu0 %v4037
    %5791 = vmatprep.subr.mxu0 %v4022
    %5792 = vmatpush1.msra.mxu0 %v4021
    %5793 = vmatprep.subr.mxu0 0.0
    %5794 = vmatpush2.msra.mxu0 0.0
    %5795 = vmatprep.subr.mxu0 0.0
    %5796 = vmatpush2.msra.mxu0 0.0
    %5797 = vmatprep.subr.mxu0 0.0
    %5798 = vmatpush2.msra.mxu0 0.0
    %5799 = vmatprep.subr.mxu0 0.0
    %5800 = vmatpush2.msra.mxu0 0.0
    %5801 = vmatprep.subr.mxu0 0.0
    %5802 = vmatpush2.msra.mxu0 0.0
    %5803 = vmatprep.subr.mxu0 0.0
    %5804 = vmatpush2.msra.mxu0 0.0
    %5805 = vmatprep.subr.mxu0 0.0
    %5806 = vmatpush2.msra.mxu0 0.0
    %5807 = vmatprep.subr.mxu0 0.0
    %5808 = vmatpush2.msra.mxu0 0.0
    %5809 = vmatprep.subr.mxu0 0.0
    %5810 = vmatpush2.msra.mxu0 0.0
    %5811 = vmatprep.subr.mxu0 0.0
    %5812 = vmatpush2.msra.mxu0 0.0
    %5813 = vmatprep.subr.mxu0 0.0
    %5814 = vmatpush2.msra.mxu0 0.0
    %5815 = vmatprep.subr.mxu0 0.0
    %5816 = vmatpush2.msra.mxu0 0.0
    %5817 = vmatprep.subr.mxu0 0.0
    %5818 = vmatpush2.msra.mxu0 0.0
    %5819 = vmatprep.subr.mxu0 0.0
    %5820 = vmatpush2.msra.mxu0 0.0
    %5821 = vmatprep.subr.mxu0 0.0
    %5822 = vmatpush2.msra.mxu0 0.0
    %5823 = vmatprep.subr.mxu0 0.0
    %5824 = vmatpush2.msra.mxu0 0.0
    %5825 = vmatprep.mubr.f32.mxu0 0.0
    %5826 = vmatmul.mubr.f32.gmra.mxu0 %v5753
    %v5827 = vpop.f32.mrf.mxu0
    %v5828 = vadd.f32 %v5675, %v5827
    %v5829 = vpop.f32.mrf.mxu0
    %v5830 = vadd.f32 %v5679, %v5829
    %5831 = vmatprep.mubr.f32.mxu0 0.0
    %5832 = vmatmul.mubr.f32.gmra.mxu0 %v5756
    %v5833 = vpop.f32.mrf.mxu0
    %v5834 = vadd.f32 %v5675, %v5833
    %v5835 = vpop.f32.mrf.mxu0
    %v5836 = vadd.f32 %v5679, %v5835
    %5837 = vmatprep.mubr.f32.mxu0 0.0
    %5838 = vmatmul.mubr.f32.gmra.mxu0 %v5759
    %v5839 = vpop.f32.mrf.mxu0
    %v5840 = vadd.f32 %v5675, %v5839
    %v5841 = vpop.f32.mrf.mxu0
    %v5842 = vadd.f32 %v5679, %v5841
    %5843 = vdwg.mxu0
    %5844 = vmatprep.subr.mxu0 0.0
    %5845 = vmatpush1.msra.mxu0 0.0
    %5846 = vmatprep.subr.mxu0 0.0
    %5847 = vmatpush1.msra.mxu0 0.0
    %5848 = vmatprep.subr.mxu0 0.0
    %5849 = vmatpush1.msra.mxu0 0.0
    %5850 = vmatprep.subr.mxu0 0.0
    %5851 = vmatpush1.msra.mxu0 0.0
    %5852 = vmatprep.subr.mxu0 0.0
    %5853 = vmatpush1.msra.mxu0 0.0
    %5854 = vmatprep.subr.mxu0 0.0
    %5855 = vmatpush1.msra.mxu0 0.0
    %5856 = vmatprep.subr.mxu0 0.0
    %5857 = vmatpush1.msra.mxu0 0.0
    %5858 = vmatprep.subr.mxu0 0.0
    %5859 = vmatpush1.msra.mxu0 0.0
    %5860 = vmatprep.subr.mxu0 0.0
    %5861 = vmatpush1.msra.mxu0 0.0
    %5862 = vmatprep.subr.mxu0 0.0
    %5863 = vmatpush1.msra.mxu0 0.0
    %5864 = vmatprep.subr.mxu0 0.0
    %5865 = vmatpush1.msra.mxu0 0.0
    %5866 = vmatprep.subr.mxu0 0.0
    %5867 = vmatpush1.msra.mxu0 0.0
    %5868 = vmatprep.subr.mxu0 %v4072
    %5869 = vmatpush1.msra.mxu0 %v4071
    %5870 = vmatprep.subr.mxu0 %v4056
    %5871 = vmatpush1.msra.mxu0 %v4055
    %5872 = vmatprep.subr.mxu0 %v4040
    %5873 = vmatpush1.msra.mxu0 %v4039
    %5874 = vmatprep.subr.mxu0 %v4024
    %5875 = vmatpush1.msra.mxu0 %v4023
    %5876 = vmatprep.subr.mxu0 0.0
    %5877 = vmatpush2.msra.mxu0 0.0
    %5878 = vmatprep.subr.mxu0 0.0
    %5879 = vmatpush2.msra.mxu0 0.0
    %5880 = vmatprep.subr.mxu0 0.0
    %5881 = vmatpush2.msra.mxu0 0.0
    %5882 = vmatprep.subr.mxu0 0.0
    %5883 = vmatpush2.msra.mxu0 0.0
    %5884 = vmatprep.subr.mxu0 0.0
    %5885 = vmatpush2.msra.mxu0 0.0
    %5886 = vmatprep.subr.mxu0 0.0
    %5887 = vmatpush2.msra.mxu0 0.0
    %5888 = vmatprep.subr.mxu0 0.0
    %5889 = vmatpush2.msra.mxu0 0.0
    %5890 = vmatprep.subr.mxu0 0.0
    %5891 = vmatpush2.msra.mxu0 0.0
    %5892 = vmatprep.subr.mxu0 0.0
    %5893 = vmatpush2.msra.mxu0 0.0
    %5894 = vmatprep.subr.mxu0 0.0
    %5895 = vmatpush2.msra.mxu0 0.0
    %5896 = vmatprep.subr.mxu0 0.0
    %5897 = vmatpush2.msra.mxu0 0.0
    %5898 = vmatprep.subr.mxu0 0.0
    %5899 = vmatpush2.msra.mxu0 0.0
    %5900 = vmatprep.subr.mxu0 0.0
    %5901 = vmatpush2.msra.mxu0 0.0
    %5902 = vmatprep.subr.mxu0 0.0
    %5903 = vmatpush2.msra.mxu0 0.0
    %5904 = vmatprep.subr.mxu0 0.0
    %5905 = vmatpush2.msra.mxu0 0.0
    %5906 = vmatprep.subr.mxu0 0.0
    %5907 = vmatpush2.msra.mxu0 0.0
    %5908 = vmatprep.mubr.f32.mxu0 0.0
    %5909 = vmatmul.mubr.f32.gmra.mxu0 %v5753
    %v5910 = vpop.f32.mrf.mxu0
    %v5911 = vadd.f32 %v5683, %v5910
    %v5912 = vpop.f32.mrf.mxu0
    %v5913 = vadd.f32 %v5687, %v5912
    %5914 = vmatprep.mubr.f32.mxu0 0.0
    %5915 = vmatmul.mubr.f32.gmra.mxu0 %v5756
    %v5916 = vpop.f32.mrf.mxu0
    %v5917 = vadd.f32 %v5683, %v5916
    %v5918 = vpop.f32.mrf.mxu0
    %v5919 = vadd.f32 %v5687, %v5918
    %5920 = vmatprep.mubr.f32.mxu0 0.0
    %5921 = vmatmul.mubr.f32.gmra.mxu0 %v5759
    %v5922 = vpop.f32.mrf.mxu0
    %v5923 = vadd.f32 %v5683, %v5922
    %v5924 = vpop.f32.mrf.mxu0
    %v5925 = vadd.f32 %v5687, %v5924
    %5926 = vdwg.mxu0
    %5927 = vmatprep.subr.mxu0 0.0
    %5928 = vmatpush1.msra.mxu0 0.0
    %5929 = vmatprep.subr.mxu0 0.0
    %5930 = vmatpush1.msra.mxu0 0.0
    %5931 = vmatprep.subr.mxu0 0.0
    %5932 = vmatpush1.msra.mxu0 0.0
    %5933 = vmatprep.subr.mxu0 0.0
    %5934 = vmatpush1.msra.mxu0 0.0
    %5935 = vmatprep.subr.mxu0 0.0
    %5936 = vmatpush1.msra.mxu0 0.0
    %5937 = vmatprep.subr.mxu0 0.0
    %5938 = vmatpush1.msra.mxu0 0.0
    %5939 = vmatprep.subr.mxu0 0.0
    %5940 = vmatpush1.msra.mxu0 0.0
    %5941 = vmatprep.subr.mxu0 0.0
    %5942 = vmatpush1.msra.mxu0 0.0
    %5943 = vmatprep.subr.mxu0 0.0
    %5944 = vmatpush1.msra.mxu0 0.0
    %5945 = vmatprep.subr.mxu0 0.0
    %5946 = vmatpush1.msra.mxu0 0.0
    %5947 = vmatprep.subr.mxu0 0.0
    %5948 = vmatpush1.msra.mxu0 0.0
    %5949 = vmatprep.subr.mxu0 0.0
    %5950 = vmatpush1.msra.mxu0 0.0
    %5951 = vmatprep.subr.mxu0 %v4074
    %5952 = vmatpush1.msra.mxu0 %v4073
    %5953 = vmatprep.subr.mxu0 %v4058
    %5954 = vmatpush1.msra.mxu0 %v4057
    %5955 = vmatprep.subr.mxu0 %v4042
    %5956 = vmatpush1.msra.mxu0 %v4041
    %5957 = vmatprep.subr.mxu0 %v4026
    %5958 = vmatpush1.msra.mxu0 %v4025
    %5959 = vmatprep.subr.mxu0 0.0
    %5960 = vmatpush2.msra.mxu0 0.0
    %5961 = vmatprep.subr.mxu0 0.0
    %5962 = vmatpush2.msra.mxu0 0.0
    %5963 = vmatprep.subr.mxu0 0.0
    %5964 = vmatpush2.msra.mxu0 0.0
    %5965 = vmatprep.subr.mxu0 0.0
    %5966 = vmatpush2.msra.mxu0 0.0
    %5967 = vmatprep.subr.mxu0 0.0
    %5968 = vmatpush2.msra.mxu0 0.0
    %5969 = vmatprep.subr.mxu0 0.0
    %5970 = vmatpush2.msra.mxu0 0.0
    %5971 = vmatprep.subr.mxu0 0.0
    %5972 = vmatpush2.msra.mxu0 0.0
    %5973 = vmatprep.subr.mxu0 0.0
    %5974 = vmatpush2.msra.mxu0 0.0
    %5975 = vmatprep.subr.mxu0 0.0
    %5976 = vmatpush2.msra.mxu0 0.0
    %5977 = vmatprep.subr.mxu0 0.0
    %5978 = vmatpush2.msra.mxu0 0.0
    %5979 = vmatprep.subr.mxu0 0.0
    %5980 = vmatpush2.msra.mxu0 0.0
    %5981 = vmatprep.subr.mxu0 0.0
    %5982 = vmatpush2.msra.mxu0 0.0
    %5983 = vmatprep.subr.mxu0 0.0
    %5984 = vmatpush2.msra.mxu0 0.0
    %5985 = vmatprep.subr.mxu0 0.0
    %5986 = vmatpush2.msra.mxu0 0.0
    %5987 = vmatprep.subr.mxu0 0.0
    %5988 = vmatpush2.msra.mxu0 0.0
    %5989 = vmatprep.subr.mxu0 0.0
    %5990 = vmatpush2.msra.mxu0 0.0
    %5991 = vmatprep.mubr.f32.mxu0 0.0
    %5992 = vmatmul.mubr.f32.gmra.mxu0 %v5753
    %v5993 = vpop.f32.mrf.mxu0
    %v5994 = vadd.f32 %v5691, %v5993
    %v5995 = vpop.f32.mrf.mxu0
    %v5996 = vadd.f32 %v5695, %v5995
    %5997 = vmatprep.mubr.f32.mxu0 0.0
    %5998 = vmatmul.mubr.f32.gmra.mxu0 %v5756
    %v5999 = vpop.f32.mrf.mxu0
    %v6000 = vadd.f32 %v5691, %v5999
    %v6001 = vpop.f32.mrf.mxu0
    %v6002 = vadd.f32 %v5695, %v6001
    %6003 = vmatprep.mubr.f32.mxu0 0.0
    %6004 = vmatmul.mubr.f32.gmra.mxu0 %v5759
    %v6005 = vpop.f32.mrf.mxu0
    %v6006 = vadd.f32 %v5691, %v6005
    %v6007 = vpop.f32.mrf.mxu0
    %v6008 = vadd.f32 %v5695, %v6007
    %6009 = vdwg.mxu0
    %6010 = vmatprep.subr.mxu0 0.0
    %6011 = vmatpush1.msra.mxu0 0.0
    %6012 = vmatprep.subr.mxu0 0.0
    %6013 = vmatpush1.msra.mxu0 0.0
    %6014 = vmatprep.subr.mxu0 0.0
    %6015 = vmatpush1.msra.mxu0 0.0
    %6016 = vmatprep.subr.mxu0 0.0
    %6017 = vmatpush1.msra.mxu0 0.0
    %6018 = vmatprep.subr.mxu0 0.0
    %6019 = vmatpush1.msra.mxu0 0.0
    %6020 = vmatprep.subr.mxu0 0.0
    %6021 = vmatpush1.msra.mxu0 0.0
    %6022 = vmatprep.subr.mxu0 0.0
    %6023 = vmatpush1.msra.mxu0 0.0
    %6024 = vmatprep.subr.mxu0 0.0
    %6025 = vmatpush1.msra.mxu0 0.0
    %6026 = vmatprep.subr.mxu0 0.0
    %6027 = vmatpush1.msra.mxu0 0.0
    %6028 = vmatprep.subr.mxu0 0.0
    %6029 = vmatpush1.msra.mxu0 0.0
    %6030 = vmatprep.subr.mxu0 0.0
    %6031 = vmatpush1.msra.mxu0 0.0
    %6032 = vmatprep.subr.mxu0 0.0
    %6033 = vmatpush1.msra.mxu0 0.0
    %6034 = vmatprep.subr.mxu0 %v4076
    %6035 = vmatpush1.msra.mxu0 %v4075
    %6036 = vmatprep.subr.mxu0 %v4060
    %6037 = vmatpush1.msra.mxu0 %v4059
    %6038 = vmatprep.subr.mxu0 %v4044
    %6039 = vmatpush1.msra.mxu0 %v4043
    %6040 = vmatprep.subr.mxu0 %v4028
    %6041 = vmatpush1.msra.mxu0 %v4027
    %6042 = vmatprep.subr.mxu0 0.0
    %6043 = vmatpush2.msra.mxu0 0.0
    %6044 = vmatprep.subr.mxu0 0.0
    %6045 = vmatpush2.msra.mxu0 0.0
    %6046 = vmatprep.subr.mxu0 0.0
    %6047 = vmatpush2.msra.mxu0 0.0
    %6048 = vmatprep.subr.mxu0 0.0
    %6049 = vmatpush2.msra.mxu0 0.0
    %6050 = vmatprep.subr.mxu0 0.0
    %6051 = vmatpush2.msra.mxu0 0.0
    %6052 = vmatprep.subr.mxu0 0.0
    %6053 = vmatpush2.msra.mxu0 0.0
    %6054 = vmatprep.subr.mxu0 0.0
    %6055 = vmatpush2.msra.mxu0 0.0
    %6056 = vmatprep.subr.mxu0 0.0
    %6057 = vmatpush2.msra.mxu0 0.0
    %6058 = vmatprep.subr.mxu0 0.0
    %6059 = vmatpush2.msra.mxu0 0.0
    %6060 = vmatprep.subr.mxu0 0.0
    %6061 = vmatpush2.msra.mxu0 0.0
    %6062 = vmatprep.subr.mxu0 0.0
    %6063 = vmatpush2.msra.mxu0 0.0
    %6064 = vmatprep.subr.mxu0 0.0
    %6065 = vmatpush2.msra.mxu0 0.0
    %6066 = vmatprep.subr.mxu0 0.0
    %6067 = vmatpush2.msra.mxu0 0.0
    %6068 = vmatprep.subr.mxu0 0.0
    %6069 = vmatpush2.msra.mxu0 0.0
    %6070 = vmatprep.subr.mxu0 0.0
    %6071 = vmatpush2.msra.mxu0 0.0
    %6072 = vmatprep.subr.mxu0 0.0
    %6073 = vmatpush2.msra.mxu0 0.0
    %6074 = vmatprep.mubr.f32.mxu0 0.0
    %6075 = vmatmul.mubr.f32.gmra.mxu0 %v5753
    %v6076 = vpop.f32.mrf.mxu0
    %v6077 = vadd.f32 %v5699, %v6076
    %v6078 = vpop.f32.mrf.mxu0
    %v6079 = vadd.f32 %v5703, %v6078
    %6080 = vmatprep.mubr.f32.mxu0 0.0
    %6081 = vmatmul.mubr.f32.gmra.mxu0 %v5756
    %v6082 = vpop.f32.mrf.mxu0
    %v6083 = vadd.f32 %v5699, %v6082
    %v6084 = vpop.f32.mrf.mxu0
    %v6085 = vadd.f32 %v5703, %v6084
    %6086 = vmatprep.mubr.f32.mxu0 0.0
    %6087 = vmatmul.mubr.f32.gmra.mxu0 %v5759
    %v6088 = vpop.f32.mrf.mxu0
    %v6089 = vadd.f32 %v5699, %v6088
    %v6090 = vpop.f32.mrf.mxu0
    %v6091 = vadd.f32 %v5703, %v6090
    %6092 = vdwg.mxu0
    %6093 = vmatprep.subr.mxu0 0.0
    %6094 = vmatpush1.msra.mxu0 0.0
    %6095 = vmatprep.subr.mxu0 0.0
    %6096 = vmatpush1.msra.mxu0 0.0
    %6097 = vmatprep.subr.mxu0 0.0
    %6098 = vmatpush1.msra.mxu0 0.0
    %6099 = vmatprep.subr.mxu0 0.0
    %6100 = vmatpush1.msra.mxu0 0.0
    %6101 = vmatprep.subr.mxu0 0.0
    %6102 = vmatpush1.msra.mxu0 0.0
    %6103 = vmatprep.subr.mxu0 0.0
    %6104 = vmatpush1.msra.mxu0 0.0
    %6105 = vmatprep.subr.mxu0 0.0
    %6106 = vmatpush1.msra.mxu0 0.0
    %6107 = vmatprep.subr.mxu0 0.0
    %6108 = vmatpush1.msra.mxu0 0.0
    %6109 = vmatprep.subr.mxu0 0.0
    %6110 = vmatpush1.msra.mxu0 0.0
    %6111 = vmatprep.subr.mxu0 0.0
    %6112 = vmatpush1.msra.mxu0 0.0
    %6113 = vmatprep.subr.mxu0 0.0
    %6114 = vmatpush1.msra.mxu0 0.0
    %6115 = vmatprep.subr.mxu0 0.0
    %6116 = vmatpush1.msra.mxu0 0.0
    %6117 = vmatprep.subr.mxu0 %v4078
    %6118 = vmatpush1.msra.mxu0 %v4077
    %6119 = vmatprep.subr.mxu0 %v4062
    %6120 = vmatpush1.msra.mxu0 %v4061
    %6121 = vmatprep.subr.mxu0 %v4046
    %6122 = vmatpush1.msra.mxu0 %v4045
    %6123 = vmatprep.subr.mxu0 %v4030
    %6124 = vmatpush1.msra.mxu0 %v4029
    %6125 = vmatprep.subr.mxu0 0.0
    %6126 = vmatpush2.msra.mxu0 0.0
    %6127 = vmatprep.subr.mxu0 0.0
    %6128 = vmatpush2.msra.mxu0 0.0
    %6129 = vmatprep.subr.mxu0 0.0
    %6130 = vmatpush2.msra.mxu0 0.0
    %6131 = vmatprep.subr.mxu0 0.0
    %6132 = vmatpush2.msra.mxu0 0.0
    %6133 = vmatprep.subr.mxu0 0.0
    %6134 = vmatpush2.msra.mxu0 0.0
    %6135 = vmatprep.subr.mxu0 0.0
    %6136 = vmatpush2.msra.mxu0 0.0
    %6137 = vmatprep.subr.mxu0 0.0
    %6138 = vmatpush2.msra.mxu0 0.0
    %6139 = vmatprep.subr.mxu0 0.0
    %6140 = vmatpush2.msra.mxu0 0.0
    %6141 = vmatprep.subr.mxu0 0.0
    %6142 = vmatpush2.msra.mxu0 0.0
    %6143 = vmatprep.subr.mxu0 0.0
    %6144 = vmatpush2.msra.mxu0 0.0
    %6145 = vmatprep.subr.mxu0 0.0
    %6146 = vmatpush2.msra.mxu0 0.0
    %6147 = vmatprep.subr.mxu0 0.0
    %6148 = vmatpush2.msra.mxu0 0.0
    %6149 = vmatprep.subr.mxu0 0.0
    %6150 = vmatpush2.msra.mxu0 0.0
    %6151 = vmatprep.subr.mxu0 0.0
    %6152 = vmatpush2.msra.mxu0 0.0
    %6153 = vmatprep.subr.mxu0 0.0
    %6154 = vmatpush2.msra.mxu0 0.0
    %6155 = vmatprep.subr.mxu0 0.0
    %6156 = vmatpush2.msra.mxu0 0.0
    %6157 = vmatprep.mubr.f32.mxu0 0.0
    %6158 = vmatmul.mubr.f32.gmra.mxu0 %v5753
    %v6159 = vpop.f32.mrf.mxu0
    %v6160 = vadd.f32 %v5707, %v6159
    %v6161 = vpop.f32.mrf.mxu0
    %v6162 = vadd.f32 %v5711, %v6161
    %6163 = vmatprep.mubr.f32.mxu0 0.0
    %6164 = vmatmul.mubr.f32.gmra.mxu0 %v5756
    %v6165 = vpop.f32.mrf.mxu0
    %v6166 = vadd.f32 %v5707, %v6165
    %v6167 = vpop.f32.mrf.mxu0
    %v6168 = vadd.f32 %v5711, %v6167
    %6169 = vmatprep.mubr.f32.mxu0 0.0
    %6170 = vmatmul.mubr.f32.gmra.mxu0 %v5759
    %v6171 = vpop.f32.mrf.mxu0
    %v6172 = vadd.f32 %v5707, %v6171
    %v6173 = vpop.f32.mrf.mxu0
    %v6174 = vadd.f32 %v5711, %v6173
    %6175 = vdwg.mxu0
    %6176 = vmatprep.subr.mxu0 0.0
    %6177 = vmatpush1.msra.mxu0 0.0
    %6178 = vmatprep.subr.mxu0 0.0
    %6179 = vmatpush1.msra.mxu0 0.0
    %6180 = vmatprep.subr.mxu0 0.0
    %6181 = vmatpush1.msra.mxu0 0.0
    %6182 = vmatprep.subr.mxu0 0.0
    %6183 = vmatpush1.msra.mxu0 0.0
    %6184 = vmatprep.subr.mxu0 0.0
    %6185 = vmatpush1.msra.mxu0 0.0
    %6186 = vmatprep.subr.mxu0 0.0
    %6187 = vmatpush1.msra.mxu0 0.0
    %6188 = vmatprep.subr.mxu0 0.0
    %6189 = vmatpush1.msra.mxu0 0.0
    %6190 = vmatprep.subr.mxu0 0.0
    %6191 = vmatpush1.msra.mxu0 0.0
    %6192 = vmatprep.subr.mxu0 0.0
    %6193 = vmatpush1.msra.mxu0 0.0
    %6194 = vmatprep.subr.mxu0 0.0
    %6195 = vmatpush1.msra.mxu0 0.0
    %6196 = vmatprep.subr.mxu0 0.0
    %6197 = vmatpush1.msra.mxu0 0.0
    %6198 = vmatprep.subr.mxu0 0.0
    %6199 = vmatpush1.msra.mxu0 0.0
    %6200 = vmatprep.subr.mxu0 %v4080
    %6201 = vmatpush1.msra.mxu0 %v4079
    %6202 = vmatprep.subr.mxu0 %v4064
    %6203 = vmatpush1.msra.mxu0 %v4063
    %6204 = vmatprep.subr.mxu0 %v4048
    %6205 = vmatpush1.msra.mxu0 %v4047
    %6206 = vmatprep.subr.mxu0 %v4032
    %6207 = vmatpush1.msra.mxu0 %v4031
    %6208 = vmatprep.subr.mxu0 0.0
    %6209 = vmatpush2.msra.mxu0 0.0
    %6210 = vmatprep.subr.mxu0 0.0
    %6211 = vmatpush2.msra.mxu0 0.0
    %6212 = vmatprep.subr.mxu0 0.0
    %6213 = vmatpush2.msra.mxu0 0.0
    %6214 = vmatprep.subr.mxu0 0.0
    %6215 = vmatpush2.msra.mxu0 0.0
    %6216 = vmatprep.subr.mxu0 0.0
    %6217 = vmatpush2.msra.mxu0 0.0
    %6218 = vmatprep.subr.mxu0 0.0
    %6219 = vmatpush2.msra.mxu0 0.0
    %6220 = vmatprep.subr.mxu0 0.0
    %6221 = vmatpush2.msra.mxu0 0.0
    %6222 = vmatprep.subr.mxu0 0.0
    %6223 = vmatpush2.msra.mxu0 0.0
    %6224 = vmatprep.subr.mxu0 0.0
    %6225 = vmatpush2.msra.mxu0 0.0
    %6226 = vmatprep.subr.mxu0 0.0
    %6227 = vmatpush2.msra.mxu0 0.0
    %6228 = vmatprep.subr.mxu0 0.0
    %6229 = vmatpush2.msra.mxu0 0.0
    %6230 = vmatprep.subr.mxu0 0.0
    %6231 = vmatpush2.msra.mxu0 0.0
    %6232 = vmatprep.subr.mxu0 0.0
    %6233 = vmatpush2.msra.mxu0 0.0
    %6234 = vmatprep.subr.mxu0 0.0
    %6235 = vmatpush2.msra.mxu0 0.0
    %6236 = vmatprep.subr.mxu0 0.0
    %6237 = vmatpush2.msra.mxu0 0.0
    %6238 = vmatprep.subr.mxu0 0.0
    %6239 = vmatpush2.msra.mxu0 0.0
    %6240 = vmatprep.mubr.f32.mxu0 0.0
    %6241 = vmatmul.mubr.f32.gmra.mxu0 %v5753
    %v6242 = vpop.f32.mrf.mxu0
    %v6243 = vadd.f32 %v5715, %v6242
    %v6244 = vpop.f32.mrf.mxu0
    %v6245 = vadd.f32 %v5719, %v6244
    %6246 = vmatprep.mubr.f32.mxu0 0.0
    %6247 = vmatmul.mubr.f32.gmra.mxu0 %v5756
    %v6248 = vpop.f32.mrf.mxu0
    %v6249 = vadd.f32 %v5715, %v6248
    %v6250 = vpop.f32.mrf.mxu0
    %v6251 = vadd.f32 %v5719, %v6250
    %6252 = vmatprep.mubr.f32.mxu0 0.0
    %6253 = vmatmul.mubr.f32.gmra.mxu0 %v5759
    %v6254 = vpop.f32.mrf.mxu0
    %v6255 = vadd.f32 %v5715, %v6254
    %v6256 = vpop.f32.mrf.mxu0
    %v6257 = vadd.f32 %v5719, %v6256
    %6258 = vdwg.mxu0
    %6259 = vmatprep.subr.mxu0 0.0
    %6260 = vmatpush1.msra.mxu0 0.0
    %6261 = vmatprep.subr.mxu0 0.0
    %6262 = vmatpush1.msra.mxu0 0.0
    %6263 = vmatprep.subr.mxu0 0.0
    %6264 = vmatpush1.msra.mxu0 0.0
    %6265 = vmatprep.subr.mxu0 0.0
    %6266 = vmatpush1.msra.mxu0 0.0
    %6267 = vmatprep.subr.mxu0 0.0
    %6268 = vmatpush1.msra.mxu0 0.0
    %6269 = vmatprep.subr.mxu0 0.0
    %6270 = vmatpush1.msra.mxu0 0.0
    %6271 = vmatprep.subr.mxu0 0.0
    %6272 = vmatpush1.msra.mxu0 0.0
    %6273 = vmatprep.subr.mxu0 0.0
    %6274 = vmatpush1.msra.mxu0 0.0
    %6275 = vmatprep.subr.mxu0 0.0
    %6276 = vmatpush1.msra.mxu0 0.0
    %6277 = vmatprep.subr.mxu0 0.0
    %6278 = vmatpush1.msra.mxu0 0.0
    %6279 = vmatprep.subr.mxu0 0.0
    %6280 = vmatpush1.msra.mxu0 0.0
    %6281 = vmatprep.subr.mxu0 0.0
    %6282 = vmatpush1.msra.mxu0 0.0
    %6283 = vmatprep.subr.mxu0 %v4082
    %6284 = vmatpush1.msra.mxu0 %v4081
    %6285 = vmatprep.subr.mxu0 %v4066
    %6286 = vmatpush1.msra.mxu0 %v4065
    %6287 = vmatprep.subr.mxu0 %v4050
    %6288 = vmatpush1.msra.mxu0 %v4049
    %6289 = vmatprep.subr.mxu0 %v4034
    %6290 = vmatpush1.msra.mxu0 %v4033
    %6291 = vmatprep.subr.mxu0 0.0
    %6292 = vmatpush2.msra.mxu0 0.0
    %6293 = vmatprep.subr.mxu0 0.0
    %6294 = vmatpush2.msra.mxu0 0.0
    %6295 = vmatprep.subr.mxu0 0.0
    %6296 = vmatpush2.msra.mxu0 0.0
    %6297 = vmatprep.subr.mxu0 0.0
    %6298 = vmatpush2.msra.mxu0 0.0
    %6299 = vmatprep.subr.mxu0 0.0
    %6300 = vmatpush2.msra.mxu0 0.0
    %6301 = vmatprep.subr.mxu0 0.0
    %6302 = vmatpush2.msra.mxu0 0.0
    %6303 = vmatprep.subr.mxu0 0.0
    %6304 = vmatpush2.msra.mxu0 0.0
    %6305 = vmatprep.subr.mxu0 0.0
    %6306 = vmatpush2.msra.mxu0 0.0
    %6307 = vmatprep.subr.mxu0 0.0
    %6308 = vmatpush2.msra.mxu0 0.0
    %6309 = vmatprep.subr.mxu0 0.0
    %6310 = vmatpush2.msra.mxu0 0.0
    %6311 = vmatprep.subr.mxu0 0.0
    %6312 = vmatpush2.msra.mxu0 0.0
    %6313 = vmatprep.subr.mxu0 0.0
    %6314 = vmatpush2.msra.mxu0 0.0
    %6315 = vmatprep.subr.mxu0 0.0
    %6316 = vmatpush2.msra.mxu0 0.0
    %6317 = vmatprep.subr.mxu0 0.0
    %6318 = vmatpush2.msra.mxu0 0.0
    %6319 = vmatprep.subr.mxu0 0.0
    %6320 = vmatpush2.msra.mxu0 0.0
    %6321 = vmatprep.subr.mxu0 0.0
    %6322 = vmatpush2.msra.mxu0 0.0
    %6323 = vmatprep.mubr.f32.mxu0 0.0
    %6324 = vmatmul.mubr.f32.gmra.mxu0 %v5753
    %v6325 = vpop.f32.mrf.mxu0
    %v6326 = vadd.f32 %v5723, %v6325
    %v6327 = vpop.f32.mrf.mxu0
    %v6328 = vadd.f32 %v5727, %v6327
    %6329 = vmatprep.mubr.f32.mxu0 0.0
    %6330 = vmatmul.mubr.f32.gmra.mxu0 %v5756
    %v6331 = vpop.f32.mrf.mxu0
    %v6332 = vadd.f32 %v5723, %v6331
    %v6333 = vpop.f32.mrf.mxu0
    %v6334 = vadd.f32 %v5727, %v6333
    %6335 = vmatprep.mubr.f32.mxu0 0.0
    %6336 = vmatmul.mubr.f32.gmra.mxu0 %v5759
    %v6337 = vpop.f32.mrf.mxu0
    %v6338 = vadd.f32 %v5723, %v6337
    %v6339 = vpop.f32.mrf.mxu0
    %v6340 = vadd.f32 %v5727, %v6339
    %6341 = vdwg.mxu0
    %6342 = vmatprep.subr.mxu0 0.0
    %6343 = vmatpush1.msra.mxu0 0.0
    %6344 = vmatprep.subr.mxu0 0.0
    %6345 = vmatpush1.msra.mxu0 0.0
    %6346 = vmatprep.subr.mxu0 0.0
    %6347 = vmatpush1.msra.mxu0 0.0
    %6348 = vmatprep.subr.mxu0 0.0
    %6349 = vmatpush1.msra.mxu0 0.0
    %6350 = vmatprep.subr.mxu0 0.0
    %6351 = vmatpush1.msra.mxu0 0.0
    %6352 = vmatprep.subr.mxu0 0.0
    %6353 = vmatpush1.msra.mxu0 0.0
    %6354 = vmatprep.subr.mxu0 0.0
    %6355 = vmatpush1.msra.mxu0 0.0
    %6356 = vmatprep.subr.mxu0 0.0
    %6357 = vmatpush1.msra.mxu0 0.0
    %6358 = vmatprep.subr.mxu0 0.0
    %6359 = vmatpush1.msra.mxu0 0.0
    %6360 = vmatprep.subr.mxu0 0.0
    %6361 = vmatpush1.msra.mxu0 0.0
    %6362 = vmatprep.subr.mxu0 0.0
    %6363 = vmatpush1.msra.mxu0 0.0
    %6364 = vmatprep.subr.mxu0 0.0
    %6365 = vmatpush1.msra.mxu0 0.0
    %6366 = vmatprep.subr.mxu0 %v4084
    %6367 = vmatpush1.msra.mxu0 %v4083
    %6368 = vmatprep.subr.mxu0 %v4068
    %6369 = vmatpush1.msra.mxu0 %v4067
    %6370 = vmatprep.subr.mxu0 %v4052
    %6371 = vmatpush1.msra.mxu0 %v4051
    %6372 = vmatprep.subr.mxu0 %v4036
    %6373 = vmatpush1.msra.mxu0 %v4035
    %6374 = vmatprep.subr.mxu0 0.0
    %6375 = vmatpush2.msra.mxu0 0.0
    %6376 = vmatprep.subr.mxu0 0.0
    %6377 = vmatpush2.msra.mxu0 0.0
    %6378 = vmatprep.subr.mxu0 0.0
    %6379 = vmatpush2.msra.mxu0 0.0
    %6380 = vmatprep.subr.mxu0 0.0
    %6381 = vmatpush2.msra.mxu0 0.0
    %6382 = vmatprep.subr.mxu0 0.0
    %6383 = vmatpush2.msra.mxu0 0.0
    %6384 = vmatprep.subr.mxu0 0.0
    %6385 = vmatpush2.msra.mxu0 0.0
    %6386 = vmatprep.subr.mxu0 0.0
    %6387 = vmatpush2.msra.mxu0 0.0
    %6388 = vmatprep.subr.mxu0 0.0
    %6389 = vmatpush2.msra.mxu0 0.0
    %6390 = vmatprep.subr.mxu0 0.0
    %6391 = vmatpush2.msra.mxu0 0.0
    %6392 = vmatprep.subr.mxu0 0.0
    %6393 = vmatpush2.msra.mxu0 0.0
    %6394 = vmatprep.subr.mxu0 0.0
    %6395 = vmatpush2.msra.mxu0 0.0
    %6396 = vmatprep.subr.mxu0 0.0
    %6397 = vmatpush2.msra.mxu0 0.0
    %6398 = vmatprep.subr.mxu0 0.0
    %6399 = vmatpush2.msra.mxu0 0.0
    %6400 = vmatprep.subr.mxu0 0.0
    %6401 = vmatpush2.msra.mxu0 0.0
    %6402 = vmatprep.subr.mxu0 0.0
    %6403 = vmatpush2.msra.mxu0 0.0
    %6404 = vmatprep.subr.mxu0 0.0
    %6405 = vmatpush2.msra.mxu0 0.0
    %6406 = vmatprep.mubr.f32.mxu0 0.0
    %6407 = vmatmul.mubr.f32.gmra.mxu0 %v5753
    %v6408 = vpop.f32.mrf.mxu0
    %v6409 = vadd.f32 %v5731, %v6408
    %v6410 = vpop.f32.mrf.mxu0
    %v6411 = vadd.f32 %v5735, %v6410
    %6412 = vmatprep.mubr.f32.mxu0 0.0
    %6413 = vmatmul.mubr.f32.gmra.mxu0 %v5756
    %v6414 = vpop.f32.mrf.mxu0
    %v6415 = vadd.f32 %v5731, %v6414
    %v6416 = vpop.f32.mrf.mxu0
    %v6417 = vadd.f32 %v5735, %v6416
    %6418 = vmatprep.mubr.f32.mxu0 0.0
    %6419 = vmatmul.mubr.f32.gmra.mxu0 %v5759
    %v6420 = vpop.f32.mrf.mxu0
    %v6421 = vadd.f32 %v5731, %v6420
    %v6422 = vpop.f32.mrf.mxu0
    %v6423 = vadd.f32 %v5735, %v6422
    %6424 = vdwg.mxu0
    %v6425 = vmax.f32 %v5828, 0.0
    %v6426 = vmax.f32 %v5830, 0.0
    %v6427 = vmax.f32 %v5911, 0.0
    %v6428 = vmax.f32 %v5913, 0.0
    %v6429 = vmax.f32 %v5994, 0.0
    %v6430 = vmax.f32 %v5996, 0.0
    %v6431 = vmax.f32 %v6077, 0.0
    %v6432 = vmax.f32 %v6079, 0.0
    %v6433 = vmax.f32 %v6160, 0.0
    %v6434 = vmax.f32 %v6162, 0.0
    %v6435 = vmax.f32 %v6243, 0.0
    %v6436 = vmax.f32 %v6245, 0.0
    %v6437 = vmax.f32 %v6326, 0.0
    %v6438 = vmax.f32 %v6328, 0.0
    %v6439 = vmax.f32 %v6409, 0.0
    %v6440 = vmax.f32 %v6411, 0.0
    %v6441 = vmax.f32 %v5834, 0.0
    %v6442 = vmax.f32 %v5836, 0.0
    %v6443 = vmax.f32 %v5917, 0.0
    %v6444 = vmax.f32 %v5919, 0.0
    %v6445 = vmax.f32 %v6000, 0.0
    %v6446 = vmax.f32 %v6002, 0.0
    %v6447 = vmax.f32 %v6083, 0.0
    %v6448 = vmax.f32 %v6085, 0.0
    %v6449 = vmax.f32 %v6166, 0.0
    %v6450 = vmax.f32 %v6168, 0.0
    %v6451 = vmax.f32 %v6249, 0.0
    %v6452 = vmax.f32 %v6251, 0.0
    %v6453 = vmax.f32 %v6332, 0.0
    %v6454 = vmax.f32 %v6334, 0.0
    %v6455 = vmax.f32 %v6415, 0.0
    %v6456 = vmax.f32 %v6417, 0.0
    %v6457 = vmax.f32 %v5840, 0.0
    %v6458 = vmax.f32 %v5842, 0.0
    %v6459 = vmax.f32 %v5923, 0.0
    %v6460 = vmax.f32 %v5925, 0.0
    %v6461 = vmax.f32 %v6006, 0.0
    %v6462 = vmax.f32 %v6008, 0.0
    %v6463 = vmax.f32 %v6089, 0.0
    %v6464 = vmax.f32 %v6091, 0.0
    %v6465 = vmax.f32 %v6172, 0.0
    %v6466 = vmax.f32 %v6174, 0.0
    %v6467 = vmax.f32 %v6255, 0.0
    %v6468 = vmax.f32 %v6257, 0.0
    %v6469 = vmax.f32 %v6338, 0.0
    %v6470 = vmax.f32 %v6340, 0.0
    %v6471 = vmax.f32 %v6421, 0.0
    %v6472 = vmax.f32 %v6423, 0.0
    %v6474 = vlaneseq
    %v6475 = vshrl.u32 %v6474, 7
    %v6476 = vsub.s32 0, %v6475
    %v6477 = vrot.slane %v4018, %v6476
    %6479 = vmatprep.subr.mxu0 0.0
    %6480 = vmatpush1.msra.mxu0 %v4100
    %6481 = vmatprep.subr.mxu0 0.0
    %6482 = vmatpush1.msra.mxu0 %v4099
    %6483 = vmatprep.subr.mxu0 0.0
    %6484 = vmatpush1.msra.mxu0 %v4098
    %6485 = vmatprep.subr.mxu0 0.0
    %6486 = vmatpush1.msra.mxu0 %v4097
    %6487 = vmatprep.subr.mxu0 0.0
    %6488 = vmatpush1.msra.mxu0 %v4096
    %6489 = vmatprep.subr.mxu0 0.0
    %6490 = vmatpush1.msra.mxu0 %v4095
    %6491 = vmatprep.subr.mxu0 0.0
    %6492 = vmatpush1.msra.mxu0 %v4094
    %6493 = vmatprep.subr.mxu0 0.0
    %6494 = vmatpush1.msra.mxu0 %v4093
    %6495 = vmatprep.subr.mxu0 0.0
    %6496 = vmatpush1.msra.mxu0 %v4092
    %6497 = vmatprep.subr.mxu0 0.0
    %6498 = vmatpush1.msra.mxu0 %v4091
    %6499 = vmatprep.subr.mxu0 0.0
    %6500 = vmatpush1.msra.mxu0 %v4090
    %6501 = vmatprep.subr.mxu0 0.0
    %6502 = vmatpush1.msra.mxu0 %v4089
    %6503 = vmatprep.subr.mxu0 0.0
    %6504 = vmatpush1.msra.mxu0 %v4088
    %6505 = vmatprep.subr.mxu0 0.0
    %6506 = vmatpush1.msra.mxu0 %v4087
    %6507 = vmatprep.subr.mxu0 0.0
    %6508 = vmatpush1.msra.mxu0 %v4086
    %6509 = vmatprep.subr.mxu0 0.0
    %6510 = vmatpush1.msra.mxu0 %v4085
    %6511 = vmatprep.subr.mxu0 0.0
    %6512 = vmatpush2.msra.mxu0 %v4116
    %6513 = vmatprep.subr.mxu0 0.0
    %6514 = vmatpush2.msra.mxu0 %v4115
    %6515 = vmatprep.subr.mxu0 0.0
    %6516 = vmatpush2.msra.mxu0 %v4114
    %6517 = vmatprep.subr.mxu0 0.0
    %6518 = vmatpush2.msra.mxu0 %v4113
    %6519 = vmatprep.subr.mxu0 0.0
    %6520 = vmatpush2.msra.mxu0 %v4112
    %6521 = vmatprep.subr.mxu0 0.0
    %6522 = vmatpush2.msra.mxu0 %v4111
    %6523 = vmatprep.subr.mxu0 0.0
    %6524 = vmatpush2.msra.mxu0 %v4110
    %6525 = vmatprep.subr.mxu0 0.0
    %6526 = vmatpush2.msra.mxu0 %v4109
    %6527 = vmatprep.subr.mxu0 0.0
    %6528 = vmatpush2.msra.mxu0 %v4108
    %6529 = vmatprep.subr.mxu0 0.0
    %6530 = vmatpush2.msra.mxu0 %v4107
    %6531 = vmatprep.subr.mxu0 0.0
    %6532 = vmatpush2.msra.mxu0 %v4106
    %6533 = vmatprep.subr.mxu0 0.0
    %6534 = vmatpush2.msra.mxu0 %v4105
    %6535 = vmatprep.subr.mxu0 0.0
    %6536 = vmatpush2.msra.mxu0 %v4104
    %6537 = vmatprep.subr.mxu0 0.0
    %6538 = vmatpush2.msra.mxu0 %v4103
    %6539 = vmatprep.subr.mxu0 0.0
    %6540 = vmatpush2.msra.mxu0 %v4102
    %6541 = vmatprep.subr.mxu0 0.0
    %6542 = vmatpush2.msra.mxu0 %v4101
    %6543 = vmatprep.mubr.f32.mxu0 %v6426
    %6544 = vmatmul.mubr.f32.gmra.mxu0 %v6425
    %v6545 = vpop.f32.mrf.mxu0
    %v6546 = vadd.f32 %v6477, %v6545
    %v6547 = vpop.f32.mrf.mxu0
    %6548 = vmatprep.mubr.f32.mxu0 %v6442
    %6549 = vmatmul.mubr.f32.gmra.mxu0 %v6441
    %v6550 = vpop.f32.mrf.mxu0
    %v6551 = vadd.f32 %v6477, %v6550
    %v6552 = vpop.f32.mrf.mxu0
    %6553 = vmatprep.mubr.f32.mxu0 %v6458
    %6554 = vmatmul.mubr.f32.gmra.mxu0 %v6457
    %v6555 = vpop.f32.mrf.mxu0
    %v6556 = vadd.f32 %v6477, %v6555
    %v6557 = vpop.f32.mrf.mxu0
    %6558 = vdwg.mxu0
    %6559 = vmatprep.subr.mxu0 0.0
    %6560 = vmatpush1.msra.mxu0 %v4132
    %6561 = vmatprep.subr.mxu0 0.0
    %6562 = vmatpush1.msra.mxu0 %v4131
    %6563 = vmatprep.subr.mxu0 0.0
    %6564 = vmatpush1.msra.mxu0 %v4130
    %6565 = vmatprep.subr.mxu0 0.0
    %6566 = vmatpush1.msra.mxu0 %v4129
    %6567 = vmatprep.subr.mxu0 0.0
    %6568 = vmatpush1.msra.mxu0 %v4128
    %6569 = vmatprep.subr.mxu0 0.0
    %6570 = vmatpush1.msra.mxu0 %v4127
    %6571 = vmatprep.subr.mxu0 0.0
    %6572 = vmatpush1.msra.mxu0 %v4126
    %6573 = vmatprep.subr.mxu0 0.0
    %6574 = vmatpush1.msra.mxu0 %v4125
    %6575 = vmatprep.subr.mxu0 0.0
    %6576 = vmatpush1.msra.mxu0 %v4124
    %6577 = vmatprep.subr.mxu0 0.0
    %6578 = vmatpush1.msra.mxu0 %v4123
    %6579 = vmatprep.subr.mxu0 0.0
    %6580 = vmatpush1.msra.mxu0 %v4122
    %6581 = vmatprep.subr.mxu0 0.0
    %6582 = vmatpush1.msra.mxu0 %v4121
    %6583 = vmatprep.subr.mxu0 0.0
    %6584 = vmatpush1.msra.mxu0 %v4120
    %6585 = vmatprep.subr.mxu0 0.0
    %6586 = vmatpush1.msra.mxu0 %v4119
    %6587 = vmatprep.subr.mxu0 0.0
    %6588 = vmatpush1.msra.mxu0 %v4118
    %6589 = vmatprep.subr.mxu0 0.0
    %6590 = vmatpush1.msra.mxu0 %v4117
    %6591 = vmatprep.subr.mxu0 0.0
    %6592 = vmatpush2.msra.mxu0 %v4148
    %6593 = vmatprep.subr.mxu0 0.0
    %6594 = vmatpush2.msra.mxu0 %v4147
    %6595 = vmatprep.subr.mxu0 0.0
    %6596 = vmatpush2.msra.mxu0 %v4146
    %6597 = vmatprep.subr.mxu0 0.0
    %6598 = vmatpush2.msra.mxu0 %v4145
    %6599 = vmatprep.subr.mxu0 0.0
    %6600 = vmatpush2.msra.mxu0 %v4144
    %6601 = vmatprep.subr.mxu0 0.0
    %6602 = vmatpush2.msra.mxu0 %v4143
    %6603 = vmatprep.subr.mxu0 0.0
    %6604 = vmatpush2.msra.mxu0 %v4142
    %6605 = vmatprep.subr.mxu0 0.0
    %6606 = vmatpush2.msra.mxu0 %v4141
    %6607 = vmatprep.subr.mxu0 0.0
    %6608 = vmatpush2.msra.mxu0 %v4140
    %6609 = vmatprep.subr.mxu0 0.0
    %6610 = vmatpush2.msra.mxu0 %v4139
    %6611 = vmatprep.subr.mxu0 0.0
    %6612 = vmatpush2.msra.mxu0 %v4138
    %6613 = vmatprep.subr.mxu0 0.0
    %6614 = vmatpush2.msra.mxu0 %v4137
    %6615 = vmatprep.subr.mxu0 0.0
    %6616 = vmatpush2.msra.mxu0 %v4136
    %6617 = vmatprep.subr.mxu0 0.0
    %6618 = vmatpush2.msra.mxu0 %v4135
    %6619 = vmatprep.subr.mxu0 0.0
    %6620 = vmatpush2.msra.mxu0 %v4134
    %6621 = vmatprep.subr.mxu0 0.0
    %6622 = vmatpush2.msra.mxu0 %v4133
    %6623 = vmatprep.mubr.f32.mxu0 %v6428
    %6624 = vmatmul.mubr.f32.gmra.mxu0 %v6427
    %v6625 = vpop.f32.mrf.mxu0
    %v6626 = vadd.f32 %v6546, %v6625
    %v6627 = vpop.f32.mrf.mxu0
    %6628 = vmatprep.mubr.f32.mxu0 %v6444
    %6629 = vmatmul.mubr.f32.gmra.mxu0 %v6443
    %v6630 = vpop.f32.mrf.mxu0
    %v6631 = vadd.f32 %v6551, %v6630
    %v6632 = vpop.f32.mrf.mxu0
    %6633 = vmatprep.mubr.f32.mxu0 %v6460
    %6634 = vmatmul.mubr.f32.gmra.mxu0 %v6459
    %v6635 = vpop.f32.mrf.mxu0
    %v6636 = vadd.f32 %v6556, %v6635
    %v6637 = vpop.f32.mrf.mxu0
    %6638 = vdwg.mxu0
    %6639 = vmatprep.subr.mxu0 0.0
    %6640 = vmatpush1.msra.mxu0 %v4164
    %6641 = vmatprep.subr.mxu0 0.0
    %6642 = vmatpush1.msra.mxu0 %v4163
    %6643 = vmatprep.subr.mxu0 0.0
    %6644 = vmatpush1.msra.mxu0 %v4162
    %6645 = vmatprep.subr.mxu0 0.0
    %6646 = vmatpush1.msra.mxu0 %v4161
    %6647 = vmatprep.subr.mxu0 0.0
    %6648 = vmatpush1.msra.mxu0 %v4160
    %6649 = vmatprep.subr.mxu0 0.0
    %6650 = vmatpush1.msra.mxu0 %v4159
    %6651 = vmatprep.subr.mxu0 0.0
    %6652 = vmatpush1.msra.mxu0 %v4158
    %6653 = vmatprep.subr.mxu0 0.0
    %6654 = vmatpush1.msra.mxu0 %v4157
    %6655 = vmatprep.subr.mxu0 0.0
    %6656 = vmatpush1.msra.mxu0 %v4156
    %6657 = vmatprep.subr.mxu0 0.0
    %6658 = vmatpush1.msra.mxu0 %v4155
    %6659 = vmatprep.subr.mxu0 0.0
    %6660 = vmatpush1.msra.mxu0 %v4154
    %6661 = vmatprep.subr.mxu0 0.0
    %6662 = vmatpush1.msra.mxu0 %v4153
    %6663 = vmatprep.subr.mxu0 0.0
    %6664 = vmatpush1.msra.mxu0 %v4152
    %6665 = vmatprep.subr.mxu0 0.0
    %6666 = vmatpush1.msra.mxu0 %v4151
    %6667 = vmatprep.subr.mxu0 0.0
    %6668 = vmatpush1.msra.mxu0 %v4150
    %6669 = vmatprep.subr.mxu0 0.0
    %6670 = vmatpush1.msra.mxu0 %v4149
    %6671 = vmatprep.subr.mxu0 0.0
    %6672 = vmatpush2.msra.mxu0 %v4180
    %6673 = vmatprep.subr.mxu0 0.0
    %6674 = vmatpush2.msra.mxu0 %v4179
    %6675 = vmatprep.subr.mxu0 0.0
    %6676 = vmatpush2.msra.mxu0 %v4178
    %6677 = vmatprep.subr.mxu0 0.0
    %6678 = vmatpush2.msra.mxu0 %v4177
    %6679 = vmatprep.subr.mxu0 0.0
    %6680 = vmatpush2.msra.mxu0 %v4176
    %6681 = vmatprep.subr.mxu0 0.0
    %6682 = vmatpush2.msra.mxu0 %v4175
    %6683 = vmatprep.subr.mxu0 0.0
    %6684 = vmatpush2.msra.mxu0 %v4174
    %6685 = vmatprep.subr.mxu0 0.0
    %6686 = vmatpush2.msra.mxu0 %v4173
    %6687 = vmatprep.subr.mxu0 0.0
    %6688 = vmatpush2.msra.mxu0 %v4172
    %6689 = vmatprep.subr.mxu0 0.0
    %6690 = vmatpush2.msra.mxu0 %v4171
    %6691 = vmatprep.subr.mxu0 0.0
    %6692 = vmatpush2.msra.mxu0 %v4170
    %6693 = vmatprep.subr.mxu0 0.0
    %6694 = vmatpush2.msra.mxu0 %v4169
    %6695 = vmatprep.subr.mxu0 0.0
    %6696 = vmatpush2.msra.mxu0 %v4168
    %6697 = vmatprep.subr.mxu0 0.0
    %6698 = vmatpush2.msra.mxu0 %v4167
    %6699 = vmatprep.subr.mxu0 0.0
    %6700 = vmatpush2.msra.mxu0 %v4166
    %6701 = vmatprep.subr.mxu0 0.0
    %6702 = vmatpush2.msra.mxu0 %v4165
    %6703 = vmatprep.mubr.f32.mxu0 %v6430
    %6704 = vmatmul.mubr.f32.gmra.mxu0 %v6429
    %v6705 = vpop.f32.mrf.mxu0
    %v6706 = vadd.f32 %v6626, %v6705
    %v6707 = vpop.f32.mrf.mxu0
    %6708 = vmatprep.mubr.f32.mxu0 %v6446
    %6709 = vmatmul.mubr.f32.gmra.mxu0 %v6445
    %v6710 = vpop.f32.mrf.mxu0
    %v6711 = vadd.f32 %v6631, %v6710
    %v6712 = vpop.f32.mrf.mxu0
    %6713 = vmatprep.mubr.f32.mxu0 %v6462
    %6714 = vmatmul.mubr.f32.gmra.mxu0 %v6461
    %v6715 = vpop.f32.mrf.mxu0
    %v6716 = vadd.f32 %v6636, %v6715
    %v6717 = vpop.f32.mrf.mxu0
    %6718 = vdwg.mxu0
    %6719 = vmatprep.subr.mxu0 0.0
    %6720 = vmatpush1.msra.mxu0 %v4196
    %6721 = vmatprep.subr.mxu0 0.0
    %6722 = vmatpush1.msra.mxu0 %v4195
    %6723 = vmatprep.subr.mxu0 0.0
    %6724 = vmatpush1.msra.mxu0 %v4194
    %6725 = vmatprep.subr.mxu0 0.0
    %6726 = vmatpush1.msra.mxu0 %v4193
    %6727 = vmatprep.subr.mxu0 0.0
    %6728 = vmatpush1.msra.mxu0 %v4192
    %6729 = vmatprep.subr.mxu0 0.0
    %6730 = vmatpush1.msra.mxu0 %v4191
    %6731 = vmatprep.subr.mxu0 0.0
    %6732 = vmatpush1.msra.mxu0 %v4190
    %6733 = vmatprep.subr.mxu0 0.0
    %6734 = vmatpush1.msra.mxu0 %v4189
    %6735 = vmatprep.subr.mxu0 0.0
    %6736 = vmatpush1.msra.mxu0 %v4188
    %6737 = vmatprep.subr.mxu0 0.0
    %6738 = vmatpush1.msra.mxu0 %v4187
    %6739 = vmatprep.subr.mxu0 0.0
    %6740 = vmatpush1.msra.mxu0 %v4186
    %6741 = vmatprep.subr.mxu0 0.0
    %6742 = vmatpush1.msra.mxu0 %v4185
    %6743 = vmatprep.subr.mxu0 0.0
    %6744 = vmatpush1.msra.mxu0 %v4184
    %6745 = vmatprep.subr.mxu0 0.0
    %6746 = vmatpush1.msra.mxu0 %v4183
    %6747 = vmatprep.subr.mxu0 0.0
    %6748 = vmatpush1.msra.mxu0 %v4182
    %6749 = vmatprep.subr.mxu0 0.0
    %6750 = vmatpush1.msra.mxu0 %v4181
    %6751 = vmatprep.subr.mxu0 0.0
    %6752 = vmatpush2.msra.mxu0 %v4212
    %6753 = vmatprep.subr.mxu0 0.0
    %6754 = vmatpush2.msra.mxu0 %v4211
    %6755 = vmatprep.subr.mxu0 0.0
    %6756 = vmatpush2.msra.mxu0 %v4210
    %6757 = vmatprep.subr.mxu0 0.0
    %6758 = vmatpush2.msra.mxu0 %v4209
    %6759 = vmatprep.subr.mxu0 0.0
    %6760 = vmatpush2.msra.mxu0 %v4208
    %6761 = vmatprep.subr.mxu0 0.0
    %6762 = vmatpush2.msra.mxu0 %v4207
    %6763 = vmatprep.subr.mxu0 0.0
    %6764 = vmatpush2.msra.mxu0 %v4206
    %6765 = vmatprep.subr.mxu0 0.0
    %6766 = vmatpush2.msra.mxu0 %v4205
    %6767 = vmatprep.subr.mxu0 0.0
    %6768 = vmatpush2.msra.mxu0 %v4204
    %6769 = vmatprep.subr.mxu0 0.0
    %6770 = vmatpush2.msra.mxu0 %v4203
    %6771 = vmatprep.subr.mxu0 0.0
    %6772 = vmatpush2.msra.mxu0 %v4202
    %6773 = vmatprep.subr.mxu0 0.0
    %6774 = vmatpush2.msra.mxu0 %v4201
    %6775 = vmatprep.subr.mxu0 0.0
    %6776 = vmatpush2.msra.mxu0 %v4200
    %6777 = vmatprep.subr.mxu0 0.0
    %6778 = vmatpush2.msra.mxu0 %v4199
    %6779 = vmatprep.subr.mxu0 0.0
    %6780 = vmatpush2.msra.mxu0 %v4198
    %6781 = vmatprep.subr.mxu0 0.0
    %6782 = vmatpush2.msra.mxu0 %v4197
    %6783 = vmatprep.mubr.f32.mxu0 %v6432
    %6784 = vmatmul.mubr.f32.gmra.mxu0 %v6431
    %v6785 = vpop.f32.mrf.mxu0
    %v6786 = vadd.f32 %v6706, %v6785
    %v6787 = vpop.f32.mrf.mxu0
    %6788 = vmatprep.mubr.f32.mxu0 %v6448
    %6789 = vmatmul.mubr.f32.gmra.mxu0 %v6447
    %v6790 = vpop.f32.mrf.mxu0
    %v6791 = vadd.f32 %v6711, %v6790
    %v6792 = vpop.f32.mrf.mxu0
    %6793 = vmatprep.mubr.f32.mxu0 %v6464
    %6794 = vmatmul.mubr.f32.gmra.mxu0 %v6463
    %v6795 = vpop.f32.mrf.mxu0
    %v6796 = vadd.f32 %v6716, %v6795
    %v6797 = vpop.f32.mrf.mxu0
    %6798 = vdwg.mxu0
    %6799 = vmatprep.subr.mxu0 0.0
    %6800 = vmatpush1.msra.mxu0 %v4228
    %6801 = vmatprep.subr.mxu0 0.0
    %6802 = vmatpush1.msra.mxu0 %v4227
    %6803 = vmatprep.subr.mxu0 0.0
    %6804 = vmatpush1.msra.mxu0 %v4226
    %6805 = vmatprep.subr.mxu0 0.0
    %6806 = vmatpush1.msra.mxu0 %v4225
    %6807 = vmatprep.subr.mxu0 0.0
    %6808 = vmatpush1.msra.mxu0 %v4224
    %6809 = vmatprep.subr.mxu0 0.0
    %6810 = vmatpush1.msra.mxu0 %v4223
    %6811 = vmatprep.subr.mxu0 0.0
    %6812 = vmatpush1.msra.mxu0 %v4222
    %6813 = vmatprep.subr.mxu0 0.0
    %6814 = vmatpush1.msra.mxu0 %v4221
    %6815 = vmatprep.subr.mxu0 0.0
    %6816 = vmatpush1.msra.mxu0 %v4220
    %6817 = vmatprep.subr.mxu0 0.0
    %6818 = vmatpush1.msra.mxu0 %v4219
    %6819 = vmatprep.subr.mxu0 0.0
    %6820 = vmatpush1.msra.mxu0 %v4218
    %6821 = vmatprep.subr.mxu0 0.0
    %6822 = vmatpush1.msra.mxu0 %v4217
    %6823 = vmatprep.subr.mxu0 0.0
    %6824 = vmatpush1.msra.mxu0 %v4216
    %6825 = vmatprep.subr.mxu0 0.0
    %6826 = vmatpush1.msra.mxu0 %v4215
    %6827 = vmatprep.subr.mxu0 0.0
    %6828 = vmatpush1.msra.mxu0 %v4214
    %6829 = vmatprep.subr.mxu0 0.0
    %6830 = vmatpush1.msra.mxu0 %v4213
    %6831 = vmatprep.subr.mxu0 0.0
    %6832 = vmatpush2.msra.mxu0 %v4244
    %6833 = vmatprep.subr.mxu0 0.0
    %6834 = vmatpush2.msra.mxu0 %v4243
    %6835 = vmatprep.subr.mxu0 0.0
    %6836 = vmatpush2.msra.mxu0 %v4242
    %6837 = vmatprep.subr.mxu0 0.0
    %6838 = vmatpush2.msra.mxu0 %v4241
    %6839 = vmatprep.subr.mxu0 0.0
    %6840 = vmatpush2.msra.mxu0 %v4240
    %6841 = vmatprep.subr.mxu0 0.0
    %6842 = vmatpush2.msra.mxu0 %v4239
    %6843 = vmatprep.subr.mxu0 0.0
    %6844 = vmatpush2.msra.mxu0 %v4238
    %6845 = vmatprep.subr.mxu0 0.0
    %6846 = vmatpush2.msra.mxu0 %v4237
    %6847 = vmatprep.subr.mxu0 0.0
    %6848 = vmatpush2.msra.mxu0 %v4236
    %6849 = vmatprep.subr.mxu0 0.0
    %6850 = vmatpush2.msra.mxu0 %v4235
    %6851 = vmatprep.subr.mxu0 0.0
    %6852 = vmatpush2.msra.mxu0 %v4234
    %6853 = vmatprep.subr.mxu0 0.0
    %6854 = vmatpush2.msra.mxu0 %v4233
    %6855 = vmatprep.subr.mxu0 0.0
    %6856 = vmatpush2.msra.mxu0 %v4232
    %6857 = vmatprep.subr.mxu0 0.0
    %6858 = vmatpush2.msra.mxu0 %v4231
    %6859 = vmatprep.subr.mxu0 0.0
    %6860 = vmatpush2.msra.mxu0 %v4230
    %6861 = vmatprep.subr.mxu0 0.0
    %6862 = vmatpush2.msra.mxu0 %v4229
    %6863 = vmatprep.mubr.f32.mxu0 %v6434
    %6864 = vmatmul.mubr.f32.gmra.mxu0 %v6433
    %v6865 = vpop.f32.mrf.mxu0
    %v6866 = vadd.f32 %v6786, %v6865
    %v6867 = vpop.f32.mrf.mxu0
    %6868 = vmatprep.mubr.f32.mxu0 %v6450
    %6869 = vmatmul.mubr.f32.gmra.mxu0 %v6449
    %v6870 = vpop.f32.mrf.mxu0
    %v6871 = vadd.f32 %v6791, %v6870
    %v6872 = vpop.f32.mrf.mxu0
    %6873 = vmatprep.mubr.f32.mxu0 %v6466
    %6874 = vmatmul.mubr.f32.gmra.mxu0 %v6465
    %v6875 = vpop.f32.mrf.mxu0
    %v6876 = vadd.f32 %v6796, %v6875
    %v6877 = vpop.f32.mrf.mxu0
    %6878 = vdwg.mxu0
    %6879 = vmatprep.subr.mxu0 0.0
    %6880 = vmatpush1.msra.mxu0 %v4260
    %6881 = vmatprep.subr.mxu0 0.0
    %6882 = vmatpush1.msra.mxu0 %v4259
    %6883 = vmatprep.subr.mxu0 0.0
    %6884 = vmatpush1.msra.mxu0 %v4258
    %6885 = vmatprep.subr.mxu0 0.0
    %6886 = vmatpush1.msra.mxu0 %v4257
    %6887 = vmatprep.subr.mxu0 0.0
    %6888 = vmatpush1.msra.mxu0 %v4256
    %6889 = vmatprep.subr.mxu0 0.0
    %6890 = vmatpush1.msra.mxu0 %v4255
    %6891 = vmatprep.subr.mxu0 0.0
    %6892 = vmatpush1.msra.mxu0 %v4254
    %6893 = vmatprep.subr.mxu0 0.0
    %6894 = vmatpush1.msra.mxu0 %v4253
    %6895 = vmatprep.subr.mxu0 0.0
    %6896 = vmatpush1.msra.mxu0 %v4252
    %6897 = vmatprep.subr.mxu0 0.0
    %6898 = vmatpush1.msra.mxu0 %v4251
    %6899 = vmatprep.subr.mxu0 0.0
    %6900 = vmatpush1.msra.mxu0 %v4250
    %6901 = vmatprep.subr.mxu0 0.0
    %6902 = vmatpush1.msra.mxu0 %v4249
    %6903 = vmatprep.subr.mxu0 0.0
    %6904 = vmatpush1.msra.mxu0 %v4248
    %6905 = vmatprep.subr.mxu0 0.0
    %6906 = vmatpush1.msra.mxu0 %v4247
    %6907 = vmatprep.subr.mxu0 0.0
    %6908 = vmatpush1.msra.mxu0 %v4246
    %6909 = vmatprep.subr.mxu0 0.0
    %6910 = vmatpush1.msra.mxu0 %v4245
    %6911 = vmatprep.subr.mxu0 0.0
    %6912 = vmatpush2.msra.mxu0 %v4276
    %6913 = vmatprep.subr.mxu0 0.0
    %6914 = vmatpush2.msra.mxu0 %v4275
    %6915 = vmatprep.subr.mxu0 0.0
    %6916 = vmatpush2.msra.mxu0 %v4274
    %6917 = vmatprep.subr.mxu0 0.0
    %6918 = vmatpush2.msra.mxu0 %v4273
    %6919 = vmatprep.subr.mxu0 0.0
    %6920 = vmatpush2.msra.mxu0 %v4272
    %6921 = vmatprep.subr.mxu0 0.0
    %6922 = vmatpush2.msra.mxu0 %v4271
    %6923 = vmatprep.subr.mxu0 0.0
    %6924 = vmatpush2.msra.mxu0 %v4270
    %6925 = vmatprep.subr.mxu0 0.0
    %6926 = vmatpush2.msra.mxu0 %v4269
    %6927 = vmatprep.subr.mxu0 0.0
    %6928 = vmatpush2.msra.mxu0 %v4268
    %6929 = vmatprep.subr.mxu0 0.0
    %6930 = vmatpush2.msra.mxu0 %v4267
    %6931 = vmatprep.subr.mxu0 0.0
    %6932 = vmatpush2.msra.mxu0 %v4266
    %6933 = vmatprep.subr.mxu0 0.0
    %6934 = vmatpush2.msra.mxu0 %v4265
    %6935 = vmatprep.subr.mxu0 0.0
    %6936 = vmatpush2.msra.mxu0 %v4264
    %6937 = vmatprep.subr.mxu0 0.0
    %6938 = vmatpush2.msra.mxu0 %v4263
    %6939 = vmatprep.subr.mxu0 0.0
    %6940 = vmatpush2.msra.mxu0 %v4262
    %6941 = vmatprep.subr.mxu0 0.0
    %6942 = vmatpush2.msra.mxu0 %v4261
    %6943 = vmatprep.mubr.f32.mxu0 %v6436
    %6944 = vmatmul.mubr.f32.gmra.mxu0 %v6435
    %v6945 = vpop.f32.mrf.mxu0
    %v6946 = vadd.f32 %v6866, %v6945
    %v6947 = vpop.f32.mrf.mxu0
    %6948 = vmatprep.mubr.f32.mxu0 %v6452
    %6949 = vmatmul.mubr.f32.gmra.mxu0 %v6451
    %v6950 = vpop.f32.mrf.mxu0
    %v6951 = vadd.f32 %v6871, %v6950
    %v6952 = vpop.f32.mrf.mxu0
    %6953 = vmatprep.mubr.f32.mxu0 %v6468
    %6954 = vmatmul.mubr.f32.gmra.mxu0 %v6467
    %v6955 = vpop.f32.mrf.mxu0
    %v6956 = vadd.f32 %v6876, %v6955
    %v6957 = vpop.f32.mrf.mxu0
    %6958 = vdwg.mxu0
    %6959 = vmatprep.subr.mxu0 0.0
    %6960 = vmatpush1.msra.mxu0 %v4292
    %6961 = vmatprep.subr.mxu0 0.0
    %6962 = vmatpush1.msra.mxu0 %v4291
    %6963 = vmatprep.subr.mxu0 0.0
    %6964 = vmatpush1.msra.mxu0 %v4290
    %6965 = vmatprep.subr.mxu0 0.0
    %6966 = vmatpush1.msra.mxu0 %v4289
    %6967 = vmatprep.subr.mxu0 0.0
    %6968 = vmatpush1.msra.mxu0 %v4288
    %6969 = vmatprep.subr.mxu0 0.0
    %6970 = vmatpush1.msra.mxu0 %v4287
    %6971 = vmatprep.subr.mxu0 0.0
    %6972 = vmatpush1.msra.mxu0 %v4286
    %6973 = vmatprep.subr.mxu0 0.0
    %6974 = vmatpush1.msra.mxu0 %v4285
    %6975 = vmatprep.subr.mxu0 0.0
    %6976 = vmatpush1.msra.mxu0 %v4284
    %6977 = vmatprep.subr.mxu0 0.0
    %6978 = vmatpush1.msra.mxu0 %v4283
    %6979 = vmatprep.subr.mxu0 0.0
    %6980 = vmatpush1.msra.mxu0 %v4282
    %6981 = vmatprep.subr.mxu0 0.0
    %6982 = vmatpush1.msra.mxu0 %v4281
    %6983 = vmatprep.subr.mxu0 0.0
    %6984 = vmatpush1.msra.mxu0 %v4280
    %6985 = vmatprep.subr.mxu0 0.0
    %6986 = vmatpush1.msra.mxu0 %v4279
    %6987 = vmatprep.subr.mxu0 0.0
    %6988 = vmatpush1.msra.mxu0 %v4278
    %6989 = vmatprep.subr.mxu0 0.0
    %6990 = vmatpush1.msra.mxu0 %v4277
    %6991 = vmatprep.subr.mxu0 0.0
    %6992 = vmatpush2.msra.mxu0 %v4308
    %6993 = vmatprep.subr.mxu0 0.0
    %6994 = vmatpush2.msra.mxu0 %v4307
    %6995 = vmatprep.subr.mxu0 0.0
    %6996 = vmatpush2.msra.mxu0 %v4306
    %6997 = vmatprep.subr.mxu0 0.0
    %6998 = vmatpush2.msra.mxu0 %v4305
    %6999 = vmatprep.subr.mxu0 0.0
    %7000 = vmatpush2.msra.mxu0 %v4304
    %7001 = vmatprep.subr.mxu0 0.0
    %7002 = vmatpush2.msra.mxu0 %v4303
    %7003 = vmatprep.subr.mxu0 0.0
    %7004 = vmatpush2.msra.mxu0 %v4302
    %7005 = vmatprep.subr.mxu0 0.0
    %7006 = vmatpush2.msra.mxu0 %v4301
    %7007 = vmatprep.subr.mxu0 0.0
    %7008 = vmatpush2.msra.mxu0 %v4300
    %7009 = vmatprep.subr.mxu0 0.0
    %7010 = vmatpush2.msra.mxu0 %v4299
    %7011 = vmatprep.subr.mxu0 0.0
    %7012 = vmatpush2.msra.mxu0 %v4298
    %7013 = vmatprep.subr.mxu0 0.0
    %7014 = vmatpush2.msra.mxu0 %v4297
    %7015 = vmatprep.subr.mxu0 0.0
    %7016 = vmatpush2.msra.mxu0 %v4296
    %7017 = vmatprep.subr.mxu0 0.0
    %7018 = vmatpush2.msra.mxu0 %v4295
    %7019 = vmatprep.subr.mxu0 0.0
    %7020 = vmatpush2.msra.mxu0 %v4294
    %7021 = vmatprep.subr.mxu0 0.0
    %7022 = vmatpush2.msra.mxu0 %v4293
    %7023 = vmatprep.mubr.f32.mxu0 %v6438
    %7024 = vmatmul.mubr.f32.gmra.mxu0 %v6437
    %v7025 = vpop.f32.mrf.mxu0
    %v7026 = vadd.f32 %v6946, %v7025
    %v7027 = vpop.f32.mrf.mxu0
    %7028 = vmatprep.mubr.f32.mxu0 %v6454
    %7029 = vmatmul.mubr.f32.gmra.mxu0 %v6453
    %v7030 = vpop.f32.mrf.mxu0
    %v7031 = vadd.f32 %v6951, %v7030
    %v7032 = vpop.f32.mrf.mxu0
    %7033 = vmatprep.mubr.f32.mxu0 %v6470
    %7034 = vmatmul.mubr.f32.gmra.mxu0 %v6469
    %v7035 = vpop.f32.mrf.mxu0
    %v7036 = vadd.f32 %v6956, %v7035
    %v7037 = vpop.f32.mrf.mxu0
    %7038 = vdwg.mxu0
    %7039 = vmatprep.subr.mxu0 0.0
    %7040 = vmatpush1.msra.mxu0 %v4324
    %7041 = vmatprep.subr.mxu0 0.0
    %7042 = vmatpush1.msra.mxu0 %v4323
    %7043 = vmatprep.subr.mxu0 0.0
    %7044 = vmatpush1.msra.mxu0 %v4322
    %7045 = vmatprep.subr.mxu0 0.0
    %7046 = vmatpush1.msra.mxu0 %v4321
    %7047 = vmatprep.subr.mxu0 0.0
    %7048 = vmatpush1.msra.mxu0 %v4320
    %7049 = vmatprep.subr.mxu0 0.0
    %7050 = vmatpush1.msra.mxu0 %v4319
    %7051 = vmatprep.subr.mxu0 0.0
    %7052 = vmatpush1.msra.mxu0 %v4318
    %7053 = vmatprep.subr.mxu0 0.0
    %7054 = vmatpush1.msra.mxu0 %v4317
    %7055 = vmatprep.subr.mxu0 0.0
    %7056 = vmatpush1.msra.mxu0 %v4316
    %7057 = vmatprep.subr.mxu0 0.0
    %7058 = vmatpush1.msra.mxu0 %v4315
    %7059 = vmatprep.subr.mxu0 0.0
    %7060 = vmatpush1.msra.mxu0 %v4314
    %7061 = vmatprep.subr.mxu0 0.0
    %7062 = vmatpush1.msra.mxu0 %v4313
    %7063 = vmatprep.subr.mxu0 0.0
    %7064 = vmatpush1.msra.mxu0 %v4312
    %7065 = vmatprep.subr.mxu0 0.0
    %7066 = vmatpush1.msra.mxu0 %v4311
    %7067 = vmatprep.subr.mxu0 0.0
    %7068 = vmatpush1.msra.mxu0 %v4310
    %7069 = vmatprep.subr.mxu0 0.0
    %7070 = vmatpush1.msra.mxu0 %v4309
    %7071 = vmatprep.subr.mxu0 0.0
    %7072 = vmatpush2.msra.mxu0 %v4340
    %7073 = vmatprep.subr.mxu0 0.0
    %7074 = vmatpush2.msra.mxu0 %v4339
    %7075 = vmatprep.subr.mxu0 0.0
    %7076 = vmatpush2.msra.mxu0 %v4338
    %7077 = vmatprep.subr.mxu0 0.0
    %7078 = vmatpush2.msra.mxu0 %v4337
    %7079 = vmatprep.subr.mxu0 0.0
    %7080 = vmatpush2.msra.mxu0 %v4336
    %7081 = vmatprep.subr.mxu0 0.0
    %7082 = vmatpush2.msra.mxu0 %v4335
    %7083 = vmatprep.subr.mxu0 0.0
    %7084 = vmatpush2.msra.mxu0 %v4334
    %7085 = vmatprep.subr.mxu0 0.0
    %7086 = vmatpush2.msra.mxu0 %v4333
    %7087 = vmatprep.subr.mxu0 0.0
    %7088 = vmatpush2.msra.mxu0 %v4332
    %7089 = vmatprep.subr.mxu0 0.0
    %7090 = vmatpush2.msra.mxu0 %v4331
    %7091 = vmatprep.subr.mxu0 0.0
    %7092 = vmatpush2.msra.mxu0 %v4330
    %7093 = vmatprep.subr.mxu0 0.0
    %7094 = vmatpush2.msra.mxu0 %v4329
    %7095 = vmatprep.subr.mxu0 0.0
    %7096 = vmatpush2.msra.mxu0 %v4328
    %7097 = vmatprep.subr.mxu0 0.0
    %7098 = vmatpush2.msra.mxu0 %v4327
    %7099 = vmatprep.subr.mxu0 0.0
    %7100 = vmatpush2.msra.mxu0 %v4326
    %7101 = vmatprep.subr.mxu0 0.0
    %7102 = vmatpush2.msra.mxu0 %v4325
    %7103 = vmatprep.mubr.f32.mxu0 %v6440
    %7104 = vmatmul.mubr.f32.gmra.mxu0 %v6439
    %v7105 = vpop.f32.mrf.mxu0
    %v7106 = vadd.f32 %v7026, %v7105
    %v7107 = vpop.f32.mrf.mxu0
    %7108 = vmatprep.mubr.f32.mxu0 %v6456
    %7109 = vmatmul.mubr.f32.gmra.mxu0 %v6455
    %v7110 = vpop.f32.mrf.mxu0
    %v7111 = vadd.f32 %v7031, %v7110
    %v7112 = vpop.f32.mrf.mxu0
    %7113 = vmatprep.mubr.f32.mxu0 %v6472
    %7114 = vmatmul.mubr.f32.gmra.mxu0 %v6471
    %v7115 = vpop.f32.mrf.mxu0
    %v7116 = vadd.f32 %v7036, %v7115
    %v7117 = vpop.f32.mrf.mxu0
    %7118 = vdwg.mxu0
    %v7119 = vadd.f32 %v5667, %v7106
    %v7120 = vadd.f32 %v5668, %v7111
    %v7121 = vadd.f32 %v5669, %v7116
    %v7122 = vsel %vm854, %v7119, 0.0
    %7123 = vadd.xlane.f32.xlu0 %v7122
    %v7124 = vpop.xlane.xlu0 %7123
    %v7125 = vsel %vm854, %v7120, 0.0
    %7126 = vadd.xlane.f32.xlu0 %v7125
    %v7127 = vpop.xlane.xlu0 %7126
    %v7128 = vsel %vm2144, %v7121, 0.0
    %7129 = vadd.xlane.f32.xlu0 %v7128
    %v7130 = vpop.xlane.xlu0 %7129
    %v7131 = vmul.f32 %v7124, %v2148
    %v7132 = vmul.f32 %v7127, %v2148
    %v7133 = vmul.f32 %v7130, %v2148
    %v7134 = vsub.f32 %v7119, %v7131
    %v7135 = vsub.f32 %v7120, %v7132
    %v7136 = vsub.f32 %v7121, %v7133
    %v7137 = vmul.f32 %v7134, %v7134
    %v7138 = vmul.f32 %v7135, %v7135
    %v7139 = vmul.f32 %v7136, %v7136
    %v7140 = vsel %vm854, %v7137, 0.0
    %7141 = vadd.xlane.f32.xlu0 %v7140
    %v7142 = vpop.xlane.xlu0 %7141
    %v7143 = vsel %vm854, %v7138, 0.0
    %7144 = vadd.xlane.f32.xlu0 %v7143
    %v7145 = vpop.xlane.xlu0 %7144
    %v7146 = vsel %vm2144, %v7139, 0.0
    %7147 = vadd.xlane.f32.xlu0 %v7146
    %v7148 = vpop.xlane.xlu0 %7147
    %v7149 = vmul.f32 %v7142, %v2148
    %v7150 = vmul.f32 %v7145, %v2148
    %v7151 = vmul.f32 %v7148, %v2148
    %v7152 = vadd.f32 %v7149, 1e-05
    %v7153 = vadd.f32 %v7150, 1e-05
    %v7154 = vadd.f32 %v7151, 1e-05
    %v7155 = vrsqrt.pop %v7152
    %v7156 = vrsqrt.pop %v7153
    %v7157 = vrsqrt.pop %v7154
    %v7158 = vmul.f32 %v7134, %v7155
    %v7159 = vmul.f32 %v7135, %v7156
    %v7160 = vmul.f32 %v7136, %v7157
    %v7162 = vlaneseq
    %v7163 = vshrl.u32 %v7162, 7
    %v7164 = vsub.s32 0, %v7163
    %v7165 = vrot.slane %v4019, %v7164
    %v7167 = vmul.f32 %v7158, %v7165
    %v7168 = vmul.f32 %v7159, %v7165
    %v7169 = vmul.f32 %v7160, %v7165
    %v7171 = vlaneseq
    %v7172 = vshrl.u32 %v7171, 7
    %v7173 = vsub.s32 0, %v7172
    %v7174 = vrot.slane %v4020, %v7173
    %v7176 = vadd.f32 %v7167, %v7174
    %v7177 = vadd.f32 %v7168, %v7174
    %v7178 = vadd.f32 %v7169, %v7174
    %v7179 = vld [vmem:[%s69] sm:$0x1]
    %v7180 = vld [vmem:[%s71] sm:$0x1]
    %v7181 = vld [vmem:[%s73] sm:$0xff]
    %v7182 = vld [vmem:[%s73 + $0x8] sm:$0xff]
    %v7183 = vld [vmem:[%s73 + $0x10] sm:$0xff]
    %v7184 = vld [vmem:[%s73 + $0x18] sm:$0xff]
    %v7185 = vld [vmem:[%s75] sm:$0x1]
    %v7186 = vld [vmem:[%s77] sm:$0xff]
    %v7187 = vld [vmem:[%s77 + $0x8] sm:$0xff]
    %v7188 = vld [vmem:[%s77 + $0x10] sm:$0xff]
    %v7189 = vld [vmem:[%s77 + $0x18] sm:$0xff]
    %v7190 = vld [vmem:[%s77 + $0x20] sm:$0xff]
    %v7191 = vld [vmem:[%s77 + $0x28] sm:$0xff]
    %v7192 = vld [vmem:[%s77 + $0x30] sm:$0xff]
    %v7193 = vld [vmem:[%s77 + $0x38] sm:$0xff]
    %v7194 = vld [vmem:[%s79] sm:$0x1]
    %v7195 = vld [vmem:[%s81] sm:$0xff]
    %v7196 = vld [vmem:[%s81 + $0x8] sm:$0xff]
    %v7197 = vld [vmem:[%s81 + $0x10] sm:$0xff]
    %v7198 = vld [vmem:[%s81 + $0x18] sm:$0xff]
    %v7199 = vld [vmem:[%s81 + $0x20] sm:$0xff]
    %v7200 = vld [vmem:[%s81 + $0x28] sm:$0xff]
    %v7201 = vld [vmem:[%s81 + $0x30] sm:$0xff]
    %v7202 = vld [vmem:[%s81 + $0x38] sm:$0xff]
    %v7203 = vld [vmem:[%s81 + $0x40] sm:$0xff]
    %v7204 = vld [vmem:[%s81 + $0x48] sm:$0xff]
    %v7205 = vld [vmem:[%s81 + $0x50] sm:$0xff]
    %v7206 = vld [vmem:[%s81 + $0x58] sm:$0xff]
    %v7207 = vld [vmem:[%s81 + $0x60] sm:$0xff]
    %v7208 = vld [vmem:[%s81 + $0x68] sm:$0xff]
    %v7209 = vld [vmem:[%s81 + $0x70] sm:$0xff]
    %v7210 = vld [vmem:[%s81 + $0x78] sm:$0xff]
    %v7211 = vld [vmem:[%s83] sm:$0x1]
    %v7212 = vld [vmem:[%s85] sm:$0xff]
    %v7213 = vld [vmem:[%s85 + $0x8] sm:$0xff]
    %v7214 = vld [vmem:[%s85 + $0x10] sm:$0xff]
    %v7215 = vld [vmem:[%s85 + $0x18] sm:$0xff]
    %v7216 = vld [vmem:[%s87] sm:$0x1]
    %v7217 = vld [vmem:[%s89] sm:$0xff]
    %v7218 = vld [vmem:[%s89 + $0x8] sm:$0xff]
    %v7219 = vld [vmem:[%s89 + $0x10] sm:$0xff]
    %v7220 = vld [vmem:[%s89 + $0x18] sm:$0xff]
    %v7221 = vld [vmem:[%s89 + $0x20] sm:$0xff]
    %v7222 = vld [vmem:[%s89 + $0x28] sm:$0xff]
    %v7223 = vld [vmem:[%s89 + $0x30] sm:$0xff]
    %v7224 = vld [vmem:[%s89 + $0x38] sm:$0xff]
    %v7225 = vld [vmem:[%s91] sm:$0x1]
    %v7226 = vld [vmem:[%s93] sm:$0xff]
    %v7227 = vld [vmem:[%s93 + $0x8] sm:$0xff]
    %v7228 = vld [vmem:[%s93 + $0x10] sm:$0xff]
    %v7229 = vld [vmem:[%s93 + $0x18] sm:$0xff]
    %v7230 = vld [vmem:[%s93 + $0x20] sm:$0xff]
    %v7231 = vld [vmem:[%s93 + $0x28] sm:$0xff]
    %v7232 = vld [vmem:[%s93 + $0x30] sm:$0xff]
    %v7233 = vld [vmem:[%s93 + $0x38] sm:$0xff]
    %v7234 = vld [vmem:[%s93 + $0x40] sm:$0xff]
    %v7235 = vld [vmem:[%s93 + $0x48] sm:$0xff]
    %v7236 = vld [vmem:[%s93 + $0x50] sm:$0xff]
    %v7237 = vld [vmem:[%s93 + $0x58] sm:$0xff]
    %v7238 = vld [vmem:[%s93 + $0x60] sm:$0xff]
    %v7239 = vld [vmem:[%s93 + $0x68] sm:$0xff]
    %v7240 = vld [vmem:[%s93 + $0x70] sm:$0xff]
    %v7241 = vld [vmem:[%s93 + $0x78] sm:$0xff]
    %v7242 = vld [vmem:[%s95] sm:$0x1]
    %v7243 = vld [vmem:[%s97] sm:$0xff]
    %v7244 = vld [vmem:[%s97 + $0x8] sm:$0xff]
    %v7245 = vld [vmem:[%s97 + $0x10] sm:$0xff]
    %v7246 = vld [vmem:[%s97 + $0x18] sm:$0xff]
    %v7247 = vld [vmem:[%s99] sm:$0x1]
    %v7248 = vlaneseq
    %v7249 = vshrl.u32 %v7248, 7
    %v7250 = vmul.u32 %v7249, 9
    %vm7251 = vcmp.eq.s32.totalorder %v1117, %v7250
    %v7252 = vsel %vm7251, 1, 0
    %v7253 = vcvt.s32.f32 %v7252
    %v7255 = vsel %vm1225, %v7253, 0
    %v7258 = vsel %vm1406, %v7178, 0
    %7260 = vmatprep.subr.mxu0 0.0
    %7261 = vmatpush1.msra.mxu0 0.0
    %7262 = vmatprep.subr.mxu0 0.0
    %7263 = vmatpush1.msra.mxu0 0.0
    %7264 = vmatprep.subr.mxu0 0.0
    %7265 = vmatpush1.msra.mxu0 0.0
    %7266 = vmatprep.subr.mxu0 0.0
    %7267 = vmatpush1.msra.mxu0 0.0
    %7268 = vmatprep.subr.mxu0 0.0
    %7269 = vmatpush1.msra.mxu0 0.0
    %7270 = vmatprep.subr.mxu0 0.0
    %7271 = vmatpush1.msra.mxu0 0.0
    %7272 = vmatprep.subr.mxu0 0.0
    %7273 = vmatpush1.msra.mxu0 0.0
    %7274 = vmatprep.subr.mxu0 0.0
    %7275 = vmatpush1.msra.mxu0 0.0
    %7276 = vmatprep.subr.mxu0 0.0
    %7277 = vmatpush1.msra.mxu0 0.0
    %7278 = vmatprep.subr.mxu0 0.0
    %7279 = vmatpush1.msra.mxu0 0.0
    %7280 = vmatprep.subr.mxu0 0.0
    %7281 = vmatpush1.msra.mxu0 0.0
    %7282 = vmatprep.subr.mxu0 0.0
    %7283 = vmatpush1.msra.mxu0 0.0
    %7284 = vmatprep.subr.mxu0 0.0
    %7285 = vmatpush1.msra.mxu0 0.0
    %7286 = vmatprep.subr.mxu0 0.0
    %7287 = vmatpush1.msra.mxu0 %v7258
    %7288 = vmatprep.subr.mxu0 0.0
    %7289 = vmatpush1.msra.mxu0 %v7177
    %7290 = vmatprep.subr.mxu0 0.0
    %7291 = vmatpush1.msra.mxu0 %v7176
    %7292 = vmatprep.subr.mxu0 0.0
    %7293 = vmatpush2.msra.mxu0 0.0
    %7294 = vmatprep.subr.mxu0 0.0
    %7295 = vmatpush2.msra.mxu0 0.0
    %7296 = vmatprep.subr.mxu0 0.0
    %7297 = vmatpush2.msra.mxu0 0.0
    %7298 = vmatprep.subr.mxu0 0.0
    %7299 = vmatpush2.msra.mxu0 0.0
    %7300 = vmatprep.subr.mxu0 0.0
    %7301 = vmatpush2.msra.mxu0 0.0
    %7302 = vmatprep.subr.mxu0 0.0
    %7303 = vmatpush2.msra.mxu0 0.0
    %7304 = vmatprep.subr.mxu0 0.0
    %7305 = vmatpush2.msra.mxu0 0.0
    %7306 = vmatprep.subr.mxu0 0.0
    %7307 = vmatpush2.msra.mxu0 0.0
    %7308 = vmatprep.subr.mxu0 0.0
    %7309 = vmatpush2.msra.mxu0 0.0
    %7310 = vmatprep.subr.mxu0 0.0
    %7311 = vmatpush2.msra.mxu0 0.0
    %7312 = vmatprep.subr.mxu0 0.0
    %7313 = vmatpush2.msra.mxu0 0.0
    %7314 = vmatprep.subr.mxu0 0.0
    %7315 = vmatpush2.msra.mxu0 0.0
    %7316 = vmatprep.subr.mxu0 0.0
    %7317 = vmatpush2.msra.mxu0 0.0
    %7318 = vmatprep.subr.mxu0 0.0
    %7319 = vmatpush2.msra.mxu0 0.0
    %7320 = vmatprep.subr.mxu0 0.0
    %7321 = vmatpush2.msra.mxu0 0.0
    %7322 = vmatprep.subr.mxu0 0.0
    %7323 = vmatpush2.msra.mxu0 0.0
    %7324 = vmatprep.mubr.f32.mxu0 0.0
    %7325 = vmatmul.mubr.f32.gmra.mxu0 %v7255
    %v7326 = vpop.f32.mrf.mxu0
    %v7327 = vadd.f32 0.0, %v7326
    %v7328 = vpop.f32.mrf.mxu0
    %7329 = vdwg.mxu0
    %v7330 = vsel %vm2144, %v7327, 0.0
    %7331 = vadd.xlane.f32.xlu0 %v7330
    %v7332 = vpop.xlane.xlu0 %7331
    %v7333 = vmul.f32 %v7332, %v2148
    %v7334 = vsub.f32 %v7327, %v7333
    %v7335 = vmul.f32 %v7334, %v7334
    %v7336 = vsel %vm2144, %v7335, 0.0
    %7337 = vadd.xlane.f32.xlu0 %v7336
    %v7338 = vpop.xlane.xlu0 %7337
    %v7339 = vmul.f32 %v7338, %v2148
    %v7340 = vadd.f32 %v7339, 1e-05
    %v7341 = vrsqrt.pop %v7340
    %v7342 = vmul.f32 %v7334, %v7341
    %v7344 = vlaneseq
    %v7345 = vshrl.u32 %v7344, 7
    %v7346 = vsub.s32 0, %v7345
    %v7347 = vrot.slane %v7179, %v7346
    %v7349 = vmul.f32 %v7342, %v7347
    %v7351 = vlaneseq
    %v7352 = vshrl.u32 %v7351, 7
    %v7353 = vsub.s32 0, %v7352
    %v7354 = vrot.slane %v7180, %v7353
    %v7356 = vadd.f32 %v7349, %v7354
    %v7358 = vlaneseq
    %v7359 = vshrl.u32 %v7358, 7
    %v7360 = vsub.s32 0, %v7359
    %v7361 = vrot.slane %v7185, %v7360
    %v7364 = vsel %vm854, %v7356, 0
    %7366 = vmatprep.subr.mxu0 0.0
    %7367 = vmatpush1.msra.mxu0 0.0
    %7368 = vmatprep.subr.mxu0 0.0
    %7369 = vmatpush1.msra.mxu0 0.0
    %7370 = vmatprep.subr.mxu0 0.0
    %7371 = vmatpush1.msra.mxu0 0.0
    %7372 = vmatprep.subr.mxu0 0.0
    %7373 = vmatpush1.msra.mxu0 0.0
    %7374 = vmatprep.subr.mxu0 0.0
    %7375 = vmatpush1.msra.mxu0 0.0
    %7376 = vmatprep.subr.mxu0 0.0
    %7377 = vmatpush1.msra.mxu0 0.0
    %7378 = vmatprep.subr.mxu0 0.0
    %7379 = vmatpush1.msra.mxu0 0.0
    %7380 = vmatprep.subr.mxu0 0.0
    %7381 = vmatpush1.msra.mxu0 0.0
    %7382 = vmatprep.subr.mxu0 0.0
    %7383 = vmatpush1.msra.mxu0 0.0
    %7384 = vmatprep.subr.mxu0 0.0
    %7385 = vmatpush1.msra.mxu0 0.0
    %7386 = vmatprep.subr.mxu0 0.0
    %7387 = vmatpush1.msra.mxu0 0.0
    %7388 = vmatprep.subr.mxu0 0.0
    %7389 = vmatpush1.msra.mxu0 0.0
    %7390 = vmatprep.subr.mxu0 0.0
    %7391 = vmatpush1.msra.mxu0 %v7184
    %7392 = vmatprep.subr.mxu0 0.0
    %7393 = vmatpush1.msra.mxu0 %v7183
    %7394 = vmatprep.subr.mxu0 0.0
    %7395 = vmatpush1.msra.mxu0 %v7182
    %7396 = vmatprep.subr.mxu0 0.0
    %7397 = vmatpush1.msra.mxu0 %v7181
    %7398 = vmatprep.subr.mxu0 0.0
    %7399 = vmatpush2.msra.mxu0 0.0
    %7400 = vmatprep.subr.mxu0 0.0
    %7401 = vmatpush2.msra.mxu0 0.0
    %7402 = vmatprep.subr.mxu0 0.0
    %7403 = vmatpush2.msra.mxu0 0.0
    %7404 = vmatprep.subr.mxu0 0.0
    %7405 = vmatpush2.msra.mxu0 0.0
    %7406 = vmatprep.subr.mxu0 0.0
    %7407 = vmatpush2.msra.mxu0 0.0
    %7408 = vmatprep.subr.mxu0 0.0
    %7409 = vmatpush2.msra.mxu0 0.0
    %7410 = vmatprep.subr.mxu0 0.0
    %7411 = vmatpush2.msra.mxu0 0.0
    %7412 = vmatprep.subr.mxu0 0.0
    %7413 = vmatpush2.msra.mxu0 0.0
    %7414 = vmatprep.subr.mxu0 0.0
    %7415 = vmatpush2.msra.mxu0 0.0
    %7416 = vmatprep.subr.mxu0 0.0
    %7417 = vmatpush2.msra.mxu0 0.0
    %7418 = vmatprep.subr.mxu0 0.0
    %7419 = vmatpush2.msra.mxu0 0.0
    %7420 = vmatprep.subr.mxu0 0.0
    %7421 = vmatpush2.msra.mxu0 0.0
    %7422 = vmatprep.subr.mxu0 0.0
    %7423 = vmatpush2.msra.mxu0 0.0
    %7424 = vmatprep.subr.mxu0 0.0
    %7425 = vmatpush2.msra.mxu0 0.0
    %7426 = vmatprep.subr.mxu0 0.0
    %7427 = vmatpush2.msra.mxu0 0.0
    %7428 = vmatprep.subr.mxu0 0.0
    %7429 = vmatpush2.msra.mxu0 0.0
    %7430 = vmatprep.mubr.f32.mxu0 0.0
    %7431 = vmatmul.mubr.f32.gmra.mxu0 %v7364
    %v7432 = vpop.f32.mrf.mxu0
    %v7433 = vadd.f32 %v7361, %v7432
    %v7434 = vpop.f32.mrf.mxu0
    %7435 = vdwg.mxu0
    %v7436 = vmul.f32 %v7433, 0.5
    %v7437 = vmul.f32 %v7433, 0.70710677
    %v7438 = vand.u32 2147483647, %v7437
    %v7439 = vmul.f32 %v7438, 0.3275911
    %v7440 = vadd.f32 %v7439, 1.0
    %v7441 = vrcp.pop %v7440
    %v7442 = vmul.f32 1.0, %v7441
    %v7443 = vmul.f32 %v7442, 1.0614054
    %v7444 = vsub.f32 %v7443, 1.4531521
    %v7445 = vmul.f32 %v7444, %v7442
    %v7446 = vadd.f32 %v7445, 1.4214138
    %v7447 = vmul.f32 %v7446, %v7442
    %v7448 = vsub.f32 %v7447, 0.28449672
    %v7449 = vmul.f32 %v7448, %v7442
    %v7450 = vadd.f32 %v7449, 0.2548296
    %v7451 = vmul.f32 %v7450, %v7442
    %v7452 = vsub.f32 0.0, %v7438
    %v7453 = vmul.f32 %v7452, %v7438
    %v7454 = vmul.f32 %v7453, 1.442695
    %v7455 = vpow.pop %v7454
    %v7456 = vmul.f32 %v7451, %v7455
    %v7457 = vsub.f32 1.0, %v7456
    %vm7458 = vcmp.lt.f32.partialorder %v7437, 0.0
    %v7459 = vsub.f32 0.0, %v7457
    %v7460 = vsel %vm7458, %v7459, %v7457
    %v7461 = vadd.f32 %v7460, 1.0
    %v7462 = vmul.f32 %v7436, %v7461
    %v7464 = vlaneseq
    %v7465 = vshrl.u32 %v7464, 7
    %v7466 = vsub.s32 0, %v7465
    %v7467 = vrot.slane %v7194, %v7466
    %vm7469 = vcmask 523264
    %v7471 = vsel %vm7469, %v7462, 0
    %7473 = vmatprep.subr.mxu0 0.0
    %7474 = vmatpush1.msra.mxu0 0.0
    %7475 = vmatprep.subr.mxu0 0.0
    %7476 = vmatpush1.msra.mxu0 0.0
    %7477 = vmatprep.subr.mxu0 0.0
    %7478 = vmatpush1.msra.mxu0 0.0
    %7479 = vmatprep.subr.mxu0 0.0
    %7480 = vmatpush1.msra.mxu0 0.0
    %7481 = vmatprep.subr.mxu0 0.0
    %7482 = vmatpush1.msra.mxu0 0.0
    %7483 = vmatprep.subr.mxu0 0.0
    %7484 = vmatpush1.msra.mxu0 0.0
    %7485 = vmatprep.subr.mxu0 0.0
    %7486 = vmatpush1.msra.mxu0 0.0
    %7487 = vmatprep.subr.mxu0 0.0
    %7488 = vmatpush1.msra.mxu0 0.0
    %7489 = vmatprep.subr.mxu0 0.0
    %7490 = vmatpush1.msra.mxu0 %v7193
    %7491 = vmatprep.subr.mxu0 0.0
    %7492 = vmatpush1.msra.mxu0 %v7192
    %7493 = vmatprep.subr.mxu0 0.0
    %7494 = vmatpush1.msra.mxu0 %v7191
    %7495 = vmatprep.subr.mxu0 0.0
    %7496 = vmatpush1.msra.mxu0 %v7190
    %7497 = vmatprep.subr.mxu0 0.0
    %7498 = vmatpush1.msra.mxu0 %v7189
    %7499 = vmatprep.subr.mxu0 0.0
    %7500 = vmatpush1.msra.mxu0 %v7188
    %7501 = vmatprep.subr.mxu0 0.0
    %7502 = vmatpush1.msra.mxu0 %v7187
    %7503 = vmatprep.subr.mxu0 0.0
    %7504 = vmatpush1.msra.mxu0 %v7186
    %7505 = vmatprep.subr.mxu0 0.0
    %7506 = vmatpush2.msra.mxu0 0.0
    %7507 = vmatprep.subr.mxu0 0.0
    %7508 = vmatpush2.msra.mxu0 0.0
    %7509 = vmatprep.subr.mxu0 0.0
    %7510 = vmatpush2.msra.mxu0 0.0
    %7511 = vmatprep.subr.mxu0 0.0
    %7512 = vmatpush2.msra.mxu0 0.0
    %7513 = vmatprep.subr.mxu0 0.0
    %7514 = vmatpush2.msra.mxu0 0.0
    %7515 = vmatprep.subr.mxu0 0.0
    %7516 = vmatpush2.msra.mxu0 0.0
    %7517 = vmatprep.subr.mxu0 0.0
    %7518 = vmatpush2.msra.mxu0 0.0
    %7519 = vmatprep.subr.mxu0 0.0
    %7520 = vmatpush2.msra.mxu0 0.0
    %7521 = vmatprep.subr.mxu0 0.0
    %7522 = vmatpush2.msra.mxu0 0.0
    %7523 = vmatprep.subr.mxu0 0.0
    %7524 = vmatpush2.msra.mxu0 0.0
    %7525 = vmatprep.subr.mxu0 0.0
    %7526 = vmatpush2.msra.mxu0 0.0
    %7527 = vmatprep.subr.mxu0 0.0
    %7528 = vmatpush2.msra.mxu0 0.0
    %7529 = vmatprep.subr.mxu0 0.0
    %7530 = vmatpush2.msra.mxu0 0.0
    %7531 = vmatprep.subr.mxu0 0.0
    %7532 = vmatpush2.msra.mxu0 0.0
    %7533 = vmatprep.subr.mxu0 0.0
    %7534 = vmatpush2.msra.mxu0 0.0
    %7535 = vmatprep.subr.mxu0 0.0
    %7536 = vmatpush2.msra.mxu0 0.0
    %7537 = vmatprep.mubr.f32.mxu0 0.0
    %7538 = vmatmul.mubr.f32.gmra.mxu0 %v7471
    %v7539 = vpop.f32.mrf.mxu0
    %v7540 = vadd.f32 %v7467, %v7539
    %v7541 = vpop.f32.mrf.mxu0
    %7542 = vdwg.mxu0
    %v7543 = vmul.f32 %v7540, 0.5
    %v7544 = vmul.f32 %v7540, 0.70710677
    %v7545 = vand.u32 2147483647, %v7544
    %v7546 = vmul.f32 %v7545, 0.3275911
    %v7547 = vadd.f32 %v7546, 1.0
    %v7548 = vrcp.pop %v7547
    %v7549 = vmul.f32 1.0, %v7548
    %v7550 = vmul.f32 %v7549, 1.0614054
    %v7551 = vsub.f32 %v7550, 1.4531521
    %v7552 = vmul.f32 %v7551, %v7549
    %v7553 = vadd.f32 %v7552, 1.4214138
    %v7554 = vmul.f32 %v7553, %v7549
    %v7555 = vsub.f32 %v7554, 0.28449672
    %v7556 = vmul.f32 %v7555, %v7549
    %v7557 = vadd.f32 %v7556, 0.2548296
    %v7558 = vmul.f32 %v7557, %v7549
    %v7559 = vsub.f32 0.0, %v7545
    %v7560 = vmul.f32 %v7559, %v7545
    %v7561 = vmul.f32 %v7560, 1.442695
    %v7562 = vpow.pop %v7561
    %v7563 = vmul.f32 %v7558, %v7562
    %v7564 = vsub.f32 1.0, %v7563
    %vm7565 = vcmp.lt.f32.partialorder %v7544, 0.0
    %v7566 = vsub.f32 0.0, %v7564
    %v7567 = vsel %vm7565, %v7566, %v7564
    %v7568 = vadd.f32 %v7567, 1.0
    %v7569 = vmul.f32 %v7543, %v7568
    %v7571 = vlaneseq
    %v7572 = vshrl.u32 %v7571, 7
    %v7573 = vsub.s32 0, %v7572
    %v7574 = vrot.slane %v7211, %v7573
    %7576 = vmatprep.subr.mxu0 0.0
    %7577 = vmatpush1.msra.mxu0 %v7210
    %7578 = vmatprep.subr.mxu0 0.0
    %7579 = vmatpush1.msra.mxu0 %v7209
    %7580 = vmatprep.subr.mxu0 0.0
    %7581 = vmatpush1.msra.mxu0 %v7208
    %7582 = vmatprep.subr.mxu0 0.0
    %7583 = vmatpush1.msra.mxu0 %v7207
    %7584 = vmatprep.subr.mxu0 0.0
    %7585 = vmatpush1.msra.mxu0 %v7206
    %7586 = vmatprep.subr.mxu0 0.0
    %7587 = vmatpush1.msra.mxu0 %v7205
    %7588 = vmatprep.subr.mxu0 0.0
    %7589 = vmatpush1.msra.mxu0 %v7204
    %7590 = vmatprep.subr.mxu0 0.0
    %7591 = vmatpush1.msra.mxu0 %v7203
    %7592 = vmatprep.subr.mxu0 0.0
    %7593 = vmatpush1.msra.mxu0 %v7202
    %7594 = vmatprep.subr.mxu0 0.0
    %7595 = vmatpush1.msra.mxu0 %v7201
    %7596 = vmatprep.subr.mxu0 0.0
    %7597 = vmatpush1.msra.mxu0 %v7200
    %7598 = vmatprep.subr.mxu0 0.0
    %7599 = vmatpush1.msra.mxu0 %v7199
    %7600 = vmatprep.subr.mxu0 0.0
    %7601 = vmatpush1.msra.mxu0 %v7198
    %7602 = vmatprep.subr.mxu0 0.0
    %7603 = vmatpush1.msra.mxu0 %v7197
    %7604 = vmatprep.subr.mxu0 0.0
    %7605 = vmatpush1.msra.mxu0 %v7196
    %7606 = vmatprep.subr.mxu0 0.0
    %7607 = vmatpush1.msra.mxu0 %v7195
    %7608 = vmatprep.subr.mxu0 0.0
    %7609 = vmatpush2.msra.mxu0 0.0
    %7610 = vmatprep.subr.mxu0 0.0
    %7611 = vmatpush2.msra.mxu0 0.0
    %7612 = vmatprep.subr.mxu0 0.0
    %7613 = vmatpush2.msra.mxu0 0.0
    %7614 = vmatprep.subr.mxu0 0.0
    %7615 = vmatpush2.msra.mxu0 0.0
    %7616 = vmatprep.subr.mxu0 0.0
    %7617 = vmatpush2.msra.mxu0 0.0
    %7618 = vmatprep.subr.mxu0 0.0
    %7619 = vmatpush2.msra.mxu0 0.0
    %7620 = vmatprep.subr.mxu0 0.0
    %7621 = vmatpush2.msra.mxu0 0.0
    %7622 = vmatprep.subr.mxu0 0.0
    %7623 = vmatpush2.msra.mxu0 0.0
    %7624 = vmatprep.subr.mxu0 0.0
    %7625 = vmatpush2.msra.mxu0 0.0
    %7626 = vmatprep.subr.mxu0 0.0
    %7627 = vmatpush2.msra.mxu0 0.0
    %7628 = vmatprep.subr.mxu0 0.0
    %7629 = vmatpush2.msra.mxu0 0.0
    %7630 = vmatprep.subr.mxu0 0.0
    %7631 = vmatpush2.msra.mxu0 0.0
    %7632 = vmatprep.subr.mxu0 0.0
    %7633 = vmatpush2.msra.mxu0 0.0
    %7634 = vmatprep.subr.mxu0 0.0
    %7635 = vmatpush2.msra.mxu0 0.0
    %7636 = vmatprep.subr.mxu0 0.0
    %7637 = vmatpush2.msra.mxu0 0.0
    %7638 = vmatprep.subr.mxu0 0.0
    %7639 = vmatpush2.msra.mxu0 0.0
    %7640 = vmatprep.mubr.f32.mxu0 0.0
    %7641 = vmatmul.mubr.f32.gmra.mxu0 %v7569
    %v7642 = vpop.f32.mrf.mxu0
    %v7643 = vadd.f32 %v7574, %v7642
    %v7644 = vpop.f32.mrf.mxu0
    %7645 = vdwg.mxu0
    %v7646 = vmul.f32 %v7643, 0.5
    %v7647 = vmul.f32 %v7643, 0.70710677
    %v7648 = vand.u32 2147483647, %v7647
    %v7649 = vmul.f32 %v7648, 0.3275911
    %v7650 = vadd.f32 %v7649, 1.0
    %v7651 = vrcp.pop %v7650
    %v7652 = vmul.f32 1.0, %v7651
    %v7653 = vmul.f32 %v7652, 1.0614054
    %v7654 = vsub.f32 %v7653, 1.4531521
    %v7655 = vmul.f32 %v7654, %v7652
    %v7656 = vadd.f32 %v7655, 1.4214138
    %v7657 = vmul.f32 %v7656, %v7652
    %v7658 = vsub.f32 %v7657, 0.28449672
    %v7659 = vmul.f32 %v7658, %v7652
    %v7660 = vadd.f32 %v7659, 0.2548296
    %v7661 = vmul.f32 %v7660, %v7652
    %v7662 = vsub.f32 0.0, %v7648
    %v7663 = vmul.f32 %v7662, %v7648
    %v7664 = vmul.f32 %v7663, 1.442695
    %v7665 = vpow.pop %v7664
    %v7666 = vmul.f32 %v7661, %v7665
    %v7667 = vsub.f32 1.0, %v7666
    %vm7668 = vcmp.lt.f32.partialorder %v7647, 0.0
    %v7669 = vsub.f32 0.0, %v7667
    %v7670 = vsel %vm7668, %v7669, %v7667
    %v7671 = vadd.f32 %v7670, 1.0
    %v7672 = vmul.f32 %v7646, %v7671
    %v7674 = vlaneseq
    %v7675 = vshrl.u32 %v7674, 7
    %v7676 = vsub.s32 0, %v7675
    %v7677 = vrot.slane %v7216, %v7676
    %v7680 = vsel %vm854, %v7672, 0
    %7682 = vmatprep.subr.mxu0 0.0
    %7683 = vmatpush1.msra.mxu0 0.0
    %7684 = vmatprep.subr.mxu0 0.0
    %7685 = vmatpush1.msra.mxu0 0.0
    %7686 = vmatprep.subr.mxu0 0.0
    %7687 = vmatpush1.msra.mxu0 0.0
    %7688 = vmatprep.subr.mxu0 0.0
    %7689 = vmatpush1.msra.mxu0 0.0
    %7690 = vmatprep.subr.mxu0 0.0
    %7691 = vmatpush1.msra.mxu0 0.0
    %7692 = vmatprep.subr.mxu0 0.0
    %7693 = vmatpush1.msra.mxu0 0.0
    %7694 = vmatprep.subr.mxu0 0.0
    %7695 = vmatpush1.msra.mxu0 0.0
    %7696 = vmatprep.subr.mxu0 0.0
    %7697 = vmatpush1.msra.mxu0 0.0
    %7698 = vmatprep.subr.mxu0 0.0
    %7699 = vmatpush1.msra.mxu0 0.0
    %7700 = vmatprep.subr.mxu0 0.0
    %7701 = vmatpush1.msra.mxu0 0.0
    %7702 = vmatprep.subr.mxu0 0.0
    %7703 = vmatpush1.msra.mxu0 0.0
    %7704 = vmatprep.subr.mxu0 0.0
    %7705 = vmatpush1.msra.mxu0 0.0
    %7706 = vmatprep.subr.mxu0 0.0
    %7707 = vmatpush1.msra.mxu0 %v7215
    %7708 = vmatprep.subr.mxu0 0.0
    %7709 = vmatpush1.msra.mxu0 %v7214
    %7710 = vmatprep.subr.mxu0 0.0
    %7711 = vmatpush1.msra.mxu0 %v7213
    %7712 = vmatprep.subr.mxu0 0.0
    %7713 = vmatpush1.msra.mxu0 %v7212
    %7714 = vmatprep.subr.mxu0 0.0
    %7715 = vmatpush2.msra.mxu0 0.0
    %7716 = vmatprep.subr.mxu0 0.0
    %7717 = vmatpush2.msra.mxu0 0.0
    %7718 = vmatprep.subr.mxu0 0.0
    %7719 = vmatpush2.msra.mxu0 0.0
    %7720 = vmatprep.subr.mxu0 0.0
    %7721 = vmatpush2.msra.mxu0 0.0
    %7722 = vmatprep.subr.mxu0 0.0
    %7723 = vmatpush2.msra.mxu0 0.0
    %7724 = vmatprep.subr.mxu0 0.0
    %7725 = vmatpush2.msra.mxu0 0.0
    %7726 = vmatprep.subr.mxu0 0.0
    %7727 = vmatpush2.msra.mxu0 0.0
    %7728 = vmatprep.subr.mxu0 0.0
    %7729 = vmatpush2.msra.mxu0 0.0
    %7730 = vmatprep.subr.mxu0 0.0
    %7731 = vmatpush2.msra.mxu0 0.0
    %7732 = vmatprep.subr.mxu0 0.0
    %7733 = vmatpush2.msra.mxu0 0.0
    %7734 = vmatprep.subr.mxu0 0.0
    %7735 = vmatpush2.msra.mxu0 0.0
    %7736 = vmatprep.subr.mxu0 0.0
    %7737 = vmatpush2.msra.mxu0 0.0
    %7738 = vmatprep.subr.mxu0 0.0
    %7739 = vmatpush2.msra.mxu0 0.0
    %7740 = vmatprep.subr.mxu0 0.0
    %7741 = vmatpush2.msra.mxu0 0.0
    %7742 = vmatprep.subr.mxu0 0.0
    %7743 = vmatpush2.msra.mxu0 0.0
    %7744 = vmatprep.subr.mxu0 0.0
    %7745 = vmatpush2.msra.mxu0 0.0
    %7746 = vmatprep.mubr.f32.mxu0 0.0
    %7747 = vmatmul.mubr.f32.gmra.mxu0 %v7680
    %v7748 = vpop.f32.mrf.mxu0
    %v7749 = vadd.f32 %v7677, %v7748
    %v7750 = vpop.f32.mrf.mxu0
    %7751 = vdwg.mxu0
    %v7752 = vmul.f32 %v7749, 0.5
    %v7753 = vmul.f32 %v7749, 0.70710677
    %v7754 = vand.u32 2147483647, %v7753
    %v7755 = vmul.f32 %v7754, 0.3275911
    %v7756 = vadd.f32 %v7755, 1.0
    %v7757 = vrcp.pop %v7756
    %v7758 = vmul.f32 1.0, %v7757
    %v7759 = vmul.f32 %v7758, 1.0614054
    %v7760 = vsub.f32 %v7759, 1.4531521
    %v7761 = vmul.f32 %v7760, %v7758
    %v7762 = vadd.f32 %v7761, 1.4214138
    %v7763 = vmul.f32 %v7762, %v7758
    %v7764 = vsub.f32 %v7763, 0.28449672
    %v7765 = vmul.f32 %v7764, %v7758
    %v7766 = vadd.f32 %v7765, 0.2548296
    %v7767 = vmul.f32 %v7766, %v7758
    %v7768 = vsub.f32 0.0, %v7754
    %v7769 = vmul.f32 %v7768, %v7754
    %v7770 = vmul.f32 %v7769, 1.442695
    %v7771 = vpow.pop %v7770
    %v7772 = vmul.f32 %v7767, %v7771
    %v7773 = vsub.f32 1.0, %v7772
    %vm7774 = vcmp.lt.f32.partialorder %v7753, 0.0
    %v7775 = vsub.f32 0.0, %v7773
    %v7776 = vsel %vm7774, %v7775, %v7773
    %v7777 = vadd.f32 %v7776, 1.0
    %v7778 = vmul.f32 %v7752, %v7777
    %v7780 = vlaneseq
    %v7781 = vshrl.u32 %v7780, 7
    %v7782 = vsub.s32 0, %v7781
    %v7783 = vrot.slane %v7225, %v7782
    %v7786 = vsel %vm7469, %v7778, 0
    %7788 = vmatprep.subr.mxu0 0.0
    %7789 = vmatpush1.msra.mxu0 0.0
    %7790 = vmatprep.subr.mxu0 0.0
    %7791 = vmatpush1.msra.mxu0 0.0
    %7792 = vmatprep.subr.mxu0 0.0
    %7793 = vmatpush1.msra.mxu0 0.0
    %7794 = vmatprep.subr.mxu0 0.0
    %7795 = vmatpush1.msra.mxu0 0.0
    %7796 = vmatprep.subr.mxu0 0.0
    %7797 = vmatpush1.msra.mxu0 0.0
    %7798 = vmatprep.subr.mxu0 0.0
    %7799 = vmatpush1.msra.mxu0 0.0
    %7800 = vmatprep.subr.mxu0 0.0
    %7801 = vmatpush1.msra.mxu0 0.0
    %7802 = vmatprep.subr.mxu0 0.0
    %7803 = vmatpush1.msra.mxu0 0.0
    %7804 = vmatprep.subr.mxu0 0.0
    %7805 = vmatpush1.msra.mxu0 %v7224
    %7806 = vmatprep.subr.mxu0 0.0
    %7807 = vmatpush1.msra.mxu0 %v7223
    %7808 = vmatprep.subr.mxu0 0.0
    %7809 = vmatpush1.msra.mxu0 %v7222
    %7810 = vmatprep.subr.mxu0 0.0
    %7811 = vmatpush1.msra.mxu0 %v7221
    %7812 = vmatprep.subr.mxu0 0.0
    %7813 = vmatpush1.msra.mxu0 %v7220
    %7814 = vmatprep.subr.mxu0 0.0
    %7815 = vmatpush1.msra.mxu0 %v7219
    %7816 = vmatprep.subr.mxu0 0.0
    %7817 = vmatpush1.msra.mxu0 %v7218
    %7818 = vmatprep.subr.mxu0 0.0
    %7819 = vmatpush1.msra.mxu0 %v7217
    %7820 = vmatprep.subr.mxu0 0.0
    %7821 = vmatpush2.msra.mxu0 0.0
    %7822 = vmatprep.subr.mxu0 0.0
    %7823 = vmatpush2.msra.mxu0 0.0
    %7824 = vmatprep.subr.mxu0 0.0
    %7825 = vmatpush2.msra.mxu0 0.0
    %7826 = vmatprep.subr.mxu0 0.0
    %7827 = vmatpush2.msra.mxu0 0.0
    %7828 = vmatprep.subr.mxu0 0.0
    %7829 = vmatpush2.msra.mxu0 0.0
    %7830 = vmatprep.subr.mxu0 0.0
    %7831 = vmatpush2.msra.mxu0 0.0
    %7832 = vmatprep.subr.mxu0 0.0
    %7833 = vmatpush2.msra.mxu0 0.0
    %7834 = vmatprep.subr.mxu0 0.0
    %7835 = vmatpush2.msra.mxu0 0.0
    %7836 = vmatprep.subr.mxu0 0.0
    %7837 = vmatpush2.msra.mxu0 0.0
    %7838 = vmatprep.subr.mxu0 0.0
    %7839 = vmatpush2.msra.mxu0 0.0
    %7840 = vmatprep.subr.mxu0 0.0
    %7841 = vmatpush2.msra.mxu0 0.0
    %7842 = vmatprep.subr.mxu0 0.0
    %7843 = vmatpush2.msra.mxu0 0.0
    %7844 = vmatprep.subr.mxu0 0.0
    %7845 = vmatpush2.msra.mxu0 0.0
    %7846 = vmatprep.subr.mxu0 0.0
    %7847 = vmatpush2.msra.mxu0 0.0
    %7848 = vmatprep.subr.mxu0 0.0
    %7849 = vmatpush2.msra.mxu0 0.0
    %7850 = vmatprep.subr.mxu0 0.0
    %7851 = vmatpush2.msra.mxu0 0.0
    %7852 = vmatprep.mubr.f32.mxu0 0.0
    %7853 = vmatmul.mubr.f32.gmra.mxu0 %v7786
    %v7854 = vpop.f32.mrf.mxu0
    %v7855 = vadd.f32 %v7783, %v7854
    %v7856 = vpop.f32.mrf.mxu0
    %7857 = vdwg.mxu0
    %v7858 = vmul.f32 %v7855, 0.5
    %v7859 = vmul.f32 %v7855, 0.70710677
    %v7860 = vand.u32 2147483647, %v7859
    %v7861 = vmul.f32 %v7860, 0.3275911
    %v7862 = vadd.f32 %v7861, 1.0
    %v7863 = vrcp.pop %v7862
    %v7864 = vmul.f32 1.0, %v7863
    %v7865 = vmul.f32 %v7864, 1.0614054
    %v7866 = vsub.f32 %v7865, 1.4531521
    %v7867 = vmul.f32 %v7866, %v7864
    %v7868 = vadd.f32 %v7867, 1.4214138
    %v7869 = vmul.f32 %v7868, %v7864
    %v7870 = vsub.f32 %v7869, 0.28449672
    %v7871 = vmul.f32 %v7870, %v7864
    %v7872 = vadd.f32 %v7871, 0.2548296
    %v7873 = vmul.f32 %v7872, %v7864
    %v7874 = vsub.f32 0.0, %v7860
    %v7875 = vmul.f32 %v7874, %v7860
    %v7876 = vmul.f32 %v7875, 1.442695
    %v7877 = vpow.pop %v7876
    %v7878 = vmul.f32 %v7873, %v7877
    %v7879 = vsub.f32 1.0, %v7878
    %vm7880 = vcmp.lt.f32.partialorder %v7859, 0.0
    %v7881 = vsub.f32 0.0, %v7879
    %v7882 = vsel %vm7880, %v7881, %v7879
    %v7883 = vadd.f32 %v7882, 1.0
    %v7884 = vmul.f32 %v7858, %v7883
    %v7886 = vlaneseq
    %v7887 = vshrl.u32 %v7886, 7
    %v7888 = vsub.s32 0, %v7887
    %v7889 = vrot.slane %v7242, %v7888
    %7891 = vmatprep.subr.mxu0 0.0
    %7892 = vmatpush1.msra.mxu0 %v7241
    %7893 = vmatprep.subr.mxu0 0.0
    %7894 = vmatpush1.msra.mxu0 %v7240
    %7895 = vmatprep.subr.mxu0 0.0
    %7896 = vmatpush1.msra.mxu0 %v7239
    %7897 = vmatprep.subr.mxu0 0.0
    %7898 = vmatpush1.msra.mxu0 %v7238
    %7899 = vmatprep.subr.mxu0 0.0
    %7900 = vmatpush1.msra.mxu0 %v7237
    %7901 = vmatprep.subr.mxu0 0.0
    %7902 = vmatpush1.msra.mxu0 %v7236
    %7903 = vmatprep.subr.mxu0 0.0
    %7904 = vmatpush1.msra.mxu0 %v7235
    %7905 = vmatprep.subr.mxu0 0.0
    %7906 = vmatpush1.msra.mxu0 %v7234
    %7907 = vmatprep.subr.mxu0 0.0
    %7908 = vmatpush1.msra.mxu0 %v7233
    %7909 = vmatprep.subr.mxu0 0.0
    %7910 = vmatpush1.msra.mxu0 %v7232
    %7911 = vmatprep.subr.mxu0 0.0
    %7912 = vmatpush1.msra.mxu0 %v7231
    %7913 = vmatprep.subr.mxu0 0.0
    %7914 = vmatpush1.msra.mxu0 %v7230
    %7915 = vmatprep.subr.mxu0 0.0
    %7916 = vmatpush1.msra.mxu0 %v7229
    %7917 = vmatprep.subr.mxu0 0.0
    %7918 = vmatpush1.msra.mxu0 %v7228
    %7919 = vmatprep.subr.mxu0 0.0
    %7920 = vmatpush1.msra.mxu0 %v7227
    %7921 = vmatprep.subr.mxu0 0.0
    %7922 = vmatpush1.msra.mxu0 %v7226
    %7923 = vmatprep.subr.mxu0 0.0
    %7924 = vmatpush2.msra.mxu0 0.0
    %7925 = vmatprep.subr.mxu0 0.0
    %7926 = vmatpush2.msra.mxu0 0.0
    %7927 = vmatprep.subr.mxu0 0.0
    %7928 = vmatpush2.msra.mxu0 0.0
    %7929 = vmatprep.subr.mxu0 0.0
    %7930 = vmatpush2.msra.mxu0 0.0
    %7931 = vmatprep.subr.mxu0 0.0
    %7932 = vmatpush2.msra.mxu0 0.0
    %7933 = vmatprep.subr.mxu0 0.0
    %7934 = vmatpush2.msra.mxu0 0.0
    %7935 = vmatprep.subr.mxu0 0.0
    %7936 = vmatpush2.msra.mxu0 0.0
    %7937 = vmatprep.subr.mxu0 0.0
    %7938 = vmatpush2.msra.mxu0 0.0
    %7939 = vmatprep.subr.mxu0 0.0
    %7940 = vmatpush2.msra.mxu0 0.0
    %7941 = vmatprep.subr.mxu0 0.0
    %7942 = vmatpush2.msra.mxu0 0.0
    %7943 = vmatprep.subr.mxu0 0.0
    %7944 = vmatpush2.msra.mxu0 0.0
    %7945 = vmatprep.subr.mxu0 0.0
    %7946 = vmatpush2.msra.mxu0 0.0
    %7947 = vmatprep.subr.mxu0 0.0
    %7948 = vmatpush2.msra.mxu0 0.0
    %7949 = vmatprep.subr.mxu0 0.0
    %7950 = vmatpush2.msra.mxu0 0.0
    %7951 = vmatprep.subr.mxu0 0.0
    %7952 = vmatpush2.msra.mxu0 0.0
    %7953 = vmatprep.subr.mxu0 0.0
    %7954 = vmatpush2.msra.mxu0 0.0
    %7955 = vmatprep.mubr.f32.mxu0 0.0
    %7956 = vmatmul.mubr.f32.gmra.mxu0 %v7884
    %v7957 = vpop.f32.mrf.mxu0
    %v7958 = vadd.f32 %v7889, %v7957
    %v7959 = vpop.f32.mrf.mxu0
    %7960 = vdwg.mxu0
    %v7962 = vlaneseq
    %v7963 = vshrl.u32 %v7962, 7
    %v7964 = vsub.s32 0, %v7963
    %v7965 = vrot.slane %v7247, %v7964
    %v7968 = vsel %vm854, %v7958, 0
    %7970 = vmatprep.subr.mxu0 0.0
    %7971 = vmatpush1.msra.mxu0 0.0
    %7972 = vmatprep.subr.mxu0 0.0
    %7973 = vmatpush1.msra.mxu0 0.0
    %7974 = vmatprep.subr.mxu0 0.0
    %7975 = vmatpush1.msra.mxu0 0.0
    %7976 = vmatprep.subr.mxu0 0.0
    %7977 = vmatpush1.msra.mxu0 0.0
    %7978 = vmatprep.subr.mxu0 0.0
    %7979 = vmatpush1.msra.mxu0 0.0
    %7980 = vmatprep.subr.mxu0 0.0
    %7981 = vmatpush1.msra.mxu0 0.0
    %7982 = vmatprep.subr.mxu0 0.0
    %7983 = vmatpush1.msra.mxu0 0.0
    %7984 = vmatprep.subr.mxu0 0.0
    %7985 = vmatpush1.msra.mxu0 0.0
    %7986 = vmatprep.subr.mxu0 0.0
    %7987 = vmatpush1.msra.mxu0 0.0
    %7988 = vmatprep.subr.mxu0 0.0
    %7989 = vmatpush1.msra.mxu0 0.0
    %7990 = vmatprep.subr.mxu0 0.0
    %7991 = vmatpush1.msra.mxu0 0.0
    %7992 = vmatprep.subr.mxu0 0.0
    %7993 = vmatpush1.msra.mxu0 0.0
    %7994 = vmatprep.subr.mxu0 0.0
    %7995 = vmatpush1.msra.mxu0 %v7246
    %7996 = vmatprep.subr.mxu0 0.0
    %7997 = vmatpush1.msra.mxu0 %v7245
    %7998 = vmatprep.subr.mxu0 0.0
    %7999 = vmatpush1.msra.mxu0 %v7244
    %8000 = vmatprep.subr.mxu0 0.0
    %8001 = vmatpush1.msra.mxu0 %v7243
    %8002 = vmatprep.subr.mxu0 0.0
    %8003 = vmatpush2.msra.mxu0 0.0
    %8004 = vmatprep.subr.mxu0 0.0
    %8005 = vmatpush2.msra.mxu0 0.0
    %8006 = vmatprep.subr.mxu0 0.0
    %8007 = vmatpush2.msra.mxu0 0.0
    %8008 = vmatprep.subr.mxu0 0.0
    %8009 = vmatpush2.msra.mxu0 0.0
    %8010 = vmatprep.subr.mxu0 0.0
    %8011 = vmatpush2.msra.mxu0 0.0
    %8012 = vmatprep.subr.mxu0 0.0
    %8013 = vmatpush2.msra.mxu0 0.0
    %8014 = vmatprep.subr.mxu0 0.0
    %8015 = vmatpush2.msra.mxu0 0.0
    %8016 = vmatprep.subr.mxu0 0.0
    %8017 = vmatpush2.msra.mxu0 0.0
    %8018 = vmatprep.subr.mxu0 0.0
    %8019 = vmatpush2.msra.mxu0 0.0
    %8020 = vmatprep.subr.mxu0 0.0
    %8021 = vmatpush2.msra.mxu0 0.0
    %8022 = vmatprep.subr.mxu0 0.0
    %8023 = vmatpush2.msra.mxu0 0.0
    %8024 = vmatprep.subr.mxu0 0.0
    %8025 = vmatpush2.msra.mxu0 0.0
    %8026 = vmatprep.subr.mxu0 0.0
    %8027 = vmatpush2.msra.mxu0 0.0
    %8028 = vmatprep.subr.mxu0 0.0
    %8029 = vmatpush2.msra.mxu0 0.0
    %8030 = vmatprep.subr.mxu0 0.0
    %8031 = vmatpush2.msra.mxu0 0.0
    %8032 = vmatprep.subr.mxu0 0.0
    %8033 = vmatpush2.msra.mxu0 0.0
    %8034 = vmatprep.mubr.f32.mxu0 0.0
    %8035 = vmatmul.mubr.f32.gmra.mxu0 %v7968
    %v8036 = vpop.f32.mrf.mxu0
    %v8037 = vadd.f32 %v7965, %v8036
    %v8038 = vpop.f32.mrf.mxu0
    %8039 = vdwg.mxu0
    %vm8040 = vcmask 33792
    %8041 = vst.msk [vmem:[#allocation2] sm:$0x3] %vm8040, %v8037
    // Predicated region
    $region202: #{forward.3} parent=1 // pred_check
      _
    $region203: #{forward.3} parent=1 // pred_check_branch
      %8043 = sbr.rel (0) target = $region205
    $region204: #{forward.3} parent=1 // pred_region
      %s8045 = ssub.s32 32, 32
      %8046 = vsyncadd [#allocation3], %s8045
      %s8048 = sshll.u32 [#allocation2], 4
      %s8049 = int_to_ptr.vmem [resolvable:$true] %s8048
      %8051 = dma.vmem_to_hbm [thread:$0]  %s8049, 32, %s101, [#allocation3]
    $region205: #{forward.3} parent=1 // pred_fallthru
      _
    // Predicated region
    $region206: #{forward.3} parent=1 // pred_check
      _
    $region207: #{forward.3} parent=1 // pred_check_branch
      %8053 = sbr.rel (0) target = $region209
    $region208: #{forward.3} parent=1 // pred_region
      %8054 = dma.done [#allocation3], 32
    $region209: #{forward.3} parent=1 // pred_fallthru
      _
    %8055 = vsyncpa [#allocation3], 1

</llo_original>
